<compile_context>
chip_gen: v5e
topology: v5e:2x2
jax: 0.10.0
libtpu: 0.0.40
codegen_flags: <defaults>
</compile_context>

<pallas_src>
import numpy as np
import jax
import jax.numpy as jnp
from jax import lax
from jax.experimental import pallas as pl
from jax.experimental.pallas import tpu as pltpu


# --------------------------------------------------------------------------
# static (numpy) precomputation: sampling grids, pupil, Fresnel kernels, DFT
# --------------------------------------------------------------------------
def _fftshift2_np(x):
    # replicates fftshift2_tmp: roll by shape//2 along dim1 then dim0
    return np.roll(np.roll(x, x.shape[1] // 2, axis=1), x.shape[0] // 2, axis=0)


class MultislicePallas:
    def __init__(self, Np, na, wl, ps, mag, alpha, T=4, testFlag=False,
                 fft_dtype=jnp.float32):
        assert Np[0] == Np[1], "square fields assumed (DFT matrix is NxN)"
        self.Np = list(Np)
        self.Npad = list(Np)
        self.na = float(na)
        self.wl = float(wl)
        self.ps = float(ps)
        self.mag = float(mag)
        self.T = T
        self.testFlag = testFlag
        # set fft_dtype=jnp.bfloat16 on v6e/v7x for ~2-3x MXU throughput
        # (validate DFT round-trip error vs an f32 reference first).
        self.fft_dtype = fft_dtype

        # (same overwrite as the PyTorch module)
        self.dz = self.wl / self.na ** 2
        self.dz = 10.0 * self.ps / self.mag

        # ---- sampling() ----
        self.ps_eff = self.ps / self.mag
        x = (np.arange(self.Npad[0]) - self.Npad[0] // 2) * self.ps_eff
        y = (np.arange(self.Npad[1]) - self.Npad[1] // 2) * self.ps_eff
        self.xx, self.yy = np.meshgrid(x, y)
        ux = (np.arange(self.Npad[0]) - self.Npad[0] // 2) * (1.0 / self.ps_eff / self.Npad[0])
        uy = (np.arange(self.Npad[1]) - self.Npad[1] // 2) * (1.0 / self.ps_eff / self.Npad[1])
        self.uxx, self.uyy = np.meshgrid(ux, uy)

        # ---- genPupil(): imaginary part is identically zero -> keep real only
        urr2 = self.uxx ** 2 + self.uyy ** 2
        pupil_raw = 1.0 * (urr2 < (self.na / self.wl) ** 2)
        self._pupil_dev = jnp.asarray(_fftshift2_np(pupil_raw).astype(np.float32))

        # ---- genFrensel(dz) ---- (real / imag passed as separate planes)
        pr, pi = self._gen_fresnel(self.dz)
        self._prop_r_dev = jnp.asarray(pr)
        self._prop_i_dev = jnp.asarray(pi)

        # scalar parameters (static -> baked into the kernel as Python floats)
        self.alpha = float(alpha)
        self.k_imag = float(2.0 * np.pi * self.dz / self.wl)

        # ---- block-form complex DFT matrices (host-side) ----
        # forward:  F[m,n] = exp(-2*pi*i*m*n/N)
        # inverse:  G = conj(F)/N  (so ifft2 needs no extra 1/N^2 or negation)
        #   left transform : [[R,-I],[I,R]](2N,2N) @ [xr;xi](2N,BN)
        #   right transform: [tr|ti](BN,2N) @ [[R,I],[-I,R]](2N,2N)
        N = self.Npad[0]
        idx = np.arange(N)
        ang = 2.0 * np.pi * np.outer(idx, idx) / N
        Fr = np.cos(ang)
        Fi = -np.sin(ang)
        Gr = Fr / N
        Gi = -Fi / N
        FL = np.block([[Fr, -Fi], [Fi, Fr]])
        FR = np.block([[Fr, Fi], [-Fi, Fr]])
        GL = np.block([[Gr, -Gi], [Gi, Gr]])
        GR = np.block([[Gr, Gi], [-Gi, Gr]])
        self._dfl = jnp.asarray(FL.astype(np.float32), dtype=fft_dtype)
        self._dfr = jnp.asarray(FR.astype(np.float32), dtype=fft_dtype)
        self._dgl = jnp.asarray(GL.astype(np.float32), dtype=fft_dtype)
        self._dgr = jnp.asarray(GR.astype(np.float32), dtype=fft_dtype)

        self._propf_cache = {}
        self._call_cache = {}

    # ---- genFrensel() ----
    def _gen_fresnel(self, dz):
        urr2 = self.uxx ** 2 + self.uyy ** 2
        pupil_raw = 1.0 * (urr2 < (self.na / self.wl) ** 2)
        # fftshift2(genPupil(...))[...,0] == fftshift applied twice
        p = _fftshift2_np(_fftshift2_np(pupil_raw))
        kern = p * np.exp(p * 1j * 2.0 * np.pi * dz *
                          np.sqrt(p * ((1.0 / self.wl) ** 2 - urr2)))
        kr = _fftshift2_np(np.real(kern)).astype(np.float32)
        ki = _fftshift2_np(np.imag(kern)).astype(np.float32)
        return kr, ki

    def _propf_dev(self, Z):
        if Z not in self._propf_cache:
            pfr, pfi = self._gen_fresnel(-1.0 * self.dz * ((Z - 1) / 2.0))
            self._propf_cache[Z] = (jnp.asarray(pfr), jnp.asarray(pfi))
        return self._propf_cache[Z]

    # ---- genPlaneWave() (runtime input na_illum -> plain JAX glue) ----
    def _gen_plane_wave(self, na_illum):
        dfx = 1.0 / self.ps_eff / self.Npad[0]
        t0 = jnp.round((na_illum[0] / self.wl) / dfx) * dfx
        t1 = jnp.round((na_illum[1] / self.wl) / dfx) * dfx
        phase = 2.0 * np.pi * (t0 * jnp.asarray(self.xx, jnp.float32)
                               + t1 * jnp.asarray(self.yy, jnp.float32))
        return jnp.cos(phase), jnp.sin(phase)     # (N, N), (N, N)

    # ---- build (and cache) the pallas_call for a given (Z, N) ----
    def _get_call(self, Z, N):
        key = (Z, N)
        if key in self._call_cache:
            return self._call_cache[key]

        plane = N * N * 4                                    # one f32 (N,N) plane
        itemf = np.dtype(self.fft_dtype).itemsize
        dft_bytes = 4 * (2 * N) * (2 * N) * itemf            # FL/FR/GL/GR
        footprint = ((2 * Z) * plane          # object input
                     + (2 * Z) * plane        # output (Z, N, 2N)
                     + 4 * plane              # u / bp scratch planes
                     + 8 * plane              # sqrt_meas, wave(2), pupil, prop(2), propf(2)
                     + dft_bytes
                     + 48 * plane)            # live (2N,2N) matmul temps (B=2 adjoint chain)

        # generation-aware VMEM limit (v7x has only 64 MiB physical VMEM)
        try:
            cap = int(getattr(pltpu.get_tpu_info(), "vmem_capacity_bytes",
                              128 * 1024 * 1024))
        except Exception:
            cap = 128 * 1024 * 1024
        vmem_limit = int(min(max(int(1.5 * footprint), 32 * 1024 * 1024),
                             int(0.90 * cap)))

        # advisory cost so XLA overlaps the surrounding glue (wave gen, sqrt,
        # transposes) with this long custom call
        flops = int(96 * Z * N ** 3)
        transcendentals = int(10 * Z * N * N)
        bytes_accessed = int((4 * Z + 8) * plane + dft_bytes)
        cost = pl.CostEstimate(flops=flops, transcendentals=transcendentals,
                               bytes_accessed=bytes_accessed)

        vspec = pl.BlockSpec(memory_space=pltpu.MemorySpace.VMEM)
        call = pl.pallas_call(
            _make_multislice_kernel(Z, N, self.alpha, self.k_imag, self.fft_dtype),
            out_shape=jax.ShapeDtypeStruct((Z, N, 2 * N), jnp.float32),
            in_specs=[vspec] * 13,
            out_specs=vspec,
            scratch_shapes=[
                pltpu.VMEM((N, N), jnp.float32),   # u real
                pltpu.VMEM((N, N), jnp.float32),   # u imag
                pltpu.VMEM((N, N), jnp.float32),   # back-prop real
                pltpu.VMEM((N, N), jnp.float32),   # back-prop imag
            ],
            compiler_params=pltpu.CompilerParams(vmem_limit_bytes=vmem_limit),
            cost_estimate=cost,
        )
        self._call_cache[key] = call
        return call

    # ----------------------------------------------------------------------
    # forward:  x + step(x) = x - alpha * grad(x)
    # ----------------------------------------------------------------------
    def forward(self, x, meas, na_illum):
        # x: (N, N, 2, Z) PyTorch layout; meas: (N, N); na_illum: (2,)
        N0, N1, _, Z = x.shape
        assert (N0, N1) == tuple(self.Np)
        N = N0

        # object -> (Z*2, N, N) so the kernel can index slices dynamically
        o = jnp.transpose(x.astype(jnp.float32), (3, 2, 0, 1)).reshape(Z * 2, N, N)
        wave_r, wave_i = self._gen_plane_wave(jnp.asarray(na_illum, jnp.float32))
        sqrt_meas = jnp.sqrt(jnp.asarray(meas, jnp.float32))     # host/XLA-side
        pfr, pfi = self._propf_dev(Z)

        call = self._get_call(Z, N)
        out = call(o, sqrt_meas, wave_r, wave_i,
                   self._pupil_dev, self._prop_r_dev, self._prop_i_dev,
                   pfr, pfi, self._dfl, self._dfr, self._dgl, self._dgr)

        # (Z, N, 2N) [real|imag] -> (N, N, 2, Z)
        out = out.reshape(Z, N, 2, N)
        return jnp.transpose(out, (1, 3, 2, 0))


# --------------------------------------------------------------------------
# Pallas kernel: full multislice forward model + adjoint + gradient update
# --------------------------------------------------------------------------
def _make_multislice_kernel(Z, N, alpha, k_im, fft_dtype):
    alpha = float(alpha)
    k_im = float(k_im)
    ak = alpha * k_im      # (-alpha) * conj(k) folded into the final update
    fd = fft_dtype

    def kernel(o_ref, sqrt_meas_ref, wave_r_ref, wave_i_ref, pupil_ref,
               prop_r_ref, prop_i_ref, propf_r_ref, propf_i_ref,
               dfl_ref, dfr_ref, dgl_ref, dgr_ref,
               out_ref, ur_scr, ui_scr, br_scr, bi_scr):

        def cmul(ar, ai, br, bi):        # a * b
            return ar * br - ai * bi, ar * bi + ai * br

        def cmul_cj(ar, ai, br, bi):     # a * conj(b)   (no explicit negates)
            return ar * br + ai * bi, ai * br - ar * bi

        # ---- block-form complex 2-D DFT chain: ifft2(freq_fn(fft2(x))) ----
        # fields are packed along the matmul free dimension, so B independent
        # transforms share the same 4 MXU matmuls (K = 2N on every matmul).
        def _stack_cols(rs, im):         # lists of (N,N) -> (2N, B*N)
            return jnp.concatenate([jnp.concatenate(rs, axis=1),
                                    jnp.concatenate(im, axis=1)], axis=0)

        def _pack_rows(L, B):            # (2N, B*N) stacked -> (B*N, 2N) [r|i]
            return jnp.concatenate(
                [jnp.concatenate([L[:N, f * N:(f + 1) * N],
                                  L[N:, f * N:(f + 1) * N]], axis=1)
                 for f in range(B)], axis=0)

        def fft_chain(fields, freq_fn):
            B = len(fields)
            S = _stack_cols([r for r, _ in fields],
                            [i for _, i in fields]).astype(fd)
            L = jnp.dot(dfl_ref[...], S, preferred_element_type=jnp.float32)
            P = _pack_rows(L, B).astype(fd)
            Fhat = jnp.dot(P, dfr_ref[...], preferred_element_type=jnp.float32)
            out_r, out_i = [], []
            for f in range(B):
                fr_ = Fhat[f * N:(f + 1) * N, :N]
                fi_ = Fhat[f * N:(f + 1) * N, N:]
                gr_, gi_ = freq_fn(fr_, fi_)
                out_r.append(gr_)
                out_i.append(gi_)
            S2 = _stack_cols(out_r, out_i).astype(fd)
            L2 = jnp.dot(dgl_ref[...], S2, preferred_element_type=jnp.float32)
            P2 = _pack_rows(L2, B).astype(fd)
            V = jnp.dot(P2, dgr_ref[...], preferred_element_type=jnp.float32)
            return [(V[f * N:(f + 1) * N, :N], V[f * N:(f + 1) * N, N:])
                    for f in range(B)]

        # ---- T[zz] recomputed on demand (no (2Z,N,N) checkpoint in VMEM) ----
        def calc_T(zz):
            o_r = o_ref[2 * zz]
            o_i = o_ref[2 * zz + 1]
            # T = exp(i*k_im*(o_r + i*o_i)) = exp(-k_im*o_i)*e^{i*k_im*o_r}
            mag = jnp.exp(-k_im * o_i)
            return (mag * jnp.cos(k_im * o_r), mag * jnp.sin(k_im * o_r),
                    o_r, o_i)

        # ---- forward multislice propagation ----
        ur_scr[...] = wave_r_ref[...]
        ui_scr[...] = wave_i_ref[...]

        @pl.loop(0, Z)
        def _fwd(zz):
            tr, ti, _, _ = calc_T(zz)
            ur, ui = cmul(tr, ti, ur_scr[...], ui_scr[...])
            ur_scr[...] = ur
            ui_scr[...] = ui

            @pl.when(zz < Z - 1)
            def _():
                def prop_mul(fr_, fi_):
                    return cmul(fr_, fi_, prop_r_ref[...], prop_i_ref[...])
                (nr, ni), = fft_chain([(ur, ui)], prop_mul)
                ur_scr[...] = nr
                ui_scr[...] = ni

        # ---- refocus + pupil, fused into ONE transform pair ----
        #   u_pup = ifft2( pupil * propf * fft2(u) )   (pupil is purely real)
        ur = ur_scr[...]
        ui = ui_scr[...]
        if Z > 1:
            def focus_pupil(fr_, fi_):
                rr, ri = cmul(fr_, fi_, propf_r_ref[...], propf_i_ref[...])
                p = pupil_ref[...]
                return p * rr, p * ri
            (up_r, up_i), = fft_chain([(ur, ui)], focus_pupil)
        else:
            # TODO(synk): PyTorch grad() leaves u_ref undefined when Z == 1; we pass u through.
            def pupil_only(fr_, fi_):
                p = pupil_ref[...]
                return p * fr_, p * fi_
            (up_r, up_i), = fft_chain([(ur, ui)], pupil_only)

        # ---- amplitude residual: res = u_pup * (1 - sqrt(meas)/|u_pup|) ----
        # (1e-30 eps is an intentional NaN guard vs the reference's direct divide)
        inv_abs = lax.rsqrt(up_r * up_r + up_i * up_i + 1e-30)
        fac = 1.0 - sqrt_meas_ref[...] * inv_abs
        res_r = up_r * fac
        res_i = up_i * fac

        # ---- back-propagate through pupil + refocus, fused into ONE pair ----
        #   bp = ifft2( conj(propf) * pupil * fft2(res) )
        if Z > 1:
            def bp_freq(fr_, fi_):
                p = pupil_ref[...]
                ar, ai = p * fr_, p * fi_
                return cmul_cj(ar, ai, propf_r_ref[...], propf_i_ref[...])
        else:
            def bp_freq(fr_, fi_):
                p = pupil_ref[...]
                return p * fr_, p * fi_
        (bp_r, bp_i), = fft_chain([(res_r, res_i)], bp_freq)
        br_scr[...] = bp_r
        bi_scr[...] = bp_i

        # ---- slice-by-slice adjoint + gradient update ----
        # NOTE: the reference back-propagates u through conj(propkern) and then
        # divides by T[zz-1]; this is NOT the saved forward field, so the
        # "checkpoint the forward field" optimization would change semantics
        # and is intentionally not applied.
        @pl.loop(0, Z)
        def _adj(i):
            zz = Z - 1 - i
            ur = ur_scr[...]
            ui = ui_scr[...]
            bpr = br_scr[...]
            bpi = bi_scr[...]
            tr, ti, o_r, o_i = calc_T(zz)

            g_r, g_i = cmul_cj(bpr, bpi, ur, ui)      # u_bp * conj(u)
            g_r, g_i = cmul_cj(g_r, g_i, tr, ti)      # * conj(T[zz])
            # * conj(k) = -i*k_im, folded with forward's (x - alpha*grad):
            #   grad = (k_im*g_i, -k_im*g_r) -> out = (o_r - ak*g_i, o_i + ak*g_r)
            out_ref[zz, :, 0:N] = o_r - ak * g_i      # direct half-stores,
            out_ref[zz, :, N:2 * N] = o_i + ak * g_r  # no concat copy

            @pl.when(zz > 0)
            def _():
                # both chains share the SAME batched transforms (B = 2):
                #   bp <- ifft2( conj(prop) * fft2( bp * conj(T[zz]) ) )
                #   u  <- ifft2( conj(prop) * fft2( u ) ) / T[zz-1]
                nbr, nbi = cmul_cj(bpr, bpi, tr, ti)

                def conj_prop(fr_, fi_):
                    return cmul_cj(fr_, fi_, prop_r_ref[...], prop_i_ref[...])

                (b2_r, b2_i), (u2_r, u2_i) = fft_chain(
                    [(nbr, nbi), (ur, ui)], conj_prop)
                br_scr[...] = b2_r
                bi_scr[...] = b2_i

                ptr, pti, _, _ = calc_T(zz - 1)       # T[zz-1] recomputed
                # exact reciprocal: approx error would compound over Z slices
                inv_den = pl.reciprocal(ptr * ptr + pti * pti, approx=False)
                dr, di = cmul_cj(u2_r, u2_i, ptr, pti)
                ur_scr[...] = dr * inv_den
                ui_scr[...] = di * inv_den

    return kernel


# --------------------------------------------------------------------------
if __name__ == "__main__":
    key = jax.random.PRNGKey(0)
    Np = [32, 32]
    Z = 3

    model = MultislicePallas(Np, na=0.65, wl=0.5, ps=6.5, mag=20.0, alpha=0.1)

    k1, k2 = jax.random.split(key)
    # object estimate x: (N, N, 2, Z)  (real/imag channels, Z slices)
    x = 0.01 * jax.random.normal(k1, (Np[0], Np[1], 2, Z), dtype=jnp.float32)
    # measured intensity: (N, N), strictly positive
    meas = jax.random.uniform(k2, (Np[0], Np[1]), dtype=jnp.float32,
                              minval=0.5, maxval=1.5)
    na_illum = jnp.array([0.2, -0.1], dtype=jnp.float32)

    out = model.forward(x, meas, na_illum)
    out = jax.block_until_ready(out)

    assert out.shape == x.shape
    assert bool(jnp.all(jnp.isfinite(out)))
    print("KERNEL_OK")
</pallas_src>

<mosaic_0001>
module attributes {stable_mosaic.version = 11 : i64} {
  func.func @kernel(%arg0: memref<6x32x32xf32, #tpu.memory_space<vmem>>, %arg1: memref<32x32xf32, #tpu.memory_space<vmem>>, %arg2: memref<32x32xf32, #tpu.memory_space<vmem>>, %arg3: memref<32x32xf32, #tpu.memory_space<vmem>>, %arg4: memref<32x32xf32, #tpu.memory_space<vmem>>, %arg5: memref<32x32xf32, #tpu.memory_space<vmem>>, %arg6: memref<32x32xf32, #tpu.memory_space<vmem>>, %arg7: memref<32x32xf32, #tpu.memory_space<vmem>>, %arg8: memref<32x32xf32, #tpu.memory_space<vmem>>, %arg9: memref<64x64xf32, #tpu.memory_space<vmem>>, %arg10: memref<64x64xf32, #tpu.memory_space<vmem>>, %arg11: memref<64x64xf32, #tpu.memory_space<vmem>>, %arg12: memref<64x64xf32, #tpu.memory_space<vmem>>, %arg13: memref<3x32x64xf32, #tpu.memory_space<vmem>>, %arg14: memref<32x32xf32, #tpu.memory_space<vmem>>, %arg15: memref<32x32xf32, #tpu.memory_space<vmem>>, %arg16: memref<32x32xf32, #tpu.memory_space<vmem>>, %arg17: memref<32x32xf32, #tpu.memory_space<vmem>>) attributes {dimension_semantics = [], scalar_prefetch = 0 : i64, scratch_operands = 4 : i64, tpu.core_type = #tpu.core_type<tc>} {
    %c0 = arith.constant 0 : index
    %c0_0 = arith.constant 0 : index
    %0 = vector.load %arg2[%c0, %c0_0] : memref<32x32xf32, #tpu.memory_space<vmem>>, vector<32x32xf32>
    %c0_1 = arith.constant 0 : index
    %c0_2 = arith.constant 0 : index
    %1 = vector.load %arg14[%c0_1, %c0_2] : memref<32x32xf32, #tpu.memory_space<vmem>>, vector<32x32xf32>
    tpu.vector_store %arg14[%c0_1, %c0_2], %0 {strides = array<i32>} : memref<32x32xf32, #tpu.memory_space<vmem>>, vector<32x32xf32>,
    %c0_3 = arith.constant 0 : index
    %c0_4 = arith.constant 0 : index
    %2 = vector.load %arg3[%c0_3, %c0_4] : memref<32x32xf32, #tpu.memory_space<vmem>>, vector<32x32xf32>
    %c0_5 = arith.constant 0 : index
    %c0_6 = arith.constant 0 : index
    %3 = vector.load %arg15[%c0_5, %c0_6] : memref<32x32xf32, #tpu.memory_space<vmem>>, vector<32x32xf32>
    tpu.vector_store %arg15[%c0_5, %c0_6], %2 {strides = array<i32>} : memref<32x32xf32, #tpu.memory_space<vmem>>, vector<32x32xf32>,
    %c0_i32 = arith.constant 0 : i32
    %c3_i32 = arith.constant 3 : i32
    %4 = arith.addi %c0_i32, %c3_i32 : i32
    %c1_i32 = arith.constant 1 : i32
    scf.for %arg18 = %c0_i32 to %4 step %c1_i32  : i32 {
      %c1_i32_59 = arith.constant 1 : i32
      %84 = arith.muli %arg18, %c1_i32_59 : i32
      %c0_i32_60 = arith.constant 0 : i32
      %85 = arith.addi %c0_i32_60, %84 : i32
      %c2_i32 = arith.constant 2 : i32
      %86 = arith.muli %c2_i32, %85 : i32
      %87 = arith.index_cast %86 : i32 to index
      %c0_61 = arith.constant 0 : index
      %c0_62 = arith.constant 0 : index
      %88 = vector.load %arg0[%87, %c0_61, %c0_62] : memref<6x32x32xf32, #tpu.memory_space<vmem>>, vector<1x32x32xf32>
      %89 = vector.shape_cast %88 : vector<1x32x32xf32> to vector<32x32xf32>
      %c2_i32_63 = arith.constant 2 : i32
      %90 = arith.muli %c2_i32_63, %85 : i32
      %c1_i32_64 = arith.constant 1 : i32
      %91 = arith.addi %90, %c1_i32_64 : i32
      %92 = arith.index_cast %91 : i32 to index
      %c0_65 = arith.constant 0 : index
      %c0_66 = arith.constant 0 : index
      %93 = vector.load %arg0[%92, %c0_65, %c0_66] : memref<6x32x32xf32, #tpu.memory_space<vmem>>, vector<1x32x32xf32>
      %94 = vector.shape_cast %93 : vector<1x32x32xf32> to vector<32x32xf32>
      %cst_67 = arith.constant -40.8407059 : f32
      %95 = vector.broadcast %cst_67 : f32 to vector<32x32xf32>
      %96 = arith.mulf %95, %94 : vector<32x32xf32>
      %97 = math.exp %96 : vector<32x32xf32>
      %cst_68 = arith.constant 40.8407059 : f32
      %98 = vector.broadcast %cst_68 : f32 to vector<32x32xf32>
      %99 = arith.mulf %98, %89 : vector<32x32xf32>
      %100 = math.cos %99 : vector<32x32xf32>
      %101 = arith.mulf %97, %100 : vector<32x32xf32>
      %cst_69 = arith.constant 40.8407059 : f32
      %102 = vector.broadcast %cst_69 : f32 to vector<32x32xf32>
      %103 = arith.mulf %102, %89 : vector<32x32xf32>
      %104 = math.sin %103 : vector<32x32xf32>
      %105 = arith.mulf %97, %104 : vector<32x32xf32>
      %c0_70 = arith.constant 0 : index
      %c0_71 = arith.constant 0 : index
      %106 = vector.load %arg14[%c0_70, %c0_71] : memref<32x32xf32, #tpu.memory_space<vmem>>, vector<32x32xf32>
      %c0_72 = arith.constant 0 : index
      %c0_73 = arith.constant 0 : index
      %107 = vector.load %arg15[%c0_72, %c0_73] : memref<32x32xf32, #tpu.memory_space<vmem>>, vector<32x32xf32>
      %108 = arith.mulf %101, %106 : vector<32x32xf32>
      %109 = arith.mulf %105, %107 : vector<32x32xf32>
      %110 = arith.subf %108, %109 : vector<32x32xf32>
      %111 = arith.mulf %101, %107 : vector<32x32xf32>
      %112 = arith.mulf %105, %106 : vector<32x32xf32>
      %113 = arith.addf %111, %112 : vector<32x32xf32>
      %c0_74 = arith.constant 0 : index
      %c0_75 = arith.constant 0 : index
      %114 = vector.load %arg14[%c0_74, %c0_75] : memref<32x32xf32, #tpu.memory_space<vmem>>, vector<32x32xf32>
      tpu.vector_store %arg14[%c0_74, %c0_75], %110 {strides = array<i32>} : memref<32x32xf32, #tpu.memory_space<vmem>>, vector<32x32xf32>,
      %c0_76 = arith.constant 0 : index
      %c0_77 = arith.constant 0 : index
      %115 = vector.load %arg15[%c0_76, %c0_77] : memref<32x32xf32, #tpu.memory_space<vmem>>, vector<32x32xf32>
      tpu.vector_store %arg15[%c0_76, %c0_77], %113 {strides = array<i32>} : memref<32x32xf32, #tpu.memory_space<vmem>>, vector<32x32xf32>,
      %c2_i32_78 = arith.constant 2 : i32
      %116 = arith.cmpi slt, %85, %c2_i32_78 : i32
      %117 = arith.extui %116 : i1 to i32
      %c0_i32_79 = arith.constant 0 : i32
      %118 = arith.cmpi ne, %117, %c0_i32_79 : i32
      scf.if %118 {
        %119 = tpu.concatenate %110, %113 in 0 : vector<32x32xf32>, vector<32x32xf32> -> vector<64x32xf32>
        %c0_80 = arith.constant 0 : index
        %c0_81 = arith.constant 0 : index
        %120 = vector.load %arg9[%c0_80, %c0_81] : memref<64x64xf32, #tpu.memory_space<vmem>>, vector<64x64xf32>
        %cst_82 = arith.constant dense<0.000000e+00> : vector<64x32xf32>
        %121 = tpu.matmul %120, %119, %cst_82 {dimension_numbers = #tpu.dot_dimension_numbers<[1], [0], [0], [1], [0, 0, 1, 1], [], []>} : vector<64x64xf32>, vector<64x32xf32>, vector<64x32xf32> -> vector<64x32xf32>
        %122 = vector.extract_strided_slice %121 {offsets = [0, 0], sizes = [32, 32], strides = [1, 1]} : vector<64x32xf32> to vector<32x32xf32>
        %123 = vector.extract_strided_slice %121 {offsets = [32, 0], sizes = [32, 32], strides = [1, 1]} : vector<64x32xf32> to vector<32x32xf32>
        %124 = tpu.concatenate %122, %123 in 1 : vector<32x32xf32>, vector<32x32xf32> -> vector<32x64xf32>
        %c0_83 = arith.constant 0 : index
        %c0_84 = arith.constant 0 : index
        %125 = vector.load %arg10[%c0_83, %c0_84] : memref<64x64xf32, #tpu.memory_space<vmem>>, vector<64x64xf32>
        %cst_85 = arith.constant dense<0.000000e+00> : vector<32x64xf32>
        %126 = tpu.matmul %124, %125, %cst_85 {dimension_numbers = #tpu.dot_dimension_numbers<[1], [0], [0], [1], [0, 0, 1, 1], [], []>} : vector<32x64xf32>, vector<64x64xf32>, vector<32x64xf32> -> vector<32x64xf32>
        %127 = vector.extract_strided_slice %126 {offsets = [0, 0], sizes = [32, 32], strides = [1, 1]} : vector<32x64xf32> to vector<32x32xf32>
        %128 = vector.extract_strided_slice %126 {offsets = [0, 32], sizes = [32, 32], strides = [1, 1]} : vector<32x64xf32> to vector<32x32xf32>
        %c0_86 = arith.constant 0 : index
        %c0_87 = arith.constant 0 : index
        %129 = vector.load %arg5[%c0_86, %c0_87] : memref<32x32xf32, #tpu.memory_space<vmem>>, vector<32x32xf32>
        %c0_88 = arith.constant 0 : index
        %c0_89 = arith.constant 0 : index
        %130 = vector.load %arg6[%c0_88, %c0_89] : memref<32x32xf32, #tpu.memory_space<vmem>>, vector<32x32xf32>
        %131 = arith.mulf %127, %129 : vector<32x32xf32>
        %132 = arith.mulf %128, %130 : vector<32x32xf32>
        %133 = arith.subf %131, %132 : vector<32x32xf32>
        %134 = arith.mulf %127, %130 : vector<32x32xf32>
        %135 = arith.mulf %128, %129 : vector<32x32xf32>
        %136 = arith.addf %134, %135 : vector<32x32xf32>
        %137 = tpu.concatenate %133, %136 in 0 : vector<32x32xf32>, vector<32x32xf32> -> vector<64x32xf32>
        %c0_90 = arith.constant 0 : index
        %c0_91 = arith.constant 0 : index
        %138 = vector.load %arg11[%c0_90, %c0_91] : memref<64x64xf32, #tpu.memory_space<vmem>>, vector<64x64xf32>
        %cst_92 = arith.constant dense<0.000000e+00> : vector<64x32xf32>
        %139 = tpu.matmul %138, %137, %cst_92 {dimension_numbers = #tpu.dot_dimension_numbers<[1], [0], [0], [1], [0, 0, 1, 1], [], []>} : vector<64x64xf32>, vector<64x32xf32>, vector<64x32xf32> -> vector<64x32xf32>
        %140 = vector.extract_strided_slice %139 {offsets = [0, 0], sizes = [32, 32], strides = [1, 1]} : vector<64x32xf32> to vector<32x32xf32>
        %141 = vector.extract_strided_slice %139 {offsets = [32, 0], sizes = [32, 32], strides = [1, 1]} : vector<64x32xf32> to vector<32x32xf32>
        %142 = tpu.concatenate %140, %141 in 1 : vector<32x32xf32>, vector<32x32xf32> -> vector<32x64xf32>
        %c0_93 = arith.constant 0 : index
        %c0_94 = arith.constant 0 : index
        %143 = vector.load %arg12[%c0_93, %c0_94] : memref<64x64xf32, #tpu.memory_space<vmem>>, vector<64x64xf32>
        %cst_95 = arith.constant dense<0.000000e+00> : vector<32x64xf32>
        %144 = tpu.matmul %142, %143, %cst_95 {dimension_numbers = #tpu.dot_dimension_numbers<[1], [0], [0], [1], [0, 0, 1, 1], [], []>} : vector<32x64xf32>, vector<64x64xf32>, vector<32x64xf32> -> vector<32x64xf32>
        %145 = vector.extract_strided_slice %144 {offsets = [0, 0], sizes = [32, 32], strides = [1, 1]} : vector<32x64xf32> to vector<32x32xf32>
        %146 = vector.extract_strided_slice %144 {offsets = [0, 32], sizes = [32, 32], strides = [1, 1]} : vector<32x64xf32> to vector<32x32xf32>
        %c0_96 = arith.constant 0 : index
        %c0_97 = arith.constant 0 : index
        %147 = vector.load %arg14[%c0_96, %c0_97] : memref<32x32xf32, #tpu.memory_space<vmem>>, vector<32x32xf32>
        tpu.vector_store %arg14[%c0_96, %c0_97], %145 {strides = array<i32>} : memref<32x32xf32, #tpu.memory_space<vmem>>, vector<32x32xf32>,
        %c0_98 = arith.constant 0 : index
        %c0_99 = arith.constant 0 : index
        %148 = vector.load %arg15[%c0_98, %c0_99] : memref<32x32xf32, #tpu.memory_space<vmem>>, vector<32x32xf32>
        tpu.vector_store %arg15[%c0_98, %c0_99], %146 {strides = array<i32>} : memref<32x32xf32, #tpu.memory_space<vmem>>, vector<32x32xf32>,
      } else {
      }
    }
    %c3_i32_7 = arith.constant 3 : i32
    %c0_8 = arith.constant 0 : index
    %c0_9 = arith.constant 0 : index
    %5 = vector.load %arg14[%c0_8, %c0_9] : memref<32x32xf32, #tpu.memory_space<vmem>>, vector<32x32xf32>
    %c0_10 = arith.constant 0 : index
    %c0_11 = arith.constant 0 : index
    %6 = vector.load %arg15[%c0_10, %c0_11] : memref<32x32xf32, #tpu.memory_space<vmem>>, vector<32x32xf32>
    %7 = tpu.concatenate %5, %6 in 0 : vector<32x32xf32>, vector<32x32xf32> -> vector<64x32xf32>
    %c0_12 = arith.constant 0 : index
    %c0_13 = arith.constant 0 : index
    %8 = vector.load %arg9[%c0_12, %c0_13] : memref<64x64xf32, #tpu.memory_space<vmem>>, vector<64x64xf32>
    %cst = arith.constant dense<0.000000e+00> : vector<64x32xf32>
    %9 = tpu.matmul %8, %7, %cst {dimension_numbers = #tpu.dot_dimension_numbers<[1], [0], [0], [1], [0, 0, 1, 1], [], []>} : vector<64x64xf32>, vector<64x32xf32>, vector<64x32xf32> -> vector<64x32xf32>
    %10 = vector.extract_strided_slice %9 {offsets = [0, 0], sizes = [32, 32], strides = [1, 1]} : vector<64x32xf32> to vector<32x32xf32>
    %11 = vector.extract_strided_slice %9 {offsets = [32, 0], sizes = [32, 32], strides = [1, 1]} : vector<64x32xf32> to vector<32x32xf32>
    %12 = tpu.concatenate %10, %11 in 1 : vector<32x32xf32>, vector<32x32xf32> -> vector<32x64xf32>
    %c0_14 = arith.constant 0 : index
    %c0_15 = arith.constant 0 : index
    %13 = vector.load %arg10[%c0_14, %c0_15] : memref<64x64xf32, #tpu.memory_space<vmem>>, vector<64x64xf32>
    %cst_16 = arith.constant dense<0.000000e+00> : vector<32x64xf32>
    %14 = tpu.matmul %12, %13, %cst_16 {dimension_numbers = #tpu.dot_dimension_numbers<[1], [0], [0], [1], [0, 0, 1, 1], [], []>} : vector<32x64xf32>, vector<64x64xf32>, vector<32x64xf32> -> vector<32x64xf32>
    %15 = vector.extract_strided_slice %14 {offsets = [0, 0], sizes = [32, 32], strides = [1, 1]} : vector<32x64xf32> to vector<32x32xf32>
    %16 = vector.extract_strided_slice %14 {offsets = [0, 32], sizes = [32, 32], strides = [1, 1]} : vector<32x64xf32> to vector<32x32xf32>
    %c0_17 = arith.constant 0 : index
    %c0_18 = arith.constant 0 : index
    %17 = vector.load %arg7[%c0_17, %c0_18] : memref<32x32xf32, #tpu.memory_space<vmem>>, vector<32x32xf32>
    %c0_19 = arith.constant 0 : index
    %c0_20 = arith.constant 0 : index
    %18 = vector.load %arg8[%c0_19, %c0_20] : memref<32x32xf32, #tpu.memory_space<vmem>>, vector<32x32xf32>
    %19 = arith.mulf %15, %17 : vector<32x32xf32>
    %20 = arith.mulf %16, %18 : vector<32x32xf32>
    %21 = arith.subf %19, %20 : vector<32x32xf32>
    %22 = arith.mulf %15, %18 : vector<32x32xf32>
    %23 = arith.mulf %16, %17 : vector<32x32xf32>
    %24 = arith.addf %22, %23 : vector<32x32xf32>
    %c0_21 = arith.constant 0 : index
    %c0_22 = arith.constant 0 : index
    %25 = vector.load %arg4[%c0_21, %c0_22] : memref<32x32xf32, #tpu.memory_space<vmem>>, vector<32x32xf32>
    %26 = arith.mulf %25, %21 : vector<32x32xf32>
    %27 = arith.mulf %25, %24 : vector<32x32xf32>
    %28 = tpu.concatenate %26, %27 in 0 : vector<32x32xf32>, vector<32x32xf32> -> vector<64x32xf32>
    %c0_23 = arith.constant 0 : index
    %c0_24 = arith.constant 0 : index
    %29 = vector.load %arg11[%c0_23, %c0_24] : memref<64x64xf32, #tpu.memory_space<vmem>>, vector<64x64xf32>
    %cst_25 = arith.constant dense<0.000000e+00> : vector<64x32xf32>
    %30 = tpu.matmul %29, %28, %cst_25 {dimension_numbers = #tpu.dot_dimension_numbers<[1], [0], [0], [1], [0, 0, 1, 1], [], []>} : vector<64x64xf32>, vector<64x32xf32>, vector<64x32xf32> -> vector<64x32xf32>
    %31 = vector.extract_strided_slice %30 {offsets = [0, 0], sizes = [32, 32], strides = [1, 1]} : vector<64x32xf32> to vector<32x32xf32>
    %32 = vector.extract_strided_slice %30 {offsets = [32, 0], sizes = [32, 32], strides = [1, 1]} : vector<64x32xf32> to vector<32x32xf32>
    %33 = tpu.concatenate %31, %32 in 1 : vector<32x32xf32>, vector<32x32xf32> -> vector<32x64xf32>
    %c0_26 = arith.constant 0 : index
    %c0_27 = arith.constant 0 : index
    %34 = vector.load %arg12[%c0_26, %c0_27] : memref<64x64xf32, #tpu.memory_space<vmem>>, vector<64x64xf32>
    %cst_28 = arith.constant dense<0.000000e+00> : vector<32x64xf32>
    %35 = tpu.matmul %33, %34, %cst_28 {dimension_numbers = #tpu.dot_dimension_numbers<[1], [0], [0], [1], [0, 0, 1, 1], [], []>} : vector<32x64xf32>, vector<64x64xf32>, vector<32x64xf32> -> vector<32x64xf32>
    %36 = vector.extract_strided_slice %35 {offsets = [0, 0], sizes = [32, 32], strides = [1, 1]} : vector<32x64xf32> to vector<32x32xf32>
    %37 = vector.extract_strided_slice %35 {offsets = [0, 32], sizes = [32, 32], strides = [1, 1]} : vector<32x64xf32> to vector<32x32xf32>
    %38 = arith.mulf %36, %36 : vector<32x32xf32>
    %39 = arith.mulf %37, %37 : vector<32x32xf32>
    %40 = arith.addf %38, %39 : vector<32x32xf32>
    %cst_29 = arith.constant 1.000000e-30 : f32
    %41 = vector.broadcast %cst_29 : f32 to vector<32x32xf32>
    %42 = arith.addf %40, %41 : vector<32x32xf32>
    %43 = math.rsqrt %42 : vector<32x32xf32>
    %c0_30 = arith.constant 0 : index
    %c0_31 = arith.constant 0 : index
    %44 = vector.load %arg1[%c0_30, %c0_31] : memref<32x32xf32, #tpu.memory_space<vmem>>, vector<32x32xf32>
    %45 = arith.mulf %44, %43 : vector<32x32xf32>
    %cst_32 = arith.constant 1.000000e+00 : f32
    %46 = vector.broadcast %cst_32 : f32 to vector<32x32xf32>
    %47 = arith.subf %46, %45 : vector<32x32xf32>
    %48 = arith.mulf %36, %47 : vector<32x32xf32>
    %49 = arith.mulf %37, %47 : vector<32x32xf32>
    %50 = tpu.concatenate %48, %49 in 0 : vector<32x32xf32>, vector<32x32xf32> -> vector<64x32xf32>
    %c0_33 = arith.constant 0 : index
    %c0_34 = arith.constant 0 : index
    %51 = vector.load %arg9[%c0_33, %c0_34] : memref<64x64xf32, #tpu.memory_space<vmem>>, vector<64x64xf32>
    %cst_35 = arith.constant dense<0.000000e+00> : vector<64x32xf32>
    %52 = tpu.matmul %51, %50, %cst_35 {dimension_numbers = #tpu.dot_dimension_numbers<[1], [0], [0], [1], [0, 0, 1, 1], [], []>} : vector<64x64xf32>, vector<64x32xf32>, vector<64x32xf32> -> vector<64x32xf32>
    %53 = vector.extract_strided_slice %52 {offsets = [0, 0], sizes = [32, 32], strides = [1, 1]} : vector<64x32xf32> to vector<32x32xf32>
    %54 = vector.extract_strided_slice %52 {offsets = [32, 0], sizes = [32, 32], strides = [1, 1]} : vector<64x32xf32> to vector<32x32xf32>
    %55 = tpu.concatenate %53, %54 in 1 : vector<32x32xf32>, vector<32x32xf32> -> vector<32x64xf32>
    %c0_36 = arith.constant 0 : index
    %c0_37 = arith.constant 0 : index
    %56 = vector.load %arg10[%c0_36, %c0_37] : memref<64x64xf32, #tpu.memory_space<vmem>>, vector<64x64xf32>
    %cst_38 = arith.constant dense<0.000000e+00> : vector<32x64xf32>
    %57 = tpu.matmul %55, %56, %cst_38 {dimension_numbers = #tpu.dot_dimension_numbers<[1], [0], [0], [1], [0, 0, 1, 1], [], []>} : vector<32x64xf32>, vector<64x64xf32>, vector<32x64xf32> -> vector<32x64xf32>
    %58 = vector.extract_strided_slice %57 {offsets = [0, 0], sizes = [32, 32], strides = [1, 1]} : vector<32x64xf32> to vector<32x32xf32>
    %59 = vector.extract_strided_slice %57 {offsets = [0, 32], sizes = [32, 32], strides = [1, 1]} : vector<32x64xf32> to vector<32x32xf32>
    %c0_39 = arith.constant 0 : index
    %c0_40 = arith.constant 0 : index
    %60 = vector.load %arg4[%c0_39, %c0_40] : memref<32x32xf32, #tpu.memory_space<vmem>>, vector<32x32xf32>
    %61 = arith.mulf %60, %58 : vector<32x32xf32>
    %62 = arith.mulf %60, %59 : vector<32x32xf32>
    %c0_41 = arith.constant 0 : index
    %c0_42 = arith.constant 0 : index
    %63 = vector.load %arg7[%c0_41, %c0_42] : memref<32x32xf32, #tpu.memory_space<vmem>>, vector<32x32xf32>
    %c0_43 = arith.constant 0 : index
    %c0_44 = arith.constant 0 : index
    %64 = vector.load %arg8[%c0_43, %c0_44] : memref<32x32xf32, #tpu.memory_space<vmem>>, vector<32x32xf32>
    %65 = arith.mulf %61, %63 : vector<32x32xf32>
    %66 = arith.mulf %62, %64 : vector<32x32xf32>
    %67 = arith.addf %65, %66 : vector<32x32xf32>
    %68 = arith.mulf %62, %63 : vector<32x32xf32>
    %69 = arith.mulf %61, %64 : vector<32x32xf32>
    %70 = arith.subf %68, %69 : vector<32x32xf32>
    %71 = tpu.concatenate %67, %70 in 0 : vector<32x32xf32>, vector<32x32xf32> -> vector<64x32xf32>
    %c0_45 = arith.constant 0 : index
    %c0_46 = arith.constant 0 : index
    %72 = vector.load %arg11[%c0_45, %c0_46] : memref<64x64xf32, #tpu.memory_space<vmem>>, vector<64x64xf32>
    %cst_47 = arith.constant dense<0.000000e+00> : vector<64x32xf32>
    %73 = tpu.matmul %72, %71, %cst_47 {dimension_numbers = #tpu.dot_dimension_numbers<[1], [0], [0], [1], [0, 0, 1, 1], [], []>} : vector<64x64xf32>, vector<64x32xf32>, vector<64x32xf32> -> vector<64x32xf32>
    %74 = vector.extract_strided_slice %73 {offsets = [0, 0], sizes = [32, 32], strides = [1, 1]} : vector<64x32xf32> to vector<32x32xf32>
    %75 = vector.extract_strided_slice %73 {offsets = [32, 0], sizes = [32, 32], strides = [1, 1]} : vector<64x32xf32> to vector<32x32xf32>
    %76 = tpu.concatenate %74, %75 in 1 : vector<32x32xf32>, vector<32x32xf32> -> vector<32x64xf32>
    %c0_48 = arith.constant 0 : index
    %c0_49 = arith.constant 0 : index
    %77 = vector.load %arg12[%c0_48, %c0_49] : memref<64x64xf32, #tpu.memory_space<vmem>>, vector<64x64xf32>
    %cst_50 = arith.constant dense<0.000000e+00> : vector<32x64xf32>
    %78 = tpu.matmul %76, %77, %cst_50 {dimension_numbers = #tpu.dot_dimension_numbers<[1], [0], [0], [1], [0, 0, 1, 1], [], []>} : vector<32x64xf32>, vector<64x64xf32>, vector<32x64xf32> -> vector<32x64xf32>
    %79 = vector.extract_strided_slice %78 {offsets = [0, 0], sizes = [32, 32], strides = [1, 1]} : vector<32x64xf32> to vector<32x32xf32>
    %80 = vector.extract_strided_slice %78 {offsets = [0, 32], sizes = [32, 32], strides = [1, 1]} : vector<32x64xf32> to vector<32x32xf32>
    %c0_51 = arith.constant 0 : index
    %c0_52 = arith.constant 0 : index
    %81 = vector.load %arg16[%c0_51, %c0_52] : memref<32x32xf32, #tpu.memory_space<vmem>>, vector<32x32xf32>
    tpu.vector_store %arg16[%c0_51, %c0_52], %79 {strides = array<i32>} : memref<32x32xf32, #tpu.memory_space<vmem>>, vector<32x32xf32>,
    %c0_53 = arith.constant 0 : index
    %c0_54 = arith.constant 0 : index
    %82 = vector.load %arg17[%c0_53, %c0_54] : memref<32x32xf32, #tpu.memory_space<vmem>>, vector<32x32xf32>
    tpu.vector_store %arg17[%c0_53, %c0_54], %80 {strides = array<i32>} : memref<32x32xf32, #tpu.memory_space<vmem>>, vector<32x32xf32>,
    %c0_i32_55 = arith.constant 0 : i32
    %c3_i32_56 = arith.constant 3 : i32
    %83 = arith.addi %c0_i32_55, %c3_i32_56 : i32
    %c1_i32_57 = arith.constant 1 : i32
    scf.for %arg18 = %c0_i32_55 to %83 step %c1_i32_57  : i32 {
      %c1_i32_59 = arith.constant 1 : i32
      %84 = arith.muli %arg18, %c1_i32_59 : i32
      %c0_i32_60 = arith.constant 0 : i32
      %85 = arith.addi %c0_i32_60, %84 : i32
      %c2_i32 = arith.constant 2 : i32
      %86 = arith.subi %c2_i32, %85 : i32
      %c0_61 = arith.constant 0 : index
      %c0_62 = arith.constant 0 : index
      %87 = vector.load %arg14[%c0_61, %c0_62] : memref<32x32xf32, #tpu.memory_space<vmem>>, vector<32x32xf32>
      %c0_63 = arith.constant 0 : index
      %c0_64 = arith.constant 0 : index
      %88 = vector.load %arg15[%c0_63, %c0_64] : memref<32x32xf32, #tpu.memory_space<vmem>>, vector<32x32xf32>
      %c0_65 = arith.constant 0 : index
      %c0_66 = arith.constant 0 : index
      %89 = vector.load %arg16[%c0_65, %c0_66] : memref<32x32xf32, #tpu.memory_space<vmem>>, vector<32x32xf32>
      %c0_67 = arith.constant 0 : index
      %c0_68 = arith.constant 0 : index
      %90 = vector.load %arg17[%c0_67, %c0_68] : memref<32x32xf32, #tpu.memory_space<vmem>>, vector<32x32xf32>
      %c2_i32_69 = arith.constant 2 : i32
      %91 = arith.muli %c2_i32_69, %86 : i32
      %92 = arith.index_cast %91 : i32 to index
      %c0_70 = arith.constant 0 : index
      %c0_71 = arith.constant 0 : index
      %93 = vector.load %arg0[%92, %c0_70, %c0_71] : memref<6x32x32xf32, #tpu.memory_space<vmem>>, vector<1x32x32xf32>
      %94 = vector.shape_cast %93 : vector<1x32x32xf32> to vector<32x32xf32>
      %c2_i32_72 = arith.constant 2 : i32
      %95 = arith.muli %c2_i32_72, %86 : i32
      %c1_i32_73 = arith.constant 1 : i32
      %96 = arith.addi %95, %c1_i32_73 : i32
      %97 = arith.index_cast %96 : i32 to index
      %c0_74 = arith.constant 0 : index
      %c0_75 = arith.constant 0 : index
      %98 = vector.load %arg0[%97, %c0_74, %c0_75] : memref<6x32x32xf32, #tpu.memory_space<vmem>>, vector<1x32x32xf32>
      %99 = vector.shape_cast %98 : vector<1x32x32xf32> to vector<32x32xf32>
      %cst_76 = arith.constant -40.8407059 : f32
      %100 = vector.broadcast %cst_76 : f32 to vector<32x32xf32>
      %101 = arith.mulf %100, %99 : vector<32x32xf32>
      %102 = math.exp %101 : vector<32x32xf32>
      %cst_77 = arith.constant 40.8407059 : f32
      %103 = vector.broadcast %cst_77 : f32 to vector<32x32xf32>
      %104 = arith.mulf %103, %94 : vector<32x32xf32>
      %105 = math.cos %104 : vector<32x32xf32>
      %106 = arith.mulf %102, %105 : vector<32x32xf32>
      %cst_78 = arith.constant 40.8407059 : f32
      %107 = vector.broadcast %cst_78 : f32 to vector<32x32xf32>
      %108 = arith.mulf %107, %94 : vector<32x32xf32>
      %109 = math.sin %108 : vector<32x32xf32>
      %110 = arith.mulf %102, %109 : vector<32x32xf32>
      %111 = arith.mulf %89, %87 : vector<32x32xf32>
      %112 = arith.mulf %90, %88 : vector<32x32xf32>
      %113 = arith.addf %111, %112 : vector<32x32xf32>
      %114 = arith.mulf %90, %87 : vector<32x32xf32>
      %115 = arith.mulf %89, %88 : vector<32x32xf32>
      %116 = arith.subf %114, %115 : vector<32x32xf32>
      %117 = arith.mulf %113, %106 : vector<32x32xf32>
      %118 = arith.mulf %116, %110 : vector<32x32xf32>
      %119 = arith.addf %117, %118 : vector<32x32xf32>
      %120 = arith.mulf %116, %106 : vector<32x32xf32>
      %121 = arith.mulf %113, %110 : vector<32x32xf32>
      %122 = arith.subf %120, %121 : vector<32x32xf32>
      %cst_79 = arith.constant 4.08407068 : f32
      %123 = vector.broadcast %cst_79 : f32 to vector<32x32xf32>
      %124 = arith.mulf %123, %122 : vector<32x32xf32>
      %125 = arith.subf %94, %124 : vector<32x32xf32>
      %126 = arith.index_cast %86 : i32 to index
      %c0_80 = arith.constant 0 : index
      %c0_81 = arith.constant 0 : index
      %127 = vector.load %arg13[%126, %c0_80, %c0_81] : memref<3x32x64xf32, #tpu.memory_space<vmem>>, vector<1x32x32xf32>
      %128 = vector.shape_cast %127 : vector<1x32x32xf32> to vector<32x32xf32>
      %129 = vector.shape_cast %125 : vector<32x32xf32> to vector<1x32x32xf32>
      tpu.vector_store %arg13[%126, %c0_80, %c0_81], %129 {strides = array<i32>} : memref<3x32x64xf32, #tpu.memory_space<vmem>>, vector<1x32x32xf32>,
      %cst_82 = arith.constant 4.08407068 : f32
      %130 = vector.broadcast %cst_82 : f32 to vector<32x32xf32>
      %131 = arith.mulf %130, %119 : vector<32x32xf32>
      %132 = arith.addf %99, %131 : vector<32x32xf32>
      %133 = arith.index_cast %86 : i32 to index
      %c0_83 = arith.constant 0 : index
      %c32 = arith.constant 32 : index
      %134 = vector.load %arg13[%133, %c0_83, %c32] : memref<3x32x64xf32, #tpu.memory_space<vmem>>, vector<1x32x32xf32>
      %135 = vector.shape_cast %134 : vector<1x32x32xf32> to vector<32x32xf32>
      %136 = vector.shape_cast %132 : vector<32x32xf32> to vector<1x32x32xf32>
      tpu.vector_store %arg13[%133, %c0_83, %c32], %136 {strides = array<i32>} : memref<3x32x64xf32, #tpu.memory_space<vmem>>, vector<1x32x32xf32>,
      %c0_i32_84 = arith.constant 0 : i32
      %137 = arith.cmpi sgt, %86, %c0_i32_84 : i32
      %138 = arith.extui %137 : i1 to i32
      %c0_i32_85 = arith.constant 0 : i32
      %139 = arith.cmpi ne, %138, %c0_i32_85 : i32
      scf.if %139 {
        %140 = arith.mulf %89, %106 : vector<32x32xf32>
        %141 = arith.mulf %90, %110 : vector<32x32xf32>
        %142 = arith.addf %140, %141 : vector<32x32xf32>
        %143 = arith.mulf %90, %106 : vector<32x32xf32>
        %144 = arith.mulf %89, %110 : vector<32x32xf32>
        %145 = arith.subf %143, %144 : vector<32x32xf32>
        %146 = tpu.concatenate %142, %87 in 1 : vector<32x32xf32>, vector<32x32xf32> -> vector<32x64xf32>
        %147 = tpu.concatenate %145, %88 in 1 : vector<32x32xf32>, vector<32x32xf32> -> vector<32x64xf32>
        %148 = tpu.concatenate %146, %147 in 0 : vector<32x64xf32>, vector<32x64xf32> -> vector<64x64xf32>
        %c0_86 = arith.constant 0 : index
        %c0_87 = arith.constant 0 : index
        %149 = vector.load %arg9[%c0_86, %c0_87] : memref<64x64xf32, #tpu.memory_space<vmem>>, vector<64x64xf32>
        %cst_88 = arith.constant dense<0.000000e+00> : vector<64x64xf32>
        %150 = tpu.matmul %149, %148, %cst_88 {dimension_numbers = #tpu.dot_dimension_numbers<[1], [0], [0], [1], [0, 0, 1, 1], [], []>} : vector<64x64xf32>, vector<64x64xf32>, vector<64x64xf32> -> vector<64x64xf32>
        %151 = vector.extract_strided_slice %150 {offsets = [0, 0], sizes = [32, 32], strides = [1, 1]} : vector<64x64xf32> to vector<32x32xf32>
        %152 = vector.extract_strided_slice %150 {offsets = [32, 0], sizes = [32, 32], strides = [1, 1]} : vector<64x64xf32> to vector<32x32xf32>
        %153 = tpu.concatenate %151, %152 in 1 : vector<32x32xf32>, vector<32x32xf32> -> vector<32x64xf32>
        %154 = vector.extract_strided_slice %150 {offsets = [0, 32], sizes = [32, 32], strides = [1, 1]} : vector<64x64xf32> to vector<32x32xf32>
        %155 = vector.extract_strided_slice %150 {offsets = [32, 32], sizes = [32, 32], strides = [1, 1]} : vector<64x64xf32> to vector<32x32xf32>
        %156 = tpu.concatenate %154, %155 in 1 : vector<32x32xf32>, vector<32x32xf32> -> vector<32x64xf32>
        %157 = tpu.concatenate %153, %156 in 0 : vector<32x64xf32>, vector<32x64xf32> -> vector<64x64xf32>
        %c0_89 = arith.constant 0 : index
        %c0_90 = arith.constant 0 : index
        %158 = vector.load %arg10[%c0_89, %c0_90] : memref<64x64xf32, #tpu.memory_space<vmem>>, vector<64x64xf32>
        %cst_91 = arith.constant dense<0.000000e+00> : vector<64x64xf32>
        %159 = tpu.matmul %157, %158, %cst_91 {dimension_numbers = #tpu.dot_dimension_numbers<[1], [0], [0], [1], [0, 0, 1, 1], [], []>} : vector<64x64xf32>, vector<64x64xf32>, vector<64x64xf32> -> vector<64x64xf32>
        %160 = vector.extract_strided_slice %159 {offsets = [0, 0], sizes = [32, 32], strides = [1, 1]} : vector<64x64xf32> to vector<32x32xf32>
        %161 = vector.extract_strided_slice %159 {offsets = [0, 32], sizes = [32, 32], strides = [1, 1]} : vector<64x64xf32> to vector<32x32xf32>
        %c0_92 = arith.constant 0 : index
        %c0_93 = arith.constant 0 : index
        %162 = vector.load %arg5[%c0_92, %c0_93] : memref<32x32xf32, #tpu.memory_space<vmem>>, vector<32x32xf32>
        %c0_94 = arith.constant 0 : index
        %c0_95 = arith.constant 0 : index
        %163 = vector.load %arg6[%c0_94, %c0_95] : memref<32x32xf32, #tpu.memory_space<vmem>>, vector<32x32xf32>
        %164 = arith.mulf %160, %162 : vector<32x32xf32>
        %165 = arith.mulf %161, %163 : vector<32x32xf32>
        %166 = arith.addf %164, %165 : vector<32x32xf32>
        %167 = arith.mulf %161, %162 : vector<32x32xf32>
        %168 = arith.mulf %160, %163 : vector<32x32xf32>
        %169 = arith.subf %167, %168 : vector<32x32xf32>
        %170 = vector.extract_strided_slice %159 {offsets = [32, 0], sizes = [32, 32], strides = [1, 1]} : vector<64x64xf32> to vector<32x32xf32>
        %171 = vector.extract_strided_slice %159 {offsets = [32, 32], sizes = [32, 32], strides = [1, 1]} : vector<64x64xf32> to vector<32x32xf32>
        %c0_96 = arith.constant 0 : index
        %c0_97 = arith.constant 0 : index
        %172 = vector.load %arg5[%c0_96, %c0_97] : memref<32x32xf32, #tpu.memory_space<vmem>>, vector<32x32xf32>
        %c0_98 = arith.constant 0 : index
        %c0_99 = arith.constant 0 : index
        %173 = vector.load %arg6[%c0_98, %c0_99] : memref<32x32xf32, #tpu.memory_space<vmem>>, vector<32x32xf32>
        %174 = arith.mulf %170, %172 : vector<32x32xf32>
        %175 = arith.mulf %171, %173 : vector<32x32xf32>
        %176 = arith.addf %174, %175 : vector<32x32xf32>
        %177 = arith.mulf %171, %172 : vector<32x32xf32>
        %178 = arith.mulf %170, %173 : vector<32x32xf32>
        %179 = arith.subf %177, %178 : vector<32x32xf32>
        %180 = tpu.concatenate %166, %176 in 1 : vector<32x32xf32>, vector<32x32xf32> -> vector<32x64xf32>
        %181 = tpu.concatenate %169, %179 in 1 : vector<32x32xf32>, vector<32x32xf32> -> vector<32x64xf32>
        %182 = tpu.concatenate %180, %181 in 0 : vector<32x64xf32>, vector<32x64xf32> -> vector<64x64xf32>
        %c0_100 = arith.constant 0 : index
        %c0_101 = arith.constant 0 : index
        %183 = vector.load %arg11[%c0_100, %c0_101] : memref<64x64xf32, #tpu.memory_space<vmem>>, vector<64x64xf32>
        %cst_102 = arith.constant dense<0.000000e+00> : vector<64x64xf32>
        %184 = tpu.matmul %183, %182, %cst_102 {dimension_numbers = #tpu.dot_dimension_numbers<[1], [0], [0], [1], [0, 0, 1, 1], [], []>} : vector<64x64xf32>, vector<64x64xf32>, vector<64x64xf32> -> vector<64x64xf32>
        %185 = vector.extract_strided_slice %184 {offsets = [0, 0], sizes = [32, 32], strides = [1, 1]} : vector<64x64xf32> to vector<32x32xf32>
        %186 = vector.extract_strided_slice %184 {offsets = [32, 0], sizes = [32, 32], strides = [1, 1]} : vector<64x64xf32> to vector<32x32xf32>
        %187 = tpu.concatenate %185, %186 in 1 : vector<32x32xf32>, vector<32x32xf32> -> vector<32x64xf32>
        %188 = vector.extract_strided_slice %184 {offsets = [0, 32], sizes = [32, 32], strides = [1, 1]} : vector<64x64xf32> to vector<32x32xf32>
        %189 = vector.extract_strided_slice %184 {offsets = [32, 32], sizes = [32, 32], strides = [1, 1]} : vector<64x64xf32> to vector<32x32xf32>
        %190 = tpu.concatenate %188, %189 in 1 : vector<32x32xf32>, vector<32x32xf32> -> vector<32x64xf32>
        %191 = tpu.concatenate %187, %190 in 0 : vector<32x64xf32>, vector<32x64xf32> -> vector<64x64xf32>
        %c0_103 = arith.constant 0 : index
        %c0_104 = arith.constant 0 : index
        %192 = vector.load %arg12[%c0_103, %c0_104] : memref<64x64xf32, #tpu.memory_space<vmem>>, vector<64x64xf32>
        %cst_105 = arith.constant dense<0.000000e+00> : vector<64x64xf32>
        %193 = tpu.matmul %191, %192, %cst_105 {dimension_numbers = #tpu.dot_dimension_numbers<[1], [0], [0], [1], [0, 0, 1, 1], [], []>} : vector<64x64xf32>, vector<64x64xf32>, vector<64x64xf32> -> vector<64x64xf32>
        %194 = vector.extract_strided_slice %193 {offsets = [0, 0], sizes = [32, 32], strides = [1, 1]} : vector<64x64xf32> to vector<32x32xf32>
        %195 = vector.extract_strided_slice %193 {offsets = [0, 32], sizes = [32, 32], strides = [1, 1]} : vector<64x64xf32> to vector<32x32xf32>
        %196 = vector.extract_strided_slice %193 {offsets = [32, 0], sizes = [32, 32], strides = [1, 1]} : vector<64x64xf32> to vector<32x32xf32>
        %197 = vector.extract_strided_slice %193 {offsets = [32, 32], sizes = [32, 32], strides = [1, 1]} : vector<64x64xf32> to vector<32x32xf32>
        %c0_106 = arith.constant 0 : index
        %c0_107 = arith.constant 0 : index
        %198 = vector.load %arg16[%c0_106, %c0_107] : memref<32x32xf32, #tpu.memory_space<vmem>>, vector<32x32xf32>
        tpu.vector_store %arg16[%c0_106, %c0_107], %194 {strides = array<i32>} : memref<32x32xf32, #tpu.memory_space<vmem>>, vector<32x32xf32>,
        %c0_108 = arith.constant 0 : index
        %c0_109 = arith.constant 0 : index
        %199 = vector.load %arg17[%c0_108, %c0_109] : memref<32x32xf32, #tpu.memory_space<vmem>>, vector<32x32xf32>
        tpu.vector_store %arg17[%c0_108, %c0_109], %195 {strides = array<i32>} : memref<32x32xf32, #tpu.memory_space<vmem>>, vector<32x32xf32>,
        %c1_i32_110 = arith.constant 1 : i32
        %200 = arith.subi %86, %c1_i32_110 : i32
        %c2_i32_111 = arith.constant 2 : i32
        %201 = arith.muli %c2_i32_111, %200 : i32
        %202 = arith.index_cast %201 : i32 to index
        %c0_112 = arith.constant 0 : index
        %c0_113 = arith.constant 0 : index
        %203 = vector.load %arg0[%202, %c0_112, %c0_113] : memref<6x32x32xf32, #tpu.memory_space<vmem>>, vector<1x32x32xf32>
        %204 = vector.shape_cast %203 : vector<1x32x32xf32> to vector<32x32xf32>
        %c2_i32_114 = arith.constant 2 : i32
        %205 = arith.muli %c2_i32_114, %200 : i32
        %c1_i32_115 = arith.constant 1 : i32
        %206 = arith.addi %205, %c1_i32_115 : i32
        %207 = arith.index_cast %206 : i32 to index
        %c0_116 = arith.constant 0 : index
        %c0_117 = arith.constant 0 : index
        %208 = vector.load %arg0[%207, %c0_116, %c0_117] : memref<6x32x32xf32, #tpu.memory_space<vmem>>, vector<1x32x32xf32>
        %209 = vector.shape_cast %208 : vector<1x32x32xf32> to vector<32x32xf32>
        %cst_118 = arith.constant -40.8407059 : f32
        %210 = vector.broadcast %cst_118 : f32 to vector<32x32xf32>
        %211 = arith.mulf %210, %209 : vector<32x32xf32>
        %212 = math.exp %211 : vector<32x32xf32>
        %cst_119 = arith.constant 40.8407059 : f32
        %213 = vector.broadcast %cst_119 : f32 to vector<32x32xf32>
        %214 = arith.mulf %213, %204 : vector<32x32xf32>
        %215 = math.cos %214 : vector<32x32xf32>
        %216 = arith.mulf %212, %215 : vector<32x32xf32>
        %cst_120 = arith.constant 40.8407059 : f32
        %217 = vector.broadcast %cst_120 : f32 to vector<32x32xf32>
        %218 = arith.mulf %217, %204 : vector<32x32xf32>
        %219 = math.sin %218 : vector<32x32xf32>
        %220 = arith.mulf %212, %219 : vector<32x32xf32>
        %221 = arith.mulf %216, %216 : vector<32x32xf32>
        %222 = arith.mulf %220, %220 : vector<32x32xf32>
        %223 = arith.addf %221, %222 : vector<32x32xf32>
        %224 = tpu.reciprocal %223 : vector<32x32xf32> -> vector<32x32xf32>
        %225 = arith.mulf %196, %216 : vector<32x32xf32>
        %226 = arith.mulf %197, %220 : vector<32x32xf32>
        %227 = arith.addf %225, %226 : vector<32x32xf32>
        %228 = arith.mulf %197, %216 : vector<32x32xf32>
        %229 = arith.mulf %196, %220 : vector<32x32xf32>
        %230 = arith.subf %228, %229 : vector<32x32xf32>
        %231 = arith.mulf %227, %224 : vector<32x32xf32>
        %c0_121 = arith.constant 0 : index
        %c0_122 = arith.constant 0 : index
        %232 = vector.load %arg14[%c0_121, %c0_122] : memref<32x32xf32, #tpu.memory_space<vmem>>, vector<32x32xf32>
        tpu.vector_store %arg14[%c0_121, %c0_122], %231 {strides = array<i32>} : memref<32x32xf32, #tpu.memory_space<vmem>>, vector<32x32xf32>,
        %233 = arith.mulf %230, %224 : vector<32x32xf32>
        %c0_123 = arith.constant 0 : index
        %c0_124 = arith.constant 0 : index
        %234 = vector.load %arg15[%c0_123, %c0_124] : memref<32x32xf32, #tpu.memory_space<vmem>>, vector<32x32xf32>
        tpu.vector_store %arg15[%c0_123, %c0_124], %233 {strides = array<i32>} : memref<32x32xf32, #tpu.memory_space<vmem>>, vector<32x32xf32>,
      } else {
      }
    }
    %c3_i32_58 = arith.constant 3 : i32
    return
  }
}

</mosaic_0001>

<llo_original>
// kernel: tpu_custom_call.1
$region0: #{tpu_custom_call.1}
  #allocation0 [shape = 'u32[]', space=smem, size = 0x4, offset = 0x4, fixed_abs, tag = 'smem constant byte address 0x4 - core index']
  #allocation1 [shape = 'u32[72,128]{1,0:T(1,128)}', space=vmem, size = 0x9000, scoped, tag = 'internal scratch']
  #allocation2 [shape = 'f32[32,32]{1,0:T(8,128)}', space=vmem, size = 0x4000, scoped, tag = 'scratch operand']
  #allocation3 [shape = 'f32[32,32]{1,0:T(8,128)}', space=vmem, size = 0x4000, scoped, tag = 'scratch operand']
  #allocation4 [shape = 'f32[32,32]{1,0:T(8,128)}', space=vmem, size = 0x4000, scoped, tag = 'scratch operand']
  #allocation5 [shape = 'f32[32,32]{1,0:T(8,128)}', space=vmem, size = 0x4000, scoped, tag = 'scratch operand']
  %s0 = inlined_call_operand.hbm [shape: f32[6,32,32], index: 0, kind: input, shape index: {}]
  %s1 = inlined_call_operand.hbm [shape: f32[32,32], index: 1, kind: input, shape index: {}]
  %s2 = inlined_call_operand.hbm [shape: f32[32,32], index: 2, kind: input, shape index: {}]
  %s3 = inlined_call_operand.hbm [shape: f32[32,32], index: 3, kind: input, shape index: {}]
  %s4 = inlined_call_operand.hbm [shape: f32[32,32], index: 4, kind: input, shape index: {}]
  %s5 = inlined_call_operand.hbm [shape: f32[32,32], index: 5, kind: input, shape index: {}]
  %s6 = inlined_call_operand.hbm [shape: f32[32,32], index: 6, kind: input, shape index: {}]
  %s7 = inlined_call_operand.hbm [shape: f32[32,32], index: 7, kind: input, shape index: {}]
  %s8 = inlined_call_operand.hbm [shape: f32[32,32], index: 8, kind: input, shape index: {}]
  %s9 = inlined_call_operand.hbm [shape: f32[64,64], index: 9, kind: input, shape index: {}]
  %s10 = inlined_call_operand.hbm [shape: f32[64,64], index: 10, kind: input, shape index: {}]
  %s11 = inlined_call_operand.hbm [shape: f32[64,64], index: 11, kind: input, shape index: {}]
  %s12 = inlined_call_operand.hbm [shape: f32[64,64], index: 12, kind: input, shape index: {}]
  %s13 = inlined_call_operand.hbm [shape: f32[3,32,64], index: 13, kind: output, shape index: {}]
  %s14 = sld [smem:[#allocation0]]
  $region136: #{tpu_custom_call.1} parent=0
    _
  %s16 = ssub.s32 1, %s14
  %s17 = scalar_select 0, %s16, %s14
  $region1: #{tpu_custom_call.1} parent=0
    #allocation6 [shape = 'u8[98304]{0}', space=vmem, size = 0x18000, scoped, tag = 'input window, operand 0, single buffered']
    #allocation7 [shape = 's32[1]{0}', space=sflag, size = 0x4, scoped, tag = 'scoped memory for tpu_custom_call.1']
    #allocation8 [shape = 's32[1]{0}', space=sflag, size = 0x4, scoped, tag = 'scoped memory for tpu_custom_call.1']
    #allocation9 [shape = 'u8[16384]{0}', space=vmem, size = 0x4000, scoped, tag = 'input window, operand 1, single buffered']
    #allocation10 [shape = 's32[1]{0}', space=sflag, size = 0x4, scoped, tag = 'scoped memory for tpu_custom_call.1']
    #allocation11 [shape = 'u8[16384]{0}', space=vmem, size = 0x4000, scoped, tag = 'input window, operand 2, single buffered']
    #allocation12 [shape = 'u8[16384]{0}', space=vmem, size = 0x4000, scoped, tag = 'input window, operand 3, single buffered']
    #allocation13 [shape = 's32[1]{0}', space=sflag, size = 0x4, scoped, tag = 'scoped memory for tpu_custom_call.1']
    #allocation14 [shape = 'u8[16384]{0}', space=vmem, size = 0x4000, scoped, tag = 'input window, operand 4, single buffered']
    #allocation15 [shape = 'u8[16384]{0}', space=vmem, size = 0x4000, scoped, tag = 'input window, operand 5, single buffered']
    #allocation16 [shape = 's32[1]{0}', space=sflag, size = 0x4, scoped, tag = 'scoped memory for tpu_custom_call.1']
    #allocation17 [shape = 'u8[16384]{0}', space=vmem, size = 0x4000, scoped, tag = 'input window, operand 6, single buffered']
    #allocation18 [shape = 'u8[16384]{0}', space=vmem, size = 0x4000, scoped, tag = 'input window, operand 7, single buffered']
    #allocation19 [shape = 's32[1]{0}', space=sflag, size = 0x4, scoped, tag = 'scoped memory for tpu_custom_call.1']
    #allocation20 [shape = 'u8[16384]{0}', space=vmem, size = 0x4000, scoped, tag = 'input window, operand 8, single buffered']
    #allocation21 [shape = 'u8[32768]{0}', space=vmem, size = 0x8000, scoped, tag = 'input window, operand 9, single buffered']
    #allocation22 [shape = 's32[1]{0}', space=sflag, size = 0x4, scoped, tag = 'scoped memory for tpu_custom_call.1']
    #allocation23 [shape = 'u8[32768]{0}', space=vmem, size = 0x8000, scoped, tag = 'input window, operand 10, single buffered']
    #allocation24 [shape = 'u8[32768]{0}', space=vmem, size = 0x8000, scoped, tag = 'input window, operand 11, single buffered']
    #allocation25 [shape = 's32[1]{0}', space=sflag, size = 0x4, scoped, tag = 'scoped memory for tpu_custom_call.1']
    #allocation26 [shape = 'u8[32768]{0}', space=vmem, size = 0x8000, scoped, tag = 'input window, operand 12, single buffered']
    #allocation27 [shape = 'u8[49152]{0}', space=vmem, size = 0xc000, scoped, tag = 'output window, operand 0, single buffered']
    %18 = vsyncpa [#allocation7], 0
    %19 = vsyncpa [#allocation10], 0
    %20 = vsyncpa [#allocation13], 0
    %21 = vsyncpa [#allocation16], 0
    %22 = vsyncpa [#allocation19], 0
    %23 = vsyncpa [#allocation22], 0
    %24 = vsyncpa [#allocation25], 0
    %25 = vsyncpa [#allocation8], 0
    // Predicated region
    $region2: #{tpu_custom_call.1} parent=1 // pred_check
      _
    $region3: #{tpu_custom_call.1} parent=1 // pred_check_branch
      %27 = sbr.rel (0) target = $region5
    $region4: #{tpu_custom_call.1} parent=1 // pred_region
      %29 = vsyncadd [#allocation7], 0
      %s30 = sshll.u32 %s0, 4
      %s31 = int_to_ptr.hbm [resolvable:$true] %s30
      %s32 = sshll.u32 [#allocation6], 4
      %s33 = int_to_ptr.vmem [resolvable:$true] %s32
      %38 = dma.hbm_to_vmem [thread:$0]  %s31, 3072, %s33, [#allocation7], 128, 128, 8
    $region5: #{tpu_custom_call.1} parent=1 // pred_fallthru
      _
    // Predicated region
    $region6: #{tpu_custom_call.1} parent=1 // pred_check
      _
    $region7: #{tpu_custom_call.1} parent=1 // pred_check_branch
      %40 = sbr.rel (0) target = $region9
    $region8: #{tpu_custom_call.1} parent=1 // pred_region
      %42 = vsyncadd [#allocation10], 0
      %s43 = sshll.u32 %s1, 4
      %s44 = int_to_ptr.hbm [resolvable:$true] %s43
      %s45 = sshll.u32 [#allocation9], 4
      %s46 = int_to_ptr.vmem [resolvable:$true] %s45
      %51 = dma.hbm_to_vmem [thread:$0]  %s44, 512, %s46, [#allocation10], 128, 128, 8
    $region9: #{tpu_custom_call.1} parent=1 // pred_fallthru
      _
    // Predicated region
    $region10: #{tpu_custom_call.1} parent=1 // pred_check
      _
    $region11: #{tpu_custom_call.1} parent=1 // pred_check_branch
      %53 = sbr.rel (0) target = $region13
    $region12: #{tpu_custom_call.1} parent=1 // pred_region
      %55 = vsyncadd [#allocation10], 0
      %s56 = sshll.u32 %s2, 4
      %s57 = int_to_ptr.hbm [resolvable:$true] %s56
      %s58 = sshll.u32 [#allocation11], 4
      %s59 = int_to_ptr.vmem [resolvable:$true] %s58
      %64 = dma.hbm_to_vmem [thread:$0]  %s57, 512, %s59, [#allocation10], 128, 128, 8
    $region13: #{tpu_custom_call.1} parent=1 // pred_fallthru
      _
    // Predicated region
    $region14: #{tpu_custom_call.1} parent=1 // pred_check
      _
    $region15: #{tpu_custom_call.1} parent=1 // pred_check_branch
      %66 = sbr.rel (0) target = $region17
    $region16: #{tpu_custom_call.1} parent=1 // pred_region
      %68 = vsyncadd [#allocation13], 0
      %s69 = sshll.u32 %s3, 4
      %s70 = int_to_ptr.hbm [resolvable:$true] %s69
      %s71 = sshll.u32 [#allocation12], 4
      %s72 = int_to_ptr.vmem [resolvable:$true] %s71
      %77 = dma.hbm_to_vmem [thread:$0]  %s70, 512, %s72, [#allocation13], 128, 128, 8
    $region17: #{tpu_custom_call.1} parent=1 // pred_fallthru
      _
    // Predicated region
    $region18: #{tpu_custom_call.1} parent=1 // pred_check
      _
    $region19: #{tpu_custom_call.1} parent=1 // pred_check_branch
      %79 = sbr.rel (0) target = $region21
    $region20: #{tpu_custom_call.1} parent=1 // pred_region
      %81 = vsyncadd [#allocation13], 0
      %s82 = sshll.u32 %s4, 4
      %s83 = int_to_ptr.hbm [resolvable:$true] %s82
      %s84 = sshll.u32 [#allocation14], 4
      %s85 = int_to_ptr.vmem [resolvable:$true] %s84
      %90 = dma.hbm_to_vmem [thread:$0]  %s83, 512, %s85, [#allocation13], 128, 128, 8
    $region21: #{tpu_custom_call.1} parent=1 // pred_fallthru
      _
    // Predicated region
    $region22: #{tpu_custom_call.1} parent=1 // pred_check
      _
    $region23: #{tpu_custom_call.1} parent=1 // pred_check_branch
      %92 = sbr.rel (0) target = $region25
    $region24: #{tpu_custom_call.1} parent=1 // pred_region
      %94 = vsyncadd [#allocation16], 0
      %s95 = sshll.u32 %s5, 4
      %s96 = int_to_ptr.hbm [resolvable:$true] %s95
      %s97 = sshll.u32 [#allocation15], 4
      %s98 = int_to_ptr.vmem [resolvable:$true] %s97
      %103 = dma.hbm_to_vmem [thread:$0]  %s96, 512, %s98, [#allocation16], 128, 128, 8
    $region25: #{tpu_custom_call.1} parent=1 // pred_fallthru
      _
    // Predicated region
    $region26: #{tpu_custom_call.1} parent=1 // pred_check
      _
    $region27: #{tpu_custom_call.1} parent=1 // pred_check_branch
      %105 = sbr.rel (0) target = $region29
    $region28: #{tpu_custom_call.1} parent=1 // pred_region
      %107 = vsyncadd [#allocation16], 0
      %s108 = sshll.u32 %s6, 4
      %s109 = int_to_ptr.hbm [resolvable:$true] %s108
      %s110 = sshll.u32 [#allocation17], 4
      %s111 = int_to_ptr.vmem [resolvable:$true] %s110
      %116 = dma.hbm_to_vmem [thread:$0]  %s109, 512, %s111, [#allocation16], 128, 128, 8
    $region29: #{tpu_custom_call.1} parent=1 // pred_fallthru
      _
    // Predicated region
    $region30: #{tpu_custom_call.1} parent=1 // pred_check
      _
    $region31: #{tpu_custom_call.1} parent=1 // pred_check_branch
      %118 = sbr.rel (0) target = $region33
    $region32: #{tpu_custom_call.1} parent=1 // pred_region
      %120 = vsyncadd [#allocation19], 0
      %s121 = sshll.u32 %s7, 4
      %s122 = int_to_ptr.hbm [resolvable:$true] %s121
      %s123 = sshll.u32 [#allocation18], 4
      %s124 = int_to_ptr.vmem [resolvable:$true] %s123
      %129 = dma.hbm_to_vmem [thread:$0]  %s122, 512, %s124, [#allocation19], 128, 128, 8
    $region33: #{tpu_custom_call.1} parent=1 // pred_fallthru
      _
    // Predicated region
    $region34: #{tpu_custom_call.1} parent=1 // pred_check
      _
    $region35: #{tpu_custom_call.1} parent=1 // pred_check_branch
      %131 = sbr.rel (0) target = $region37
    $region36: #{tpu_custom_call.1} parent=1 // pred_region
      %133 = vsyncadd [#allocation19], 0
      %s134 = sshll.u32 %s8, 4
      %s135 = int_to_ptr.hbm [resolvable:$true] %s134
      %s136 = sshll.u32 [#allocation20], 4
      %s137 = int_to_ptr.vmem [resolvable:$true] %s136
      %142 = dma.hbm_to_vmem [thread:$0]  %s135, 512, %s137, [#allocation19], 128, 128, 8
    $region37: #{tpu_custom_call.1} parent=1 // pred_fallthru
      _
    // Predicated region
    $region38: #{tpu_custom_call.1} parent=1 // pred_check
      _
    $region39: #{tpu_custom_call.1} parent=1 // pred_check_branch
      %144 = sbr.rel (0) target = $region41
    $region40: #{tpu_custom_call.1} parent=1 // pred_region
      %146 = vsyncadd [#allocation22], 0
      %s147 = sshll.u32 %s9, 4
      %s148 = int_to_ptr.hbm [resolvable:$true] %s147
      %s149 = sshll.u32 [#allocation21], 4
      %s150 = int_to_ptr.vmem [resolvable:$true] %s149
      %155 = dma.hbm_to_vmem [thread:$0]  %s148, 1024, %s150, [#allocation22], 128, 128, 8
    $region41: #{tpu_custom_call.1} parent=1 // pred_fallthru
      _
    // Predicated region
    $region42: #{tpu_custom_call.1} parent=1 // pred_check
      _
    $region43: #{tpu_custom_call.1} parent=1 // pred_check_branch
      %157 = sbr.rel (0) target = $region45
    $region44: #{tpu_custom_call.1} parent=1 // pred_region
      %159 = vsyncadd [#allocation22], 0
      %s160 = sshll.u32 %s10, 4
      %s161 = int_to_ptr.hbm [resolvable:$true] %s160
      %s162 = sshll.u32 [#allocation23], 4
      %s163 = int_to_ptr.vmem [resolvable:$true] %s162
      %168 = dma.hbm_to_vmem [thread:$0]  %s161, 1024, %s163, [#allocation22], 128, 128, 8
    $region45: #{tpu_custom_call.1} parent=1 // pred_fallthru
      _
    // Predicated region
    $region46: #{tpu_custom_call.1} parent=1 // pred_check
      _
    $region47: #{tpu_custom_call.1} parent=1 // pred_check_branch
      %170 = sbr.rel (0) target = $region49
    $region48: #{tpu_custom_call.1} parent=1 // pred_region
      %172 = vsyncadd [#allocation25], 0
      %s173 = sshll.u32 %s11, 4
      %s174 = int_to_ptr.hbm [resolvable:$true] %s173
      %s175 = sshll.u32 [#allocation24], 4
      %s176 = int_to_ptr.vmem [resolvable:$true] %s175
      %181 = dma.hbm_to_vmem [thread:$0]  %s174, 1024, %s176, [#allocation25], 128, 128, 8
    $region49: #{tpu_custom_call.1} parent=1 // pred_fallthru
      _
    // Predicated region
    $region50: #{tpu_custom_call.1} parent=1 // pred_check
      _
    $region51: #{tpu_custom_call.1} parent=1 // pred_check_branch
      %183 = sbr.rel (0) target = $region53
    $region52: #{tpu_custom_call.1} parent=1 // pred_region
      %185 = vsyncadd [#allocation25], 0
      %s186 = sshll.u32 %s12, 4
      %s187 = int_to_ptr.hbm [resolvable:$true] %s186
      %s188 = sshll.u32 [#allocation26], 4
      %s189 = int_to_ptr.vmem [resolvable:$true] %s188
      %194 = dma.hbm_to_vmem [thread:$0]  %s187, 1024, %s189, [#allocation25], 128, 128, 8
    $region53: #{tpu_custom_call.1} parent=1 // pred_fallthru
      _
    // Predicated region
    $region54: #{tpu_custom_call.1} parent=1 // pred_check
      _
    $region55: #{tpu_custom_call.1} parent=1 // pred_check_branch
      %196 = sbr.rel (0) target = $region57
    $region56: #{tpu_custom_call.1} parent=1 // pred_region
      %198 = dma.done [#allocation7], 3072
    $region57: #{tpu_custom_call.1} parent=1 // pred_fallthru
      _
    // Predicated region
    $region58: #{tpu_custom_call.1} parent=1 // pred_check
      _
    $region59: #{tpu_custom_call.1} parent=1 // pred_check_branch
      %200 = sbr.rel (0) target = $region61
    $region60: #{tpu_custom_call.1} parent=1 // pred_region
      %202 = dma.done [#allocation10], 512
    $region61: #{tpu_custom_call.1} parent=1 // pred_fallthru
      _
    // Predicated region
    $region62: #{tpu_custom_call.1} parent=1 // pred_check
      _
    $region63: #{tpu_custom_call.1} parent=1 // pred_check_branch
      %204 = sbr.rel (0) target = $region65
    $region64: #{tpu_custom_call.1} parent=1 // pred_region
      %206 = dma.done [#allocation10], 512
    $region65: #{tpu_custom_call.1} parent=1 // pred_fallthru
      _
    // Predicated region
    $region66: #{tpu_custom_call.1} parent=1 // pred_check
      _
    $region67: #{tpu_custom_call.1} parent=1 // pred_check_branch
      %208 = sbr.rel (0) target = $region69
    $region68: #{tpu_custom_call.1} parent=1 // pred_region
      %210 = dma.done [#allocation13], 512
    $region69: #{tpu_custom_call.1} parent=1 // pred_fallthru
      _
    // Predicated region
    $region70: #{tpu_custom_call.1} parent=1 // pred_check
      _
    $region71: #{tpu_custom_call.1} parent=1 // pred_check_branch
      %212 = sbr.rel (0) target = $region73
    $region72: #{tpu_custom_call.1} parent=1 // pred_region
      %214 = dma.done [#allocation13], 512
    $region73: #{tpu_custom_call.1} parent=1 // pred_fallthru
      _
    // Predicated region
    $region74: #{tpu_custom_call.1} parent=1 // pred_check
      _
    $region75: #{tpu_custom_call.1} parent=1 // pred_check_branch
      %216 = sbr.rel (0) target = $region77
    $region76: #{tpu_custom_call.1} parent=1 // pred_region
      %218 = dma.done [#allocation16], 512
    $region77: #{tpu_custom_call.1} parent=1 // pred_fallthru
      _
    // Predicated region
    $region78: #{tpu_custom_call.1} parent=1 // pred_check
      _
    $region79: #{tpu_custom_call.1} parent=1 // pred_check_branch
      %220 = sbr.rel (0) target = $region81
    $region80: #{tpu_custom_call.1} parent=1 // pred_region
      %222 = dma.done [#allocation16], 512
    $region81: #{tpu_custom_call.1} parent=1 // pred_fallthru
      _
    // Predicated region
    $region82: #{tpu_custom_call.1} parent=1 // pred_check
      _
    $region83: #{tpu_custom_call.1} parent=1 // pred_check_branch
      %224 = sbr.rel (0) target = $region85
    $region84: #{tpu_custom_call.1} parent=1 // pred_region
      %226 = dma.done [#allocation19], 512
    $region85: #{tpu_custom_call.1} parent=1 // pred_fallthru
      _
    // Predicated region
    $region86: #{tpu_custom_call.1} parent=1 // pred_check
      _
    $region87: #{tpu_custom_call.1} parent=1 // pred_check_branch
      %228 = sbr.rel (0) target = $region89
    $region88: #{tpu_custom_call.1} parent=1 // pred_region
      %230 = dma.done [#allocation19], 512
    $region89: #{tpu_custom_call.1} parent=1 // pred_fallthru
      _
    // Predicated region
    $region90: #{tpu_custom_call.1} parent=1 // pred_check
      _
    $region91: #{tpu_custom_call.1} parent=1 // pred_check_branch
      %232 = sbr.rel (0) target = $region93
    $region92: #{tpu_custom_call.1} parent=1 // pred_region
      %234 = dma.done [#allocation22], 1024
    $region93: #{tpu_custom_call.1} parent=1 // pred_fallthru
      _
    // Predicated region
    $region94: #{tpu_custom_call.1} parent=1 // pred_check
      _
    $region95: #{tpu_custom_call.1} parent=1 // pred_check_branch
      %236 = sbr.rel (0) target = $region97
    $region96: #{tpu_custom_call.1} parent=1 // pred_region
      %238 = dma.done [#allocation22], 1024
    $region97: #{tpu_custom_call.1} parent=1 // pred_fallthru
      _
    // Predicated region
    $region98: #{tpu_custom_call.1} parent=1 // pred_check
      _
    $region99: #{tpu_custom_call.1} parent=1 // pred_check_branch
      %240 = sbr.rel (0) target = $region101
    $region100: #{tpu_custom_call.1} parent=1 // pred_region
      %242 = dma.done [#allocation25], 1024
    $region101: #{tpu_custom_call.1} parent=1 // pred_fallthru
      _
    // Predicated region
    $region102: #{tpu_custom_call.1} parent=1 // pred_check
      _
    $region103: #{tpu_custom_call.1} parent=1 // pred_check_branch
      %244 = sbr.rel (0) target = $region105
    $region104: #{tpu_custom_call.1} parent=1 // pred_region
      %246 = dma.done [#allocation25], 1024
    $region105: #{tpu_custom_call.1} parent=1 // pred_fallthru
      _
    %v247 = vld [vmem:[#allocation11] sm:$0xff]
    %v248 = vld [vmem:[#allocation11 + $0x8] sm:$0xff]
    %v249 = vld [vmem:[#allocation11 + $0x10] sm:$0xff]
    %v250 = vld [vmem:[#allocation11 + $0x18] sm:$0xff]
    %vm251 = vcmask 261120
    %252 = vst.msk [vmem:[#allocation2] sm:$0xff] %vm251, %v247
    %253 = vst.msk [vmem:[#allocation2 + $0x8] sm:$0xff] %vm251, %v248
    %254 = vst.msk [vmem:[#allocation2 + $0x10] sm:$0xff] %vm251, %v249
    %255 = vst.msk [vmem:[#allocation2 + $0x18] sm:$0xff] %vm251, %v250
    %v256 = vld [vmem:[#allocation12] sm:$0xff]
    %v257 = vld [vmem:[#allocation12 + $0x8] sm:$0xff]
    %v258 = vld [vmem:[#allocation12 + $0x10] sm:$0xff]
    %v259 = vld [vmem:[#allocation12 + $0x18] sm:$0xff]
    %260 = vst.msk [vmem:[#allocation3] sm:$0xff] %vm251, %v256
    %261 = vst.msk [vmem:[#allocation3 + $0x8] sm:$0xff] %vm251, %v257
    %262 = vst.msk [vmem:[#allocation3 + $0x10] sm:$0xff] %vm251, %v258
    %263 = vst.msk [vmem:[#allocation3 + $0x18] sm:$0xff] %vm251, %v259
    loop: start=0, step=1, limit=3
    $region106: #{tpu_custom_call.1} parent=1 // loop_pre_header
      _
    $region107: #{tpu_custom_call.1} parent=1 // loop_header
      %s265 = sphi 0, %s269
      %p266 = scmp.ge.s32.totalorder %s265, 3
    $region108: #{tpu_custom_call.1} parent=1 // loop_header_branch
      %268 = sbr.rel (%p266) target = $region112
    $region109: #{tpu_custom_call.1} parent=1 // loop_body
      %s270 = smul.u32 %s265, 2
      %s271 = smul.u32 %s270, 32
      %s272 = scalar_lea.vmem [#allocation6], %s271
      %v273 = vld [vmem:[%s272] sm:$0xff]
      %v274 = vld [vmem:[%s272 + $0x8] sm:$0xff]
      %v275 = vld [vmem:[%s272 + $0x10] sm:$0xff]
      %v276 = vld [vmem:[%s272 + $0x18] sm:$0xff]
      %s277 = sadd.s32 %s270, 1
      %s278 = smul.u32 %s277, 32
      %s279 = scalar_lea.vmem [#allocation6], %s278
      %v280 = vld [vmem:[%s279] sm:$0xff]
      %v281 = vld [vmem:[%s279 + $0x8] sm:$0xff]
      %v282 = vld [vmem:[%s279 + $0x10] sm:$0xff]
      %v283 = vld [vmem:[%s279 + $0x18] sm:$0xff]
      %v284 = vmul.f32 %v280, -40.840706
      %v285 = vmul.f32 %v281, -40.840706
      %v286 = vmul.f32 %v282, -40.840706
      %v287 = vmul.f32 %v283, -40.840706
      %v288 = vmul.f32 %v284, 1.442695
      %v289 = vpow.pop %v288
      %v290 = vmul.f32 %v285, 1.442695
      %v291 = vpow.pop %v290
      %v292 = vmul.f32 %v286, 1.442695
      %v293 = vpow.pop %v292
      %v294 = vmul.f32 %v287, 1.442695
      %v295 = vpow.pop %v294
      %v296 = vmul.f32 %v273, 40.840706
      %v297 = vmul.f32 %v274, 40.840706
      %v298 = vmul.f32 %v275, 40.840706
      %v299 = vmul.f32 %v276, 40.840706
      %v300 = vand.u32 2147483647, %v296
      %vm301 = vcmp.le.f32.partialorder %v300, 0.7853982
      %vm302 = vcmp.lt.s32.totalorder %v296, 0
      %v303 = vand.u32 %v296, 2139095040
      %v304 = vshrl.u32 %v303, 23
      %v305 = vsub.s32 %v304, 127
      %v306 = vand.u32 2147483647, %v296
      %v307 = vand.u32 %v306, 8388607
      %v308 = vor.u32 %v307, 8388608
      %v309 = vsub.s32 0, %v308
      %v310 = vadd.s32 %v305, 1
      %vm311 = vcmp.gt.s32.totalorder %v310, 0
      %v312 = vsel %vm311, %v310, 0
      %v313 = vshrl.u32 %v312, 5
      %v314 = vand.u32 %v312, 31
      %v315 = vsub.s32 32, %v314
      %v316 = vshrl.u32 683565275, %v315
      %v317 = vshll.u32 683565275, %v314
      %v318 = vshrl.u32 2475754826, %v315
      %v319 = vor.u32 %v317, %v318
      %v320 = vshll.u32 2475754826, %v314
      %v321 = vshrl.u32 2131351028, %v315
      %v322 = vor.u32 %v320, %v321
      %v323 = vshll.u32 2131351028, %v314
      %v324 = vshrl.u32 2102212464, %v315
      %v325 = vor.u32 %v323, %v324
      %v326 = vshll.u32 2102212464, %v314
      %v327 = vshrl.u32 920167782, %v315
      %v328 = vor.u32 %v326, %v327
      %v329 = vshll.u32 920167782, %v314
      %v330 = vshrl.u32 1326507024, %v315
      %v331 = vor.u32 %v329, %v330
      %vm332 = vcmp.lt.s32.totalorder %v313, 1
      %vm333 = vcmp.lt.s32.totalorder %v313, 2
      %vm334 = vcmp.lt.s32.totalorder %v313, 3
      %vm335 = vcmp.lt.s32.totalorder %v313, 4
      %v336 = vsel %vm332, %v316, %v319
      %v337 = vsel %vm335, %v325, 2102212464
      %v338 = vsel %vm334, %v322, %v337
      %v339 = vsel %vm333, %v336, %v338
      %v340 = vsel %vm332, %v319, %v322
      %v341 = vsel %vm335, %v328, 920167782
      %v342 = vsel %vm334, %v325, %v341
      %v343 = vsel %vm333, %v340, %v342
      %v344 = vsel %vm332, %v322, %v325
      %v345 = vsel %vm335, %v331, 1326507024
      %v346 = vsel %vm334, %v328, %v345
      %v347 = vsel %vm333, %v344, %v346
      %v348 = vshll.u32 %v308, 8
      %v349 = vand.u32 %v348, 65535
      %v350 = vshrl.u32 %v348, 16
      %v351 = vand.u32 %v347, 65535
      %v352 = vshrl.u32 %v347, 16
      %v353 = vmul.u32 %v349, %v351
      %v354 = vmul.u32 %v349, %v352
      %v355 = vmul.u32 %v350, %v351
      %v356 = vmul.u32 %v350, %v352
      %v357 = vshll.u32 %v354, 16
      %v358 = vshrl.u32 %v354, 16
      %v359 = vshll.u32 %v355, 16
      %v360 = vshrl.u32 %v355, 16
      %vm361 = vc.u32 %v353, %v357
      %v362 = vsel %vm361, 1, 0
      %v363 = vadd.s32 %v353, %v357
      %v364 = vadd.s32 %v356, %v362
      %vm365 = vc.u32 %v363, %v359
      %v366 = vsel %vm365, 1, 0
      %v367 = vadd.s32 %v363, %v359
      %v368 = vadd.s32 %v364, %v366
      %v369 = vadd.s32 %v368, %v358
      %v370 = vadd.s32 %v369, %v360
      %v371 = vand.u32 %v348, 65535
      %v372 = vshrl.u32 %v348, 16
      %v373 = vand.u32 %v343, 65535
      %v374 = vshrl.u32 %v343, 16
      %v375 = vmul.u32 %v371, %v373
      %v376 = vmul.u32 %v371, %v374
      %v377 = vmul.u32 %v372, %v373
      %v378 = vmul.u32 %v372, %v374
      %v379 = vshll.u32 %v376, 16
      %v380 = vshrl.u32 %v376, 16
      %v381 = vshll.u32 %v377, 16
      %v382 = vshrl.u32 %v377, 16
      %vm383 = vc.u32 %v375, %v379
      %v384 = vsel %vm383, 1, 0
      %v385 = vadd.s32 %v375, %v379
      %v386 = vadd.s32 %v378, %v384
      %vm387 = vc.u32 %v385, %v381
      %v388 = vsel %vm387, 1, 0
      %v389 = vadd.s32 %v385, %v381
      %v390 = vadd.s32 %v386, %v388
      %v391 = vadd.s32 %v390, %v380
      %v392 = vadd.s32 %v391, %v382
      %v393 = vmul.u32 %v348, %v339
      %v394 = vadd.s32 %v370, %v389
      %vm395 = vc.u32 %v370, %v389
      %v396 = vadd.s32 %v392, 1
      %v397 = vsel %vm395, %v396, %v392
      %v398 = vadd.s32 %v393, %v397
      %v399 = vadd.s32 %v398, 536870912
      %v400 = vshrl.u32 %v399, 30
      %v401 = vshll.u32 %v400, 30
      %v402 = vsub.s32 %v398, %v401
      %vm403 = vcmp.lt.s32.totalorder %v402, 0
      %v404 = vsub.s32 0, %v402
      %v405 = vsel %vm403, %v404, %v402
      %v406 = vclz %v405
      %v407 = vsub.s32 %v406, 2
      %vm408 = vcmp.gt.s32.totalorder 0, %v407
      %v409 = vsel %vm408, 0, %v407
      %v410 = vsub.s32 32, %v409
      %v411 = vshll.u32 %v402, %v409
      %v412 = vshrl.u32 %v394, %v410
      %v413 = vor.u32 %v411, %v412
      %v414 = vsub.s32 4294967266, %v409
      %v415 = vadd.s32 %v414, 127
      %v416 = vshll.u32 %v415, 23
      %v417 = vor.u32 4788187, %v416
      %v418 = vand.u32 2147483647, %v417
      %v420 = vcvt.s32.f32 %v413
      %v421 = vmul.f32 %v420, %v418
      %v422 = vxor.u32 %v421, 2147483648
      %v423 = vsel %vm302, %v422, %v421
      %v424 = vsub.s32 4, %v400
      %v425 = vsel %vm302, %v424, %v400
      %v426 = vsel %vm301, %v296, %v423
      %v427 = vsel %vm301, 0, %v425
      %v428 = vmul.f32 %v426, %v426
      %v429 = vmul.f32 %v428, -0.001358992
      %v430 = vadd.f32 %v429, 0.041655596
      %v431 = vmul.f32 %v428, %v430
      %v432 = vadd.f32 %v431, -0.4999988
      %v433 = vmul.f32 %v428, %v432
      %v434 = vadd.f32 1.0, %v433
      %v435 = vmul.f32 %v426, %v426
      %v436 = vmul.f32 %v435, -0.00019511016
      %v437 = vadd.f32 %v436, 0.008332121
      %v438 = vmul.f32 %v435, %v437
      %v439 = vadd.f32 %v438, -0.16666654
      %v440 = vmul.f32 %v435, %v439
      %v441 = vadd.f32 %v440, 1.0
      %v442 = vmul.f32 %v441, %v426
      %vm443 = vweird.f32 %v296
      %v444 = vand.u32 %v427, 3
      %vm445 = vcmp.lt.s32.totalorder %v444, 2
      %vm446 = vcmp.eq.s32.totalorder %v444, 0
      %v447 = vxor.u32 %v442, 2147483648
      %v448 = vsel %vm446, %v434, %v447
      %vm449 = vcmp.eq.s32.totalorder %v444, 2
      %v450 = vxor.u32 %v434, 2147483648
      %v451 = vsel %vm449, %v450, %v442
      %v452 = vsel %vm445, %v448, %v451
      %v453 = vsel %vm443, nan, %v452
      %v454 = vand.u32 2147483647, %v297
      %vm455 = vcmp.le.f32.partialorder %v454, 0.7853982
      %vm456 = vcmp.lt.s32.totalorder %v297, 0
      %v457 = vand.u32 %v297, 2139095040
      %v458 = vshrl.u32 %v457, 23
      %v459 = vsub.s32 %v458, 127
      %v460 = vand.u32 2147483647, %v297
      %v461 = vand.u32 %v460, 8388607
      %v462 = vor.u32 %v461, 8388608
      %v463 = vsub.s32 0, %v462
      %v464 = vadd.s32 %v459, 1
      %vm465 = vcmp.gt.s32.totalorder %v464, 0
      %v466 = vsel %vm465, %v464, 0
      %v467 = vshrl.u32 %v466, 5
      %v468 = vand.u32 %v466, 31
      %v469 = vsub.s32 32, %v468
      %v470 = vshrl.u32 683565275, %v469
      %v471 = vshll.u32 683565275, %v468
      %v472 = vshrl.u32 2475754826, %v469
      %v473 = vor.u32 %v471, %v472
      %v474 = vshll.u32 2475754826, %v468
      %v475 = vshrl.u32 2131351028, %v469
      %v476 = vor.u32 %v474, %v475
      %v477 = vshll.u32 2131351028, %v468
      %v478 = vshrl.u32 2102212464, %v469
      %v479 = vor.u32 %v477, %v478
      %v480 = vshll.u32 2102212464, %v468
      %v481 = vshrl.u32 920167782, %v469
      %v482 = vor.u32 %v480, %v481
      %v483 = vshll.u32 920167782, %v468
      %v484 = vshrl.u32 1326507024, %v469
      %v485 = vor.u32 %v483, %v484
      %vm486 = vcmp.lt.s32.totalorder %v467, 1
      %vm487 = vcmp.lt.s32.totalorder %v467, 2
      %vm488 = vcmp.lt.s32.totalorder %v467, 3
      %vm489 = vcmp.lt.s32.totalorder %v467, 4
      %v490 = vsel %vm486, %v470, %v473
      %v491 = vsel %vm489, %v479, 2102212464
      %v492 = vsel %vm488, %v476, %v491
      %v493 = vsel %vm487, %v490, %v492
      %v494 = vsel %vm486, %v473, %v476
      %v495 = vsel %vm489, %v482, 920167782
      %v496 = vsel %vm488, %v479, %v495
      %v497 = vsel %vm487, %v494, %v496
      %v498 = vsel %vm486, %v476, %v479
      %v499 = vsel %vm489, %v485, 1326507024
      %v500 = vsel %vm488, %v482, %v499
      %v501 = vsel %vm487, %v498, %v500
      %v502 = vshll.u32 %v462, 8
      %v503 = vand.u32 %v502, 65535
      %v504 = vshrl.u32 %v502, 16
      %v505 = vand.u32 %v501, 65535
      %v506 = vshrl.u32 %v501, 16
      %v507 = vmul.u32 %v503, %v505
      %v508 = vmul.u32 %v503, %v506
      %v509 = vmul.u32 %v504, %v505
      %v510 = vmul.u32 %v504, %v506
      %v511 = vshll.u32 %v508, 16
      %v512 = vshrl.u32 %v508, 16
      %v513 = vshll.u32 %v509, 16
      %v514 = vshrl.u32 %v509, 16
      %vm515 = vc.u32 %v507, %v511
      %v516 = vsel %vm515, 1, 0
      %v517 = vadd.s32 %v507, %v511
      %v518 = vadd.s32 %v510, %v516
      %vm519 = vc.u32 %v517, %v513
      %v520 = vsel %vm519, 1, 0
      %v521 = vadd.s32 %v517, %v513
      %v522 = vadd.s32 %v518, %v520
      %v523 = vadd.s32 %v522, %v512
      %v524 = vadd.s32 %v523, %v514
      %v525 = vand.u32 %v502, 65535
      %v526 = vshrl.u32 %v502, 16
      %v527 = vand.u32 %v497, 65535
      %v528 = vshrl.u32 %v497, 16
      %v529 = vmul.u32 %v525, %v527
      %v530 = vmul.u32 %v525, %v528
      %v531 = vmul.u32 %v526, %v527
      %v532 = vmul.u32 %v526, %v528
      %v533 = vshll.u32 %v530, 16
      %v534 = vshrl.u32 %v530, 16
      %v535 = vshll.u32 %v531, 16
      %v536 = vshrl.u32 %v531, 16
      %vm537 = vc.u32 %v529, %v533
      %v538 = vsel %vm537, 1, 0
      %v539 = vadd.s32 %v529, %v533
      %v540 = vadd.s32 %v532, %v538
      %vm541 = vc.u32 %v539, %v535
      %v542 = vsel %vm541, 1, 0
      %v543 = vadd.s32 %v539, %v535
      %v544 = vadd.s32 %v540, %v542
      %v545 = vadd.s32 %v544, %v534
      %v546 = vadd.s32 %v545, %v536
      %v547 = vmul.u32 %v502, %v493
      %v548 = vadd.s32 %v524, %v543
      %vm549 = vc.u32 %v524, %v543
      %v550 = vadd.s32 %v546, 1
      %v551 = vsel %vm549, %v550, %v546
      %v552 = vadd.s32 %v547, %v551
      %v553 = vadd.s32 %v552, 536870912
      %v554 = vshrl.u32 %v553, 30
      %v555 = vshll.u32 %v554, 30
      %v556 = vsub.s32 %v552, %v555
      %vm557 = vcmp.lt.s32.totalorder %v556, 0
      %v558 = vsub.s32 0, %v556
      %v559 = vsel %vm557, %v558, %v556
      %v560 = vclz %v559
      %v561 = vsub.s32 %v560, 2
      %vm562 = vcmp.gt.s32.totalorder 0, %v561
      %v563 = vsel %vm562, 0, %v561
      %v564 = vsub.s32 32, %v563
      %v565 = vshll.u32 %v556, %v563
      %v566 = vshrl.u32 %v548, %v564
      %v567 = vor.u32 %v565, %v566
      %v568 = vsub.s32 4294967266, %v563
      %v569 = vadd.s32 %v568, 127
      %v570 = vshll.u32 %v569, 23
      %v571 = vor.u32 4788187, %v570
      %v572 = vand.u32 2147483647, %v571
      %v574 = vcvt.s32.f32 %v567
      %v575 = vmul.f32 %v574, %v572
      %v576 = vxor.u32 %v575, 2147483648
      %v577 = vsel %vm456, %v576, %v575
      %v578 = vsub.s32 4, %v554
      %v579 = vsel %vm456, %v578, %v554
      %v580 = vsel %vm455, %v297, %v577
      %v581 = vsel %vm455, 0, %v579
      %v582 = vmul.f32 %v580, %v580
      %v583 = vmul.f32 %v582, -0.001358992
      %v584 = vadd.f32 %v583, 0.041655596
      %v585 = vmul.f32 %v582, %v584
      %v586 = vadd.f32 %v585, -0.4999988
      %v587 = vmul.f32 %v582, %v586
      %v588 = vadd.f32 1.0, %v587
      %v589 = vmul.f32 %v580, %v580
      %v590 = vmul.f32 %v589, -0.00019511016
      %v591 = vadd.f32 %v590, 0.008332121
      %v592 = vmul.f32 %v589, %v591
      %v593 = vadd.f32 %v592, -0.16666654
      %v594 = vmul.f32 %v589, %v593
      %v595 = vadd.f32 %v594, 1.0
      %v596 = vmul.f32 %v595, %v580
      %vm597 = vweird.f32 %v297
      %v598 = vand.u32 %v581, 3
      %vm599 = vcmp.lt.s32.totalorder %v598, 2
      %vm600 = vcmp.eq.s32.totalorder %v598, 0
      %v601 = vxor.u32 %v596, 2147483648
      %v602 = vsel %vm600, %v588, %v601
      %vm603 = vcmp.eq.s32.totalorder %v598, 2
      %v604 = vxor.u32 %v588, 2147483648
      %v605 = vsel %vm603, %v604, %v596
      %v606 = vsel %vm599, %v602, %v605
      %v607 = vsel %vm597, nan, %v606
      %v608 = vand.u32 2147483647, %v298
      %vm609 = vcmp.le.f32.partialorder %v608, 0.7853982
      %vm610 = vcmp.lt.s32.totalorder %v298, 0
      %v611 = vand.u32 %v298, 2139095040
      %v612 = vshrl.u32 %v611, 23
      %v613 = vsub.s32 %v612, 127
      %v614 = vand.u32 2147483647, %v298
      %v615 = vand.u32 %v614, 8388607
      %v616 = vor.u32 %v615, 8388608
      %v617 = vsub.s32 0, %v616
      %v618 = vadd.s32 %v613, 1
      %vm619 = vcmp.gt.s32.totalorder %v618, 0
      %v620 = vsel %vm619, %v618, 0
      %v621 = vshrl.u32 %v620, 5
      %v622 = vand.u32 %v620, 31
      %v623 = vsub.s32 32, %v622
      %v624 = vshrl.u32 683565275, %v623
      %v625 = vshll.u32 683565275, %v622
      %v626 = vshrl.u32 2475754826, %v623
      %v627 = vor.u32 %v625, %v626
      %v628 = vshll.u32 2475754826, %v622
      %v629 = vshrl.u32 2131351028, %v623
      %v630 = vor.u32 %v628, %v629
      %v631 = vshll.u32 2131351028, %v622
      %v632 = vshrl.u32 2102212464, %v623
      %v633 = vor.u32 %v631, %v632
      %v634 = vshll.u32 2102212464, %v622
      %v635 = vshrl.u32 920167782, %v623
      %v636 = vor.u32 %v634, %v635
      %v637 = vshll.u32 920167782, %v622
      %v638 = vshrl.u32 1326507024, %v623
      %v639 = vor.u32 %v637, %v638
      %vm640 = vcmp.lt.s32.totalorder %v621, 1
      %vm641 = vcmp.lt.s32.totalorder %v621, 2
      %vm642 = vcmp.lt.s32.totalorder %v621, 3
      %vm643 = vcmp.lt.s32.totalorder %v621, 4
      %v644 = vsel %vm640, %v624, %v627
      %v645 = vsel %vm643, %v633, 2102212464
      %v646 = vsel %vm642, %v630, %v645
      %v647 = vsel %vm641, %v644, %v646
      %v648 = vsel %vm640, %v627, %v630
      %v649 = vsel %vm643, %v636, 920167782
      %v650 = vsel %vm642, %v633, %v649
      %v651 = vsel %vm641, %v648, %v650
      %v652 = vsel %vm640, %v630, %v633
      %v653 = vsel %vm643, %v639, 1326507024
      %v654 = vsel %vm642, %v636, %v653
      %v655 = vsel %vm641, %v652, %v654
      %v656 = vshll.u32 %v616, 8
      %v657 = vand.u32 %v656, 65535
      %v658 = vshrl.u32 %v656, 16
      %v659 = vand.u32 %v655, 65535
      %v660 = vshrl.u32 %v655, 16
      %v661 = vmul.u32 %v657, %v659
      %v662 = vmul.u32 %v657, %v660
      %v663 = vmul.u32 %v658, %v659
      %v664 = vmul.u32 %v658, %v660
      %v665 = vshll.u32 %v662, 16
      %v666 = vshrl.u32 %v662, 16
      %v667 = vshll.u32 %v663, 16
      %v668 = vshrl.u32 %v663, 16
      %vm669 = vc.u32 %v661, %v665
      %v670 = vsel %vm669, 1, 0
      %v671 = vadd.s32 %v661, %v665
      %v672 = vadd.s32 %v664, %v670
      %vm673 = vc.u32 %v671, %v667
      %v674 = vsel %vm673, 1, 0
      %v675 = vadd.s32 %v671, %v667
      %v676 = vadd.s32 %v672, %v674
      %v677 = vadd.s32 %v676, %v666
      %v678 = vadd.s32 %v677, %v668
      %v679 = vand.u32 %v656, 65535
      %v680 = vshrl.u32 %v656, 16
      %v681 = vand.u32 %v651, 65535
      %v682 = vshrl.u32 %v651, 16
      %v683 = vmul.u32 %v679, %v681
      %v684 = vmul.u32 %v679, %v682
      %v685 = vmul.u32 %v680, %v681
      %v686 = vmul.u32 %v680, %v682
      %v687 = vshll.u32 %v684, 16
      %v688 = vshrl.u32 %v684, 16
      %v689 = vshll.u32 %v685, 16
      %v690 = vshrl.u32 %v685, 16
      %vm691 = vc.u32 %v683, %v687
      %v692 = vsel %vm691, 1, 0
      %v693 = vadd.s32 %v683, %v687
      %v694 = vadd.s32 %v686, %v692
      %vm695 = vc.u32 %v693, %v689
      %v696 = vsel %vm695, 1, 0
      %v697 = vadd.s32 %v693, %v689
      %v698 = vadd.s32 %v694, %v696
      %v699 = vadd.s32 %v698, %v688
      %v700 = vadd.s32 %v699, %v690
      %v701 = vmul.u32 %v656, %v647
      %v702 = vadd.s32 %v678, %v697
      %vm703 = vc.u32 %v678, %v697
      %v704 = vadd.s32 %v700, 1
      %v705 = vsel %vm703, %v704, %v700
      %v706 = vadd.s32 %v701, %v705
      %v707 = vadd.s32 %v706, 536870912
      %v708 = vshrl.u32 %v707, 30
      %v709 = vshll.u32 %v708, 30
      %v710 = vsub.s32 %v706, %v709
      %vm711 = vcmp.lt.s32.totalorder %v710, 0
      %v712 = vsub.s32 0, %v710
      %v713 = vsel %vm711, %v712, %v710
      %v714 = vclz %v713
      %v715 = vsub.s32 %v714, 2
      %vm716 = vcmp.gt.s32.totalorder 0, %v715
      %v717 = vsel %vm716, 0, %v715
      %v718 = vsub.s32 32, %v717
      %v719 = vshll.u32 %v710, %v717
      %v720 = vshrl.u32 %v702, %v718
      %v721 = vor.u32 %v719, %v720
      %v722 = vsub.s32 4294967266, %v717
      %v723 = vadd.s32 %v722, 127
      %v724 = vshll.u32 %v723, 23
      %v725 = vor.u32 4788187, %v724
      %v726 = vand.u32 2147483647, %v725
      %v728 = vcvt.s32.f32 %v721
      %v729 = vmul.f32 %v728, %v726
      %v730 = vxor.u32 %v729, 2147483648
      %v731 = vsel %vm610, %v730, %v729
      %v732 = vsub.s32 4, %v708
      %v733 = vsel %vm610, %v732, %v708
      %v734 = vsel %vm609, %v298, %v731
      %v735 = vsel %vm609, 0, %v733
      %v736 = vmul.f32 %v734, %v734
      %v737 = vmul.f32 %v736, -0.001358992
      %v738 = vadd.f32 %v737, 0.041655596
      %v739 = vmul.f32 %v736, %v738
      %v740 = vadd.f32 %v739, -0.4999988
      %v741 = vmul.f32 %v736, %v740
      %v742 = vadd.f32 1.0, %v741
      %v743 = vmul.f32 %v734, %v734
      %v744 = vmul.f32 %v743, -0.00019511016
      %v745 = vadd.f32 %v744, 0.008332121
      %v746 = vmul.f32 %v743, %v745
      %v747 = vadd.f32 %v746, -0.16666654
      %v748 = vmul.f32 %v743, %v747
      %v749 = vadd.f32 %v748, 1.0
      %v750 = vmul.f32 %v749, %v734
      %vm751 = vweird.f32 %v298
      %v752 = vand.u32 %v735, 3
      %vm753 = vcmp.lt.s32.totalorder %v752, 2
      %vm754 = vcmp.eq.s32.totalorder %v752, 0
      %v755 = vxor.u32 %v750, 2147483648
      %v756 = vsel %vm754, %v742, %v755
      %vm757 = vcmp.eq.s32.totalorder %v752, 2
      %v758 = vxor.u32 %v742, 2147483648
      %v759 = vsel %vm757, %v758, %v750
      %v760 = vsel %vm753, %v756, %v759
      %v761 = vsel %vm751, nan, %v760
      %v762 = vand.u32 2147483647, %v299
      %vm763 = vcmp.le.f32.partialorder %v762, 0.7853982
      %vm764 = vcmp.lt.s32.totalorder %v299, 0
      %v765 = vand.u32 %v299, 2139095040
      %v766 = vshrl.u32 %v765, 23
      %v767 = vsub.s32 %v766, 127
      %v768 = vand.u32 2147483647, %v299
      %v769 = vand.u32 %v768, 8388607
      %v770 = vor.u32 %v769, 8388608
      %v771 = vsub.s32 0, %v770
      %v772 = vadd.s32 %v767, 1
      %vm773 = vcmp.gt.s32.totalorder %v772, 0
      %v774 = vsel %vm773, %v772, 0
      %v775 = vshrl.u32 %v774, 5
      %v776 = vand.u32 %v774, 31
      %v777 = vsub.s32 32, %v776
      %v778 = vshrl.u32 683565275, %v777
      %v779 = vshll.u32 683565275, %v776
      %v780 = vshrl.u32 2475754826, %v777
      %v781 = vor.u32 %v779, %v780
      %v782 = vshll.u32 2475754826, %v776
      %v783 = vshrl.u32 2131351028, %v777
      %v784 = vor.u32 %v782, %v783
      %v785 = vshll.u32 2131351028, %v776
      %v786 = vshrl.u32 2102212464, %v777
      %v787 = vor.u32 %v785, %v786
      %v788 = vshll.u32 2102212464, %v776
      %v789 = vshrl.u32 920167782, %v777
      %v790 = vor.u32 %v788, %v789
      %v791 = vshll.u32 920167782, %v776
      %v792 = vshrl.u32 1326507024, %v777
      %v793 = vor.u32 %v791, %v792
      %vm794 = vcmp.lt.s32.totalorder %v775, 1
      %vm795 = vcmp.lt.s32.totalorder %v775, 2
      %vm796 = vcmp.lt.s32.totalorder %v775, 3
      %vm797 = vcmp.lt.s32.totalorder %v775, 4
      %v798 = vsel %vm794, %v778, %v781
      %v799 = vsel %vm797, %v787, 2102212464
      %v800 = vsel %vm796, %v784, %v799
      %v801 = vsel %vm795, %v798, %v800
      %v802 = vsel %vm794, %v781, %v784
      %v803 = vsel %vm797, %v790, 920167782
      %v804 = vsel %vm796, %v787, %v803
      %v805 = vsel %vm795, %v802, %v804
      %v806 = vsel %vm794, %v784, %v787
      %v807 = vsel %vm797, %v793, 1326507024
      %v808 = vsel %vm796, %v790, %v807
      %v809 = vsel %vm795, %v806, %v808
      %v810 = vshll.u32 %v770, 8
      %v811 = vand.u32 %v810, 65535
      %v812 = vshrl.u32 %v810, 16
      %v813 = vand.u32 %v809, 65535
      %v814 = vshrl.u32 %v809, 16
      %v815 = vmul.u32 %v811, %v813
      %v816 = vmul.u32 %v811, %v814
      %v817 = vmul.u32 %v812, %v813
      %v818 = vmul.u32 %v812, %v814
      %v819 = vshll.u32 %v816, 16
      %v820 = vshrl.u32 %v816, 16
      %v821 = vshll.u32 %v817, 16
      %v822 = vshrl.u32 %v817, 16
      %vm823 = vc.u32 %v815, %v819
      %v824 = vsel %vm823, 1, 0
      %v825 = vadd.s32 %v815, %v819
      %v826 = vadd.s32 %v818, %v824
      %vm827 = vc.u32 %v825, %v821
      %v828 = vsel %vm827, 1, 0
      %v829 = vadd.s32 %v825, %v821
      %v830 = vadd.s32 %v826, %v828
      %v831 = vadd.s32 %v830, %v820
      %v832 = vadd.s32 %v831, %v822
      %v833 = vand.u32 %v810, 65535
      %v834 = vshrl.u32 %v810, 16
      %v835 = vand.u32 %v805, 65535
      %v836 = vshrl.u32 %v805, 16
      %v837 = vmul.u32 %v833, %v835
      %v838 = vmul.u32 %v833, %v836
      %v839 = vmul.u32 %v834, %v835
      %v840 = vmul.u32 %v834, %v836
      %v841 = vshll.u32 %v838, 16
      %v842 = vshrl.u32 %v838, 16
      %v843 = vshll.u32 %v839, 16
      %v844 = vshrl.u32 %v839, 16
      %vm845 = vc.u32 %v837, %v841
      %v846 = vsel %vm845, 1, 0
      %v847 = vadd.s32 %v837, %v841
      %v848 = vadd.s32 %v840, %v846
      %vm849 = vc.u32 %v847, %v843
      %v850 = vsel %vm849, 1, 0
      %v851 = vadd.s32 %v847, %v843
      %v852 = vadd.s32 %v848, %v850
      %v853 = vadd.s32 %v852, %v842
      %v854 = vadd.s32 %v853, %v844
      %v855 = vmul.u32 %v810, %v801
      %v856 = vadd.s32 %v832, %v851
      %vm857 = vc.u32 %v832, %v851
      %v858 = vadd.s32 %v854, 1
      %v859 = vsel %vm857, %v858, %v854
      %v860 = vadd.s32 %v855, %v859
      %v861 = vadd.s32 %v860, 536870912
      %v862 = vshrl.u32 %v861, 30
      %v863 = vshll.u32 %v862, 30
      %v864 = vsub.s32 %v860, %v863
      %vm865 = vcmp.lt.s32.totalorder %v864, 0
      %v866 = vsub.s32 0, %v864
      %v867 = vsel %vm865, %v866, %v864
      %v868 = vclz %v867
      %v869 = vsub.s32 %v868, 2
      %vm870 = vcmp.gt.s32.totalorder 0, %v869
      %v871 = vsel %vm870, 0, %v869
      %v872 = vsub.s32 32, %v871
      %v873 = vshll.u32 %v864, %v871
      %v874 = vshrl.u32 %v856, %v872
      %v875 = vor.u32 %v873, %v874
      %v876 = vsub.s32 4294967266, %v871
      %v877 = vadd.s32 %v876, 127
      %v878 = vshll.u32 %v877, 23
      %v879 = vor.u32 4788187, %v878
      %v880 = vand.u32 2147483647, %v879
      %v882 = vcvt.s32.f32 %v875
      %v883 = vmul.f32 %v882, %v880
      %v884 = vxor.u32 %v883, 2147483648
      %v885 = vsel %vm764, %v884, %v883
      %v886 = vsub.s32 4, %v862
      %v887 = vsel %vm764, %v886, %v862
      %v888 = vsel %vm763, %v299, %v885
      %v889 = vsel %vm763, 0, %v887
      %v890 = vmul.f32 %v888, %v888
      %v891 = vmul.f32 %v890, -0.001358992
      %v892 = vadd.f32 %v891, 0.041655596
      %v893 = vmul.f32 %v890, %v892
      %v894 = vadd.f32 %v893, -0.4999988
      %v895 = vmul.f32 %v890, %v894
      %v896 = vadd.f32 1.0, %v895
      %v897 = vmul.f32 %v888, %v888
      %v898 = vmul.f32 %v897, -0.00019511016
      %v899 = vadd.f32 %v898, 0.008332121
      %v900 = vmul.f32 %v897, %v899
      %v901 = vadd.f32 %v900, -0.16666654
      %v902 = vmul.f32 %v897, %v901
      %v903 = vadd.f32 %v902, 1.0
      %v904 = vmul.f32 %v903, %v888
      %vm905 = vweird.f32 %v299
      %v906 = vand.u32 %v889, 3
      %vm907 = vcmp.lt.s32.totalorder %v906, 2
      %vm908 = vcmp.eq.s32.totalorder %v906, 0
      %v909 = vxor.u32 %v904, 2147483648
      %v910 = vsel %vm908, %v896, %v909
      %vm911 = vcmp.eq.s32.totalorder %v906, 2
      %v912 = vxor.u32 %v896, 2147483648
      %v913 = vsel %vm911, %v912, %v904
      %v914 = vsel %vm907, %v910, %v913
      %v915 = vsel %vm905, nan, %v914
      %v916 = vmul.f32 %v289, %v453
      %v917 = vmul.f32 %v291, %v607
      %v918 = vmul.f32 %v293, %v761
      %v919 = vmul.f32 %v295, %v915
      %v920 = vand.u32 2147483647, %v296
      %vm921 = vcmp.le.f32.partialorder %v920, 0.7853982
      %vm922 = vcmp.lt.s32.totalorder %v296, 0
      %v923 = vand.u32 %v296, 2139095040
      %v924 = vshrl.u32 %v923, 23
      %v925 = vsub.s32 %v924, 127
      %v926 = vand.u32 2147483647, %v296
      %v927 = vand.u32 %v926, 8388607
      %v928 = vor.u32 %v927, 8388608
      %v929 = vsub.s32 0, %v928
      %v930 = vadd.s32 %v925, 1
      %vm931 = vcmp.gt.s32.totalorder %v930, 0
      %v932 = vsel %vm931, %v930, 0
      %v933 = vshrl.u32 %v932, 5
      %v934 = vand.u32 %v932, 31
      %v935 = vsub.s32 32, %v934
      %v936 = vshrl.u32 683565275, %v935
      %v937 = vshll.u32 683565275, %v934
      %v938 = vshrl.u32 2475754826, %v935
      %v939 = vor.u32 %v937, %v938
      %v940 = vshll.u32 2475754826, %v934
      %v941 = vshrl.u32 2131351028, %v935
      %v942 = vor.u32 %v940, %v941
      %v943 = vshll.u32 2131351028, %v934
      %v944 = vshrl.u32 2102212464, %v935
      %v945 = vor.u32 %v943, %v944
      %v946 = vshll.u32 2102212464, %v934
      %v947 = vshrl.u32 920167782, %v935
      %v948 = vor.u32 %v946, %v947
      %v949 = vshll.u32 920167782, %v934
      %v950 = vshrl.u32 1326507024, %v935
      %v951 = vor.u32 %v949, %v950
      %vm952 = vcmp.lt.s32.totalorder %v933, 1
      %vm953 = vcmp.lt.s32.totalorder %v933, 2
      %vm954 = vcmp.lt.s32.totalorder %v933, 3
      %vm955 = vcmp.lt.s32.totalorder %v933, 4
      %v956 = vsel %vm952, %v936, %v939
      %v957 = vsel %vm955, %v945, 2102212464
      %v958 = vsel %vm954, %v942, %v957
      %v959 = vsel %vm953, %v956, %v958
      %v960 = vsel %vm952, %v939, %v942
      %v961 = vsel %vm955, %v948, 920167782
      %v962 = vsel %vm954, %v945, %v961
      %v963 = vsel %vm953, %v960, %v962
      %v964 = vsel %vm952, %v942, %v945
      %v965 = vsel %vm955, %v951, 1326507024
      %v966 = vsel %vm954, %v948, %v965
      %v967 = vsel %vm953, %v964, %v966
      %v968 = vshll.u32 %v928, 8
      %v969 = vand.u32 %v968, 65535
      %v970 = vshrl.u32 %v968, 16
      %v971 = vand.u32 %v967, 65535
      %v972 = vshrl.u32 %v967, 16
      %v973 = vmul.u32 %v969, %v971
      %v974 = vmul.u32 %v969, %v972
      %v975 = vmul.u32 %v970, %v971
      %v976 = vmul.u32 %v970, %v972
      %v977 = vshll.u32 %v974, 16
      %v978 = vshrl.u32 %v974, 16
      %v979 = vshll.u32 %v975, 16
      %v980 = vshrl.u32 %v975, 16
      %vm981 = vc.u32 %v973, %v977
      %v982 = vsel %vm981, 1, 0
      %v983 = vadd.s32 %v973, %v977
      %v984 = vadd.s32 %v976, %v982
      %vm985 = vc.u32 %v983, %v979
      %v986 = vsel %vm985, 1, 0
      %v987 = vadd.s32 %v983, %v979
      %v988 = vadd.s32 %v984, %v986
      %v989 = vadd.s32 %v988, %v978
      %v990 = vadd.s32 %v989, %v980
      %v991 = vand.u32 %v968, 65535
      %v992 = vshrl.u32 %v968, 16
      %v993 = vand.u32 %v963, 65535
      %v994 = vshrl.u32 %v963, 16
      %v995 = vmul.u32 %v991, %v993
      %v996 = vmul.u32 %v991, %v994
      %v997 = vmul.u32 %v992, %v993
      %v998 = vmul.u32 %v992, %v994
      %v999 = vshll.u32 %v996, 16
      %v1000 = vshrl.u32 %v996, 16
      %v1001 = vshll.u32 %v997, 16
      %v1002 = vshrl.u32 %v997, 16
      %vm1003 = vc.u32 %v995, %v999
      %v1004 = vsel %vm1003, 1, 0
      %v1005 = vadd.s32 %v995, %v999
      %v1006 = vadd.s32 %v998, %v1004
      %vm1007 = vc.u32 %v1005, %v1001
      %v1008 = vsel %vm1007, 1, 0
      %v1009 = vadd.s32 %v1005, %v1001
      %v1010 = vadd.s32 %v1006, %v1008
      %v1011 = vadd.s32 %v1010, %v1000
      %v1012 = vadd.s32 %v1011, %v1002
      %v1013 = vmul.u32 %v968, %v959
      %v1014 = vadd.s32 %v990, %v1009
      %vm1015 = vc.u32 %v990, %v1009
      %v1016 = vadd.s32 %v1012, 1
      %v1017 = vsel %vm1015, %v1016, %v1012
      %v1018 = vadd.s32 %v1013, %v1017
      %v1019 = vadd.s32 %v1018, 536870912
      %v1020 = vshrl.u32 %v1019, 30
      %v1021 = vshll.u32 %v1020, 30
      %v1022 = vsub.s32 %v1018, %v1021
      %vm1023 = vcmp.lt.s32.totalorder %v1022, 0
      %v1024 = vsub.s32 0, %v1022
      %v1025 = vsel %vm1023, %v1024, %v1022
      %v1026 = vclz %v1025
      %v1027 = vsub.s32 %v1026, 2
      %vm1028 = vcmp.gt.s32.totalorder 0, %v1027
      %v1029 = vsel %vm1028, 0, %v1027
      %v1030 = vsub.s32 32, %v1029
      %v1031 = vshll.u32 %v1022, %v1029
      %v1032 = vshrl.u32 %v1014, %v1030
      %v1033 = vor.u32 %v1031, %v1032
      %v1034 = vsub.s32 4294967266, %v1029
      %v1035 = vadd.s32 %v1034, 127
      %v1036 = vshll.u32 %v1035, 23
      %v1037 = vor.u32 4788187, %v1036
      %v1038 = vand.u32 2147483647, %v1037
      %v1040 = vcvt.s32.f32 %v1033
      %v1041 = vmul.f32 %v1040, %v1038
      %v1042 = vxor.u32 %v1041, 2147483648
      %v1043 = vsel %vm922, %v1042, %v1041
      %v1044 = vsub.s32 4, %v1020
      %v1045 = vsel %vm922, %v1044, %v1020
      %v1046 = vsel %vm921, %v296, %v1043
      %v1047 = vsel %vm921, 0, %v1045
      %v1048 = vmul.f32 %v1046, %v1046
      %v1049 = vmul.f32 %v1048, -0.001358992
      %v1050 = vadd.f32 %v1049, 0.041655596
      %v1051 = vmul.f32 %v1048, %v1050
      %v1052 = vadd.f32 %v1051, -0.4999988
      %v1053 = vmul.f32 %v1048, %v1052
      %v1054 = vadd.f32 1.0, %v1053
      %v1055 = vmul.f32 %v1046, %v1046
      %v1056 = vmul.f32 %v1055, -0.00019511016
      %v1057 = vadd.f32 %v1056, 0.008332121
      %v1058 = vmul.f32 %v1055, %v1057
      %v1059 = vadd.f32 %v1058, -0.16666654
      %v1060 = vmul.f32 %v1055, %v1059
      %v1061 = vadd.f32 %v1060, 1.0
      %v1062 = vmul.f32 %v1061, %v1046
      %vm1063 = vweird.f32 %v296
      %v1064 = vadd.s32 %v1047, 3
      %v1065 = vand.u32 %v1064, 3
      %vm1066 = vcmp.lt.s32.totalorder %v1065, 2
      %vm1067 = vcmp.eq.s32.totalorder %v1065, 0
      %v1068 = vxor.u32 %v1062, 2147483648
      %v1069 = vsel %vm1067, %v1054, %v1068
      %vm1070 = vcmp.eq.s32.totalorder %v1065, 2
      %v1071 = vxor.u32 %v1054, 2147483648
      %v1072 = vsel %vm1070, %v1071, %v1062
      %v1073 = vsel %vm1066, %v1069, %v1072
      %v1074 = vsel %vm1063, nan, %v1073
      %v1075 = vand.u32 2147483647, %v297
      %vm1076 = vcmp.le.f32.partialorder %v1075, 0.7853982
      %vm1077 = vcmp.lt.s32.totalorder %v297, 0
      %v1078 = vand.u32 %v297, 2139095040
      %v1079 = vshrl.u32 %v1078, 23
      %v1080 = vsub.s32 %v1079, 127
      %v1081 = vand.u32 2147483647, %v297
      %v1082 = vand.u32 %v1081, 8388607
      %v1083 = vor.u32 %v1082, 8388608
      %v1084 = vsub.s32 0, %v1083
      %v1085 = vadd.s32 %v1080, 1
      %vm1086 = vcmp.gt.s32.totalorder %v1085, 0
      %v1087 = vsel %vm1086, %v1085, 0
      %v1088 = vshrl.u32 %v1087, 5
      %v1089 = vand.u32 %v1087, 31
      %v1090 = vsub.s32 32, %v1089
      %v1091 = vshrl.u32 683565275, %v1090
      %v1092 = vshll.u32 683565275, %v1089
      %v1093 = vshrl.u32 2475754826, %v1090
      %v1094 = vor.u32 %v1092, %v1093
      %v1095 = vshll.u32 2475754826, %v1089
      %v1096 = vshrl.u32 2131351028, %v1090
      %v1097 = vor.u32 %v1095, %v1096
      %v1098 = vshll.u32 2131351028, %v1089
      %v1099 = vshrl.u32 2102212464, %v1090
      %v1100 = vor.u32 %v1098, %v1099
      %v1101 = vshll.u32 2102212464, %v1089
      %v1102 = vshrl.u32 920167782, %v1090
      %v1103 = vor.u32 %v1101, %v1102
      %v1104 = vshll.u32 920167782, %v1089
      %v1105 = vshrl.u32 1326507024, %v1090
      %v1106 = vor.u32 %v1104, %v1105
      %vm1107 = vcmp.lt.s32.totalorder %v1088, 1
      %vm1108 = vcmp.lt.s32.totalorder %v1088, 2
      %vm1109 = vcmp.lt.s32.totalorder %v1088, 3
      %vm1110 = vcmp.lt.s32.totalorder %v1088, 4
      %v1111 = vsel %vm1107, %v1091, %v1094
      %v1112 = vsel %vm1110, %v1100, 2102212464
      %v1113 = vsel %vm1109, %v1097, %v1112
      %v1114 = vsel %vm1108, %v1111, %v1113
      %v1115 = vsel %vm1107, %v1094, %v1097
      %v1116 = vsel %vm1110, %v1103, 920167782
      %v1117 = vsel %vm1109, %v1100, %v1116
      %v1118 = vsel %vm1108, %v1115, %v1117
      %v1119 = vsel %vm1107, %v1097, %v1100
      %v1120 = vsel %vm1110, %v1106, 1326507024
      %v1121 = vsel %vm1109, %v1103, %v1120
      %v1122 = vsel %vm1108, %v1119, %v1121
      %v1123 = vshll.u32 %v1083, 8
      %v1124 = vand.u32 %v1123, 65535
      %v1125 = vshrl.u32 %v1123, 16
      %v1126 = vand.u32 %v1122, 65535
      %v1127 = vshrl.u32 %v1122, 16
      %v1128 = vmul.u32 %v1124, %v1126
      %v1129 = vmul.u32 %v1124, %v1127
      %v1130 = vmul.u32 %v1125, %v1126
      %v1131 = vmul.u32 %v1125, %v1127
      %v1132 = vshll.u32 %v1129, 16
      %v1133 = vshrl.u32 %v1129, 16
      %v1134 = vshll.u32 %v1130, 16
      %v1135 = vshrl.u32 %v1130, 16
      %vm1136 = vc.u32 %v1128, %v1132
      %v1137 = vsel %vm1136, 1, 0
      %v1138 = vadd.s32 %v1128, %v1132
      %v1139 = vadd.s32 %v1131, %v1137
      %vm1140 = vc.u32 %v1138, %v1134
      %v1141 = vsel %vm1140, 1, 0
      %v1142 = vadd.s32 %v1138, %v1134
      %v1143 = vadd.s32 %v1139, %v1141
      %v1144 = vadd.s32 %v1143, %v1133
      %v1145 = vadd.s32 %v1144, %v1135
      %v1146 = vand.u32 %v1123, 65535
      %v1147 = vshrl.u32 %v1123, 16
      %v1148 = vand.u32 %v1118, 65535
      %v1149 = vshrl.u32 %v1118, 16
      %v1150 = vmul.u32 %v1146, %v1148
      %v1151 = vmul.u32 %v1146, %v1149
      %v1152 = vmul.u32 %v1147, %v1148
      %v1153 = vmul.u32 %v1147, %v1149
      %v1154 = vshll.u32 %v1151, 16
      %v1155 = vshrl.u32 %v1151, 16
      %v1156 = vshll.u32 %v1152, 16
      %v1157 = vshrl.u32 %v1152, 16
      %vm1158 = vc.u32 %v1150, %v1154
      %v1159 = vsel %vm1158, 1, 0
      %v1160 = vadd.s32 %v1150, %v1154
      %v1161 = vadd.s32 %v1153, %v1159
      %vm1162 = vc.u32 %v1160, %v1156
      %v1163 = vsel %vm1162, 1, 0
      %v1164 = vadd.s32 %v1160, %v1156
      %v1165 = vadd.s32 %v1161, %v1163
      %v1166 = vadd.s32 %v1165, %v1155
      %v1167 = vadd.s32 %v1166, %v1157
      %v1168 = vmul.u32 %v1123, %v1114
      %v1169 = vadd.s32 %v1145, %v1164
      %vm1170 = vc.u32 %v1145, %v1164
      %v1171 = vadd.s32 %v1167, 1
      %v1172 = vsel %vm1170, %v1171, %v1167
      %v1173 = vadd.s32 %v1168, %v1172
      %v1174 = vadd.s32 %v1173, 536870912
      %v1175 = vshrl.u32 %v1174, 30
      %v1176 = vshll.u32 %v1175, 30
      %v1177 = vsub.s32 %v1173, %v1176
      %vm1178 = vcmp.lt.s32.totalorder %v1177, 0
      %v1179 = vsub.s32 0, %v1177
      %v1180 = vsel %vm1178, %v1179, %v1177
      %v1181 = vclz %v1180
      %v1182 = vsub.s32 %v1181, 2
      %vm1183 = vcmp.gt.s32.totalorder 0, %v1182
      %v1184 = vsel %vm1183, 0, %v1182
      %v1185 = vsub.s32 32, %v1184
      %v1186 = vshll.u32 %v1177, %v1184
      %v1187 = vshrl.u32 %v1169, %v1185
      %v1188 = vor.u32 %v1186, %v1187
      %v1189 = vsub.s32 4294967266, %v1184
      %v1190 = vadd.s32 %v1189, 127
      %v1191 = vshll.u32 %v1190, 23
      %v1192 = vor.u32 4788187, %v1191
      %v1193 = vand.u32 2147483647, %v1192
      %v1195 = vcvt.s32.f32 %v1188
      %v1196 = vmul.f32 %v1195, %v1193
      %v1197 = vxor.u32 %v1196, 2147483648
      %v1198 = vsel %vm1077, %v1197, %v1196
      %v1199 = vsub.s32 4, %v1175
      %v1200 = vsel %vm1077, %v1199, %v1175
      %v1201 = vsel %vm1076, %v297, %v1198
      %v1202 = vsel %vm1076, 0, %v1200
      %v1203 = vmul.f32 %v1201, %v1201
      %v1204 = vmul.f32 %v1203, -0.001358992
      %v1205 = vadd.f32 %v1204, 0.041655596
      %v1206 = vmul.f32 %v1203, %v1205
      %v1207 = vadd.f32 %v1206, -0.4999988
      %v1208 = vmul.f32 %v1203, %v1207
      %v1209 = vadd.f32 1.0, %v1208
      %v1210 = vmul.f32 %v1201, %v1201
      %v1211 = vmul.f32 %v1210, -0.00019511016
      %v1212 = vadd.f32 %v1211, 0.008332121
      %v1213 = vmul.f32 %v1210, %v1212
      %v1214 = vadd.f32 %v1213, -0.16666654
      %v1215 = vmul.f32 %v1210, %v1214
      %v1216 = vadd.f32 %v1215, 1.0
      %v1217 = vmul.f32 %v1216, %v1201
      %vm1218 = vweird.f32 %v297
      %v1219 = vadd.s32 %v1202, 3
      %v1220 = vand.u32 %v1219, 3
      %vm1221 = vcmp.lt.s32.totalorder %v1220, 2
      %vm1222 = vcmp.eq.s32.totalorder %v1220, 0
      %v1223 = vxor.u32 %v1217, 2147483648
      %v1224 = vsel %vm1222, %v1209, %v1223
      %vm1225 = vcmp.eq.s32.totalorder %v1220, 2
      %v1226 = vxor.u32 %v1209, 2147483648
      %v1227 = vsel %vm1225, %v1226, %v1217
      %v1228 = vsel %vm1221, %v1224, %v1227
      %v1229 = vsel %vm1218, nan, %v1228
      %v1230 = vand.u32 2147483647, %v298
      %vm1231 = vcmp.le.f32.partialorder %v1230, 0.7853982
      %vm1232 = vcmp.lt.s32.totalorder %v298, 0
      %v1233 = vand.u32 %v298, 2139095040
      %v1234 = vshrl.u32 %v1233, 23
      %v1235 = vsub.s32 %v1234, 127
      %v1236 = vand.u32 2147483647, %v298
      %v1237 = vand.u32 %v1236, 8388607
      %v1238 = vor.u32 %v1237, 8388608
      %v1239 = vsub.s32 0, %v1238
      %v1240 = vadd.s32 %v1235, 1
      %vm1241 = vcmp.gt.s32.totalorder %v1240, 0
      %v1242 = vsel %vm1241, %v1240, 0
      %v1243 = vshrl.u32 %v1242, 5
      %v1244 = vand.u32 %v1242, 31
      %v1245 = vsub.s32 32, %v1244
      %v1246 = vshrl.u32 683565275, %v1245
      %v1247 = vshll.u32 683565275, %v1244
      %v1248 = vshrl.u32 2475754826, %v1245
      %v1249 = vor.u32 %v1247, %v1248
      %v1250 = vshll.u32 2475754826, %v1244
      %v1251 = vshrl.u32 2131351028, %v1245
      %v1252 = vor.u32 %v1250, %v1251
      %v1253 = vshll.u32 2131351028, %v1244
      %v1254 = vshrl.u32 2102212464, %v1245
      %v1255 = vor.u32 %v1253, %v1254
      %v1256 = vshll.u32 2102212464, %v1244
      %v1257 = vshrl.u32 920167782, %v1245
      %v1258 = vor.u32 %v1256, %v1257
      %v1259 = vshll.u32 920167782, %v1244
      %v1260 = vshrl.u32 1326507024, %v1245
      %v1261 = vor.u32 %v1259, %v1260
      %vm1262 = vcmp.lt.s32.totalorder %v1243, 1
      %vm1263 = vcmp.lt.s32.totalorder %v1243, 2
      %vm1264 = vcmp.lt.s32.totalorder %v1243, 3
      %vm1265 = vcmp.lt.s32.totalorder %v1243, 4
      %v1266 = vsel %vm1262, %v1246, %v1249
      %v1267 = vsel %vm1265, %v1255, 2102212464
      %v1268 = vsel %vm1264, %v1252, %v1267
      %v1269 = vsel %vm1263, %v1266, %v1268
      %v1270 = vsel %vm1262, %v1249, %v1252
      %v1271 = vsel %vm1265, %v1258, 920167782
      %v1272 = vsel %vm1264, %v1255, %v1271
      %v1273 = vsel %vm1263, %v1270, %v1272
      %v1274 = vsel %vm1262, %v1252, %v1255
      %v1275 = vsel %vm1265, %v1261, 1326507024
      %v1276 = vsel %vm1264, %v1258, %v1275
      %v1277 = vsel %vm1263, %v1274, %v1276
      %v1278 = vshll.u32 %v1238, 8
      %v1279 = vand.u32 %v1278, 65535
      %v1280 = vshrl.u32 %v1278, 16
      %v1281 = vand.u32 %v1277, 65535
      %v1282 = vshrl.u32 %v1277, 16
      %v1283 = vmul.u32 %v1279, %v1281
      %v1284 = vmul.u32 %v1279, %v1282
      %v1285 = vmul.u32 %v1280, %v1281
      %v1286 = vmul.u32 %v1280, %v1282
      %v1287 = vshll.u32 %v1284, 16
      %v1288 = vshrl.u32 %v1284, 16
      %v1289 = vshll.u32 %v1285, 16
      %v1290 = vshrl.u32 %v1285, 16
      %vm1291 = vc.u32 %v1283, %v1287
      %v1292 = vsel %vm1291, 1, 0
      %v1293 = vadd.s32 %v1283, %v1287
      %v1294 = vadd.s32 %v1286, %v1292
      %vm1295 = vc.u32 %v1293, %v1289
      %v1296 = vsel %vm1295, 1, 0
      %v1297 = vadd.s32 %v1293, %v1289
      %v1298 = vadd.s32 %v1294, %v1296
      %v1299 = vadd.s32 %v1298, %v1288
      %v1300 = vadd.s32 %v1299, %v1290
      %v1301 = vand.u32 %v1278, 65535
      %v1302 = vshrl.u32 %v1278, 16
      %v1303 = vand.u32 %v1273, 65535
      %v1304 = vshrl.u32 %v1273, 16
      %v1305 = vmul.u32 %v1301, %v1303
      %v1306 = vmul.u32 %v1301, %v1304
      %v1307 = vmul.u32 %v1302, %v1303
      %v1308 = vmul.u32 %v1302, %v1304
      %v1309 = vshll.u32 %v1306, 16
      %v1310 = vshrl.u32 %v1306, 16
      %v1311 = vshll.u32 %v1307, 16
      %v1312 = vshrl.u32 %v1307, 16
      %vm1313 = vc.u32 %v1305, %v1309
      %v1314 = vsel %vm1313, 1, 0
      %v1315 = vadd.s32 %v1305, %v1309
      %v1316 = vadd.s32 %v1308, %v1314
      %vm1317 = vc.u32 %v1315, %v1311
      %v1318 = vsel %vm1317, 1, 0
      %v1319 = vadd.s32 %v1315, %v1311
      %v1320 = vadd.s32 %v1316, %v1318
      %v1321 = vadd.s32 %v1320, %v1310
      %v1322 = vadd.s32 %v1321, %v1312
      %v1323 = vmul.u32 %v1278, %v1269
      %v1324 = vadd.s32 %v1300, %v1319
      %vm1325 = vc.u32 %v1300, %v1319
      %v1326 = vadd.s32 %v1322, 1
      %v1327 = vsel %vm1325, %v1326, %v1322
      %v1328 = vadd.s32 %v1323, %v1327
      %v1329 = vadd.s32 %v1328, 536870912
      %v1330 = vshrl.u32 %v1329, 30
      %v1331 = vshll.u32 %v1330, 30
      %v1332 = vsub.s32 %v1328, %v1331
      %vm1333 = vcmp.lt.s32.totalorder %v1332, 0
      %v1334 = vsub.s32 0, %v1332
      %v1335 = vsel %vm1333, %v1334, %v1332
      %v1336 = vclz %v1335
      %v1337 = vsub.s32 %v1336, 2
      %vm1338 = vcmp.gt.s32.totalorder 0, %v1337
      %v1339 = vsel %vm1338, 0, %v1337
      %v1340 = vsub.s32 32, %v1339
      %v1341 = vshll.u32 %v1332, %v1339
      %v1342 = vshrl.u32 %v1324, %v1340
      %v1343 = vor.u32 %v1341, %v1342
      %v1344 = vsub.s32 4294967266, %v1339
      %v1345 = vadd.s32 %v1344, 127
      %v1346 = vshll.u32 %v1345, 23
      %v1347 = vor.u32 4788187, %v1346
      %v1348 = vand.u32 2147483647, %v1347
      %v1350 = vcvt.s32.f32 %v1343
      %v1351 = vmul.f32 %v1350, %v1348
      %v1352 = vxor.u32 %v1351, 2147483648
      %v1353 = vsel %vm1232, %v1352, %v1351
      %v1354 = vsub.s32 4, %v1330
      %v1355 = vsel %vm1232, %v1354, %v1330
      %v1356 = vsel %vm1231, %v298, %v1353
      %v1357 = vsel %vm1231, 0, %v1355
      %v1358 = vmul.f32 %v1356, %v1356
      %v1359 = vmul.f32 %v1358, -0.001358992
      %v1360 = vadd.f32 %v1359, 0.041655596
      %v1361 = vmul.f32 %v1358, %v1360
      %v1362 = vadd.f32 %v1361, -0.4999988
      %v1363 = vmul.f32 %v1358, %v1362
      %v1364 = vadd.f32 1.0, %v1363
      %v1365 = vmul.f32 %v1356, %v1356
      %v1366 = vmul.f32 %v1365, -0.00019511016
      %v1367 = vadd.f32 %v1366, 0.008332121
      %v1368 = vmul.f32 %v1365, %v1367
      %v1369 = vadd.f32 %v1368, -0.16666654
      %v1370 = vmul.f32 %v1365, %v1369
      %v1371 = vadd.f32 %v1370, 1.0
      %v1372 = vmul.f32 %v1371, %v1356
      %vm1373 = vweird.f32 %v298
      %v1374 = vadd.s32 %v1357, 3
      %v1375 = vand.u32 %v1374, 3
      %vm1376 = vcmp.lt.s32.totalorder %v1375, 2
      %vm1377 = vcmp.eq.s32.totalorder %v1375, 0
      %v1378 = vxor.u32 %v1372, 2147483648
      %v1379 = vsel %vm1377, %v1364, %v1378
      %vm1380 = vcmp.eq.s32.totalorder %v1375, 2
      %v1381 = vxor.u32 %v1364, 2147483648
      %v1382 = vsel %vm1380, %v1381, %v1372
      %v1383 = vsel %vm1376, %v1379, %v1382
      %v1384 = vsel %vm1373, nan, %v1383
      %v1385 = vand.u32 2147483647, %v299
      %vm1386 = vcmp.le.f32.partialorder %v1385, 0.7853982
      %vm1387 = vcmp.lt.s32.totalorder %v299, 0
      %v1388 = vand.u32 %v299, 2139095040
      %v1389 = vshrl.u32 %v1388, 23
      %v1390 = vsub.s32 %v1389, 127
      %v1391 = vand.u32 2147483647, %v299
      %v1392 = vand.u32 %v1391, 8388607
      %v1393 = vor.u32 %v1392, 8388608
      %v1394 = vsub.s32 0, %v1393
      %v1395 = vadd.s32 %v1390, 1
      %vm1396 = vcmp.gt.s32.totalorder %v1395, 0
      %v1397 = vsel %vm1396, %v1395, 0
      %v1398 = vshrl.u32 %v1397, 5
      %v1399 = vand.u32 %v1397, 31
      %v1400 = vsub.s32 32, %v1399
      %v1401 = vshrl.u32 683565275, %v1400
      %v1402 = vshll.u32 683565275, %v1399
      %v1403 = vshrl.u32 2475754826, %v1400
      %v1404 = vor.u32 %v1402, %v1403
      %v1405 = vshll.u32 2475754826, %v1399
      %v1406 = vshrl.u32 2131351028, %v1400
      %v1407 = vor.u32 %v1405, %v1406
      %v1408 = vshll.u32 2131351028, %v1399
      %v1409 = vshrl.u32 2102212464, %v1400
      %v1410 = vor.u32 %v1408, %v1409
      %v1411 = vshll.u32 2102212464, %v1399
      %v1412 = vshrl.u32 920167782, %v1400
      %v1413 = vor.u32 %v1411, %v1412
      %v1414 = vshll.u32 920167782, %v1399
      %v1415 = vshrl.u32 1326507024, %v1400
      %v1416 = vor.u32 %v1414, %v1415
      %vm1417 = vcmp.lt.s32.totalorder %v1398, 1
      %vm1418 = vcmp.lt.s32.totalorder %v1398, 2
      %vm1419 = vcmp.lt.s32.totalorder %v1398, 3
      %vm1420 = vcmp.lt.s32.totalorder %v1398, 4
      %v1421 = vsel %vm1417, %v1401, %v1404
      %v1422 = vsel %vm1420, %v1410, 2102212464
      %v1423 = vsel %vm1419, %v1407, %v1422
      %v1424 = vsel %vm1418, %v1421, %v1423
      %v1425 = vsel %vm1417, %v1404, %v1407
      %v1426 = vsel %vm1420, %v1413, 920167782
      %v1427 = vsel %vm1419, %v1410, %v1426
      %v1428 = vsel %vm1418, %v1425, %v1427
      %v1429 = vsel %vm1417, %v1407, %v1410
      %v1430 = vsel %vm1420, %v1416, 1326507024
      %v1431 = vsel %vm1419, %v1413, %v1430
      %v1432 = vsel %vm1418, %v1429, %v1431
      %v1433 = vshll.u32 %v1393, 8
      %v1434 = vand.u32 %v1433, 65535
      %v1435 = vshrl.u32 %v1433, 16
      %v1436 = vand.u32 %v1432, 65535
      %v1437 = vshrl.u32 %v1432, 16
      %v1438 = vmul.u32 %v1434, %v1436
      %v1439 = vmul.u32 %v1434, %v1437
      %v1440 = vmul.u32 %v1435, %v1436
      %v1441 = vmul.u32 %v1435, %v1437
      %v1442 = vshll.u32 %v1439, 16
      %v1443 = vshrl.u32 %v1439, 16
      %v1444 = vshll.u32 %v1440, 16
      %v1445 = vshrl.u32 %v1440, 16
      %vm1446 = vc.u32 %v1438, %v1442
      %v1447 = vsel %vm1446, 1, 0
      %v1448 = vadd.s32 %v1438, %v1442
      %v1449 = vadd.s32 %v1441, %v1447
      %vm1450 = vc.u32 %v1448, %v1444
      %v1451 = vsel %vm1450, 1, 0
      %v1452 = vadd.s32 %v1448, %v1444
      %v1453 = vadd.s32 %v1449, %v1451
      %v1454 = vadd.s32 %v1453, %v1443
      %v1455 = vadd.s32 %v1454, %v1445
      %v1456 = vand.u32 %v1433, 65535
      %v1457 = vshrl.u32 %v1433, 16
      %v1458 = vand.u32 %v1428, 65535
      %v1459 = vshrl.u32 %v1428, 16
      %v1460 = vmul.u32 %v1456, %v1458
      %v1461 = vmul.u32 %v1456, %v1459
      %v1462 = vmul.u32 %v1457, %v1458
      %v1463 = vmul.u32 %v1457, %v1459
      %v1464 = vshll.u32 %v1461, 16
      %v1465 = vshrl.u32 %v1461, 16
      %v1466 = vshll.u32 %v1462, 16
      %v1467 = vshrl.u32 %v1462, 16
      %vm1468 = vc.u32 %v1460, %v1464
      %v1469 = vsel %vm1468, 1, 0
      %v1470 = vadd.s32 %v1460, %v1464
      %v1471 = vadd.s32 %v1463, %v1469
      %vm1472 = vc.u32 %v1470, %v1466
      %v1473 = vsel %vm1472, 1, 0
      %v1474 = vadd.s32 %v1470, %v1466
      %v1475 = vadd.s32 %v1471, %v1473
      %v1476 = vadd.s32 %v1475, %v1465
      %v1477 = vadd.s32 %v1476, %v1467
      %v1478 = vmul.u32 %v1433, %v1424
      %v1479 = vadd.s32 %v1455, %v1474
      %vm1480 = vc.u32 %v1455, %v1474
      %v1481 = vadd.s32 %v1477, 1
      %v1482 = vsel %vm1480, %v1481, %v1477
      %v1483 = vadd.s32 %v1478, %v1482
      %v1484 = vadd.s32 %v1483, 536870912
      %v1485 = vshrl.u32 %v1484, 30
      %v1486 = vshll.u32 %v1485, 30
      %v1487 = vsub.s32 %v1483, %v1486
      %vm1488 = vcmp.lt.s32.totalorder %v1487, 0
      %v1489 = vsub.s32 0, %v1487
      %v1490 = vsel %vm1488, %v1489, %v1487
      %v1491 = vclz %v1490
      %v1492 = vsub.s32 %v1491, 2
      %vm1493 = vcmp.gt.s32.totalorder 0, %v1492
      %v1494 = vsel %vm1493, 0, %v1492
      %v1495 = vsub.s32 32, %v1494
      %v1496 = vshll.u32 %v1487, %v1494
      %v1497 = vshrl.u32 %v1479, %v1495
      %v1498 = vor.u32 %v1496, %v1497
      %v1499 = vsub.s32 4294967266, %v1494
      %v1500 = vadd.s32 %v1499, 127
      %v1501 = vshll.u32 %v1500, 23
      %v1502 = vor.u32 4788187, %v1501
      %v1503 = vand.u32 2147483647, %v1502
      %v1505 = vcvt.s32.f32 %v1498
      %v1506 = vmul.f32 %v1505, %v1503
      %v1507 = vxor.u32 %v1506, 2147483648
      %v1508 = vsel %vm1387, %v1507, %v1506
      %v1509 = vsub.s32 4, %v1485
      %v1510 = vsel %vm1387, %v1509, %v1485
      %v1511 = vsel %vm1386, %v299, %v1508
      %v1512 = vsel %vm1386, 0, %v1510
      %v1513 = vmul.f32 %v1511, %v1511
      %v1514 = vmul.f32 %v1513, -0.001358992
      %v1515 = vadd.f32 %v1514, 0.041655596
      %v1516 = vmul.f32 %v1513, %v1515
      %v1517 = vadd.f32 %v1516, -0.4999988
      %v1518 = vmul.f32 %v1513, %v1517
      %v1519 = vadd.f32 1.0, %v1518
      %v1520 = vmul.f32 %v1511, %v1511
      %v1521 = vmul.f32 %v1520, -0.00019511016
      %v1522 = vadd.f32 %v1521, 0.008332121
      %v1523 = vmul.f32 %v1520, %v1522
      %v1524 = vadd.f32 %v1523, -0.16666654
      %v1525 = vmul.f32 %v1520, %v1524
      %v1526 = vadd.f32 %v1525, 1.0
      %v1527 = vmul.f32 %v1526, %v1511
      %vm1528 = vweird.f32 %v299
      %v1529 = vadd.s32 %v1512, 3
      %v1530 = vand.u32 %v1529, 3
      %vm1531 = vcmp.lt.s32.totalorder %v1530, 2
      %vm1532 = vcmp.eq.s32.totalorder %v1530, 0
      %v1533 = vxor.u32 %v1527, 2147483648
      %v1534 = vsel %vm1532, %v1519, %v1533
      %vm1535 = vcmp.eq.s32.totalorder %v1530, 2
      %v1536 = vxor.u32 %v1519, 2147483648
      %v1537 = vsel %vm1535, %v1536, %v1527
      %v1538 = vsel %vm1531, %v1534, %v1537
      %v1539 = vsel %vm1528, nan, %v1538
      %v1540 = vmul.f32 %v289, %v1074
      %v1541 = vmul.f32 %v291, %v1229
      %v1542 = vmul.f32 %v293, %v1384
      %v1543 = vmul.f32 %v295, %v1539
      %v1544 = vld [vmem:[#allocation2] sm:$0xff]
      %v1545 = vld [vmem:[#allocation2 + $0x8] sm:$0xff]
      %v1546 = vld [vmem:[#allocation2 + $0x10] sm:$0xff]
      %v1547 = vld [vmem:[#allocation2 + $0x18] sm:$0xff]
      %v1548 = vld [vmem:[#allocation3] sm:$0xff]
      %v1549 = vld [vmem:[#allocation3 + $0x8] sm:$0xff]
      %v1550 = vld [vmem:[#allocation3 + $0x10] sm:$0xff]
      %v1551 = vld [vmem:[#allocation3 + $0x18] sm:$0xff]
      %v1552 = vmul.f32 %v916, %v1544
      %v1553 = vmul.f32 %v917, %v1545
      %v1554 = vmul.f32 %v918, %v1546
      %v1555 = vmul.f32 %v919, %v1547
      %v1556 = vmul.f32 %v1540, %v1548
      %v1557 = vmul.f32 %v1541, %v1549
      %v1558 = vmul.f32 %v1542, %v1550
      %v1559 = vmul.f32 %v1543, %v1551
      %v1560 = vsub.f32 %v1552, %v1556
      %v1561 = vsub.f32 %v1553, %v1557
      %v1562 = vsub.f32 %v1554, %v1558
      %v1563 = vsub.f32 %v1555, %v1559
      %v1564 = vmul.f32 %v916, %v1548
      %v1565 = vmul.f32 %v917, %v1549
      %v1566 = vmul.f32 %v918, %v1550
      %v1567 = vmul.f32 %v919, %v1551
      %v1568 = vmul.f32 %v1540, %v1544
      %v1569 = vmul.f32 %v1541, %v1545
      %v1570 = vmul.f32 %v1542, %v1546
      %v1571 = vmul.f32 %v1543, %v1547
      %v1572 = vadd.f32 %v1564, %v1568
      %v1573 = vadd.f32 %v1565, %v1569
      %v1574 = vadd.f32 %v1566, %v1570
      %v1575 = vadd.f32 %v1567, %v1571
      %1576 = vst.msk [vmem:[#allocation2] sm:$0xff] %vm251, %v1560
      %1577 = vst.msk [vmem:[#allocation2 + $0x8] sm:$0xff] %vm251, %v1561
      %1578 = vst.msk [vmem:[#allocation2 + $0x10] sm:$0xff] %vm251, %v1562
      %1579 = vst.msk [vmem:[#allocation2 + $0x18] sm:$0xff] %vm251, %v1563
      %1580 = vst.msk [vmem:[#allocation3] sm:$0xff] %vm251, %v1572
      %1581 = vst.msk [vmem:[#allocation3 + $0x8] sm:$0xff] %vm251, %v1573
      %1582 = vst.msk [vmem:[#allocation3 + $0x10] sm:$0xff] %vm251, %v1574
      %1583 = vst.msk [vmem:[#allocation3 + $0x18] sm:$0xff] %vm251, %v1575
      %p1584 = scmp.lt.s32.totalorder %s265, 2
      // Predicated region
      $region113: #{tpu_custom_call.1} parent=109 // pred_check
        %p1585 = pneg %p1584
      $region114: #{tpu_custom_call.1} parent=109 // pred_check_branch
        %1587 = sbr.rel (%p1585) target = $region116
      $region115: #{tpu_custom_call.1} parent=109 // pred_region
        %v1588 = vld [vmem:[#allocation21] sm:$0xff]
        %v1589 = vld [vmem:[#allocation21 + $0x8] sm:$0xff]
        %v1590 = vld [vmem:[#allocation21 + $0x10] sm:$0xff]
        %v1591 = vld [vmem:[#allocation21 + $0x18] sm:$0xff]
        %v1592 = vld [vmem:[#allocation21 + $0x20] sm:$0xff]
        %v1593 = vld [vmem:[#allocation21 + $0x28] sm:$0xff]
        %v1594 = vld [vmem:[#allocation21 + $0x30] sm:$0xff]
        %v1595 = vld [vmem:[#allocation21 + $0x38] sm:$0xff]
        %vm1596 = vcmask 523264
        %v1598 = vsel %vm1596, %v1588, 0
        %v1601 = vsel %vm1596, %v1589, 0
        %v1604 = vsel %vm1596, %v1590, 0
        %v1607 = vsel %vm1596, %v1591, 0
        %v1610 = vsel %vm1596, %v1592, 0
        %v1613 = vsel %vm1596, %v1593, 0
        %v1616 = vsel %vm1596, %v1594, 0
        %v1619 = vsel %vm1596, %v1595, 0
        %1621 = vmatpush.msra.mxu0 0.0
        %1622 = vmatpush.msra.mxu0 0.0
        %1623 = vmatpush.msra.mxu0 0.0
        %1624 = vmatpush.msra.mxu0 0.0
        %1625 = vmatpush.msra.mxu0 0.0
        %1626 = vmatpush.msra.mxu0 0.0
        %1627 = vmatpush.msra.mxu0 0.0
        %1628 = vmatpush.msra.mxu0 0.0
        %1629 = vmatpush.msra.mxu0 %v1575
        %1630 = vmatpush.msra.mxu0 %v1574
        %1631 = vmatpush.msra.mxu0 %v1573
        %1632 = vmatpush.msra.mxu0 %v1572
        %1633 = vmatpush.msra.mxu0 %v1563
        %1634 = vmatpush.msra.mxu0 %v1562
        %1635 = vmatpush.msra.mxu0 %v1561
        %1636 = vmatpush.msra.mxu0 %v1560
        %1637 = vmatmul.f32.gmra.mxu0 %v1598
        %v1638 = vpop.f32.mrf.mxu0
        %v1639 = vadd.f32 0.0, %v1638
        %1640 = vmatmul.f32.gmra.mxu0 %v1601
        %v1641 = vpop.f32.mrf.mxu0
        %v1642 = vadd.f32 0.0, %v1641
        %1643 = vmatmul.f32.gmra.mxu0 %v1604
        %v1644 = vpop.f32.mrf.mxu0
        %v1645 = vadd.f32 0.0, %v1644
        %1646 = vmatmul.f32.gmra.mxu0 %v1607
        %v1647 = vpop.f32.mrf.mxu0
        %v1648 = vadd.f32 0.0, %v1647
        %1649 = vmatmul.f32.gmra.mxu0 %v1610
        %v1650 = vpop.f32.mrf.mxu0
        %v1651 = vadd.f32 0.0, %v1650
        %1652 = vmatmul.f32.gmra.mxu0 %v1613
        %v1653 = vpop.f32.mrf.mxu0
        %v1654 = vadd.f32 0.0, %v1653
        %1655 = vmatmul.f32.gmra.mxu0 %v1616
        %v1656 = vpop.f32.mrf.mxu0
        %v1657 = vadd.f32 0.0, %v1656
        %1658 = vmatmul.f32.gmra.mxu0 %v1619
        %v1659 = vpop.f32.mrf.mxu0
        %v1660 = vadd.f32 0.0, %v1659
        %1661 = vdwg.mxu0
        %1666 = vrot.lane.b32.xlu0 %v1651, 32
        %v1667 = vpop.permute.xlu0 %1666
        %1668 = vrot.lane.b32.xlu0 %v1654, 32
        %v1669 = vpop.permute.xlu0 %1668
        %1670 = vrot.lane.b32.xlu0 %v1657, 32
        %v1671 = vpop.permute.xlu0 %1670
        %1672 = vrot.lane.b32.xlu0 %v1660, 32
        %v1673 = vpop.permute.xlu0 %1672
        %v1678 = vsel %vm251, %v1639, %v1667
        %v1679 = vsel %vm251, %v1642, %v1669
        %v1680 = vsel %vm251, %v1645, %v1671
        %v1681 = vsel %vm251, %v1648, %v1673
        %v1682 = vld [vmem:[#allocation23] sm:$0xff]
        %v1683 = vld [vmem:[#allocation23 + $0x8] sm:$0xff]
        %v1684 = vld [vmem:[#allocation23 + $0x10] sm:$0xff]
        %v1685 = vld [vmem:[#allocation23 + $0x18] sm:$0xff]
        %v1686 = vld [vmem:[#allocation23 + $0x20] sm:$0xff]
        %v1687 = vld [vmem:[#allocation23 + $0x28] sm:$0xff]
        %v1688 = vld [vmem:[#allocation23 + $0x30] sm:$0xff]
        %v1689 = vld [vmem:[#allocation23 + $0x38] sm:$0xff]
        %v1691 = vsel %vm1596, %v1678, 0
        %v1694 = vsel %vm1596, %v1679, 0
        %v1697 = vsel %vm1596, %v1680, 0
        %v1700 = vsel %vm1596, %v1681, 0
        %1702 = vmatpush.msra.mxu0 0.0
        %1703 = vmatpush.msra.mxu0 0.0
        %1704 = vmatpush.msra.mxu0 0.0
        %1705 = vmatpush.msra.mxu0 0.0
        %1706 = vmatpush.msra.mxu0 0.0
        %1707 = vmatpush.msra.mxu0 0.0
        %1708 = vmatpush.msra.mxu0 0.0
        %1709 = vmatpush.msra.mxu0 0.0
        %1710 = vmatpush.msra.mxu0 %v1689
        %1711 = vmatpush.msra.mxu0 %v1688
        %1712 = vmatpush.msra.mxu0 %v1687
        %1713 = vmatpush.msra.mxu0 %v1686
        %1714 = vmatpush.msra.mxu0 %v1685
        %1715 = vmatpush.msra.mxu0 %v1684
        %1716 = vmatpush.msra.mxu0 %v1683
        %1717 = vmatpush.msra.mxu0 %v1682
        %1718 = vmatmul.f32.gmra.mxu0 %v1691
        %v1719 = vpop.f32.mrf.mxu0
        %v1720 = vadd.f32 0.0, %v1719
        %1721 = vmatmul.f32.gmra.mxu0 %v1694
        %v1722 = vpop.f32.mrf.mxu0
        %v1723 = vadd.f32 0.0, %v1722
        %1724 = vmatmul.f32.gmra.mxu0 %v1697
        %v1725 = vpop.f32.mrf.mxu0
        %v1726 = vadd.f32 0.0, %v1725
        %1727 = vmatmul.f32.gmra.mxu0 %v1700
        %v1728 = vpop.f32.mrf.mxu0
        %v1729 = vadd.f32 0.0, %v1728
        %1730 = vdwg.mxu0
        %v1731 = vld [vmem:[#allocation15] sm:$0xff]
        %v1732 = vld [vmem:[#allocation15 + $0x8] sm:$0xff]
        %v1733 = vld [vmem:[#allocation15 + $0x10] sm:$0xff]
        %v1734 = vld [vmem:[#allocation15 + $0x18] sm:$0xff]
        %v1735 = vld [vmem:[#allocation17] sm:$0xff]
        %v1736 = vld [vmem:[#allocation17 + $0x8] sm:$0xff]
        %v1737 = vld [vmem:[#allocation17 + $0x10] sm:$0xff]
        %v1738 = vld [vmem:[#allocation17 + $0x18] sm:$0xff]
        %v1739 = vmul.f32 %v1720, %v1731
        %v1740 = vmul.f32 %v1723, %v1732
        %v1741 = vmul.f32 %v1726, %v1733
        %v1742 = vmul.f32 %v1729, %v1734
        %1747 = vrot.lane.b32.xlu0 %v1735, 32
        %v1748 = vpop.permute.xlu0 %1747
        %1749 = vrot.lane.b32.xlu0 %v1736, 32
        %v1750 = vpop.permute.xlu0 %1749
        %1751 = vrot.lane.b32.xlu0 %v1737, 32
        %v1752 = vpop.permute.xlu0 %1751
        %1753 = vrot.lane.b32.xlu0 %v1738, 32
        %v1754 = vpop.permute.xlu0 %1753
        %v1759 = vmul.f32 %v1720, %v1748
        %v1760 = vmul.f32 %v1723, %v1750
        %v1761 = vmul.f32 %v1726, %v1752
        %v1762 = vmul.f32 %v1729, %v1754
        %1767 = vrot.lane.b32.xlu0 %v1759, 96
        %v1768 = vpop.permute.xlu0 %1767
        %1769 = vrot.lane.b32.xlu0 %v1760, 96
        %v1770 = vpop.permute.xlu0 %1769
        %1771 = vrot.lane.b32.xlu0 %v1761, 96
        %v1772 = vpop.permute.xlu0 %1771
        %1773 = vrot.lane.b32.xlu0 %v1762, 96
        %v1774 = vpop.permute.xlu0 %1773
        %v1779 = vsub.f32 %v1739, %v1768
        %v1780 = vsub.f32 %v1740, %v1770
        %v1781 = vsub.f32 %v1741, %v1772
        %v1782 = vsub.f32 %v1742, %v1774
        %v1783 = vmul.f32 %v1720, %v1735
        %v1784 = vmul.f32 %v1723, %v1736
        %v1785 = vmul.f32 %v1726, %v1737
        %v1786 = vmul.f32 %v1729, %v1738
        %1791 = vrot.lane.b32.xlu0 %v1731, 32
        %v1792 = vpop.permute.xlu0 %1791
        %1793 = vrot.lane.b32.xlu0 %v1732, 32
        %v1794 = vpop.permute.xlu0 %1793
        %1795 = vrot.lane.b32.xlu0 %v1733, 32
        %v1796 = vpop.permute.xlu0 %1795
        %1797 = vrot.lane.b32.xlu0 %v1734, 32
        %v1798 = vpop.permute.xlu0 %1797
        %v1803 = vmul.f32 %v1720, %v1792
        %v1804 = vmul.f32 %v1723, %v1794
        %v1805 = vmul.f32 %v1726, %v1796
        %v1806 = vmul.f32 %v1729, %v1798
        %1811 = vrot.lane.b32.xlu0 %v1803, 96
        %v1812 = vpop.permute.xlu0 %1811
        %1813 = vrot.lane.b32.xlu0 %v1804, 96
        %v1814 = vpop.permute.xlu0 %1813
        %1815 = vrot.lane.b32.xlu0 %v1805, 96
        %v1816 = vpop.permute.xlu0 %1815
        %1817 = vrot.lane.b32.xlu0 %v1806, 96
        %v1818 = vpop.permute.xlu0 %1817
        %v1823 = vadd.f32 %v1783, %v1812
        %v1824 = vadd.f32 %v1784, %v1814
        %v1825 = vadd.f32 %v1785, %v1816
        %v1826 = vadd.f32 %v1786, %v1818
        %v1827 = vld [vmem:[#allocation24] sm:$0xff]
        %v1828 = vld [vmem:[#allocation24 + $0x8] sm:$0xff]
        %v1829 = vld [vmem:[#allocation24 + $0x10] sm:$0xff]
        %v1830 = vld [vmem:[#allocation24 + $0x18] sm:$0xff]
        %v1831 = vld [vmem:[#allocation24 + $0x20] sm:$0xff]
        %v1832 = vld [vmem:[#allocation24 + $0x28] sm:$0xff]
        %v1833 = vld [vmem:[#allocation24 + $0x30] sm:$0xff]
        %v1834 = vld [vmem:[#allocation24 + $0x38] sm:$0xff]
        %v1836 = vsel %vm1596, %v1827, 0
        %v1839 = vsel %vm1596, %v1828, 0
        %v1842 = vsel %vm1596, %v1829, 0
        %v1845 = vsel %vm1596, %v1830, 0
        %v1848 = vsel %vm1596, %v1831, 0
        %v1851 = vsel %vm1596, %v1832, 0
        %v1854 = vsel %vm1596, %v1833, 0
        %v1857 = vsel %vm1596, %v1834, 0
        %1859 = vmatpush.msra.mxu0 0.0
        %1860 = vmatpush.msra.mxu0 0.0
        %1861 = vmatpush.msra.mxu0 0.0
        %1862 = vmatpush.msra.mxu0 0.0
        %1863 = vmatpush.msra.mxu0 0.0
        %1864 = vmatpush.msra.mxu0 0.0
        %1865 = vmatpush.msra.mxu0 0.0
        %1866 = vmatpush.msra.mxu0 0.0
        %1867 = vmatpush.msra.mxu0 %v1826
        %1868 = vmatpush.msra.mxu0 %v1825
        %1869 = vmatpush.msra.mxu0 %v1824
        %1870 = vmatpush.msra.mxu0 %v1823
        %1871 = vmatpush.msra.mxu0 %v1782
        %1872 = vmatpush.msra.mxu0 %v1781
        %1873 = vmatpush.msra.mxu0 %v1780
        %1874 = vmatpush.msra.mxu0 %v1779
        %1875 = vmatmul.f32.gmra.mxu0 %v1836
        %v1876 = vpop.f32.mrf.mxu0
        %v1877 = vadd.f32 0.0, %v1876
        %1878 = vmatmul.f32.gmra.mxu0 %v1839
        %v1879 = vpop.f32.mrf.mxu0
        %v1880 = vadd.f32 0.0, %v1879
        %1881 = vmatmul.f32.gmra.mxu0 %v1842
        %v1882 = vpop.f32.mrf.mxu0
        %v1883 = vadd.f32 0.0, %v1882
        %1884 = vmatmul.f32.gmra.mxu0 %v1845
        %v1885 = vpop.f32.mrf.mxu0
        %v1886 = vadd.f32 0.0, %v1885
        %1887 = vmatmul.f32.gmra.mxu0 %v1848
        %v1888 = vpop.f32.mrf.mxu0
        %v1889 = vadd.f32 0.0, %v1888
        %1890 = vmatmul.f32.gmra.mxu0 %v1851
        %v1891 = vpop.f32.mrf.mxu0
        %v1892 = vadd.f32 0.0, %v1891
        %1893 = vmatmul.f32.gmra.mxu0 %v1854
        %v1894 = vpop.f32.mrf.mxu0
        %v1895 = vadd.f32 0.0, %v1894
        %1896 = vmatmul.f32.gmra.mxu0 %v1857
        %v1897 = vpop.f32.mrf.mxu0
        %v1898 = vadd.f32 0.0, %v1897
        %1899 = vdwg.mxu0
        %1904 = vrot.lane.b32.xlu0 %v1889, 32
        %v1905 = vpop.permute.xlu0 %1904
        %1906 = vrot.lane.b32.xlu0 %v1892, 32
        %v1907 = vpop.permute.xlu0 %1906
        %1908 = vrot.lane.b32.xlu0 %v1895, 32
        %v1909 = vpop.permute.xlu0 %1908
        %1910 = vrot.lane.b32.xlu0 %v1898, 32
        %v1911 = vpop.permute.xlu0 %1910
        %v1916 = vsel %vm251, %v1877, %v1905
        %v1917 = vsel %vm251, %v1880, %v1907
        %v1918 = vsel %vm251, %v1883, %v1909
        %v1919 = vsel %vm251, %v1886, %v1911
        %v1920 = vld [vmem:[#allocation26] sm:$0xff]
        %v1921 = vld [vmem:[#allocation26 + $0x8] sm:$0xff]
        %v1922 = vld [vmem:[#allocation26 + $0x10] sm:$0xff]
        %v1923 = vld [vmem:[#allocation26 + $0x18] sm:$0xff]
        %v1924 = vld [vmem:[#allocation26 + $0x20] sm:$0xff]
        %v1925 = vld [vmem:[#allocation26 + $0x28] sm:$0xff]
        %v1926 = vld [vmem:[#allocation26 + $0x30] sm:$0xff]
        %v1927 = vld [vmem:[#allocation26 + $0x38] sm:$0xff]
        %v1929 = vsel %vm1596, %v1916, 0
        %v1932 = vsel %vm1596, %v1917, 0
        %v1935 = vsel %vm1596, %v1918, 0
        %v1938 = vsel %vm1596, %v1919, 0
        %1940 = vmatpush.msra.mxu0 0.0
        %1941 = vmatpush.msra.mxu0 0.0
        %1942 = vmatpush.msra.mxu0 0.0
        %1943 = vmatpush.msra.mxu0 0.0
        %1944 = vmatpush.msra.mxu0 0.0
        %1945 = vmatpush.msra.mxu0 0.0
        %1946 = vmatpush.msra.mxu0 0.0
        %1947 = vmatpush.msra.mxu0 0.0
        %1948 = vmatpush.msra.mxu0 %v1927
        %1949 = vmatpush.msra.mxu0 %v1926
        %1950 = vmatpush.msra.mxu0 %v1925
        %1951 = vmatpush.msra.mxu0 %v1924
        %1952 = vmatpush.msra.mxu0 %v1923
        %1953 = vmatpush.msra.mxu0 %v1922
        %1954 = vmatpush.msra.mxu0 %v1921
        %1955 = vmatpush.msra.mxu0 %v1920
        %1956 = vmatmul.f32.gmra.mxu0 %v1929
        %v1957 = vpop.f32.mrf.mxu0
        %v1958 = vadd.f32 0.0, %v1957
        %1959 = vmatmul.f32.gmra.mxu0 %v1932
        %v1960 = vpop.f32.mrf.mxu0
        %v1961 = vadd.f32 0.0, %v1960
        %1962 = vmatmul.f32.gmra.mxu0 %v1935
        %v1963 = vpop.f32.mrf.mxu0
        %v1964 = vadd.f32 0.0, %v1963
        %1965 = vmatmul.f32.gmra.mxu0 %v1938
        %v1966 = vpop.f32.mrf.mxu0
        %v1967 = vadd.f32 0.0, %v1966
        %1968 = vdwg.mxu0
        %1969 = vst.msk [vmem:[#allocation2] sm:$0xff] %vm251, %v1958
        %1970 = vst.msk [vmem:[#allocation2 + $0x8] sm:$0xff] %vm251, %v1961
        %1971 = vst.msk [vmem:[#allocation2 + $0x10] sm:$0xff] %vm251, %v1964
        %1972 = vst.msk [vmem:[#allocation2 + $0x18] sm:$0xff] %vm251, %v1967
        %1977 = vrot.lane.b32.xlu0 %v1958, 96
        %v1978 = vpop.permute.xlu0 %1977
        %1979 = vrot.lane.b32.xlu0 %v1961, 96
        %v1980 = vpop.permute.xlu0 %1979
        %1981 = vrot.lane.b32.xlu0 %v1964, 96
        %v1982 = vpop.permute.xlu0 %1981
        %1983 = vrot.lane.b32.xlu0 %v1967, 96
        %v1984 = vpop.permute.xlu0 %1983
        %1989 = vst.msk [vmem:[#allocation3] sm:$0xff] %vm251, %v1978
        %1990 = vst.msk [vmem:[#allocation3 + $0x8] sm:$0xff] %vm251, %v1980
        %1991 = vst.msk [vmem:[#allocation3 + $0x10] sm:$0xff] %vm251, %v1982
        %1992 = vst.msk [vmem:[#allocation3 + $0x18] sm:$0xff] %vm251, %v1984
      $region116: #{tpu_custom_call.1} parent=109 // pred_fallthru
        _
    $region110: #{tpu_custom_call.1} parent=1 // loop_footer
      %s269 = sadd.s32 1, %s265
    $region111: #{tpu_custom_call.1} parent=1 // loop_footer_branch
      %264 = sbr.rel target = $region107
    $region112: #{tpu_custom_call.1} parent=1 // loop_exit
      _
    %v1993 = vld [vmem:[#allocation2] sm:$0xff]
    %v1994 = vld [vmem:[#allocation2 + $0x8] sm:$0xff]
    %v1995 = vld [vmem:[#allocation2 + $0x10] sm:$0xff]
    %v1996 = vld [vmem:[#allocation2 + $0x18] sm:$0xff]
    %v1997 = vld [vmem:[#allocation3] sm:$0xff]
    %v1998 = vld [vmem:[#allocation3 + $0x8] sm:$0xff]
    %v1999 = vld [vmem:[#allocation3 + $0x10] sm:$0xff]
    %v2000 = vld [vmem:[#allocation3 + $0x18] sm:$0xff]
    %v2001 = vld [vmem:[#allocation21] sm:$0xff]
    %v2002 = vld [vmem:[#allocation21 + $0x8] sm:$0xff]
    %v2003 = vld [vmem:[#allocation21 + $0x10] sm:$0xff]
    %v2004 = vld [vmem:[#allocation21 + $0x18] sm:$0xff]
    %v2005 = vld [vmem:[#allocation21 + $0x20] sm:$0xff]
    %v2006 = vld [vmem:[#allocation21 + $0x28] sm:$0xff]
    %v2007 = vld [vmem:[#allocation21 + $0x30] sm:$0xff]
    %v2008 = vld [vmem:[#allocation21 + $0x38] sm:$0xff]
    %vm2009 = vcmask 523264
    %v2011 = vsel %vm2009, %v2001, 0
    %v2014 = vsel %vm2009, %v2002, 0
    %v2017 = vsel %vm2009, %v2003, 0
    %v2020 = vsel %vm2009, %v2004, 0
    %v2023 = vsel %vm2009, %v2005, 0
    %v2026 = vsel %vm2009, %v2006, 0
    %v2029 = vsel %vm2009, %v2007, 0
    %v2032 = vsel %vm2009, %v2008, 0
    %2034 = vmatpush.msra.mxu0 0.0
    %2035 = vmatpush.msra.mxu0 0.0
    %2036 = vmatpush.msra.mxu0 0.0
    %2037 = vmatpush.msra.mxu0 0.0
    %2038 = vmatpush.msra.mxu0 0.0
    %2039 = vmatpush.msra.mxu0 0.0
    %2040 = vmatpush.msra.mxu0 0.0
    %2041 = vmatpush.msra.mxu0 0.0
    %2042 = vmatpush.msra.mxu0 %v2000
    %2043 = vmatpush.msra.mxu0 %v1999
    %2044 = vmatpush.msra.mxu0 %v1998
    %2045 = vmatpush.msra.mxu0 %v1997
    %2046 = vmatpush.msra.mxu0 %v1996
    %2047 = vmatpush.msra.mxu0 %v1995
    %2048 = vmatpush.msra.mxu0 %v1994
    %2049 = vmatpush.msra.mxu0 %v1993
    %2050 = vmatmul.f32.gmra.mxu0 %v2011
    %v2051 = vpop.f32.mrf.mxu0
    %v2052 = vadd.f32 0.0, %v2051
    %2053 = vmatmul.f32.gmra.mxu0 %v2014
    %v2054 = vpop.f32.mrf.mxu0
    %v2055 = vadd.f32 0.0, %v2054
    %2056 = vmatmul.f32.gmra.mxu0 %v2017
    %v2057 = vpop.f32.mrf.mxu0
    %v2058 = vadd.f32 0.0, %v2057
    %2059 = vmatmul.f32.gmra.mxu0 %v2020
    %v2060 = vpop.f32.mrf.mxu0
    %v2061 = vadd.f32 0.0, %v2060
    %2062 = vmatmul.f32.gmra.mxu0 %v2023
    %v2063 = vpop.f32.mrf.mxu0
    %v2064 = vadd.f32 0.0, %v2063
    %2065 = vmatmul.f32.gmra.mxu0 %v2026
    %v2066 = vpop.f32.mrf.mxu0
    %v2067 = vadd.f32 0.0, %v2066
    %2068 = vmatmul.f32.gmra.mxu0 %v2029
    %v2069 = vpop.f32.mrf.mxu0
    %v2070 = vadd.f32 0.0, %v2069
    %2071 = vmatmul.f32.gmra.mxu0 %v2032
    %v2072 = vpop.f32.mrf.mxu0
    %v2073 = vadd.f32 0.0, %v2072
    %2074 = vdwg.mxu0
    %2079 = vrot.lane.b32.xlu0 %v2064, 32
    %v2080 = vpop.permute.xlu0 %2079
    %2081 = vrot.lane.b32.xlu0 %v2067, 32
    %v2082 = vpop.permute.xlu0 %2081
    %2083 = vrot.lane.b32.xlu0 %v2070, 32
    %v2084 = vpop.permute.xlu0 %2083
    %2085 = vrot.lane.b32.xlu0 %v2073, 32
    %v2086 = vpop.permute.xlu0 %2085
    %v2091 = vsel %vm251, %v2052, %v2080
    %v2092 = vsel %vm251, %v2055, %v2082
    %v2093 = vsel %vm251, %v2058, %v2084
    %v2094 = vsel %vm251, %v2061, %v2086
    %v2095 = vld [vmem:[#allocation23] sm:$0xff]
    %v2096 = vld [vmem:[#allocation23 + $0x8] sm:$0xff]
    %v2097 = vld [vmem:[#allocation23 + $0x10] sm:$0xff]
    %v2098 = vld [vmem:[#allocation23 + $0x18] sm:$0xff]
    %v2099 = vld [vmem:[#allocation23 + $0x20] sm:$0xff]
    %v2100 = vld [vmem:[#allocation23 + $0x28] sm:$0xff]
    %v2101 = vld [vmem:[#allocation23 + $0x30] sm:$0xff]
    %v2102 = vld [vmem:[#allocation23 + $0x38] sm:$0xff]
    %v2104 = vsel %vm2009, %v2091, 0
    %v2107 = vsel %vm2009, %v2092, 0
    %v2110 = vsel %vm2009, %v2093, 0
    %v2113 = vsel %vm2009, %v2094, 0
    %2115 = vmatpush.msra.mxu0 0.0
    %2116 = vmatpush.msra.mxu0 0.0
    %2117 = vmatpush.msra.mxu0 0.0
    %2118 = vmatpush.msra.mxu0 0.0
    %2119 = vmatpush.msra.mxu0 0.0
    %2120 = vmatpush.msra.mxu0 0.0
    %2121 = vmatpush.msra.mxu0 0.0
    %2122 = vmatpush.msra.mxu0 0.0
    %2123 = vmatpush.msra.mxu0 %v2102
    %2124 = vmatpush.msra.mxu0 %v2101
    %2125 = vmatpush.msra.mxu0 %v2100
    %2126 = vmatpush.msra.mxu0 %v2099
    %2127 = vmatpush.msra.mxu0 %v2098
    %2128 = vmatpush.msra.mxu0 %v2097
    %2129 = vmatpush.msra.mxu0 %v2096
    %2130 = vmatpush.msra.mxu0 %v2095
    %2131 = vmatmul.f32.gmra.mxu0 %v2104
    %v2132 = vpop.f32.mrf.mxu0
    %v2133 = vadd.f32 0.0, %v2132
    %2134 = vmatmul.f32.gmra.mxu0 %v2107
    %v2135 = vpop.f32.mrf.mxu0
    %v2136 = vadd.f32 0.0, %v2135
    %2137 = vmatmul.f32.gmra.mxu0 %v2110
    %v2138 = vpop.f32.mrf.mxu0
    %v2139 = vadd.f32 0.0, %v2138
    %2140 = vmatmul.f32.gmra.mxu0 %v2113
    %v2141 = vpop.f32.mrf.mxu0
    %v2142 = vadd.f32 0.0, %v2141
    %2143 = vdwg.mxu0
    %v2144 = vld [vmem:[#allocation18] sm:$0xff]
    %v2145 = vld [vmem:[#allocation18 + $0x8] sm:$0xff]
    %v2146 = vld [vmem:[#allocation18 + $0x10] sm:$0xff]
    %v2147 = vld [vmem:[#allocation18 + $0x18] sm:$0xff]
    %v2148 = vld [vmem:[#allocation20] sm:$0xff]
    %v2149 = vld [vmem:[#allocation20 + $0x8] sm:$0xff]
    %v2150 = vld [vmem:[#allocation20 + $0x10] sm:$0xff]
    %v2151 = vld [vmem:[#allocation20 + $0x18] sm:$0xff]
    %v2152 = vmul.f32 %v2133, %v2144
    %v2153 = vmul.f32 %v2136, %v2145
    %v2154 = vmul.f32 %v2139, %v2146
    %v2155 = vmul.f32 %v2142, %v2147
    %2160 = vrot.lane.b32.xlu0 %v2148, 32
    %v2161 = vpop.permute.xlu0 %2160
    %2162 = vrot.lane.b32.xlu0 %v2149, 32
    %v2163 = vpop.permute.xlu0 %2162
    %2164 = vrot.lane.b32.xlu0 %v2150, 32
    %v2165 = vpop.permute.xlu0 %2164
    %2166 = vrot.lane.b32.xlu0 %v2151, 32
    %v2167 = vpop.permute.xlu0 %2166
    %v2172 = vmul.f32 %v2133, %v2161
    %v2173 = vmul.f32 %v2136, %v2163
    %v2174 = vmul.f32 %v2139, %v2165
    %v2175 = vmul.f32 %v2142, %v2167
    %2180 = vrot.lane.b32.xlu0 %v2172, 96
    %v2181 = vpop.permute.xlu0 %2180
    %2182 = vrot.lane.b32.xlu0 %v2173, 96
    %v2183 = vpop.permute.xlu0 %2182
    %2184 = vrot.lane.b32.xlu0 %v2174, 96
    %v2185 = vpop.permute.xlu0 %2184
    %2186 = vrot.lane.b32.xlu0 %v2175, 96
    %v2187 = vpop.permute.xlu0 %2186
    %v2192 = vsub.f32 %v2152, %v2181
    %v2193 = vsub.f32 %v2153, %v2183
    %v2194 = vsub.f32 %v2154, %v2185
    %v2195 = vsub.f32 %v2155, %v2187
    %v2196 = vmul.f32 %v2133, %v2148
    %v2197 = vmul.f32 %v2136, %v2149
    %v2198 = vmul.f32 %v2139, %v2150
    %v2199 = vmul.f32 %v2142, %v2151
    %2204 = vrot.lane.b32.xlu0 %v2144, 32
    %v2205 = vpop.permute.xlu0 %2204
    %2206 = vrot.lane.b32.xlu0 %v2145, 32
    %v2207 = vpop.permute.xlu0 %2206
    %2208 = vrot.lane.b32.xlu0 %v2146, 32
    %v2209 = vpop.permute.xlu0 %2208
    %2210 = vrot.lane.b32.xlu0 %v2147, 32
    %v2211 = vpop.permute.xlu0 %2210
    %v2216 = vmul.f32 %v2133, %v2205
    %v2217 = vmul.f32 %v2136, %v2207
    %v2218 = vmul.f32 %v2139, %v2209
    %v2219 = vmul.f32 %v2142, %v2211
    %2224 = vrot.lane.b32.xlu0 %v2216, 96
    %v2225 = vpop.permute.xlu0 %2224
    %2226 = vrot.lane.b32.xlu0 %v2217, 96
    %v2227 = vpop.permute.xlu0 %2226
    %2228 = vrot.lane.b32.xlu0 %v2218, 96
    %v2229 = vpop.permute.xlu0 %2228
    %2230 = vrot.lane.b32.xlu0 %v2219, 96
    %v2231 = vpop.permute.xlu0 %2230
    %v2236 = vadd.f32 %v2196, %v2225
    %v2237 = vadd.f32 %v2197, %v2227
    %v2238 = vadd.f32 %v2198, %v2229
    %v2239 = vadd.f32 %v2199, %v2231
    %v2240 = vld [vmem:[#allocation14] sm:$0xff]
    %v2241 = vld [vmem:[#allocation14 + $0x8] sm:$0xff]
    %v2242 = vld [vmem:[#allocation14 + $0x10] sm:$0xff]
    %v2243 = vld [vmem:[#allocation14 + $0x18] sm:$0xff]
    %v2244 = vmul.f32 %v2240, %v2192
    %v2245 = vmul.f32 %v2241, %v2193
    %v2246 = vmul.f32 %v2242, %v2194
    %v2247 = vmul.f32 %v2243, %v2195
    %v2248 = vmul.f32 %v2240, %v2236
    %v2249 = vmul.f32 %v2241, %v2237
    %v2250 = vmul.f32 %v2242, %v2238
    %v2251 = vmul.f32 %v2243, %v2239
    %v2252 = vld [vmem:[#allocation24] sm:$0xff]
    %v2253 = vld [vmem:[#allocation24 + $0x8] sm:$0xff]
    %v2254 = vld [vmem:[#allocation24 + $0x10] sm:$0xff]
    %v2255 = vld [vmem:[#allocation24 + $0x18] sm:$0xff]
    %v2256 = vld [vmem:[#allocation24 + $0x20] sm:$0xff]
    %v2257 = vld [vmem:[#allocation24 + $0x28] sm:$0xff]
    %v2258 = vld [vmem:[#allocation24 + $0x30] sm:$0xff]
    %v2259 = vld [vmem:[#allocation24 + $0x38] sm:$0xff]
    %v2261 = vsel %vm2009, %v2252, 0
    %v2264 = vsel %vm2009, %v2253, 0
    %v2267 = vsel %vm2009, %v2254, 0
    %v2270 = vsel %vm2009, %v2255, 0
    %v2273 = vsel %vm2009, %v2256, 0
    %v2276 = vsel %vm2009, %v2257, 0
    %v2279 = vsel %vm2009, %v2258, 0
    %v2282 = vsel %vm2009, %v2259, 0
    %2284 = vmatpush.msra.mxu0 0.0
    %2285 = vmatpush.msra.mxu0 0.0
    %2286 = vmatpush.msra.mxu0 0.0
    %2287 = vmatpush.msra.mxu0 0.0
    %2288 = vmatpush.msra.mxu0 0.0
    %2289 = vmatpush.msra.mxu0 0.0
    %2290 = vmatpush.msra.mxu0 0.0
    %2291 = vmatpush.msra.mxu0 0.0
    %2292 = vmatpush.msra.mxu0 %v2251
    %2293 = vmatpush.msra.mxu0 %v2250
    %2294 = vmatpush.msra.mxu0 %v2249
    %2295 = vmatpush.msra.mxu0 %v2248
    %2296 = vmatpush.msra.mxu0 %v2247
    %2297 = vmatpush.msra.mxu0 %v2246
    %2298 = vmatpush.msra.mxu0 %v2245
    %2299 = vmatpush.msra.mxu0 %v2244
    %2300 = vmatmul.f32.gmra.mxu0 %v2261
    %v2301 = vpop.f32.mrf.mxu0
    %v2302 = vadd.f32 0.0, %v2301
    %2303 = vmatmul.f32.gmra.mxu0 %v2264
    %v2304 = vpop.f32.mrf.mxu0
    %v2305 = vadd.f32 0.0, %v2304
    %2306 = vmatmul.f32.gmra.mxu0 %v2267
    %v2307 = vpop.f32.mrf.mxu0
    %v2308 = vadd.f32 0.0, %v2307
    %2309 = vmatmul.f32.gmra.mxu0 %v2270
    %v2310 = vpop.f32.mrf.mxu0
    %v2311 = vadd.f32 0.0, %v2310
    %2312 = vmatmul.f32.gmra.mxu0 %v2273
    %v2313 = vpop.f32.mrf.mxu0
    %v2314 = vadd.f32 0.0, %v2313
    %2315 = vmatmul.f32.gmra.mxu0 %v2276
    %v2316 = vpop.f32.mrf.mxu0
    %v2317 = vadd.f32 0.0, %v2316
    %2318 = vmatmul.f32.gmra.mxu0 %v2279
    %v2319 = vpop.f32.mrf.mxu0
    %v2320 = vadd.f32 0.0, %v2319
    %2321 = vmatmul.f32.gmra.mxu0 %v2282
    %v2322 = vpop.f32.mrf.mxu0
    %v2323 = vadd.f32 0.0, %v2322
    %2324 = vdwg.mxu0
    %2329 = vrot.lane.b32.xlu0 %v2314, 32
    %v2330 = vpop.permute.xlu0 %2329
    %2331 = vrot.lane.b32.xlu0 %v2317, 32
    %v2332 = vpop.permute.xlu0 %2331
    %2333 = vrot.lane.b32.xlu0 %v2320, 32
    %v2334 = vpop.permute.xlu0 %2333
    %2335 = vrot.lane.b32.xlu0 %v2323, 32
    %v2336 = vpop.permute.xlu0 %2335
    %v2341 = vsel %vm251, %v2302, %v2330
    %v2342 = vsel %vm251, %v2305, %v2332
    %v2343 = vsel %vm251, %v2308, %v2334
    %v2344 = vsel %vm251, %v2311, %v2336
    %v2345 = vld [vmem:[#allocation26] sm:$0xff]
    %v2346 = vld [vmem:[#allocation26 + $0x8] sm:$0xff]
    %v2347 = vld [vmem:[#allocation26 + $0x10] sm:$0xff]
    %v2348 = vld [vmem:[#allocation26 + $0x18] sm:$0xff]
    %v2349 = vld [vmem:[#allocation26 + $0x20] sm:$0xff]
    %v2350 = vld [vmem:[#allocation26 + $0x28] sm:$0xff]
    %v2351 = vld [vmem:[#allocation26 + $0x30] sm:$0xff]
    %v2352 = vld [vmem:[#allocation26 + $0x38] sm:$0xff]
    %v2354 = vsel %vm2009, %v2341, 0
    %v2357 = vsel %vm2009, %v2342, 0
    %v2360 = vsel %vm2009, %v2343, 0
    %v2363 = vsel %vm2009, %v2344, 0
    %2365 = vmatpush.msra.mxu0 0.0
    %2366 = vmatpush.msra.mxu0 0.0
    %2367 = vmatpush.msra.mxu0 0.0
    %2368 = vmatpush.msra.mxu0 0.0
    %2369 = vmatpush.msra.mxu0 0.0
    %2370 = vmatpush.msra.mxu0 0.0
    %2371 = vmatpush.msra.mxu0 0.0
    %2372 = vmatpush.msra.mxu0 0.0
    %2373 = vmatpush.msra.mxu0 %v2352
    %2374 = vmatpush.msra.mxu0 %v2351
    %2375 = vmatpush.msra.mxu0 %v2350
    %2376 = vmatpush.msra.mxu0 %v2349
    %2377 = vmatpush.msra.mxu0 %v2348
    %2378 = vmatpush.msra.mxu0 %v2347
    %2379 = vmatpush.msra.mxu0 %v2346
    %2380 = vmatpush.msra.mxu0 %v2345
    %2381 = vmatmul.f32.gmra.mxu0 %v2354
    %v2382 = vpop.f32.mrf.mxu0
    %v2383 = vadd.f32 0.0, %v2382
    %2384 = vmatmul.f32.gmra.mxu0 %v2357
    %v2385 = vpop.f32.mrf.mxu0
    %v2386 = vadd.f32 0.0, %v2385
    %2387 = vmatmul.f32.gmra.mxu0 %v2360
    %v2388 = vpop.f32.mrf.mxu0
    %v2389 = vadd.f32 0.0, %v2388
    %2390 = vmatmul.f32.gmra.mxu0 %v2363
    %v2391 = vpop.f32.mrf.mxu0
    %v2392 = vadd.f32 0.0, %v2391
    %2393 = vdwg.mxu0
    %v2394 = vmul.f32 %v2383, %v2383
    %v2395 = vmul.f32 %v2386, %v2386
    %v2396 = vmul.f32 %v2389, %v2389
    %v2397 = vmul.f32 %v2392, %v2392
    %2402 = vrot.lane.b32.xlu0 %v2394, 96
    %v2403 = vpop.permute.xlu0 %2402
    %2404 = vrot.lane.b32.xlu0 %v2395, 96
    %v2405 = vpop.permute.xlu0 %2404
    %2406 = vrot.lane.b32.xlu0 %v2396, 96
    %v2407 = vpop.permute.xlu0 %2406
    %2408 = vrot.lane.b32.xlu0 %v2397, 96
    %v2409 = vpop.permute.xlu0 %2408
    %v2414 = vadd.f32 %v2394, %v2403
    %v2415 = vadd.f32 %v2395, %v2405
    %v2416 = vadd.f32 %v2396, %v2407
    %v2417 = vadd.f32 %v2397, %v2409
    %v2418 = vadd.f32 %v2414, 1e-30
    %v2419 = vadd.f32 %v2415, 1e-30
    %v2420 = vadd.f32 %v2416, 1e-30
    %v2421 = vadd.f32 %v2417, 1e-30
    %v2422 = vrsqrt.pop %v2418
    %v2423 = vmul.f32 %v2422, %v2418
    %v2424 = vmul.f32 %v2423, %v2422
    %v2425 = vmul.f32 0.5, %v2424
    %v2426 = vsub.f32 1.5, %v2425
    %v2427 = vmul.f32 %v2422, %v2426
    %vm2428 = vweird.f32 %v2418
    %vm2429 = vweird.f32 %v2422
    %vm2430 = vmor %vm2428, %vm2429
    %v2431 = vsel %vm2430, %v2422, %v2427
    %v2432 = vrsqrt.pop %v2419
    %v2433 = vmul.f32 %v2432, %v2419
    %v2434 = vmul.f32 %v2433, %v2432
    %v2435 = vmul.f32 0.5, %v2434
    %v2436 = vsub.f32 1.5, %v2435
    %v2437 = vmul.f32 %v2432, %v2436
    %vm2438 = vweird.f32 %v2419
    %vm2439 = vweird.f32 %v2432
    %vm2440 = vmor %vm2438, %vm2439
    %v2441 = vsel %vm2440, %v2432, %v2437
    %v2442 = vrsqrt.pop %v2420
    %v2443 = vmul.f32 %v2442, %v2420
    %v2444 = vmul.f32 %v2443, %v2442
    %v2445 = vmul.f32 0.5, %v2444
    %v2446 = vsub.f32 1.5, %v2445
    %v2447 = vmul.f32 %v2442, %v2446
    %vm2448 = vweird.f32 %v2420
    %vm2449 = vweird.f32 %v2442
    %vm2450 = vmor %vm2448, %vm2449
    %v2451 = vsel %vm2450, %v2442, %v2447
    %v2452 = vrsqrt.pop %v2421
    %v2453 = vmul.f32 %v2452, %v2421
    %v2454 = vmul.f32 %v2453, %v2452
    %v2455 = vmul.f32 0.5, %v2454
    %v2456 = vsub.f32 1.5, %v2455
    %v2457 = vmul.f32 %v2452, %v2456
    %vm2458 = vweird.f32 %v2421
    %vm2459 = vweird.f32 %v2452
    %vm2460 = vmor %vm2458, %vm2459
    %v2461 = vsel %vm2460, %v2452, %v2457
    %v2462 = vld [vmem:[#allocation9] sm:$0xff]
    %v2463 = vld [vmem:[#allocation9 + $0x8] sm:$0xff]
    %v2464 = vld [vmem:[#allocation9 + $0x10] sm:$0xff]
    %v2465 = vld [vmem:[#allocation9 + $0x18] sm:$0xff]
    %v2466 = vmul.f32 %v2462, %v2431
    %v2467 = vmul.f32 %v2463, %v2441
    %v2468 = vmul.f32 %v2464, %v2451
    %v2469 = vmul.f32 %v2465, %v2461
    %v2470 = vsub.f32 1.0, %v2466
    %v2471 = vsub.f32 1.0, %v2467
    %v2472 = vsub.f32 1.0, %v2468
    %v2473 = vsub.f32 1.0, %v2469
    %v2474 = vmul.f32 %v2383, %v2470
    %v2475 = vmul.f32 %v2386, %v2471
    %v2476 = vmul.f32 %v2389, %v2472
    %v2477 = vmul.f32 %v2392, %v2473
    %2482 = vrot.lane.b32.xlu0 %v2470, 32
    %v2483 = vpop.permute.xlu0 %2482
    %2484 = vrot.lane.b32.xlu0 %v2471, 32
    %v2485 = vpop.permute.xlu0 %2484
    %2486 = vrot.lane.b32.xlu0 %v2472, 32
    %v2487 = vpop.permute.xlu0 %2486
    %2488 = vrot.lane.b32.xlu0 %v2473, 32
    %v2489 = vpop.permute.xlu0 %2488
    %v2494 = vmul.f32 %v2383, %v2483
    %v2495 = vmul.f32 %v2386, %v2485
    %v2496 = vmul.f32 %v2389, %v2487
    %v2497 = vmul.f32 %v2392, %v2489
    %2502 = vrot.lane.b32.xlu0 %v2494, 96
    %v2503 = vpop.permute.xlu0 %2502
    %2504 = vrot.lane.b32.xlu0 %v2495, 96
    %v2505 = vpop.permute.xlu0 %2504
    %2506 = vrot.lane.b32.xlu0 %v2496, 96
    %v2507 = vpop.permute.xlu0 %2506
    %2508 = vrot.lane.b32.xlu0 %v2497, 96
    %v2509 = vpop.permute.xlu0 %2508
    %2514 = vmatpush.msra.mxu0 0.0
    %2515 = vmatpush.msra.mxu0 0.0
    %2516 = vmatpush.msra.mxu0 0.0
    %2517 = vmatpush.msra.mxu0 0.0
    %2518 = vmatpush.msra.mxu0 0.0
    %2519 = vmatpush.msra.mxu0 0.0
    %2520 = vmatpush.msra.mxu0 0.0
    %2521 = vmatpush.msra.mxu0 0.0
    %2522 = vmatpush.msra.mxu0 %v2509
    %2523 = vmatpush.msra.mxu0 %v2507
    %2524 = vmatpush.msra.mxu0 %v2505
    %2525 = vmatpush.msra.mxu0 %v2503
    %2526 = vmatpush.msra.mxu0 %v2477
    %2527 = vmatpush.msra.mxu0 %v2476
    %2528 = vmatpush.msra.mxu0 %v2475
    %2529 = vmatpush.msra.mxu0 %v2474
    %2530 = vmatmul.f32.gmra.mxu0 %v2011
    %v2531 = vpop.f32.mrf.mxu0
    %v2532 = vadd.f32 0.0, %v2531
    %2533 = vmatmul.f32.gmra.mxu0 %v2014
    %v2534 = vpop.f32.mrf.mxu0
    %v2535 = vadd.f32 0.0, %v2534
    %2536 = vmatmul.f32.gmra.mxu0 %v2017
    %v2537 = vpop.f32.mrf.mxu0
    %v2538 = vadd.f32 0.0, %v2537
    %2539 = vmatmul.f32.gmra.mxu0 %v2020
    %v2540 = vpop.f32.mrf.mxu0
    %v2541 = vadd.f32 0.0, %v2540
    %2542 = vmatmul.f32.gmra.mxu0 %v2023
    %v2543 = vpop.f32.mrf.mxu0
    %v2544 = vadd.f32 0.0, %v2543
    %2545 = vmatmul.f32.gmra.mxu0 %v2026
    %v2546 = vpop.f32.mrf.mxu0
    %v2547 = vadd.f32 0.0, %v2546
    %2548 = vmatmul.f32.gmra.mxu0 %v2029
    %v2549 = vpop.f32.mrf.mxu0
    %v2550 = vadd.f32 0.0, %v2549
    %2551 = vmatmul.f32.gmra.mxu0 %v2032
    %v2552 = vpop.f32.mrf.mxu0
    %v2553 = vadd.f32 0.0, %v2552
    %2554 = vdwg.mxu0
    %2559 = vrot.lane.b32.xlu0 %v2544, 32
    %v2560 = vpop.permute.xlu0 %2559
    %2561 = vrot.lane.b32.xlu0 %v2547, 32
    %v2562 = vpop.permute.xlu0 %2561
    %2563 = vrot.lane.b32.xlu0 %v2550, 32
    %v2564 = vpop.permute.xlu0 %2563
    %2565 = vrot.lane.b32.xlu0 %v2553, 32
    %v2566 = vpop.permute.xlu0 %2565
    %v2571 = vsel %vm251, %v2532, %v2560
    %v2572 = vsel %vm251, %v2535, %v2562
    %v2573 = vsel %vm251, %v2538, %v2564
    %v2574 = vsel %vm251, %v2541, %v2566
    %v2576 = vsel %vm2009, %v2571, 0
    %v2579 = vsel %vm2009, %v2572, 0
    %v2582 = vsel %vm2009, %v2573, 0
    %v2585 = vsel %vm2009, %v2574, 0
    %2587 = vmatpush.msra.mxu0 0.0
    %2588 = vmatpush.msra.mxu0 0.0
    %2589 = vmatpush.msra.mxu0 0.0
    %2590 = vmatpush.msra.mxu0 0.0
    %2591 = vmatpush.msra.mxu0 0.0
    %2592 = vmatpush.msra.mxu0 0.0
    %2593 = vmatpush.msra.mxu0 0.0
    %2594 = vmatpush.msra.mxu0 0.0
    %2595 = vmatpush.msra.mxu0 %v2102
    %2596 = vmatpush.msra.mxu0 %v2101
    %2597 = vmatpush.msra.mxu0 %v2100
    %2598 = vmatpush.msra.mxu0 %v2099
    %2599 = vmatpush.msra.mxu0 %v2098
    %2600 = vmatpush.msra.mxu0 %v2097
    %2601 = vmatpush.msra.mxu0 %v2096
    %2602 = vmatpush.msra.mxu0 %v2095
    %2603 = vmatmul.f32.gmra.mxu0 %v2576
    %v2604 = vpop.f32.mrf.mxu0
    %v2605 = vadd.f32 0.0, %v2604
    %2606 = vmatmul.f32.gmra.mxu0 %v2579
    %v2607 = vpop.f32.mrf.mxu0
    %v2608 = vadd.f32 0.0, %v2607
    %2609 = vmatmul.f32.gmra.mxu0 %v2582
    %v2610 = vpop.f32.mrf.mxu0
    %v2611 = vadd.f32 0.0, %v2610
    %2612 = vmatmul.f32.gmra.mxu0 %v2585
    %v2613 = vpop.f32.mrf.mxu0
    %v2614 = vadd.f32 0.0, %v2613
    %2615 = vdwg.mxu0
    %v2616 = vmul.f32 %v2240, %v2605
    %v2617 = vmul.f32 %v2241, %v2608
    %v2618 = vmul.f32 %v2242, %v2611
    %v2619 = vmul.f32 %v2243, %v2614
    %2624 = vrot.lane.b32.xlu0 %v2605, 96
    %v2625 = vpop.permute.xlu0 %2624
    %2626 = vrot.lane.b32.xlu0 %v2608, 96
    %v2627 = vpop.permute.xlu0 %2626
    %2628 = vrot.lane.b32.xlu0 %v2611, 96
    %v2629 = vpop.permute.xlu0 %2628
    %2630 = vrot.lane.b32.xlu0 %v2614, 96
    %v2631 = vpop.permute.xlu0 %2630
    %v2636 = vmul.f32 %v2240, %v2625
    %v2637 = vmul.f32 %v2241, %v2627
    %v2638 = vmul.f32 %v2242, %v2629
    %v2639 = vmul.f32 %v2243, %v2631
    %v2640 = vmul.f32 %v2616, %v2144
    %v2641 = vmul.f32 %v2617, %v2145
    %v2642 = vmul.f32 %v2618, %v2146
    %v2643 = vmul.f32 %v2619, %v2147
    %v2644 = vmul.f32 %v2636, %v2148
    %v2645 = vmul.f32 %v2637, %v2149
    %v2646 = vmul.f32 %v2638, %v2150
    %v2647 = vmul.f32 %v2639, %v2151
    %v2648 = vadd.f32 %v2640, %v2644
    %v2649 = vadd.f32 %v2641, %v2645
    %v2650 = vadd.f32 %v2642, %v2646
    %v2651 = vadd.f32 %v2643, %v2647
    %v2652 = vmul.f32 %v2636, %v2144
    %v2653 = vmul.f32 %v2637, %v2145
    %v2654 = vmul.f32 %v2638, %v2146
    %v2655 = vmul.f32 %v2639, %v2147
    %v2656 = vmul.f32 %v2616, %v2148
    %v2657 = vmul.f32 %v2617, %v2149
    %v2658 = vmul.f32 %v2618, %v2150
    %v2659 = vmul.f32 %v2619, %v2151
    %v2660 = vsub.f32 %v2652, %v2656
    %v2661 = vsub.f32 %v2653, %v2657
    %v2662 = vsub.f32 %v2654, %v2658
    %v2663 = vsub.f32 %v2655, %v2659
    %2664 = vmatpush.msra.mxu0 0.0
    %2665 = vmatpush.msra.mxu0 0.0
    %2666 = vmatpush.msra.mxu0 0.0
    %2667 = vmatpush.msra.mxu0 0.0
    %2668 = vmatpush.msra.mxu0 0.0
    %2669 = vmatpush.msra.mxu0 0.0
    %2670 = vmatpush.msra.mxu0 0.0
    %2671 = vmatpush.msra.mxu0 0.0
    %2672 = vmatpush.msra.mxu0 %v2663
    %2673 = vmatpush.msra.mxu0 %v2662
    %2674 = vmatpush.msra.mxu0 %v2661
    %2675 = vmatpush.msra.mxu0 %v2660
    %2676 = vmatpush.msra.mxu0 %v2651
    %2677 = vmatpush.msra.mxu0 %v2650
    %2678 = vmatpush.msra.mxu0 %v2649
    %2679 = vmatpush.msra.mxu0 %v2648
    %2680 = vmatmul.f32.gmra.mxu0 %v2261
    %v2681 = vpop.f32.mrf.mxu0
    %v2682 = vadd.f32 0.0, %v2681
    %2683 = vmatmul.f32.gmra.mxu0 %v2264
    %v2684 = vpop.f32.mrf.mxu0
    %v2685 = vadd.f32 0.0, %v2684
    %2686 = vmatmul.f32.gmra.mxu0 %v2267
    %v2687 = vpop.f32.mrf.mxu0
    %v2688 = vadd.f32 0.0, %v2687
    %2689 = vmatmul.f32.gmra.mxu0 %v2270
    %v2690 = vpop.f32.mrf.mxu0
    %v2691 = vadd.f32 0.0, %v2690
    %2692 = vmatmul.f32.gmra.mxu0 %v2273
    %v2693 = vpop.f32.mrf.mxu0
    %v2694 = vadd.f32 0.0, %v2693
    %2695 = vmatmul.f32.gmra.mxu0 %v2276
    %v2696 = vpop.f32.mrf.mxu0
    %v2697 = vadd.f32 0.0, %v2696
    %2698 = vmatmul.f32.gmra.mxu0 %v2279
    %v2699 = vpop.f32.mrf.mxu0
    %v2700 = vadd.f32 0.0, %v2699
    %2701 = vmatmul.f32.gmra.mxu0 %v2282
    %v2702 = vpop.f32.mrf.mxu0
    %v2703 = vadd.f32 0.0, %v2702
    %2704 = vdwg.mxu0
    %2709 = vrot.lane.b32.xlu0 %v2694, 32
    %v2710 = vpop.permute.xlu0 %2709
    %2711 = vrot.lane.b32.xlu0 %v2697, 32
    %v2712 = vpop.permute.xlu0 %2711
    %2713 = vrot.lane.b32.xlu0 %v2700, 32
    %v2714 = vpop.permute.xlu0 %2713
    %2715 = vrot.lane.b32.xlu0 %v2703, 32
    %v2716 = vpop.permute.xlu0 %2715
    %v2721 = vsel %vm251, %v2682, %v2710
    %v2722 = vsel %vm251, %v2685, %v2712
    %v2723 = vsel %vm251, %v2688, %v2714
    %v2724 = vsel %vm251, %v2691, %v2716
    %v2726 = vsel %vm2009, %v2721, 0
    %v2729 = vsel %vm2009, %v2722, 0
    %v2732 = vsel %vm2009, %v2723, 0
    %v2735 = vsel %vm2009, %v2724, 0
    %2737 = vmatpush.msra.mxu0 0.0
    %2738 = vmatpush.msra.mxu0 0.0
    %2739 = vmatpush.msra.mxu0 0.0
    %2740 = vmatpush.msra.mxu0 0.0
    %2741 = vmatpush.msra.mxu0 0.0
    %2742 = vmatpush.msra.mxu0 0.0
    %2743 = vmatpush.msra.mxu0 0.0
    %2744 = vmatpush.msra.mxu0 0.0
    %2745 = vmatpush.msra.mxu0 %v2352
    %2746 = vmatpush.msra.mxu0 %v2351
    %2747 = vmatpush.msra.mxu0 %v2350
    %2748 = vmatpush.msra.mxu0 %v2349
    %2749 = vmatpush.msra.mxu0 %v2348
    %2750 = vmatpush.msra.mxu0 %v2347
    %2751 = vmatpush.msra.mxu0 %v2346
    %2752 = vmatpush.msra.mxu0 %v2345
    %2753 = vmatmul.f32.gmra.mxu0 %v2726
    %v2754 = vpop.f32.mrf.mxu0
    %v2755 = vadd.f32 0.0, %v2754
    %2756 = vmatmul.f32.gmra.mxu0 %v2729
    %v2757 = vpop.f32.mrf.mxu0
    %v2758 = vadd.f32 0.0, %v2757
    %2759 = vmatmul.f32.gmra.mxu0 %v2732
    %v2760 = vpop.f32.mrf.mxu0
    %v2761 = vadd.f32 0.0, %v2760
    %2762 = vmatmul.f32.gmra.mxu0 %v2735
    %v2763 = vpop.f32.mrf.mxu0
    %v2764 = vadd.f32 0.0, %v2763
    %2765 = vdwg.mxu0
    %2766 = vst.msk [vmem:[#allocation4] sm:$0xff] %vm251, %v2755
    %2767 = vst.msk [vmem:[#allocation4 + $0x8] sm:$0xff] %vm251, %v2758
    %2768 = vst.msk [vmem:[#allocation4 + $0x10] sm:$0xff] %vm251, %v2761
    %2769 = vst.msk [vmem:[#allocation4 + $0x18] sm:$0xff] %vm251, %v2764
    %2774 = vrot.lane.b32.xlu0 %v2755, 96
    %v2775 = vpop.permute.xlu0 %2774
    %2776 = vrot.lane.b32.xlu0 %v2758, 96
    %v2777 = vpop.permute.xlu0 %2776
    %2778 = vrot.lane.b32.xlu0 %v2761, 96
    %v2779 = vpop.permute.xlu0 %2778
    %2780 = vrot.lane.b32.xlu0 %v2764, 96
    %v2781 = vpop.permute.xlu0 %2780
    %2786 = vst.msk [vmem:[#allocation5] sm:$0xff] %vm251, %v2775
    %2787 = vst.msk [vmem:[#allocation5 + $0x8] sm:$0xff] %vm251, %v2777
    %2788 = vst.msk [vmem:[#allocation5 + $0x10] sm:$0xff] %vm251, %v2779
    %2789 = vst.msk [vmem:[#allocation5 + $0x18] sm:$0xff] %vm251, %v2781
    loop: start=0, step=1, limit=3
    $region117: #{tpu_custom_call.1} parent=1 // loop_pre_header
      _
    $region118: #{tpu_custom_call.1} parent=1 // loop_header
      %s2791 = sphi 0, %s2795
      %p2792 = scmp.ge.s32.totalorder %s2791, 3
    $region119: #{tpu_custom_call.1} parent=1 // loop_header_branch
      %2794 = sbr.rel (%p2792) target = $region123
    $region120: #{tpu_custom_call.1} parent=1 // loop_body
      %s2796 = ssub.s32 2, %s2791
      %v2797 = vld [vmem:[#allocation2] sm:$0xff]
      %v2798 = vld [vmem:[#allocation2 + $0x8] sm:$0xff]
      %v2799 = vld [vmem:[#allocation2 + $0x10] sm:$0xff]
      %v2800 = vld [vmem:[#allocation2 + $0x18] sm:$0xff]
      %v2801 = vld [vmem:[#allocation3] sm:$0xff]
      %v2802 = vld [vmem:[#allocation3 + $0x8] sm:$0xff]
      %v2803 = vld [vmem:[#allocation3 + $0x10] sm:$0xff]
      %v2804 = vld [vmem:[#allocation3 + $0x18] sm:$0xff]
      %v2805 = vld [vmem:[#allocation4] sm:$0xff]
      %v2806 = vld [vmem:[#allocation4 + $0x8] sm:$0xff]
      %v2807 = vld [vmem:[#allocation4 + $0x10] sm:$0xff]
      %v2808 = vld [vmem:[#allocation4 + $0x18] sm:$0xff]
      %v2809 = vld [vmem:[#allocation5] sm:$0xff]
      %v2810 = vld [vmem:[#allocation5 + $0x8] sm:$0xff]
      %v2811 = vld [vmem:[#allocation5 + $0x10] sm:$0xff]
      %v2812 = vld [vmem:[#allocation5 + $0x18] sm:$0xff]
      %s2813 = smul.u32 %s2796, 2
      %s2814 = smul.u32 %s2813, 32
      %s2815 = scalar_lea.vmem [#allocation6], %s2814
      %v2816 = vld [vmem:[%s2815] sm:$0xff]
      %v2817 = vld [vmem:[%s2815 + $0x8] sm:$0xff]
      %v2818 = vld [vmem:[%s2815 + $0x10] sm:$0xff]
      %v2819 = vld [vmem:[%s2815 + $0x18] sm:$0xff]
      %s2820 = sadd.s32 %s2813, 1
      %s2821 = smul.u32 %s2820, 32
      %s2822 = scalar_lea.vmem [#allocation6], %s2821
      %v2823 = vld [vmem:[%s2822] sm:$0xff]
      %v2824 = vld [vmem:[%s2822 + $0x8] sm:$0xff]
      %v2825 = vld [vmem:[%s2822 + $0x10] sm:$0xff]
      %v2826 = vld [vmem:[%s2822 + $0x18] sm:$0xff]
      %v2827 = vmul.f32 %v2823, -40.840706
      %v2828 = vmul.f32 %v2824, -40.840706
      %v2829 = vmul.f32 %v2825, -40.840706
      %v2830 = vmul.f32 %v2826, -40.840706
      %v2831 = vmul.f32 %v2827, 1.442695
      %v2832 = vpow.pop %v2831
      %v2833 = vmul.f32 %v2828, 1.442695
      %v2834 = vpow.pop %v2833
      %v2835 = vmul.f32 %v2829, 1.442695
      %v2836 = vpow.pop %v2835
      %v2837 = vmul.f32 %v2830, 1.442695
      %v2838 = vpow.pop %v2837
      %v2839 = vmul.f32 %v2816, 40.840706
      %v2840 = vmul.f32 %v2817, 40.840706
      %v2841 = vmul.f32 %v2818, 40.840706
      %v2842 = vmul.f32 %v2819, 40.840706
      %v2843 = vand.u32 2147483647, %v2839
      %vm2844 = vcmp.le.f32.partialorder %v2843, 0.7853982
      %vm2845 = vcmp.lt.s32.totalorder %v2839, 0
      %v2846 = vand.u32 %v2839, 2139095040
      %v2847 = vshrl.u32 %v2846, 23
      %v2848 = vsub.s32 %v2847, 127
      %v2849 = vand.u32 2147483647, %v2839
      %v2850 = vand.u32 %v2849, 8388607
      %v2851 = vor.u32 %v2850, 8388608
      %v2852 = vsub.s32 0, %v2851
      %v2853 = vadd.s32 %v2848, 1
      %vm2854 = vcmp.gt.s32.totalorder %v2853, 0
      %v2855 = vsel %vm2854, %v2853, 0
      %v2856 = vshrl.u32 %v2855, 5
      %v2857 = vand.u32 %v2855, 31
      %v2858 = vsub.s32 32, %v2857
      %v2859 = vshrl.u32 683565275, %v2858
      %v2860 = vshll.u32 683565275, %v2857
      %v2861 = vshrl.u32 2475754826, %v2858
      %v2862 = vor.u32 %v2860, %v2861
      %v2863 = vshll.u32 2475754826, %v2857
      %v2864 = vshrl.u32 2131351028, %v2858
      %v2865 = vor.u32 %v2863, %v2864
      %v2866 = vshll.u32 2131351028, %v2857
      %v2867 = vshrl.u32 2102212464, %v2858
      %v2868 = vor.u32 %v2866, %v2867
      %v2869 = vshll.u32 2102212464, %v2857
      %v2870 = vshrl.u32 920167782, %v2858
      %v2871 = vor.u32 %v2869, %v2870
      %v2872 = vshll.u32 920167782, %v2857
      %v2873 = vshrl.u32 1326507024, %v2858
      %v2874 = vor.u32 %v2872, %v2873
      %vm2875 = vcmp.lt.s32.totalorder %v2856, 1
      %vm2876 = vcmp.lt.s32.totalorder %v2856, 2
      %vm2877 = vcmp.lt.s32.totalorder %v2856, 3
      %vm2878 = vcmp.lt.s32.totalorder %v2856, 4
      %v2879 = vsel %vm2875, %v2859, %v2862
      %v2880 = vsel %vm2878, %v2868, 2102212464
      %v2881 = vsel %vm2877, %v2865, %v2880
      %v2882 = vsel %vm2876, %v2879, %v2881
      %v2883 = vsel %vm2875, %v2862, %v2865
      %v2884 = vsel %vm2878, %v2871, 920167782
      %v2885 = vsel %vm2877, %v2868, %v2884
      %v2886 = vsel %vm2876, %v2883, %v2885
      %v2887 = vsel %vm2875, %v2865, %v2868
      %v2888 = vsel %vm2878, %v2874, 1326507024
      %v2889 = vsel %vm2877, %v2871, %v2888
      %v2890 = vsel %vm2876, %v2887, %v2889
      %v2891 = vshll.u32 %v2851, 8
      %v2892 = vand.u32 %v2891, 65535
      %v2893 = vshrl.u32 %v2891, 16
      %v2894 = vand.u32 %v2890, 65535
      %v2895 = vshrl.u32 %v2890, 16
      %v2896 = vmul.u32 %v2892, %v2894
      %v2897 = vmul.u32 %v2892, %v2895
      %v2898 = vmul.u32 %v2893, %v2894
      %v2899 = vmul.u32 %v2893, %v2895
      %v2900 = vshll.u32 %v2897, 16
      %v2901 = vshrl.u32 %v2897, 16
      %v2902 = vshll.u32 %v2898, 16
      %v2903 = vshrl.u32 %v2898, 16
      %vm2904 = vc.u32 %v2896, %v2900
      %v2905 = vsel %vm2904, 1, 0
      %v2906 = vadd.s32 %v2896, %v2900
      %v2907 = vadd.s32 %v2899, %v2905
      %vm2908 = vc.u32 %v2906, %v2902
      %v2909 = vsel %vm2908, 1, 0
      %v2910 = vadd.s32 %v2906, %v2902
      %v2911 = vadd.s32 %v2907, %v2909
      %v2912 = vadd.s32 %v2911, %v2901
      %v2913 = vadd.s32 %v2912, %v2903
      %v2914 = vand.u32 %v2891, 65535
      %v2915 = vshrl.u32 %v2891, 16
      %v2916 = vand.u32 %v2886, 65535
      %v2917 = vshrl.u32 %v2886, 16
      %v2918 = vmul.u32 %v2914, %v2916
      %v2919 = vmul.u32 %v2914, %v2917
      %v2920 = vmul.u32 %v2915, %v2916
      %v2921 = vmul.u32 %v2915, %v2917
      %v2922 = vshll.u32 %v2919, 16
      %v2923 = vshrl.u32 %v2919, 16
      %v2924 = vshll.u32 %v2920, 16
      %v2925 = vshrl.u32 %v2920, 16
      %vm2926 = vc.u32 %v2918, %v2922
      %v2927 = vsel %vm2926, 1, 0
      %v2928 = vadd.s32 %v2918, %v2922
      %v2929 = vadd.s32 %v2921, %v2927
      %vm2930 = vc.u32 %v2928, %v2924
      %v2931 = vsel %vm2930, 1, 0
      %v2932 = vadd.s32 %v2928, %v2924
      %v2933 = vadd.s32 %v2929, %v2931
      %v2934 = vadd.s32 %v2933, %v2923
      %v2935 = vadd.s32 %v2934, %v2925
      %v2936 = vmul.u32 %v2891, %v2882
      %v2937 = vadd.s32 %v2913, %v2932
      %vm2938 = vc.u32 %v2913, %v2932
      %v2939 = vadd.s32 %v2935, 1
      %v2940 = vsel %vm2938, %v2939, %v2935
      %v2941 = vadd.s32 %v2936, %v2940
      %v2942 = vadd.s32 %v2941, 536870912
      %v2943 = vshrl.u32 %v2942, 30
      %v2944 = vshll.u32 %v2943, 30
      %v2945 = vsub.s32 %v2941, %v2944
      %vm2946 = vcmp.lt.s32.totalorder %v2945, 0
      %v2947 = vsub.s32 0, %v2945
      %v2948 = vsel %vm2946, %v2947, %v2945
      %v2949 = vclz %v2948
      %v2950 = vsub.s32 %v2949, 2
      %vm2951 = vcmp.gt.s32.totalorder 0, %v2950
      %v2952 = vsel %vm2951, 0, %v2950
      %v2953 = vsub.s32 32, %v2952
      %v2954 = vshll.u32 %v2945, %v2952
      %v2955 = vshrl.u32 %v2937, %v2953
      %v2956 = vor.u32 %v2954, %v2955
      %v2957 = vsub.s32 4294967266, %v2952
      %v2958 = vadd.s32 %v2957, 127
      %v2959 = vshll.u32 %v2958, 23
      %v2960 = vor.u32 4788187, %v2959
      %v2961 = vand.u32 2147483647, %v2960
      %v2963 = vcvt.s32.f32 %v2956
      %v2964 = vmul.f32 %v2963, %v2961
      %v2965 = vxor.u32 %v2964, 2147483648
      %v2966 = vsel %vm2845, %v2965, %v2964
      %v2967 = vsub.s32 4, %v2943
      %v2968 = vsel %vm2845, %v2967, %v2943
      %v2969 = vsel %vm2844, %v2839, %v2966
      %v2970 = vsel %vm2844, 0, %v2968
      %v2971 = vmul.f32 %v2969, %v2969
      %v2972 = vmul.f32 %v2971, -0.001358992
      %v2973 = vadd.f32 %v2972, 0.041655596
      %v2974 = vmul.f32 %v2971, %v2973
      %v2975 = vadd.f32 %v2974, -0.4999988
      %v2976 = vmul.f32 %v2971, %v2975
      %v2977 = vadd.f32 1.0, %v2976
      %v2978 = vmul.f32 %v2969, %v2969
      %v2979 = vmul.f32 %v2978, -0.00019511016
      %v2980 = vadd.f32 %v2979, 0.008332121
      %v2981 = vmul.f32 %v2978, %v2980
      %v2982 = vadd.f32 %v2981, -0.16666654
      %v2983 = vmul.f32 %v2978, %v2982
      %v2984 = vadd.f32 %v2983, 1.0
      %v2985 = vmul.f32 %v2984, %v2969
      %vm2986 = vweird.f32 %v2839
      %v2987 = vand.u32 %v2970, 3
      %vm2988 = vcmp.lt.s32.totalorder %v2987, 2
      %vm2989 = vcmp.eq.s32.totalorder %v2987, 0
      %v2990 = vxor.u32 %v2985, 2147483648
      %v2991 = vsel %vm2989, %v2977, %v2990
      %vm2992 = vcmp.eq.s32.totalorder %v2987, 2
      %v2993 = vxor.u32 %v2977, 2147483648
      %v2994 = vsel %vm2992, %v2993, %v2985
      %v2995 = vsel %vm2988, %v2991, %v2994
      %v2996 = vsel %vm2986, nan, %v2995
      %v2997 = vand.u32 2147483647, %v2840
      %vm2998 = vcmp.le.f32.partialorder %v2997, 0.7853982
      %vm2999 = vcmp.lt.s32.totalorder %v2840, 0
      %v3000 = vand.u32 %v2840, 2139095040
      %v3001 = vshrl.u32 %v3000, 23
      %v3002 = vsub.s32 %v3001, 127
      %v3003 = vand.u32 2147483647, %v2840
      %v3004 = vand.u32 %v3003, 8388607
      %v3005 = vor.u32 %v3004, 8388608
      %v3006 = vsub.s32 0, %v3005
      %v3007 = vadd.s32 %v3002, 1
      %vm3008 = vcmp.gt.s32.totalorder %v3007, 0
      %v3009 = vsel %vm3008, %v3007, 0
      %v3010 = vshrl.u32 %v3009, 5
      %v3011 = vand.u32 %v3009, 31
      %v3012 = vsub.s32 32, %v3011
      %v3013 = vshrl.u32 683565275, %v3012
      %v3014 = vshll.u32 683565275, %v3011
      %v3015 = vshrl.u32 2475754826, %v3012
      %v3016 = vor.u32 %v3014, %v3015
      %v3017 = vshll.u32 2475754826, %v3011
      %v3018 = vshrl.u32 2131351028, %v3012
      %v3019 = vor.u32 %v3017, %v3018
      %v3020 = vshll.u32 2131351028, %v3011
      %v3021 = vshrl.u32 2102212464, %v3012
      %v3022 = vor.u32 %v3020, %v3021
      %v3023 = vshll.u32 2102212464, %v3011
      %v3024 = vshrl.u32 920167782, %v3012
      %v3025 = vor.u32 %v3023, %v3024
      %v3026 = vshll.u32 920167782, %v3011
      %v3027 = vshrl.u32 1326507024, %v3012
      %v3028 = vor.u32 %v3026, %v3027
      %vm3029 = vcmp.lt.s32.totalorder %v3010, 1
      %vm3030 = vcmp.lt.s32.totalorder %v3010, 2
      %vm3031 = vcmp.lt.s32.totalorder %v3010, 3
      %vm3032 = vcmp.lt.s32.totalorder %v3010, 4
      %v3033 = vsel %vm3029, %v3013, %v3016
      %v3034 = vsel %vm3032, %v3022, 2102212464
      %v3035 = vsel %vm3031, %v3019, %v3034
      %v3036 = vsel %vm3030, %v3033, %v3035
      %v3037 = vsel %vm3029, %v3016, %v3019
      %v3038 = vsel %vm3032, %v3025, 920167782
      %v3039 = vsel %vm3031, %v3022, %v3038
      %v3040 = vsel %vm3030, %v3037, %v3039
      %v3041 = vsel %vm3029, %v3019, %v3022
      %v3042 = vsel %vm3032, %v3028, 1326507024
      %v3043 = vsel %vm3031, %v3025, %v3042
      %v3044 = vsel %vm3030, %v3041, %v3043
      %v3045 = vshll.u32 %v3005, 8
      %v3046 = vand.u32 %v3045, 65535
      %v3047 = vshrl.u32 %v3045, 16
      %v3048 = vand.u32 %v3044, 65535
      %v3049 = vshrl.u32 %v3044, 16
      %v3050 = vmul.u32 %v3046, %v3048
      %v3051 = vmul.u32 %v3046, %v3049
      %v3052 = vmul.u32 %v3047, %v3048
      %v3053 = vmul.u32 %v3047, %v3049
      %v3054 = vshll.u32 %v3051, 16
      %v3055 = vshrl.u32 %v3051, 16
      %v3056 = vshll.u32 %v3052, 16
      %v3057 = vshrl.u32 %v3052, 16
      %vm3058 = vc.u32 %v3050, %v3054
      %v3059 = vsel %vm3058, 1, 0
      %v3060 = vadd.s32 %v3050, %v3054
      %v3061 = vadd.s32 %v3053, %v3059
      %vm3062 = vc.u32 %v3060, %v3056
      %v3063 = vsel %vm3062, 1, 0
      %v3064 = vadd.s32 %v3060, %v3056
      %v3065 = vadd.s32 %v3061, %v3063
      %v3066 = vadd.s32 %v3065, %v3055
      %v3067 = vadd.s32 %v3066, %v3057
      %v3068 = vand.u32 %v3045, 65535
      %v3069 = vshrl.u32 %v3045, 16
      %v3070 = vand.u32 %v3040, 65535
      %v3071 = vshrl.u32 %v3040, 16
      %v3072 = vmul.u32 %v3068, %v3070
      %v3073 = vmul.u32 %v3068, %v3071
      %v3074 = vmul.u32 %v3069, %v3070
      %v3075 = vmul.u32 %v3069, %v3071
      %v3076 = vshll.u32 %v3073, 16
      %v3077 = vshrl.u32 %v3073, 16
      %v3078 = vshll.u32 %v3074, 16
      %v3079 = vshrl.u32 %v3074, 16
      %vm3080 = vc.u32 %v3072, %v3076
      %v3081 = vsel %vm3080, 1, 0
      %v3082 = vadd.s32 %v3072, %v3076
      %v3083 = vadd.s32 %v3075, %v3081
      %vm3084 = vc.u32 %v3082, %v3078
      %v3085 = vsel %vm3084, 1, 0
      %v3086 = vadd.s32 %v3082, %v3078
      %v3087 = vadd.s32 %v3083, %v3085
      %v3088 = vadd.s32 %v3087, %v3077
      %v3089 = vadd.s32 %v3088, %v3079
      %v3090 = vmul.u32 %v3045, %v3036
      %v3091 = vadd.s32 %v3067, %v3086
      %vm3092 = vc.u32 %v3067, %v3086
      %v3093 = vadd.s32 %v3089, 1
      %v3094 = vsel %vm3092, %v3093, %v3089
      %v3095 = vadd.s32 %v3090, %v3094
      %v3096 = vadd.s32 %v3095, 536870912
      %v3097 = vshrl.u32 %v3096, 30
      %v3098 = vshll.u32 %v3097, 30
      %v3099 = vsub.s32 %v3095, %v3098
      %vm3100 = vcmp.lt.s32.totalorder %v3099, 0
      %v3101 = vsub.s32 0, %v3099
      %v3102 = vsel %vm3100, %v3101, %v3099
      %v3103 = vclz %v3102
      %v3104 = vsub.s32 %v3103, 2
      %vm3105 = vcmp.gt.s32.totalorder 0, %v3104
      %v3106 = vsel %vm3105, 0, %v3104
      %v3107 = vsub.s32 32, %v3106
      %v3108 = vshll.u32 %v3099, %v3106
      %v3109 = vshrl.u32 %v3091, %v3107
      %v3110 = vor.u32 %v3108, %v3109
      %v3111 = vsub.s32 4294967266, %v3106
      %v3112 = vadd.s32 %v3111, 127
      %v3113 = vshll.u32 %v3112, 23
      %v3114 = vor.u32 4788187, %v3113
      %v3115 = vand.u32 2147483647, %v3114
      %v3117 = vcvt.s32.f32 %v3110
      %v3118 = vmul.f32 %v3117, %v3115
      %v3119 = vxor.u32 %v3118, 2147483648
      %v3120 = vsel %vm2999, %v3119, %v3118
      %v3121 = vsub.s32 4, %v3097
      %v3122 = vsel %vm2999, %v3121, %v3097
      %v3123 = vsel %vm2998, %v2840, %v3120
      %v3124 = vsel %vm2998, 0, %v3122
      %v3125 = vmul.f32 %v3123, %v3123
      %v3126 = vmul.f32 %v3125, -0.001358992
      %v3127 = vadd.f32 %v3126, 0.041655596
      %v3128 = vmul.f32 %v3125, %v3127
      %v3129 = vadd.f32 %v3128, -0.4999988
      %v3130 = vmul.f32 %v3125, %v3129
      %v3131 = vadd.f32 1.0, %v3130
      %v3132 = vmul.f32 %v3123, %v3123
      %v3133 = vmul.f32 %v3132, -0.00019511016
      %v3134 = vadd.f32 %v3133, 0.008332121
      %v3135 = vmul.f32 %v3132, %v3134
      %v3136 = vadd.f32 %v3135, -0.16666654
      %v3137 = vmul.f32 %v3132, %v3136
      %v3138 = vadd.f32 %v3137, 1.0
      %v3139 = vmul.f32 %v3138, %v3123
      %vm3140 = vweird.f32 %v2840
      %v3141 = vand.u32 %v3124, 3
      %vm3142 = vcmp.lt.s32.totalorder %v3141, 2
      %vm3143 = vcmp.eq.s32.totalorder %v3141, 0
      %v3144 = vxor.u32 %v3139, 2147483648
      %v3145 = vsel %vm3143, %v3131, %v3144
      %vm3146 = vcmp.eq.s32.totalorder %v3141, 2
      %v3147 = vxor.u32 %v3131, 2147483648
      %v3148 = vsel %vm3146, %v3147, %v3139
      %v3149 = vsel %vm3142, %v3145, %v3148
      %v3150 = vsel %vm3140, nan, %v3149
      %v3151 = vand.u32 2147483647, %v2841
      %vm3152 = vcmp.le.f32.partialorder %v3151, 0.7853982
      %vm3153 = vcmp.lt.s32.totalorder %v2841, 0
      %v3154 = vand.u32 %v2841, 2139095040
      %v3155 = vshrl.u32 %v3154, 23
      %v3156 = vsub.s32 %v3155, 127
      %v3157 = vand.u32 2147483647, %v2841
      %v3158 = vand.u32 %v3157, 8388607
      %v3159 = vor.u32 %v3158, 8388608
      %v3160 = vsub.s32 0, %v3159
      %v3161 = vadd.s32 %v3156, 1
      %vm3162 = vcmp.gt.s32.totalorder %v3161, 0
      %v3163 = vsel %vm3162, %v3161, 0
      %v3164 = vshrl.u32 %v3163, 5
      %v3165 = vand.u32 %v3163, 31
      %v3166 = vsub.s32 32, %v3165
      %v3167 = vshrl.u32 683565275, %v3166
      %v3168 = vshll.u32 683565275, %v3165
      %v3169 = vshrl.u32 2475754826, %v3166
      %v3170 = vor.u32 %v3168, %v3169
      %v3171 = vshll.u32 2475754826, %v3165
      %v3172 = vshrl.u32 2131351028, %v3166
      %v3173 = vor.u32 %v3171, %v3172
      %v3174 = vshll.u32 2131351028, %v3165
      %v3175 = vshrl.u32 2102212464, %v3166
      %v3176 = vor.u32 %v3174, %v3175
      %v3177 = vshll.u32 2102212464, %v3165
      %v3178 = vshrl.u32 920167782, %v3166
      %v3179 = vor.u32 %v3177, %v3178
      %v3180 = vshll.u32 920167782, %v3165
      %v3181 = vshrl.u32 1326507024, %v3166
      %v3182 = vor.u32 %v3180, %v3181
      %vm3183 = vcmp.lt.s32.totalorder %v3164, 1
      %vm3184 = vcmp.lt.s32.totalorder %v3164, 2
      %vm3185 = vcmp.lt.s32.totalorder %v3164, 3
      %vm3186 = vcmp.lt.s32.totalorder %v3164, 4
      %v3187 = vsel %vm3183, %v3167, %v3170
      %v3188 = vsel %vm3186, %v3176, 2102212464
      %v3189 = vsel %vm3185, %v3173, %v3188
      %v3190 = vsel %vm3184, %v3187, %v3189
      %v3191 = vsel %vm3183, %v3170, %v3173
      %v3192 = vsel %vm3186, %v3179, 920167782
      %v3193 = vsel %vm3185, %v3176, %v3192
      %v3194 = vsel %vm3184, %v3191, %v3193
      %v3195 = vsel %vm3183, %v3173, %v3176
      %v3196 = vsel %vm3186, %v3182, 1326507024
      %v3197 = vsel %vm3185, %v3179, %v3196
      %v3198 = vsel %vm3184, %v3195, %v3197
      %v3199 = vshll.u32 %v3159, 8
      %v3200 = vand.u32 %v3199, 65535
      %v3201 = vshrl.u32 %v3199, 16
      %v3202 = vand.u32 %v3198, 65535
      %v3203 = vshrl.u32 %v3198, 16
      %v3204 = vmul.u32 %v3200, %v3202
      %v3205 = vmul.u32 %v3200, %v3203
      %v3206 = vmul.u32 %v3201, %v3202
      %v3207 = vmul.u32 %v3201, %v3203
      %v3208 = vshll.u32 %v3205, 16
      %v3209 = vshrl.u32 %v3205, 16
      %v3210 = vshll.u32 %v3206, 16
      %v3211 = vshrl.u32 %v3206, 16
      %vm3212 = vc.u32 %v3204, %v3208
      %v3213 = vsel %vm3212, 1, 0
      %v3214 = vadd.s32 %v3204, %v3208
      %v3215 = vadd.s32 %v3207, %v3213
      %vm3216 = vc.u32 %v3214, %v3210
      %v3217 = vsel %vm3216, 1, 0
      %v3218 = vadd.s32 %v3214, %v3210
      %v3219 = vadd.s32 %v3215, %v3217
      %v3220 = vadd.s32 %v3219, %v3209
      %v3221 = vadd.s32 %v3220, %v3211
      %v3222 = vand.u32 %v3199, 65535
      %v3223 = vshrl.u32 %v3199, 16
      %v3224 = vand.u32 %v3194, 65535
      %v3225 = vshrl.u32 %v3194, 16
      %v3226 = vmul.u32 %v3222, %v3224
      %v3227 = vmul.u32 %v3222, %v3225
      %v3228 = vmul.u32 %v3223, %v3224
      %v3229 = vmul.u32 %v3223, %v3225
      %v3230 = vshll.u32 %v3227, 16
      %v3231 = vshrl.u32 %v3227, 16
      %v3232 = vshll.u32 %v3228, 16
      %v3233 = vshrl.u32 %v3228, 16
      %vm3234 = vc.u32 %v3226, %v3230
      %v3235 = vsel %vm3234, 1, 0
      %v3236 = vadd.s32 %v3226, %v3230
      %v3237 = vadd.s32 %v3229, %v3235
      %vm3238 = vc.u32 %v3236, %v3232
      %v3239 = vsel %vm3238, 1, 0
      %v3240 = vadd.s32 %v3236, %v3232
      %v3241 = vadd.s32 %v3237, %v3239
      %v3242 = vadd.s32 %v3241, %v3231
      %v3243 = vadd.s32 %v3242, %v3233
      %v3244 = vmul.u32 %v3199, %v3190
      %v3245 = vadd.s32 %v3221, %v3240
      %vm3246 = vc.u32 %v3221, %v3240
      %v3247 = vadd.s32 %v3243, 1
      %v3248 = vsel %vm3246, %v3247, %v3243
      %v3249 = vadd.s32 %v3244, %v3248
      %v3250 = vadd.s32 %v3249, 536870912
      %v3251 = vshrl.u32 %v3250, 30
      %v3252 = vshll.u32 %v3251, 30
      %v3253 = vsub.s32 %v3249, %v3252
      %vm3254 = vcmp.lt.s32.totalorder %v3253, 0
      %v3255 = vsub.s32 0, %v3253
      %v3256 = vsel %vm3254, %v3255, %v3253
      %v3257 = vclz %v3256
      %v3258 = vsub.s32 %v3257, 2
      %vm3259 = vcmp.gt.s32.totalorder 0, %v3258
      %v3260 = vsel %vm3259, 0, %v3258
      %v3261 = vsub.s32 32, %v3260
      %v3262 = vshll.u32 %v3253, %v3260
      %v3263 = vshrl.u32 %v3245, %v3261
      %v3264 = vor.u32 %v3262, %v3263
      %v3265 = vsub.s32 4294967266, %v3260
      %v3266 = vadd.s32 %v3265, 127
      %v3267 = vshll.u32 %v3266, 23
      %v3268 = vor.u32 4788187, %v3267
      %v3269 = vand.u32 2147483647, %v3268
      %v3271 = vcvt.s32.f32 %v3264
      %v3272 = vmul.f32 %v3271, %v3269
      %v3273 = vxor.u32 %v3272, 2147483648
      %v3274 = vsel %vm3153, %v3273, %v3272
      %v3275 = vsub.s32 4, %v3251
      %v3276 = vsel %vm3153, %v3275, %v3251
      %v3277 = vsel %vm3152, %v2841, %v3274
      %v3278 = vsel %vm3152, 0, %v3276
      %v3279 = vmul.f32 %v3277, %v3277
      %v3280 = vmul.f32 %v3279, -0.001358992
      %v3281 = vadd.f32 %v3280, 0.041655596
      %v3282 = vmul.f32 %v3279, %v3281
      %v3283 = vadd.f32 %v3282, -0.4999988
      %v3284 = vmul.f32 %v3279, %v3283
      %v3285 = vadd.f32 1.0, %v3284
      %v3286 = vmul.f32 %v3277, %v3277
      %v3287 = vmul.f32 %v3286, -0.00019511016
      %v3288 = vadd.f32 %v3287, 0.008332121
      %v3289 = vmul.f32 %v3286, %v3288
      %v3290 = vadd.f32 %v3289, -0.16666654
      %v3291 = vmul.f32 %v3286, %v3290
      %v3292 = vadd.f32 %v3291, 1.0
      %v3293 = vmul.f32 %v3292, %v3277
      %vm3294 = vweird.f32 %v2841
      %v3295 = vand.u32 %v3278, 3
      %vm3296 = vcmp.lt.s32.totalorder %v3295, 2
      %vm3297 = vcmp.eq.s32.totalorder %v3295, 0
      %v3298 = vxor.u32 %v3293, 2147483648
      %v3299 = vsel %vm3297, %v3285, %v3298
      %vm3300 = vcmp.eq.s32.totalorder %v3295, 2
      %v3301 = vxor.u32 %v3285, 2147483648
      %v3302 = vsel %vm3300, %v3301, %v3293
      %v3303 = vsel %vm3296, %v3299, %v3302
      %v3304 = vsel %vm3294, nan, %v3303
      %v3305 = vand.u32 2147483647, %v2842
      %vm3306 = vcmp.le.f32.partialorder %v3305, 0.7853982
      %vm3307 = vcmp.lt.s32.totalorder %v2842, 0
      %v3308 = vand.u32 %v2842, 2139095040
      %v3309 = vshrl.u32 %v3308, 23
      %v3310 = vsub.s32 %v3309, 127
      %v3311 = vand.u32 2147483647, %v2842
      %v3312 = vand.u32 %v3311, 8388607
      %v3313 = vor.u32 %v3312, 8388608
      %v3314 = vsub.s32 0, %v3313
      %v3315 = vadd.s32 %v3310, 1
      %vm3316 = vcmp.gt.s32.totalorder %v3315, 0
      %v3317 = vsel %vm3316, %v3315, 0
      %v3318 = vshrl.u32 %v3317, 5
      %v3319 = vand.u32 %v3317, 31
      %v3320 = vsub.s32 32, %v3319
      %v3321 = vshrl.u32 683565275, %v3320
      %v3322 = vshll.u32 683565275, %v3319
      %v3323 = vshrl.u32 2475754826, %v3320
      %v3324 = vor.u32 %v3322, %v3323
      %v3325 = vshll.u32 2475754826, %v3319
      %v3326 = vshrl.u32 2131351028, %v3320
      %v3327 = vor.u32 %v3325, %v3326
      %v3328 = vshll.u32 2131351028, %v3319
      %v3329 = vshrl.u32 2102212464, %v3320
      %v3330 = vor.u32 %v3328, %v3329
      %v3331 = vshll.u32 2102212464, %v3319
      %v3332 = vshrl.u32 920167782, %v3320
      %v3333 = vor.u32 %v3331, %v3332
      %v3334 = vshll.u32 920167782, %v3319
      %v3335 = vshrl.u32 1326507024, %v3320
      %v3336 = vor.u32 %v3334, %v3335
      %vm3337 = vcmp.lt.s32.totalorder %v3318, 1
      %vm3338 = vcmp.lt.s32.totalorder %v3318, 2
      %vm3339 = vcmp.lt.s32.totalorder %v3318, 3
      %vm3340 = vcmp.lt.s32.totalorder %v3318, 4
      %v3341 = vsel %vm3337, %v3321, %v3324
      %v3342 = vsel %vm3340, %v3330, 2102212464
      %v3343 = vsel %vm3339, %v3327, %v3342
      %v3344 = vsel %vm3338, %v3341, %v3343
      %v3345 = vsel %vm3337, %v3324, %v3327
      %v3346 = vsel %vm3340, %v3333, 920167782
      %v3347 = vsel %vm3339, %v3330, %v3346
      %v3348 = vsel %vm3338, %v3345, %v3347
      %v3349 = vsel %vm3337, %v3327, %v3330
      %v3350 = vsel %vm3340, %v3336, 1326507024
      %v3351 = vsel %vm3339, %v3333, %v3350
      %v3352 = vsel %vm3338, %v3349, %v3351
      %v3353 = vshll.u32 %v3313, 8
      %v3354 = vand.u32 %v3353, 65535
      %v3355 = vshrl.u32 %v3353, 16
      %v3356 = vand.u32 %v3352, 65535
      %v3357 = vshrl.u32 %v3352, 16
      %v3358 = vmul.u32 %v3354, %v3356
      %v3359 = vmul.u32 %v3354, %v3357
      %v3360 = vmul.u32 %v3355, %v3356
      %v3361 = vmul.u32 %v3355, %v3357
      %v3362 = vshll.u32 %v3359, 16
      %v3363 = vshrl.u32 %v3359, 16
      %v3364 = vshll.u32 %v3360, 16
      %v3365 = vshrl.u32 %v3360, 16
      %vm3366 = vc.u32 %v3358, %v3362
      %v3367 = vsel %vm3366, 1, 0
      %v3368 = vadd.s32 %v3358, %v3362
      %v3369 = vadd.s32 %v3361, %v3367
      %vm3370 = vc.u32 %v3368, %v3364
      %v3371 = vsel %vm3370, 1, 0
      %v3372 = vadd.s32 %v3368, %v3364
      %v3373 = vadd.s32 %v3369, %v3371
      %v3374 = vadd.s32 %v3373, %v3363
      %v3375 = vadd.s32 %v3374, %v3365
      %v3376 = vand.u32 %v3353, 65535
      %v3377 = vshrl.u32 %v3353, 16
      %v3378 = vand.u32 %v3348, 65535
      %v3379 = vshrl.u32 %v3348, 16
      %v3380 = vmul.u32 %v3376, %v3378
      %v3381 = vmul.u32 %v3376, %v3379
      %v3382 = vmul.u32 %v3377, %v3378
      %v3383 = vmul.u32 %v3377, %v3379
      %v3384 = vshll.u32 %v3381, 16
      %v3385 = vshrl.u32 %v3381, 16
      %v3386 = vshll.u32 %v3382, 16
      %v3387 = vshrl.u32 %v3382, 16
      %vm3388 = vc.u32 %v3380, %v3384
      %v3389 = vsel %vm3388, 1, 0
      %v3390 = vadd.s32 %v3380, %v3384
      %v3391 = vadd.s32 %v3383, %v3389
      %vm3392 = vc.u32 %v3390, %v3386
      %v3393 = vsel %vm3392, 1, 0
      %v3394 = vadd.s32 %v3390, %v3386
      %v3395 = vadd.s32 %v3391, %v3393
      %v3396 = vadd.s32 %v3395, %v3385
      %v3397 = vadd.s32 %v3396, %v3387
      %v3398 = vmul.u32 %v3353, %v3344
      %v3399 = vadd.s32 %v3375, %v3394
      %vm3400 = vc.u32 %v3375, %v3394
      %v3401 = vadd.s32 %v3397, 1
      %v3402 = vsel %vm3400, %v3401, %v3397
      %v3403 = vadd.s32 %v3398, %v3402
      %v3404 = vadd.s32 %v3403, 536870912
      %v3405 = vshrl.u32 %v3404, 30
      %v3406 = vshll.u32 %v3405, 30
      %v3407 = vsub.s32 %v3403, %v3406
      %vm3408 = vcmp.lt.s32.totalorder %v3407, 0
      %v3409 = vsub.s32 0, %v3407
      %v3410 = vsel %vm3408, %v3409, %v3407
      %v3411 = vclz %v3410
      %v3412 = vsub.s32 %v3411, 2
      %vm3413 = vcmp.gt.s32.totalorder 0, %v3412
      %v3414 = vsel %vm3413, 0, %v3412
      %v3415 = vsub.s32 32, %v3414
      %v3416 = vshll.u32 %v3407, %v3414
      %v3417 = vshrl.u32 %v3399, %v3415
      %v3418 = vor.u32 %v3416, %v3417
      %v3419 = vsub.s32 4294967266, %v3414
      %v3420 = vadd.s32 %v3419, 127
      %v3421 = vshll.u32 %v3420, 23
      %v3422 = vor.u32 4788187, %v3421
      %v3423 = vand.u32 2147483647, %v3422
      %v3425 = vcvt.s32.f32 %v3418
      %v3426 = vmul.f32 %v3425, %v3423
      %v3427 = vxor.u32 %v3426, 2147483648
      %v3428 = vsel %vm3307, %v3427, %v3426
      %v3429 = vsub.s32 4, %v3405
      %v3430 = vsel %vm3307, %v3429, %v3405
      %v3431 = vsel %vm3306, %v2842, %v3428
      %v3432 = vsel %vm3306, 0, %v3430
      %v3433 = vmul.f32 %v3431, %v3431
      %v3434 = vmul.f32 %v3433, -0.001358992
      %v3435 = vadd.f32 %v3434, 0.041655596
      %v3436 = vmul.f32 %v3433, %v3435
      %v3437 = vadd.f32 %v3436, -0.4999988
      %v3438 = vmul.f32 %v3433, %v3437
      %v3439 = vadd.f32 1.0, %v3438
      %v3440 = vmul.f32 %v3431, %v3431
      %v3441 = vmul.f32 %v3440, -0.00019511016
      %v3442 = vadd.f32 %v3441, 0.008332121
      %v3443 = vmul.f32 %v3440, %v3442
      %v3444 = vadd.f32 %v3443, -0.16666654
      %v3445 = vmul.f32 %v3440, %v3444
      %v3446 = vadd.f32 %v3445, 1.0
      %v3447 = vmul.f32 %v3446, %v3431
      %vm3448 = vweird.f32 %v2842
      %v3449 = vand.u32 %v3432, 3
      %vm3450 = vcmp.lt.s32.totalorder %v3449, 2
      %vm3451 = vcmp.eq.s32.totalorder %v3449, 0
      %v3452 = vxor.u32 %v3447, 2147483648
      %v3453 = vsel %vm3451, %v3439, %v3452
      %vm3454 = vcmp.eq.s32.totalorder %v3449, 2
      %v3455 = vxor.u32 %v3439, 2147483648
      %v3456 = vsel %vm3454, %v3455, %v3447
      %v3457 = vsel %vm3450, %v3453, %v3456
      %v3458 = vsel %vm3448, nan, %v3457
      %v3459 = vmul.f32 %v2832, %v2996
      %v3460 = vmul.f32 %v2834, %v3150
      %v3461 = vmul.f32 %v2836, %v3304
      %v3462 = vmul.f32 %v2838, %v3458
      %v3463 = vand.u32 2147483647, %v2839
      %vm3464 = vcmp.le.f32.partialorder %v3463, 0.7853982
      %vm3465 = vcmp.lt.s32.totalorder %v2839, 0
      %v3466 = vand.u32 %v2839, 2139095040
      %v3467 = vshrl.u32 %v3466, 23
      %v3468 = vsub.s32 %v3467, 127
      %v3469 = vand.u32 2147483647, %v2839
      %v3470 = vand.u32 %v3469, 8388607
      %v3471 = vor.u32 %v3470, 8388608
      %v3472 = vsub.s32 0, %v3471
      %v3473 = vadd.s32 %v3468, 1
      %vm3474 = vcmp.gt.s32.totalorder %v3473, 0
      %v3475 = vsel %vm3474, %v3473, 0
      %v3476 = vshrl.u32 %v3475, 5
      %v3477 = vand.u32 %v3475, 31
      %v3478 = vsub.s32 32, %v3477
      %v3479 = vshrl.u32 683565275, %v3478
      %v3480 = vshll.u32 683565275, %v3477
      %v3481 = vshrl.u32 2475754826, %v3478
      %v3482 = vor.u32 %v3480, %v3481
      %v3483 = vshll.u32 2475754826, %v3477
      %v3484 = vshrl.u32 2131351028, %v3478
      %v3485 = vor.u32 %v3483, %v3484
      %v3486 = vshll.u32 2131351028, %v3477
      %v3487 = vshrl.u32 2102212464, %v3478
      %v3488 = vor.u32 %v3486, %v3487
      %v3489 = vshll.u32 2102212464, %v3477
      %v3490 = vshrl.u32 920167782, %v3478
      %v3491 = vor.u32 %v3489, %v3490
      %v3492 = vshll.u32 920167782, %v3477
      %v3493 = vshrl.u32 1326507024, %v3478
      %v3494 = vor.u32 %v3492, %v3493
      %vm3495 = vcmp.lt.s32.totalorder %v3476, 1
      %vm3496 = vcmp.lt.s32.totalorder %v3476, 2
      %vm3497 = vcmp.lt.s32.totalorder %v3476, 3
      %vm3498 = vcmp.lt.s32.totalorder %v3476, 4
      %v3499 = vsel %vm3495, %v3479, %v3482
      %v3500 = vsel %vm3498, %v3488, 2102212464
      %v3501 = vsel %vm3497, %v3485, %v3500
      %v3502 = vsel %vm3496, %v3499, %v3501
      %v3503 = vsel %vm3495, %v3482, %v3485
      %v3504 = vsel %vm3498, %v3491, 920167782
      %v3505 = vsel %vm3497, %v3488, %v3504
      %v3506 = vsel %vm3496, %v3503, %v3505
      %v3507 = vsel %vm3495, %v3485, %v3488
      %v3508 = vsel %vm3498, %v3494, 1326507024
      %v3509 = vsel %vm3497, %v3491, %v3508
      %v3510 = vsel %vm3496, %v3507, %v3509
      %v3511 = vshll.u32 %v3471, 8
      %v3512 = vand.u32 %v3511, 65535
      %v3513 = vshrl.u32 %v3511, 16
      %v3514 = vand.u32 %v3510, 65535
      %v3515 = vshrl.u32 %v3510, 16
      %v3516 = vmul.u32 %v3512, %v3514
      %v3517 = vmul.u32 %v3512, %v3515
      %v3518 = vmul.u32 %v3513, %v3514
      %v3519 = vmul.u32 %v3513, %v3515
      %v3520 = vshll.u32 %v3517, 16
      %v3521 = vshrl.u32 %v3517, 16
      %v3522 = vshll.u32 %v3518, 16
      %v3523 = vshrl.u32 %v3518, 16
      %vm3524 = vc.u32 %v3516, %v3520
      %v3525 = vsel %vm3524, 1, 0
      %v3526 = vadd.s32 %v3516, %v3520
      %v3527 = vadd.s32 %v3519, %v3525
      %vm3528 = vc.u32 %v3526, %v3522
      %v3529 = vsel %vm3528, 1, 0
      %v3530 = vadd.s32 %v3526, %v3522
      %v3531 = vadd.s32 %v3527, %v3529
      %v3532 = vadd.s32 %v3531, %v3521
      %v3533 = vadd.s32 %v3532, %v3523
      %v3534 = vand.u32 %v3511, 65535
      %v3535 = vshrl.u32 %v3511, 16
      %v3536 = vand.u32 %v3506, 65535
      %v3537 = vshrl.u32 %v3506, 16
      %v3538 = vmul.u32 %v3534, %v3536
      %v3539 = vmul.u32 %v3534, %v3537
      %v3540 = vmul.u32 %v3535, %v3536
      %v3541 = vmul.u32 %v3535, %v3537
      %v3542 = vshll.u32 %v3539, 16
      %v3543 = vshrl.u32 %v3539, 16
      %v3544 = vshll.u32 %v3540, 16
      %v3545 = vshrl.u32 %v3540, 16
      %vm3546 = vc.u32 %v3538, %v3542
      %v3547 = vsel %vm3546, 1, 0
      %v3548 = vadd.s32 %v3538, %v3542
      %v3549 = vadd.s32 %v3541, %v3547
      %vm3550 = vc.u32 %v3548, %v3544
      %v3551 = vsel %vm3550, 1, 0
      %v3552 = vadd.s32 %v3548, %v3544
      %v3553 = vadd.s32 %v3549, %v3551
      %v3554 = vadd.s32 %v3553, %v3543
      %v3555 = vadd.s32 %v3554, %v3545
      %v3556 = vmul.u32 %v3511, %v3502
      %v3557 = vadd.s32 %v3533, %v3552
      %vm3558 = vc.u32 %v3533, %v3552
      %v3559 = vadd.s32 %v3555, 1
      %v3560 = vsel %vm3558, %v3559, %v3555
      %v3561 = vadd.s32 %v3556, %v3560
      %v3562 = vadd.s32 %v3561, 536870912
      %v3563 = vshrl.u32 %v3562, 30
      %v3564 = vshll.u32 %v3563, 30
      %v3565 = vsub.s32 %v3561, %v3564
      %vm3566 = vcmp.lt.s32.totalorder %v3565, 0
      %v3567 = vsub.s32 0, %v3565
      %v3568 = vsel %vm3566, %v3567, %v3565
      %v3569 = vclz %v3568
      %v3570 = vsub.s32 %v3569, 2
      %vm3571 = vcmp.gt.s32.totalorder 0, %v3570
      %v3572 = vsel %vm3571, 0, %v3570
      %v3573 = vsub.s32 32, %v3572
      %v3574 = vshll.u32 %v3565, %v3572
      %v3575 = vshrl.u32 %v3557, %v3573
      %v3576 = vor.u32 %v3574, %v3575
      %v3577 = vsub.s32 4294967266, %v3572
      %v3578 = vadd.s32 %v3577, 127
      %v3579 = vshll.u32 %v3578, 23
      %v3580 = vor.u32 4788187, %v3579
      %v3581 = vand.u32 2147483647, %v3580
      %v3583 = vcvt.s32.f32 %v3576
      %v3584 = vmul.f32 %v3583, %v3581
      %v3585 = vxor.u32 %v3584, 2147483648
      %v3586 = vsel %vm3465, %v3585, %v3584
      %v3587 = vsub.s32 4, %v3563
      %v3588 = vsel %vm3465, %v3587, %v3563
      %v3589 = vsel %vm3464, %v2839, %v3586
      %v3590 = vsel %vm3464, 0, %v3588
      %v3591 = vmul.f32 %v3589, %v3589
      %v3592 = vmul.f32 %v3591, -0.001358992
      %v3593 = vadd.f32 %v3592, 0.041655596
      %v3594 = vmul.f32 %v3591, %v3593
      %v3595 = vadd.f32 %v3594, -0.4999988
      %v3596 = vmul.f32 %v3591, %v3595
      %v3597 = vadd.f32 1.0, %v3596
      %v3598 = vmul.f32 %v3589, %v3589
      %v3599 = vmul.f32 %v3598, -0.00019511016
      %v3600 = vadd.f32 %v3599, 0.008332121
      %v3601 = vmul.f32 %v3598, %v3600
      %v3602 = vadd.f32 %v3601, -0.16666654
      %v3603 = vmul.f32 %v3598, %v3602
      %v3604 = vadd.f32 %v3603, 1.0
      %v3605 = vmul.f32 %v3604, %v3589
      %vm3606 = vweird.f32 %v2839
      %v3607 = vadd.s32 %v3590, 3
      %v3608 = vand.u32 %v3607, 3
      %vm3609 = vcmp.lt.s32.totalorder %v3608, 2
      %vm3610 = vcmp.eq.s32.totalorder %v3608, 0
      %v3611 = vxor.u32 %v3605, 2147483648
      %v3612 = vsel %vm3610, %v3597, %v3611
      %vm3613 = vcmp.eq.s32.totalorder %v3608, 2
      %v3614 = vxor.u32 %v3597, 2147483648
      %v3615 = vsel %vm3613, %v3614, %v3605
      %v3616 = vsel %vm3609, %v3612, %v3615
      %v3617 = vsel %vm3606, nan, %v3616
      %v3618 = vand.u32 2147483647, %v2840
      %vm3619 = vcmp.le.f32.partialorder %v3618, 0.7853982
      %vm3620 = vcmp.lt.s32.totalorder %v2840, 0
      %v3621 = vand.u32 %v2840, 2139095040
      %v3622 = vshrl.u32 %v3621, 23
      %v3623 = vsub.s32 %v3622, 127
      %v3624 = vand.u32 2147483647, %v2840
      %v3625 = vand.u32 %v3624, 8388607
      %v3626 = vor.u32 %v3625, 8388608
      %v3627 = vsub.s32 0, %v3626
      %v3628 = vadd.s32 %v3623, 1
      %vm3629 = vcmp.gt.s32.totalorder %v3628, 0
      %v3630 = vsel %vm3629, %v3628, 0
      %v3631 = vshrl.u32 %v3630, 5
      %v3632 = vand.u32 %v3630, 31
      %v3633 = vsub.s32 32, %v3632
      %v3634 = vshrl.u32 683565275, %v3633
      %v3635 = vshll.u32 683565275, %v3632
      %v3636 = vshrl.u32 2475754826, %v3633
      %v3637 = vor.u32 %v3635, %v3636
      %v3638 = vshll.u32 2475754826, %v3632
      %v3639 = vshrl.u32 2131351028, %v3633
      %v3640 = vor.u32 %v3638, %v3639
      %v3641 = vshll.u32 2131351028, %v3632
      %v3642 = vshrl.u32 2102212464, %v3633
      %v3643 = vor.u32 %v3641, %v3642
      %v3644 = vshll.u32 2102212464, %v3632
      %v3645 = vshrl.u32 920167782, %v3633
      %v3646 = vor.u32 %v3644, %v3645
      %v3647 = vshll.u32 920167782, %v3632
      %v3648 = vshrl.u32 1326507024, %v3633
      %v3649 = vor.u32 %v3647, %v3648
      %vm3650 = vcmp.lt.s32.totalorder %v3631, 1
      %vm3651 = vcmp.lt.s32.totalorder %v3631, 2
      %vm3652 = vcmp.lt.s32.totalorder %v3631, 3
      %vm3653 = vcmp.lt.s32.totalorder %v3631, 4
      %v3654 = vsel %vm3650, %v3634, %v3637
      %v3655 = vsel %vm3653, %v3643, 2102212464
      %v3656 = vsel %vm3652, %v3640, %v3655
      %v3657 = vsel %vm3651, %v3654, %v3656
      %v3658 = vsel %vm3650, %v3637, %v3640
      %v3659 = vsel %vm3653, %v3646, 920167782
      %v3660 = vsel %vm3652, %v3643, %v3659
      %v3661 = vsel %vm3651, %v3658, %v3660
      %v3662 = vsel %vm3650, %v3640, %v3643
      %v3663 = vsel %vm3653, %v3649, 1326507024
      %v3664 = vsel %vm3652, %v3646, %v3663
      %v3665 = vsel %vm3651, %v3662, %v3664
      %v3666 = vshll.u32 %v3626, 8
      %v3667 = vand.u32 %v3666, 65535
      %v3668 = vshrl.u32 %v3666, 16
      %v3669 = vand.u32 %v3665, 65535
      %v3670 = vshrl.u32 %v3665, 16
      %v3671 = vmul.u32 %v3667, %v3669
      %v3672 = vmul.u32 %v3667, %v3670
      %v3673 = vmul.u32 %v3668, %v3669
      %v3674 = vmul.u32 %v3668, %v3670
      %v3675 = vshll.u32 %v3672, 16
      %v3676 = vshrl.u32 %v3672, 16
      %v3677 = vshll.u32 %v3673, 16
      %v3678 = vshrl.u32 %v3673, 16
      %vm3679 = vc.u32 %v3671, %v3675
      %v3680 = vsel %vm3679, 1, 0
      %v3681 = vadd.s32 %v3671, %v3675
      %v3682 = vadd.s32 %v3674, %v3680
      %vm3683 = vc.u32 %v3681, %v3677
      %v3684 = vsel %vm3683, 1, 0
      %v3685 = vadd.s32 %v3681, %v3677
      %v3686 = vadd.s32 %v3682, %v3684
      %v3687 = vadd.s32 %v3686, %v3676
      %v3688 = vadd.s32 %v3687, %v3678
      %v3689 = vand.u32 %v3666, 65535
      %v3690 = vshrl.u32 %v3666, 16
      %v3691 = vand.u32 %v3661, 65535
      %v3692 = vshrl.u32 %v3661, 16
      %v3693 = vmul.u32 %v3689, %v3691
      %v3694 = vmul.u32 %v3689, %v3692
      %v3695 = vmul.u32 %v3690, %v3691
      %v3696 = vmul.u32 %v3690, %v3692
      %v3697 = vshll.u32 %v3694, 16
      %v3698 = vshrl.u32 %v3694, 16
      %v3699 = vshll.u32 %v3695, 16
      %v3700 = vshrl.u32 %v3695, 16
      %vm3701 = vc.u32 %v3693, %v3697
      %v3702 = vsel %vm3701, 1, 0
      %v3703 = vadd.s32 %v3693, %v3697
      %v3704 = vadd.s32 %v3696, %v3702
      %vm3705 = vc.u32 %v3703, %v3699
      %v3706 = vsel %vm3705, 1, 0
      %v3707 = vadd.s32 %v3703, %v3699
      %v3708 = vadd.s32 %v3704, %v3706
      %v3709 = vadd.s32 %v3708, %v3698
      %v3710 = vadd.s32 %v3709, %v3700
      %v3711 = vmul.u32 %v3666, %v3657
      %v3712 = vadd.s32 %v3688, %v3707
      %vm3713 = vc.u32 %v3688, %v3707
      %v3714 = vadd.s32 %v3710, 1
      %v3715 = vsel %vm3713, %v3714, %v3710
      %v3716 = vadd.s32 %v3711, %v3715
      %v3717 = vadd.s32 %v3716, 536870912
      %v3718 = vshrl.u32 %v3717, 30
      %v3719 = vshll.u32 %v3718, 30
      %v3720 = vsub.s32 %v3716, %v3719
      %vm3721 = vcmp.lt.s32.totalorder %v3720, 0
      %v3722 = vsub.s32 0, %v3720
      %v3723 = vsel %vm3721, %v3722, %v3720
      %v3724 = vclz %v3723
      %v3725 = vsub.s32 %v3724, 2
      %vm3726 = vcmp.gt.s32.totalorder 0, %v3725
      %v3727 = vsel %vm3726, 0, %v3725
      %v3728 = vsub.s32 32, %v3727
      %v3729 = vshll.u32 %v3720, %v3727
      %v3730 = vshrl.u32 %v3712, %v3728
      %v3731 = vor.u32 %v3729, %v3730
      %v3732 = vsub.s32 4294967266, %v3727
      %v3733 = vadd.s32 %v3732, 127
      %v3734 = vshll.u32 %v3733, 23
      %v3735 = vor.u32 4788187, %v3734
      %v3736 = vand.u32 2147483647, %v3735
      %v3738 = vcvt.s32.f32 %v3731
      %v3739 = vmul.f32 %v3738, %v3736
      %v3740 = vxor.u32 %v3739, 2147483648
      %v3741 = vsel %vm3620, %v3740, %v3739
      %v3742 = vsub.s32 4, %v3718
      %v3743 = vsel %vm3620, %v3742, %v3718
      %v3744 = vsel %vm3619, %v2840, %v3741
      %v3745 = vsel %vm3619, 0, %v3743
      %v3746 = vmul.f32 %v3744, %v3744
      %v3747 = vmul.f32 %v3746, -0.001358992
      %v3748 = vadd.f32 %v3747, 0.041655596
      %v3749 = vmul.f32 %v3746, %v3748
      %v3750 = vadd.f32 %v3749, -0.4999988
      %v3751 = vmul.f32 %v3746, %v3750
      %v3752 = vadd.f32 1.0, %v3751
      %v3753 = vmul.f32 %v3744, %v3744
      %v3754 = vmul.f32 %v3753, -0.00019511016
      %v3755 = vadd.f32 %v3754, 0.008332121
      %v3756 = vmul.f32 %v3753, %v3755
      %v3757 = vadd.f32 %v3756, -0.16666654
      %v3758 = vmul.f32 %v3753, %v3757
      %v3759 = vadd.f32 %v3758, 1.0
      %v3760 = vmul.f32 %v3759, %v3744
      %vm3761 = vweird.f32 %v2840
      %v3762 = vadd.s32 %v3745, 3
      %v3763 = vand.u32 %v3762, 3
      %vm3764 = vcmp.lt.s32.totalorder %v3763, 2
      %vm3765 = vcmp.eq.s32.totalorder %v3763, 0
      %v3766 = vxor.u32 %v3760, 2147483648
      %v3767 = vsel %vm3765, %v3752, %v3766
      %vm3768 = vcmp.eq.s32.totalorder %v3763, 2
      %v3769 = vxor.u32 %v3752, 2147483648
      %v3770 = vsel %vm3768, %v3769, %v3760
      %v3771 = vsel %vm3764, %v3767, %v3770
      %v3772 = vsel %vm3761, nan, %v3771
      %v3773 = vand.u32 2147483647, %v2841
      %vm3774 = vcmp.le.f32.partialorder %v3773, 0.7853982
      %vm3775 = vcmp.lt.s32.totalorder %v2841, 0
      %v3776 = vand.u32 %v2841, 2139095040
      %v3777 = vshrl.u32 %v3776, 23
      %v3778 = vsub.s32 %v3777, 127
      %v3779 = vand.u32 2147483647, %v2841
      %v3780 = vand.u32 %v3779, 8388607
      %v3781 = vor.u32 %v3780, 8388608
      %v3782 = vsub.s32 0, %v3781
      %v3783 = vadd.s32 %v3778, 1
      %vm3784 = vcmp.gt.s32.totalorder %v3783, 0
      %v3785 = vsel %vm3784, %v3783, 0
      %v3786 = vshrl.u32 %v3785, 5
      %v3787 = vand.u32 %v3785, 31
      %v3788 = vsub.s32 32, %v3787
      %v3789 = vshrl.u32 683565275, %v3788
      %v3790 = vshll.u32 683565275, %v3787
      %v3791 = vshrl.u32 2475754826, %v3788
      %v3792 = vor.u32 %v3790, %v3791
      %v3793 = vshll.u32 2475754826, %v3787
      %v3794 = vshrl.u32 2131351028, %v3788
      %v3795 = vor.u32 %v3793, %v3794
      %v3796 = vshll.u32 2131351028, %v3787
      %v3797 = vshrl.u32 2102212464, %v3788
      %v3798 = vor.u32 %v3796, %v3797
      %v3799 = vshll.u32 2102212464, %v3787
      %v3800 = vshrl.u32 920167782, %v3788
      %v3801 = vor.u32 %v3799, %v3800
      %v3802 = vshll.u32 920167782, %v3787
      %v3803 = vshrl.u32 1326507024, %v3788
      %v3804 = vor.u32 %v3802, %v3803
      %vm3805 = vcmp.lt.s32.totalorder %v3786, 1
      %vm3806 = vcmp.lt.s32.totalorder %v3786, 2
      %vm3807 = vcmp.lt.s32.totalorder %v3786, 3
      %vm3808 = vcmp.lt.s32.totalorder %v3786, 4
      %v3809 = vsel %vm3805, %v3789, %v3792
      %v3810 = vsel %vm3808, %v3798, 2102212464
      %v3811 = vsel %vm3807, %v3795, %v3810
      %v3812 = vsel %vm3806, %v3809, %v3811
      %v3813 = vsel %vm3805, %v3792, %v3795
      %v3814 = vsel %vm3808, %v3801, 920167782
      %v3815 = vsel %vm3807, %v3798, %v3814
      %v3816 = vsel %vm3806, %v3813, %v3815
      %v3817 = vsel %vm3805, %v3795, %v3798
      %v3818 = vsel %vm3808, %v3804, 1326507024
      %v3819 = vsel %vm3807, %v3801, %v3818
      %v3820 = vsel %vm3806, %v3817, %v3819
      %v3821 = vshll.u32 %v3781, 8
      %v3822 = vand.u32 %v3821, 65535
      %v3823 = vshrl.u32 %v3821, 16
      %v3824 = vand.u32 %v3820, 65535
      %v3825 = vshrl.u32 %v3820, 16
      %v3826 = vmul.u32 %v3822, %v3824
      %v3827 = vmul.u32 %v3822, %v3825
      %v3828 = vmul.u32 %v3823, %v3824
      %v3829 = vmul.u32 %v3823, %v3825
      %v3830 = vshll.u32 %v3827, 16
      %v3831 = vshrl.u32 %v3827, 16
      %v3832 = vshll.u32 %v3828, 16
      %v3833 = vshrl.u32 %v3828, 16
      %vm3834 = vc.u32 %v3826, %v3830
      %v3835 = vsel %vm3834, 1, 0
      %v3836 = vadd.s32 %v3826, %v3830
      %v3837 = vadd.s32 %v3829, %v3835
      %vm3838 = vc.u32 %v3836, %v3832
      %v3839 = vsel %vm3838, 1, 0
      %v3840 = vadd.s32 %v3836, %v3832
      %v3841 = vadd.s32 %v3837, %v3839
      %v3842 = vadd.s32 %v3841, %v3831
      %v3843 = vadd.s32 %v3842, %v3833
      %v3844 = vand.u32 %v3821, 65535
      %v3845 = vshrl.u32 %v3821, 16
      %v3846 = vand.u32 %v3816, 65535
      %v3847 = vshrl.u32 %v3816, 16
      %v3848 = vmul.u32 %v3844, %v3846
      %v3849 = vmul.u32 %v3844, %v3847
      %v3850 = vmul.u32 %v3845, %v3846
      %v3851 = vmul.u32 %v3845, %v3847
      %v3852 = vshll.u32 %v3849, 16
      %v3853 = vshrl.u32 %v3849, 16
      %v3854 = vshll.u32 %v3850, 16
      %v3855 = vshrl.u32 %v3850, 16
      %vm3856 = vc.u32 %v3848, %v3852
      %v3857 = vsel %vm3856, 1, 0
      %v3858 = vadd.s32 %v3848, %v3852
      %v3859 = vadd.s32 %v3851, %v3857
      %vm3860 = vc.u32 %v3858, %v3854
      %v3861 = vsel %vm3860, 1, 0
      %v3862 = vadd.s32 %v3858, %v3854
      %v3863 = vadd.s32 %v3859, %v3861
      %v3864 = vadd.s32 %v3863, %v3853
      %v3865 = vadd.s32 %v3864, %v3855
      %v3866 = vmul.u32 %v3821, %v3812
      %v3867 = vadd.s32 %v3843, %v3862
      %vm3868 = vc.u32 %v3843, %v3862
      %v3869 = vadd.s32 %v3865, 1
      %v3870 = vsel %vm3868, %v3869, %v3865
      %v3871 = vadd.s32 %v3866, %v3870
      %v3872 = vadd.s32 %v3871, 536870912
      %v3873 = vshrl.u32 %v3872, 30
      %v3874 = vshll.u32 %v3873, 30
      %v3875 = vsub.s32 %v3871, %v3874
      %vm3876 = vcmp.lt.s32.totalorder %v3875, 0
      %v3877 = vsub.s32 0, %v3875
      %v3878 = vsel %vm3876, %v3877, %v3875
      %v3879 = vclz %v3878
      %v3880 = vsub.s32 %v3879, 2
      %vm3881 = vcmp.gt.s32.totalorder 0, %v3880
      %v3882 = vsel %vm3881, 0, %v3880
      %v3883 = vsub.s32 32, %v3882
      %v3884 = vshll.u32 %v3875, %v3882
      %v3885 = vshrl.u32 %v3867, %v3883
      %v3886 = vor.u32 %v3884, %v3885
      %v3887 = vsub.s32 4294967266, %v3882
      %v3888 = vadd.s32 %v3887, 127
      %v3889 = vshll.u32 %v3888, 23
      %v3890 = vor.u32 4788187, %v3889
      %v3891 = vand.u32 2147483647, %v3890
      %v3893 = vcvt.s32.f32 %v3886
      %v3894 = vmul.f32 %v3893, %v3891
      %v3895 = vxor.u32 %v3894, 2147483648
      %v3896 = vsel %vm3775, %v3895, %v3894
      %v3897 = vsub.s32 4, %v3873
      %v3898 = vsel %vm3775, %v3897, %v3873
      %v3899 = vsel %vm3774, %v2841, %v3896
      %v3900 = vsel %vm3774, 0, %v3898
      %v3901 = vmul.f32 %v3899, %v3899
      %v3902 = vmul.f32 %v3901, -0.001358992
      %v3903 = vadd.f32 %v3902, 0.041655596
      %v3904 = vmul.f32 %v3901, %v3903
      %v3905 = vadd.f32 %v3904, -0.4999988
      %v3906 = vmul.f32 %v3901, %v3905
      %v3907 = vadd.f32 1.0, %v3906
      %v3908 = vmul.f32 %v3899, %v3899
      %v3909 = vmul.f32 %v3908, -0.00019511016
      %v3910 = vadd.f32 %v3909, 0.008332121
      %v3911 = vmul.f32 %v3908, %v3910
      %v3912 = vadd.f32 %v3911, -0.16666654
      %v3913 = vmul.f32 %v3908, %v3912
      %v3914 = vadd.f32 %v3913, 1.0
      %v3915 = vmul.f32 %v3914, %v3899
      %vm3916 = vweird.f32 %v2841
      %v3917 = vadd.s32 %v3900, 3
      %v3918 = vand.u32 %v3917, 3
      %vm3919 = vcmp.lt.s32.totalorder %v3918, 2
      %vm3920 = vcmp.eq.s32.totalorder %v3918, 0
      %v3921 = vxor.u32 %v3915, 2147483648
      %v3922 = vsel %vm3920, %v3907, %v3921
      %vm3923 = vcmp.eq.s32.totalorder %v3918, 2
      %v3924 = vxor.u32 %v3907, 2147483648
      %v3925 = vsel %vm3923, %v3924, %v3915
      %v3926 = vsel %vm3919, %v3922, %v3925
      %v3927 = vsel %vm3916, nan, %v3926
      %v3928 = vand.u32 2147483647, %v2842
      %vm3929 = vcmp.le.f32.partialorder %v3928, 0.7853982
      %vm3930 = vcmp.lt.s32.totalorder %v2842, 0
      %v3931 = vand.u32 %v2842, 2139095040
      %v3932 = vshrl.u32 %v3931, 23
      %v3933 = vsub.s32 %v3932, 127
      %v3934 = vand.u32 2147483647, %v2842
      %v3935 = vand.u32 %v3934, 8388607
      %v3936 = vor.u32 %v3935, 8388608
      %v3937 = vsub.s32 0, %v3936
      %v3938 = vadd.s32 %v3933, 1
      %vm3939 = vcmp.gt.s32.totalorder %v3938, 0
      %v3940 = vsel %vm3939, %v3938, 0
      %v3941 = vshrl.u32 %v3940, 5
      %v3942 = vand.u32 %v3940, 31
      %v3943 = vsub.s32 32, %v3942
      %v3944 = vshrl.u32 683565275, %v3943
      %v3945 = vshll.u32 683565275, %v3942
      %v3946 = vshrl.u32 2475754826, %v3943
      %v3947 = vor.u32 %v3945, %v3946
      %v3948 = vshll.u32 2475754826, %v3942
      %v3949 = vshrl.u32 2131351028, %v3943
      %v3950 = vor.u32 %v3948, %v3949
      %v3951 = vshll.u32 2131351028, %v3942
      %v3952 = vshrl.u32 2102212464, %v3943
      %v3953 = vor.u32 %v3951, %v3952
      %v3954 = vshll.u32 2102212464, %v3942
      %v3955 = vshrl.u32 920167782, %v3943
      %v3956 = vor.u32 %v3954, %v3955
      %v3957 = vshll.u32 920167782, %v3942
      %v3958 = vshrl.u32 1326507024, %v3943
      %v3959 = vor.u32 %v3957, %v3958
      %vm3960 = vcmp.lt.s32.totalorder %v3941, 1
      %vm3961 = vcmp.lt.s32.totalorder %v3941, 2
      %vm3962 = vcmp.lt.s32.totalorder %v3941, 3
      %vm3963 = vcmp.lt.s32.totalorder %v3941, 4
      %v3964 = vsel %vm3960, %v3944, %v3947
      %v3965 = vsel %vm3963, %v3953, 2102212464
      %v3966 = vsel %vm3962, %v3950, %v3965
      %v3967 = vsel %vm3961, %v3964, %v3966
      %v3968 = vsel %vm3960, %v3947, %v3950
      %v3969 = vsel %vm3963, %v3956, 920167782
      %v3970 = vsel %vm3962, %v3953, %v3969
      %v3971 = vsel %vm3961, %v3968, %v3970
      %v3972 = vsel %vm3960, %v3950, %v3953
      %v3973 = vsel %vm3963, %v3959, 1326507024
      %v3974 = vsel %vm3962, %v3956, %v3973
      %v3975 = vsel %vm3961, %v3972, %v3974
      %v3976 = vshll.u32 %v3936, 8
      %v3977 = vand.u32 %v3976, 65535
      %v3978 = vshrl.u32 %v3976, 16
      %v3979 = vand.u32 %v3975, 65535
      %v3980 = vshrl.u32 %v3975, 16
      %v3981 = vmul.u32 %v3977, %v3979
      %v3982 = vmul.u32 %v3977, %v3980
      %v3983 = vmul.u32 %v3978, %v3979
      %v3984 = vmul.u32 %v3978, %v3980
      %v3985 = vshll.u32 %v3982, 16
      %v3986 = vshrl.u32 %v3982, 16
      %v3987 = vshll.u32 %v3983, 16
      %v3988 = vshrl.u32 %v3983, 16
      %vm3989 = vc.u32 %v3981, %v3985
      %v3990 = vsel %vm3989, 1, 0
      %v3991 = vadd.s32 %v3981, %v3985
      %v3992 = vadd.s32 %v3984, %v3990
      %vm3993 = vc.u32 %v3991, %v3987
      %v3994 = vsel %vm3993, 1, 0
      %v3995 = vadd.s32 %v3991, %v3987
      %v3996 = vadd.s32 %v3992, %v3994
      %v3997 = vadd.s32 %v3996, %v3986
      %v3998 = vadd.s32 %v3997, %v3988
      %v3999 = vand.u32 %v3976, 65535
      %v4000 = vshrl.u32 %v3976, 16
      %v4001 = vand.u32 %v3971, 65535
      %v4002 = vshrl.u32 %v3971, 16
      %v4003 = vmul.u32 %v3999, %v4001
      %v4004 = vmul.u32 %v3999, %v4002
      %v4005 = vmul.u32 %v4000, %v4001
      %v4006 = vmul.u32 %v4000, %v4002
      %v4007 = vshll.u32 %v4004, 16
      %v4008 = vshrl.u32 %v4004, 16
      %v4009 = vshll.u32 %v4005, 16
      %v4010 = vshrl.u32 %v4005, 16
      %vm4011 = vc.u32 %v4003, %v4007
      %v4012 = vsel %vm4011, 1, 0
      %v4013 = vadd.s32 %v4003, %v4007
      %v4014 = vadd.s32 %v4006, %v4012
      %vm4015 = vc.u32 %v4013, %v4009
      %v4016 = vsel %vm4015, 1, 0
      %v4017 = vadd.s32 %v4013, %v4009
      %v4018 = vadd.s32 %v4014, %v4016
      %v4019 = vadd.s32 %v4018, %v4008
      %v4020 = vadd.s32 %v4019, %v4010
      %v4021 = vmul.u32 %v3976, %v3967
      %v4022 = vadd.s32 %v3998, %v4017
      %vm4023 = vc.u32 %v3998, %v4017
      %v4024 = vadd.s32 %v4020, 1
      %v4025 = vsel %vm4023, %v4024, %v4020
      %v4026 = vadd.s32 %v4021, %v4025
      %v4027 = vadd.s32 %v4026, 536870912
      %v4028 = vshrl.u32 %v4027, 30
      %v4029 = vshll.u32 %v4028, 30
      %v4030 = vsub.s32 %v4026, %v4029
      %vm4031 = vcmp.lt.s32.totalorder %v4030, 0
      %v4032 = vsub.s32 0, %v4030
      %v4033 = vsel %vm4031, %v4032, %v4030
      %v4034 = vclz %v4033
      %v4035 = vsub.s32 %v4034, 2
      %vm4036 = vcmp.gt.s32.totalorder 0, %v4035
      %v4037 = vsel %vm4036, 0, %v4035
      %v4038 = vsub.s32 32, %v4037
      %v4039 = vshll.u32 %v4030, %v4037
      %v4040 = vshrl.u32 %v4022, %v4038
      %v4041 = vor.u32 %v4039, %v4040
      %v4042 = vsub.s32 4294967266, %v4037
      %v4043 = vadd.s32 %v4042, 127
      %v4044 = vshll.u32 %v4043, 23
      %v4045 = vor.u32 4788187, %v4044
      %v4046 = vand.u32 2147483647, %v4045
      %v4048 = vcvt.s32.f32 %v4041
      %v4049 = vmul.f32 %v4048, %v4046
      %v4050 = vxor.u32 %v4049, 2147483648
      %v4051 = vsel %vm3930, %v4050, %v4049
      %v4052 = vsub.s32 4, %v4028
      %v4053 = vsel %vm3930, %v4052, %v4028
      %v4054 = vsel %vm3929, %v2842, %v4051
      %v4055 = vsel %vm3929, 0, %v4053
      %v4056 = vmul.f32 %v4054, %v4054
      %v4057 = vmul.f32 %v4056, -0.001358992
      %v4058 = vadd.f32 %v4057, 0.041655596
      %v4059 = vmul.f32 %v4056, %v4058
      %v4060 = vadd.f32 %v4059, -0.4999988
      %v4061 = vmul.f32 %v4056, %v4060
      %v4062 = vadd.f32 1.0, %v4061
      %v4063 = vmul.f32 %v4054, %v4054
      %v4064 = vmul.f32 %v4063, -0.00019511016
      %v4065 = vadd.f32 %v4064, 0.008332121
      %v4066 = vmul.f32 %v4063, %v4065
      %v4067 = vadd.f32 %v4066, -0.16666654
      %v4068 = vmul.f32 %v4063, %v4067
      %v4069 = vadd.f32 %v4068, 1.0
      %v4070 = vmul.f32 %v4069, %v4054
      %vm4071 = vweird.f32 %v2842
      %v4072 = vadd.s32 %v4055, 3
      %v4073 = vand.u32 %v4072, 3
      %vm4074 = vcmp.lt.s32.totalorder %v4073, 2
      %vm4075 = vcmp.eq.s32.totalorder %v4073, 0
      %v4076 = vxor.u32 %v4070, 2147483648
      %v4077 = vsel %vm4075, %v4062, %v4076
      %vm4078 = vcmp.eq.s32.totalorder %v4073, 2
      %v4079 = vxor.u32 %v4062, 2147483648
      %v4080 = vsel %vm4078, %v4079, %v4070
      %v4081 = vsel %vm4074, %v4077, %v4080
      %v4082 = vsel %vm4071, nan, %v4081
      %v4083 = vmul.f32 %v2832, %v3617
      %v4084 = vmul.f32 %v2834, %v3772
      %v4085 = vmul.f32 %v2836, %v3927
      %v4086 = vmul.f32 %v2838, %v4082
      %v4087 = vmul.f32 %v2805, %v2797
      %v4088 = vmul.f32 %v2806, %v2798
      %v4089 = vmul.f32 %v2807, %v2799
      %v4090 = vmul.f32 %v2808, %v2800
      %v4091 = vmul.f32 %v2809, %v2801
      %v4092 = vmul.f32 %v2810, %v2802
      %v4093 = vmul.f32 %v2811, %v2803
      %v4094 = vmul.f32 %v2812, %v2804
      %v4095 = vadd.f32 %v4087, %v4091
      %v4096 = vadd.f32 %v4088, %v4092
      %v4097 = vadd.f32 %v4089, %v4093
      %v4098 = vadd.f32 %v4090, %v4094
      %v4099 = vmul.f32 %v2809, %v2797
      %v4100 = vmul.f32 %v2810, %v2798
      %v4101 = vmul.f32 %v2811, %v2799
      %v4102 = vmul.f32 %v2812, %v2800
      %v4103 = vmul.f32 %v2805, %v2801
      %v4104 = vmul.f32 %v2806, %v2802
      %v4105 = vmul.f32 %v2807, %v2803
      %v4106 = vmul.f32 %v2808, %v2804
      %v4107 = vsub.f32 %v4099, %v4103
      %v4108 = vsub.f32 %v4100, %v4104
      %v4109 = vsub.f32 %v4101, %v4105
      %v4110 = vsub.f32 %v4102, %v4106
      %v4111 = vmul.f32 %v4095, %v3459
      %v4112 = vmul.f32 %v4096, %v3460
      %v4113 = vmul.f32 %v4097, %v3461
      %v4114 = vmul.f32 %v4098, %v3462
      %v4115 = vmul.f32 %v4107, %v4083
      %v4116 = vmul.f32 %v4108, %v4084
      %v4117 = vmul.f32 %v4109, %v4085
      %v4118 = vmul.f32 %v4110, %v4086
      %v4119 = vadd.f32 %v4111, %v4115
      %v4120 = vadd.f32 %v4112, %v4116
      %v4121 = vadd.f32 %v4113, %v4117
      %v4122 = vadd.f32 %v4114, %v4118
      %v4123 = vmul.f32 %v4107, %v3459
      %v4124 = vmul.f32 %v4108, %v3460
      %v4125 = vmul.f32 %v4109, %v3461
      %v4126 = vmul.f32 %v4110, %v3462
      %v4127 = vmul.f32 %v4095, %v4083
      %v4128 = vmul.f32 %v4096, %v4084
      %v4129 = vmul.f32 %v4097, %v4085
      %v4130 = vmul.f32 %v4098, %v4086
      %v4131 = vsub.f32 %v4123, %v4127
      %v4132 = vsub.f32 %v4124, %v4128
      %v4133 = vsub.f32 %v4125, %v4129
      %v4134 = vsub.f32 %v4126, %v4130
      %v4135 = vmul.f32 %v4131, 4.0840707
      %v4136 = vmul.f32 %v4132, 4.0840707
      %v4137 = vmul.f32 %v4133, 4.0840707
      %v4138 = vmul.f32 %v4134, 4.0840707
      %v4139 = vsub.f32 %v2816, %v4135
      %v4140 = vsub.f32 %v2817, %v4136
      %v4141 = vsub.f32 %v2818, %v4137
      %v4142 = vsub.f32 %v2819, %v4138
      %s4143 = smul.u32 %s2796, 32
      %s4144 = scalar_lea.vmem [#allocation27], %s4143
      %4145 = vst.msk [vmem:[%s4144] sm:$0xff] %vm251, %v4139
      %4146 = vst.msk [vmem:[%s4144 + $0x8] sm:$0xff] %vm251, %v4140
      %4147 = vst.msk [vmem:[%s4144 + $0x10] sm:$0xff] %vm251, %v4141
      %4148 = vst.msk [vmem:[%s4144 + $0x18] sm:$0xff] %vm251, %v4142
      %v4149 = vmul.f32 %v4119, 4.0840707
      %v4150 = vmul.f32 %v4120, 4.0840707
      %v4151 = vmul.f32 %v4121, 4.0840707
      %v4152 = vmul.f32 %v4122, 4.0840707
      %v4153 = vadd.f32 %v2823, %v4149
      %v4154 = vadd.f32 %v2824, %v4150
      %v4155 = vadd.f32 %v2825, %v4151
      %v4156 = vadd.f32 %v2826, %v4152
      %4161 = vrot.lane.b32.xlu0 %v4153, 32
      %v4162 = vpop.permute.xlu0 %4161
      %4163 = vrot.lane.b32.xlu0 %v4154, 32
      %v4164 = vpop.permute.xlu0 %4163
      %4165 = vrot.lane.b32.xlu0 %v4155, 32
      %v4166 = vpop.permute.xlu0 %4165
      %4167 = vrot.lane.b32.xlu0 %v4156, 32
      %v4168 = vpop.permute.xlu0 %4167
      %vm4173 = vcmask 523520
      %4174 = vst.msk [vmem:[%s4144] sm:$0xff] %vm4173, %v4162
      %4175 = vst.msk [vmem:[%s4144 + $0x8] sm:$0xff] %vm4173, %v4164
      %4176 = vst.msk [vmem:[%s4144 + $0x10] sm:$0xff] %vm4173, %v4166
      %4177 = vst.msk [vmem:[%s4144 + $0x18] sm:$0xff] %vm4173, %v4168
      %p4178 = scmp.gt.s32.totalorder %s2796, 0
      // Predicated region
      $region124: #{tpu_custom_call.1} parent=120 // pred_check
        %p4179 = pneg %p4178
      $region125: #{tpu_custom_call.1} parent=120 // pred_check_branch
        %4181 = sbr.rel (%p4179) target = $region127
      $region126: #{tpu_custom_call.1} parent=120 // pred_region
        %v4182 = vmul.f32 %v2805, %v3459
        %v4183 = vmul.f32 %v2806, %v3460
        %v4184 = vmul.f32 %v2807, %v3461
        %v4185 = vmul.f32 %v2808, %v3462
        %v4186 = vmul.f32 %v2809, %v4083
        %v4187 = vmul.f32 %v2810, %v4084
        %v4188 = vmul.f32 %v2811, %v4085
        %v4189 = vmul.f32 %v2812, %v4086
        %v4190 = vadd.f32 %v4182, %v4186
        %v4191 = vadd.f32 %v4183, %v4187
        %v4192 = vadd.f32 %v4184, %v4188
        %v4193 = vadd.f32 %v4185, %v4189
        %v4194 = vmul.f32 %v2809, %v3459
        %v4195 = vmul.f32 %v2810, %v3460
        %v4196 = vmul.f32 %v2811, %v3461
        %v4197 = vmul.f32 %v2812, %v3462
        %v4198 = vmul.f32 %v2805, %v4083
        %v4199 = vmul.f32 %v2806, %v4084
        %v4200 = vmul.f32 %v2807, %v4085
        %v4201 = vmul.f32 %v2808, %v4086
        %v4202 = vsub.f32 %v4194, %v4198
        %v4203 = vsub.f32 %v4195, %v4199
        %v4204 = vsub.f32 %v4196, %v4200
        %v4205 = vsub.f32 %v4197, %v4201
        %4210 = vrot.lane.b32.xlu0 %v2797, 32
        %v4211 = vpop.permute.xlu0 %4210
        %4212 = vrot.lane.b32.xlu0 %v2798, 32
        %v4213 = vpop.permute.xlu0 %4212
        %4214 = vrot.lane.b32.xlu0 %v2799, 32
        %v4215 = vpop.permute.xlu0 %4214
        %4216 = vrot.lane.b32.xlu0 %v2800, 32
        %v4217 = vpop.permute.xlu0 %4216
        %v4222 = vsel %vm251, %v4190, %v4211
        %v4223 = vsel %vm251, %v4191, %v4213
        %v4224 = vsel %vm251, %v4192, %v4215
        %v4225 = vsel %vm251, %v4193, %v4217
        %4230 = vrot.lane.b32.xlu0 %v2801, 32
        %v4231 = vpop.permute.xlu0 %4230
        %4232 = vrot.lane.b32.xlu0 %v2802, 32
        %v4233 = vpop.permute.xlu0 %4232
        %4234 = vrot.lane.b32.xlu0 %v2803, 32
        %v4235 = vpop.permute.xlu0 %4234
        %4236 = vrot.lane.b32.xlu0 %v2804, 32
        %v4237 = vpop.permute.xlu0 %4236
        %v4242 = vsel %vm251, %v4202, %v4231
        %v4243 = vsel %vm251, %v4203, %v4233
        %v4244 = vsel %vm251, %v4204, %v4235
        %v4245 = vsel %vm251, %v4205, %v4237
        %v4246 = vld [vmem:[#allocation21] sm:$0xff]
        %v4247 = vld [vmem:[#allocation21 + $0x8] sm:$0xff]
        %v4248 = vld [vmem:[#allocation21 + $0x10] sm:$0xff]
        %v4249 = vld [vmem:[#allocation21 + $0x18] sm:$0xff]
        %v4250 = vld [vmem:[#allocation21 + $0x20] sm:$0xff]
        %v4251 = vld [vmem:[#allocation21 + $0x28] sm:$0xff]
        %v4252 = vld [vmem:[#allocation21 + $0x30] sm:$0xff]
        %v4253 = vld [vmem:[#allocation21 + $0x38] sm:$0xff]
        %v4255 = vsel %vm2009, %v4246, 0
        %v4258 = vsel %vm2009, %v4247, 0
        %v4261 = vsel %vm2009, %v4248, 0
        %v4264 = vsel %vm2009, %v4249, 0
        %v4267 = vsel %vm2009, %v4250, 0
        %v4270 = vsel %vm2009, %v4251, 0
        %v4273 = vsel %vm2009, %v4252, 0
        %v4276 = vsel %vm2009, %v4253, 0
        %4278 = vmatpush.msra.mxu0 0.0
        %4279 = vmatpush.msra.mxu0 0.0
        %4280 = vmatpush.msra.mxu0 0.0
        %4281 = vmatpush.msra.mxu0 0.0
        %4282 = vmatpush.msra.mxu0 0.0
        %4283 = vmatpush.msra.mxu0 0.0
        %4284 = vmatpush.msra.mxu0 0.0
        %4285 = vmatpush.msra.mxu0 0.0
        %4286 = vmatpush.msra.mxu0 %v4245
        %4287 = vmatpush.msra.mxu0 %v4244
        %4288 = vmatpush.msra.mxu0 %v4243
        %4289 = vmatpush.msra.mxu0 %v4242
        %4290 = vmatpush.msra.mxu0 %v4225
        %4291 = vmatpush.msra.mxu0 %v4224
        %4292 = vmatpush.msra.mxu0 %v4223
        %4293 = vmatpush.msra.mxu0 %v4222
        %4294 = vmatmul.f32.gmra.mxu0 %v4255
        %v4295 = vpop.f32.mrf.mxu0
        %v4296 = vadd.f32 0.0, %v4295
        %4297 = vmatmul.f32.gmra.mxu0 %v4258
        %v4298 = vpop.f32.mrf.mxu0
        %v4299 = vadd.f32 0.0, %v4298
        %4300 = vmatmul.f32.gmra.mxu0 %v4261
        %v4301 = vpop.f32.mrf.mxu0
        %v4302 = vadd.f32 0.0, %v4301
        %4303 = vmatmul.f32.gmra.mxu0 %v4264
        %v4304 = vpop.f32.mrf.mxu0
        %v4305 = vadd.f32 0.0, %v4304
        %4306 = vmatmul.f32.gmra.mxu0 %v4267
        %v4307 = vpop.f32.mrf.mxu0
        %v4308 = vadd.f32 0.0, %v4307
        %4309 = vmatmul.f32.gmra.mxu0 %v4270
        %v4310 = vpop.f32.mrf.mxu0
        %v4311 = vadd.f32 0.0, %v4310
        %4312 = vmatmul.f32.gmra.mxu0 %v4273
        %v4313 = vpop.f32.mrf.mxu0
        %v4314 = vadd.f32 0.0, %v4313
        %4315 = vmatmul.f32.gmra.mxu0 %v4276
        %v4316 = vpop.f32.mrf.mxu0
        %v4317 = vadd.f32 0.0, %v4316
        %4318 = vdwg.mxu0
        %4323 = vrot.lane.b32.xlu0 %v4308, 32
        %v4324 = vpop.permute.xlu0 %4323
        %4325 = vrot.lane.b32.xlu0 %v4311, 32
        %v4326 = vpop.permute.xlu0 %4325
        %4327 = vrot.lane.b32.xlu0 %v4314, 32
        %v4328 = vpop.permute.xlu0 %4327
        %4329 = vrot.lane.b32.xlu0 %v4317, 32
        %v4330 = vpop.permute.xlu0 %4329
        %v4335 = vsel %vm251, %v4296, %v4324
        %v4336 = vsel %vm251, %v4299, %v4326
        %v4337 = vsel %vm251, %v4302, %v4328
        %v4338 = vsel %vm251, %v4305, %v4330
        %4343 = vrot.lane.b32.xlu0 %v4296, 96
        %v4344 = vpop.permute.xlu0 %4343
        %4345 = vrot.lane.b32.xlu0 %v4299, 96
        %v4346 = vpop.permute.xlu0 %4345
        %4347 = vrot.lane.b32.xlu0 %v4302, 96
        %v4348 = vpop.permute.xlu0 %4347
        %4349 = vrot.lane.b32.xlu0 %v4305, 96
        %v4350 = vpop.permute.xlu0 %4349
        %v4355 = vsel %vm251, %v4344, %v4308
        %v4356 = vsel %vm251, %v4346, %v4311
        %v4357 = vsel %vm251, %v4348, %v4314
        %v4358 = vsel %vm251, %v4350, %v4317
        %v4359 = vld [vmem:[#allocation23] sm:$0xff]
        %v4360 = vld [vmem:[#allocation23 + $0x8] sm:$0xff]
        %v4361 = vld [vmem:[#allocation23 + $0x10] sm:$0xff]
        %v4362 = vld [vmem:[#allocation23 + $0x18] sm:$0xff]
        %v4363 = vld [vmem:[#allocation23 + $0x20] sm:$0xff]
        %v4364 = vld [vmem:[#allocation23 + $0x28] sm:$0xff]
        %v4365 = vld [vmem:[#allocation23 + $0x30] sm:$0xff]
        %v4366 = vld [vmem:[#allocation23 + $0x38] sm:$0xff]
        %v4368 = vsel %vm2009, %v4335, 0
        %v4371 = vsel %vm2009, %v4336, 0
        %v4374 = vsel %vm2009, %v4337, 0
        %v4377 = vsel %vm2009, %v4338, 0
        %v4380 = vsel %vm2009, %v4355, 0
        %v4383 = vsel %vm2009, %v4356, 0
        %v4386 = vsel %vm2009, %v4357, 0
        %v4389 = vsel %vm2009, %v4358, 0
        %4391 = vmatpush.msra.mxu0 0.0
        %4392 = vmatpush.msra.mxu0 0.0
        %4393 = vmatpush.msra.mxu0 0.0
        %4394 = vmatpush.msra.mxu0 0.0
        %4395 = vmatpush.msra.mxu0 0.0
        %4396 = vmatpush.msra.mxu0 0.0
        %4397 = vmatpush.msra.mxu0 0.0
        %4398 = vmatpush.msra.mxu0 0.0
        %4399 = vmatpush.msra.mxu0 %v4366
        %4400 = vmatpush.msra.mxu0 %v4365
        %4401 = vmatpush.msra.mxu0 %v4364
        %4402 = vmatpush.msra.mxu0 %v4363
        %4403 = vmatpush.msra.mxu0 %v4362
        %4404 = vmatpush.msra.mxu0 %v4361
        %4405 = vmatpush.msra.mxu0 %v4360
        %4406 = vmatpush.msra.mxu0 %v4359
        %4407 = vmatmul.f32.gmra.mxu0 %v4368
        %v4408 = vpop.f32.mrf.mxu0
        %v4409 = vadd.f32 0.0, %v4408
        %4410 = vmatmul.f32.gmra.mxu0 %v4371
        %v4411 = vpop.f32.mrf.mxu0
        %v4412 = vadd.f32 0.0, %v4411
        %4413 = vmatmul.f32.gmra.mxu0 %v4374
        %v4414 = vpop.f32.mrf.mxu0
        %v4415 = vadd.f32 0.0, %v4414
        %4416 = vmatmul.f32.gmra.mxu0 %v4377
        %v4417 = vpop.f32.mrf.mxu0
        %v4418 = vadd.f32 0.0, %v4417
        %4419 = vmatmul.f32.gmra.mxu0 %v4380
        %v4420 = vpop.f32.mrf.mxu0
        %v4421 = vadd.f32 0.0, %v4420
        %4422 = vmatmul.f32.gmra.mxu0 %v4383
        %v4423 = vpop.f32.mrf.mxu0
        %v4424 = vadd.f32 0.0, %v4423
        %4425 = vmatmul.f32.gmra.mxu0 %v4386
        %v4426 = vpop.f32.mrf.mxu0
        %v4427 = vadd.f32 0.0, %v4426
        %4428 = vmatmul.f32.gmra.mxu0 %v4389
        %v4429 = vpop.f32.mrf.mxu0
        %v4430 = vadd.f32 0.0, %v4429
        %4431 = vdwg.mxu0
        %v4432 = vld [vmem:[#allocation15] sm:$0xff]
        %v4433 = vld [vmem:[#allocation15 + $0x8] sm:$0xff]
        %v4434 = vld [vmem:[#allocation15 + $0x10] sm:$0xff]
        %v4435 = vld [vmem:[#allocation15 + $0x18] sm:$0xff]
        %v4436 = vld [vmem:[#allocation17] sm:$0xff]
        %v4437 = vld [vmem:[#allocation17 + $0x8] sm:$0xff]
        %v4438 = vld [vmem:[#allocation17 + $0x10] sm:$0xff]
        %v4439 = vld [vmem:[#allocation17 + $0x18] sm:$0xff]
        %v4440 = vmul.f32 %v4409, %v4432
        %v4441 = vmul.f32 %v4412, %v4433
        %v4442 = vmul.f32 %v4415, %v4434
        %v4443 = vmul.f32 %v4418, %v4435
        %4448 = vrot.lane.b32.xlu0 %v4436, 32
        %v4449 = vpop.permute.xlu0 %4448
        %4450 = vrot.lane.b32.xlu0 %v4437, 32
        %v4451 = vpop.permute.xlu0 %4450
        %4452 = vrot.lane.b32.xlu0 %v4438, 32
        %v4453 = vpop.permute.xlu0 %4452
        %4454 = vrot.lane.b32.xlu0 %v4439, 32
        %v4455 = vpop.permute.xlu0 %4454
        %v4460 = vmul.f32 %v4409, %v4449
        %v4461 = vmul.f32 %v4412, %v4451
        %v4462 = vmul.f32 %v4415, %v4453
        %v4463 = vmul.f32 %v4418, %v4455
        %4468 = vrot.lane.b32.xlu0 %v4460, 96
        %v4469 = vpop.permute.xlu0 %4468
        %4470 = vrot.lane.b32.xlu0 %v4461, 96
        %v4471 = vpop.permute.xlu0 %4470
        %4472 = vrot.lane.b32.xlu0 %v4462, 96
        %v4473 = vpop.permute.xlu0 %4472
        %4474 = vrot.lane.b32.xlu0 %v4463, 96
        %v4475 = vpop.permute.xlu0 %4474
        %v4480 = vadd.f32 %v4440, %v4469
        %v4481 = vadd.f32 %v4441, %v4471
        %v4482 = vadd.f32 %v4442, %v4473
        %v4483 = vadd.f32 %v4443, %v4475
        %4488 = vrot.lane.b32.xlu0 %v4432, 32
        %v4489 = vpop.permute.xlu0 %4488
        %4490 = vrot.lane.b32.xlu0 %v4433, 32
        %v4491 = vpop.permute.xlu0 %4490
        %4492 = vrot.lane.b32.xlu0 %v4434, 32
        %v4493 = vpop.permute.xlu0 %4492
        %4494 = vrot.lane.b32.xlu0 %v4435, 32
        %v4495 = vpop.permute.xlu0 %4494
        %v4500 = vmul.f32 %v4409, %v4489
        %v4501 = vmul.f32 %v4412, %v4491
        %v4502 = vmul.f32 %v4415, %v4493
        %v4503 = vmul.f32 %v4418, %v4495
        %v4504 = vmul.f32 %v4409, %v4436
        %v4505 = vmul.f32 %v4412, %v4437
        %v4506 = vmul.f32 %v4415, %v4438
        %v4507 = vmul.f32 %v4418, %v4439
        %4512 = vrot.lane.b32.xlu0 %v4504, 32
        %v4513 = vpop.permute.xlu0 %4512
        %4514 = vrot.lane.b32.xlu0 %v4505, 32
        %v4515 = vpop.permute.xlu0 %4514
        %4516 = vrot.lane.b32.xlu0 %v4506, 32
        %v4517 = vpop.permute.xlu0 %4516
        %4518 = vrot.lane.b32.xlu0 %v4507, 32
        %v4519 = vpop.permute.xlu0 %4518
        %v4524 = vsub.f32 %v4500, %v4513
        %v4525 = vsub.f32 %v4501, %v4515
        %v4526 = vsub.f32 %v4502, %v4517
        %v4527 = vsub.f32 %v4503, %v4519
        %v4528 = vmul.f32 %v4421, %v4432
        %v4529 = vmul.f32 %v4424, %v4433
        %v4530 = vmul.f32 %v4427, %v4434
        %v4531 = vmul.f32 %v4430, %v4435
        %v4532 = vmul.f32 %v4421, %v4449
        %v4533 = vmul.f32 %v4424, %v4451
        %v4534 = vmul.f32 %v4427, %v4453
        %v4535 = vmul.f32 %v4430, %v4455
        %4540 = vrot.lane.b32.xlu0 %v4532, 96
        %v4541 = vpop.permute.xlu0 %4540
        %4542 = vrot.lane.b32.xlu0 %v4533, 96
        %v4543 = vpop.permute.xlu0 %4542
        %4544 = vrot.lane.b32.xlu0 %v4534, 96
        %v4545 = vpop.permute.xlu0 %4544
        %4546 = vrot.lane.b32.xlu0 %v4535, 96
        %v4547 = vpop.permute.xlu0 %4546
        %v4552 = vadd.f32 %v4528, %v4541
        %v4553 = vadd.f32 %v4529, %v4543
        %v4554 = vadd.f32 %v4530, %v4545
        %v4555 = vadd.f32 %v4531, %v4547
        %v4556 = vmul.f32 %v4421, %v4489
        %v4557 = vmul.f32 %v4424, %v4491
        %v4558 = vmul.f32 %v4427, %v4493
        %v4559 = vmul.f32 %v4430, %v4495
        %v4560 = vmul.f32 %v4421, %v4436
        %v4561 = vmul.f32 %v4424, %v4437
        %v4562 = vmul.f32 %v4427, %v4438
        %v4563 = vmul.f32 %v4430, %v4439
        %4568 = vrot.lane.b32.xlu0 %v4560, 32
        %v4569 = vpop.permute.xlu0 %4568
        %4570 = vrot.lane.b32.xlu0 %v4561, 32
        %v4571 = vpop.permute.xlu0 %4570
        %4572 = vrot.lane.b32.xlu0 %v4562, 32
        %v4573 = vpop.permute.xlu0 %4572
        %4574 = vrot.lane.b32.xlu0 %v4563, 32
        %v4575 = vpop.permute.xlu0 %4574
        %v4580 = vsub.f32 %v4556, %v4569
        %v4581 = vsub.f32 %v4557, %v4571
        %v4582 = vsub.f32 %v4558, %v4573
        %v4583 = vsub.f32 %v4559, %v4575
        %4588 = vrot.lane.b32.xlu0 %v4552, 32
        %v4589 = vpop.permute.xlu0 %4588
        %4590 = vrot.lane.b32.xlu0 %v4553, 32
        %v4591 = vpop.permute.xlu0 %4590
        %4592 = vrot.lane.b32.xlu0 %v4554, 32
        %v4593 = vpop.permute.xlu0 %4592
        %4594 = vrot.lane.b32.xlu0 %v4555, 32
        %v4595 = vpop.permute.xlu0 %4594
        %v4600 = vsel %vm251, %v4480, %v4589
        %v4601 = vsel %vm251, %v4481, %v4591
        %v4602 = vsel %vm251, %v4482, %v4593
        %v4603 = vsel %vm251, %v4483, %v4595
        %4608 = vrot.lane.b32.xlu0 %v4524, 96
        %v4609 = vpop.permute.xlu0 %4608
        %4610 = vrot.lane.b32.xlu0 %v4525, 96
        %v4611 = vpop.permute.xlu0 %4610
        %4612 = vrot.lane.b32.xlu0 %v4526, 96
        %v4613 = vpop.permute.xlu0 %4612
        %4614 = vrot.lane.b32.xlu0 %v4527, 96
        %v4615 = vpop.permute.xlu0 %4614
        %v4620 = vsel %vm251, %v4609, %v4580
        %v4621 = vsel %vm251, %v4611, %v4581
        %v4622 = vsel %vm251, %v4613, %v4582
        %v4623 = vsel %vm251, %v4615, %v4583
        %v4624 = vld [vmem:[#allocation24] sm:$0xff]
        %v4625 = vld [vmem:[#allocation24 + $0x8] sm:$0xff]
        %v4626 = vld [vmem:[#allocation24 + $0x10] sm:$0xff]
        %v4627 = vld [vmem:[#allocation24 + $0x18] sm:$0xff]
        %v4628 = vld [vmem:[#allocation24 + $0x20] sm:$0xff]
        %v4629 = vld [vmem:[#allocation24 + $0x28] sm:$0xff]
        %v4630 = vld [vmem:[#allocation24 + $0x30] sm:$0xff]
        %v4631 = vld [vmem:[#allocation24 + $0x38] sm:$0xff]
        %v4633 = vsel %vm2009, %v4624, 0
        %v4636 = vsel %vm2009, %v4625, 0
        %v4639 = vsel %vm2009, %v4626, 0
        %v4642 = vsel %vm2009, %v4627, 0
        %v4645 = vsel %vm2009, %v4628, 0
        %v4648 = vsel %vm2009, %v4629, 0
        %v4651 = vsel %vm2009, %v4630, 0
        %v4654 = vsel %vm2009, %v4631, 0
        %4656 = vmatpush.msra.mxu0 0.0
        %4657 = vmatpush.msra.mxu0 0.0
        %4658 = vmatpush.msra.mxu0 0.0
        %4659 = vmatpush.msra.mxu0 0.0
        %4660 = vmatpush.msra.mxu0 0.0
        %4661 = vmatpush.msra.mxu0 0.0
        %4662 = vmatpush.msra.mxu0 0.0
        %4663 = vmatpush.msra.mxu0 0.0
        %4664 = vmatpush.msra.mxu0 %v4623
        %4665 = vmatpush.msra.mxu0 %v4622
        %4666 = vmatpush.msra.mxu0 %v4621
        %4667 = vmatpush.msra.mxu0 %v4620
        %4668 = vmatpush.msra.mxu0 %v4603
        %4669 = vmatpush.msra.mxu0 %v4602
        %4670 = vmatpush.msra.mxu0 %v4601
        %4671 = vmatpush.msra.mxu0 %v4600
        %4672 = vmatmul.f32.gmra.mxu0 %v4633
        %v4673 = vpop.f32.mrf.mxu0
        %v4674 = vadd.f32 0.0, %v4673
        %4675 = vmatmul.f32.gmra.mxu0 %v4636
        %v4676 = vpop.f32.mrf.mxu0
        %v4677 = vadd.f32 0.0, %v4676
        %4678 = vmatmul.f32.gmra.mxu0 %v4639
        %v4679 = vpop.f32.mrf.mxu0
        %v4680 = vadd.f32 0.0, %v4679
        %4681 = vmatmul.f32.gmra.mxu0 %v4642
        %v4682 = vpop.f32.mrf.mxu0
        %v4683 = vadd.f32 0.0, %v4682
        %4684 = vmatmul.f32.gmra.mxu0 %v4645
        %v4685 = vpop.f32.mrf.mxu0
        %v4686 = vadd.f32 0.0, %v4685
        %4687 = vmatmul.f32.gmra.mxu0 %v4648
        %v4688 = vpop.f32.mrf.mxu0
        %v4689 = vadd.f32 0.0, %v4688
        %4690 = vmatmul.f32.gmra.mxu0 %v4651
        %v4691 = vpop.f32.mrf.mxu0
        %v4692 = vadd.f32 0.0, %v4691
        %4693 = vmatmul.f32.gmra.mxu0 %v4654
        %v4694 = vpop.f32.mrf.mxu0
        %v4695 = vadd.f32 0.0, %v4694
        %4696 = vdwg.mxu0
        %4701 = vrot.lane.b32.xlu0 %v4686, 32
        %v4702 = vpop.permute.xlu0 %4701
        %4703 = vrot.lane.b32.xlu0 %v4689, 32
        %v4704 = vpop.permute.xlu0 %4703
        %4705 = vrot.lane.b32.xlu0 %v4692, 32
        %v4706 = vpop.permute.xlu0 %4705
        %4707 = vrot.lane.b32.xlu0 %v4695, 32
        %v4708 = vpop.permute.xlu0 %4707
        %v4713 = vsel %vm251, %v4674, %v4702
        %v4714 = vsel %vm251, %v4677, %v4704
        %v4715 = vsel %vm251, %v4680, %v4706
        %v4716 = vsel %vm251, %v4683, %v4708
        %4721 = vrot.lane.b32.xlu0 %v4674, 96
        %v4722 = vpop.permute.xlu0 %4721
        %4723 = vrot.lane.b32.xlu0 %v4677, 96
        %v4724 = vpop.permute.xlu0 %4723
        %4725 = vrot.lane.b32.xlu0 %v4680, 96
        %v4726 = vpop.permute.xlu0 %4725
        %4727 = vrot.lane.b32.xlu0 %v4683, 96
        %v4728 = vpop.permute.xlu0 %4727
        %v4733 = vsel %vm251, %v4722, %v4686
        %v4734 = vsel %vm251, %v4724, %v4689
        %v4735 = vsel %vm251, %v4726, %v4692
        %v4736 = vsel %vm251, %v4728, %v4695
        %v4737 = vld [vmem:[#allocation26] sm:$0xff]
        %v4738 = vld [vmem:[#allocation26 + $0x8] sm:$0xff]
        %v4739 = vld [vmem:[#allocation26 + $0x10] sm:$0xff]
        %v4740 = vld [vmem:[#allocation26 + $0x18] sm:$0xff]
        %v4741 = vld [vmem:[#allocation26 + $0x20] sm:$0xff]
        %v4742 = vld [vmem:[#allocation26 + $0x28] sm:$0xff]
        %v4743 = vld [vmem:[#allocation26 + $0x30] sm:$0xff]
        %v4744 = vld [vmem:[#allocation26 + $0x38] sm:$0xff]
        %v4746 = vsel %vm2009, %v4713, 0
        %v4749 = vsel %vm2009, %v4714, 0
        %v4752 = vsel %vm2009, %v4715, 0
        %v4755 = vsel %vm2009, %v4716, 0
        %v4758 = vsel %vm2009, %v4733, 0
        %v4761 = vsel %vm2009, %v4734, 0
        %v4764 = vsel %vm2009, %v4735, 0
        %v4767 = vsel %vm2009, %v4736, 0
        %4769 = vmatpush.msra.mxu0 0.0
        %4770 = vmatpush.msra.mxu0 0.0
        %4771 = vmatpush.msra.mxu0 0.0
        %4772 = vmatpush.msra.mxu0 0.0
        %4773 = vmatpush.msra.mxu0 0.0
        %4774 = vmatpush.msra.mxu0 0.0
        %4775 = vmatpush.msra.mxu0 0.0
        %4776 = vmatpush.msra.mxu0 0.0
        %4777 = vmatpush.msra.mxu0 %v4744
        %4778 = vmatpush.msra.mxu0 %v4743
        %4779 = vmatpush.msra.mxu0 %v4742
        %4780 = vmatpush.msra.mxu0 %v4741
        %4781 = vmatpush.msra.mxu0 %v4740
        %4782 = vmatpush.msra.mxu0 %v4739
        %4783 = vmatpush.msra.mxu0 %v4738
        %4784 = vmatpush.msra.mxu0 %v4737
        %4785 = vmatmul.f32.gmra.mxu0 %v4746
        %v4786 = vpop.f32.mrf.mxu0
        %v4787 = vadd.f32 0.0, %v4786
        %4788 = vmatmul.f32.gmra.mxu0 %v4749
        %v4789 = vpop.f32.mrf.mxu0
        %v4790 = vadd.f32 0.0, %v4789
        %4791 = vmatmul.f32.gmra.mxu0 %v4752
        %v4792 = vpop.f32.mrf.mxu0
        %v4793 = vadd.f32 0.0, %v4792
        %4794 = vmatmul.f32.gmra.mxu0 %v4755
        %v4795 = vpop.f32.mrf.mxu0
        %v4796 = vadd.f32 0.0, %v4795
        %4797 = vmatmul.f32.gmra.mxu0 %v4758
        %v4798 = vpop.f32.mrf.mxu0
        %v4799 = vadd.f32 0.0, %v4798
        %4800 = vmatmul.f32.gmra.mxu0 %v4761
        %v4801 = vpop.f32.mrf.mxu0
        %v4802 = vadd.f32 0.0, %v4801
        %4803 = vmatmul.f32.gmra.mxu0 %v4764
        %v4804 = vpop.f32.mrf.mxu0
        %v4805 = vadd.f32 0.0, %v4804
        %4806 = vmatmul.f32.gmra.mxu0 %v4767
        %v4807 = vpop.f32.mrf.mxu0
        %v4808 = vadd.f32 0.0, %v4807
        %4809 = vdwg.mxu0
        %4810 = vst.msk [vmem:[#allocation4] sm:$0xff] %vm251, %v4787
        %4811 = vst.msk [vmem:[#allocation4 + $0x8] sm:$0xff] %vm251, %v4790
        %4812 = vst.msk [vmem:[#allocation4 + $0x10] sm:$0xff] %vm251, %v4793
        %4813 = vst.msk [vmem:[#allocation4 + $0x18] sm:$0xff] %vm251, %v4796
        %4818 = vrot.lane.b32.xlu0 %v4787, 96
        %v4819 = vpop.permute.xlu0 %4818
        %4820 = vrot.lane.b32.xlu0 %v4790, 96
        %v4821 = vpop.permute.xlu0 %4820
        %4822 = vrot.lane.b32.xlu0 %v4793, 96
        %v4823 = vpop.permute.xlu0 %4822
        %4824 = vrot.lane.b32.xlu0 %v4796, 96
        %v4825 = vpop.permute.xlu0 %4824
        %4830 = vst.msk [vmem:[#allocation5] sm:$0xff] %vm251, %v4819
        %4831 = vst.msk [vmem:[#allocation5 + $0x8] sm:$0xff] %vm251, %v4821
        %4832 = vst.msk [vmem:[#allocation5 + $0x10] sm:$0xff] %vm251, %v4823
        %4833 = vst.msk [vmem:[#allocation5 + $0x18] sm:$0xff] %vm251, %v4825
        %s4834 = ssub.s32 1, %s2791
        %s4835 = smul.u32 %s4834, 2
        %s4836 = smul.u32 %s4835, 32
        %s4837 = scalar_lea.vmem [#allocation6], %s4836
        %v4838 = vld [vmem:[%s4837] sm:$0xff]
        %v4839 = vld [vmem:[%s4837 + $0x8] sm:$0xff]
        %v4840 = vld [vmem:[%s4837 + $0x10] sm:$0xff]
        %v4841 = vld [vmem:[%s4837 + $0x18] sm:$0xff]
        %s4842 = sadd.s32 %s4835, 1
        %s4843 = smul.u32 %s4842, 32
        %s4844 = scalar_lea.vmem [#allocation6], %s4843
        %v4845 = vld [vmem:[%s4844] sm:$0xff]
        %v4846 = vld [vmem:[%s4844 + $0x8] sm:$0xff]
        %v4847 = vld [vmem:[%s4844 + $0x10] sm:$0xff]
        %v4848 = vld [vmem:[%s4844 + $0x18] sm:$0xff]
        %v4849 = vmul.f32 %v4845, -40.840706
        %v4850 = vmul.f32 %v4846, -40.840706
        %v4851 = vmul.f32 %v4847, -40.840706
        %v4852 = vmul.f32 %v4848, -40.840706
        %v4853 = vmul.f32 %v4849, 1.442695
        %v4854 = vpow.pop %v4853
        %v4855 = vmul.f32 %v4850, 1.442695
        %v4856 = vpow.pop %v4855
        %v4857 = vmul.f32 %v4851, 1.442695
        %v4858 = vpow.pop %v4857
        %v4859 = vmul.f32 %v4852, 1.442695
        %v4860 = vpow.pop %v4859
        %v4861 = vmul.f32 %v4838, 40.840706
        %v4862 = vmul.f32 %v4839, 40.840706
        %v4863 = vmul.f32 %v4840, 40.840706
        %v4864 = vmul.f32 %v4841, 40.840706
        %v4865 = vand.u32 2147483647, %v4861
        %vm4866 = vcmp.le.f32.partialorder %v4865, 0.7853982
        %vm4867 = vcmp.lt.s32.totalorder %v4861, 0
        %v4868 = vand.u32 %v4861, 2139095040
        %v4869 = vshrl.u32 %v4868, 23
        %v4870 = vsub.s32 %v4869, 127
        %v4871 = vand.u32 2147483647, %v4861
        %v4872 = vand.u32 %v4871, 8388607
        %v4873 = vor.u32 %v4872, 8388608
        %v4874 = vsub.s32 0, %v4873
        %v4875 = vadd.s32 %v4870, 1
        %vm4876 = vcmp.gt.s32.totalorder %v4875, 0
        %v4877 = vsel %vm4876, %v4875, 0
        %v4878 = vshrl.u32 %v4877, 5
        %v4879 = vand.u32 %v4877, 31
        %v4880 = vsub.s32 32, %v4879
        %v4881 = vshrl.u32 683565275, %v4880
        %v4882 = vshll.u32 683565275, %v4879
        %v4883 = vshrl.u32 2475754826, %v4880
        %v4884 = vor.u32 %v4882, %v4883
        %v4885 = vshll.u32 2475754826, %v4879
        %v4886 = vshrl.u32 2131351028, %v4880
        %v4887 = vor.u32 %v4885, %v4886
        %v4888 = vshll.u32 2131351028, %v4879
        %v4889 = vshrl.u32 2102212464, %v4880
        %v4890 = vor.u32 %v4888, %v4889
        %v4891 = vshll.u32 2102212464, %v4879
        %v4892 = vshrl.u32 920167782, %v4880
        %v4893 = vor.u32 %v4891, %v4892
        %v4894 = vshll.u32 920167782, %v4879
        %v4895 = vshrl.u32 1326507024, %v4880
        %v4896 = vor.u32 %v4894, %v4895
        %vm4897 = vcmp.lt.s32.totalorder %v4878, 1
        %vm4898 = vcmp.lt.s32.totalorder %v4878, 2
        %vm4899 = vcmp.lt.s32.totalorder %v4878, 3
        %vm4900 = vcmp.lt.s32.totalorder %v4878, 4
        %v4901 = vsel %vm4897, %v4881, %v4884
        %v4902 = vsel %vm4900, %v4890, 2102212464
        %v4903 = vsel %vm4899, %v4887, %v4902
        %v4904 = vsel %vm4898, %v4901, %v4903
        %v4905 = vsel %vm4897, %v4884, %v4887
        %v4906 = vsel %vm4900, %v4893, 920167782
        %v4907 = vsel %vm4899, %v4890, %v4906
        %v4908 = vsel %vm4898, %v4905, %v4907
        %v4909 = vsel %vm4897, %v4887, %v4890
        %v4910 = vsel %vm4900, %v4896, 1326507024
        %v4911 = vsel %vm4899, %v4893, %v4910
        %v4912 = vsel %vm4898, %v4909, %v4911
        %v4913 = vshll.u32 %v4873, 8
        %v4914 = vand.u32 %v4913, 65535
        %v4915 = vshrl.u32 %v4913, 16
        %v4916 = vand.u32 %v4912, 65535
        %v4917 = vshrl.u32 %v4912, 16
        %v4918 = vmul.u32 %v4914, %v4916
        %v4919 = vmul.u32 %v4914, %v4917
        %v4920 = vmul.u32 %v4915, %v4916
        %v4921 = vmul.u32 %v4915, %v4917
        %v4922 = vshll.u32 %v4919, 16
        %v4923 = vshrl.u32 %v4919, 16
        %v4924 = vshll.u32 %v4920, 16
        %v4925 = vshrl.u32 %v4920, 16
        %vm4926 = vc.u32 %v4918, %v4922
        %v4927 = vsel %vm4926, 1, 0
        %v4928 = vadd.s32 %v4918, %v4922
        %v4929 = vadd.s32 %v4921, %v4927
        %vm4930 = vc.u32 %v4928, %v4924
        %v4931 = vsel %vm4930, 1, 0
        %v4932 = vadd.s32 %v4928, %v4924
        %v4933 = vadd.s32 %v4929, %v4931
        %v4934 = vadd.s32 %v4933, %v4923
        %v4935 = vadd.s32 %v4934, %v4925
        %v4936 = vand.u32 %v4913, 65535
        %v4937 = vshrl.u32 %v4913, 16
        %v4938 = vand.u32 %v4908, 65535
        %v4939 = vshrl.u32 %v4908, 16
        %v4940 = vmul.u32 %v4936, %v4938
        %v4941 = vmul.u32 %v4936, %v4939
        %v4942 = vmul.u32 %v4937, %v4938
        %v4943 = vmul.u32 %v4937, %v4939
        %v4944 = vshll.u32 %v4941, 16
        %v4945 = vshrl.u32 %v4941, 16
        %v4946 = vshll.u32 %v4942, 16
        %v4947 = vshrl.u32 %v4942, 16
        %vm4948 = vc.u32 %v4940, %v4944
        %v4949 = vsel %vm4948, 1, 0
        %v4950 = vadd.s32 %v4940, %v4944
        %v4951 = vadd.s32 %v4943, %v4949
        %vm4952 = vc.u32 %v4950, %v4946
        %v4953 = vsel %vm4952, 1, 0
        %v4954 = vadd.s32 %v4950, %v4946
        %v4955 = vadd.s32 %v4951, %v4953
        %v4956 = vadd.s32 %v4955, %v4945
        %v4957 = vadd.s32 %v4956, %v4947
        %v4958 = vmul.u32 %v4913, %v4904
        %v4959 = vadd.s32 %v4935, %v4954
        %vm4960 = vc.u32 %v4935, %v4954
        %v4961 = vadd.s32 %v4957, 1
        %v4962 = vsel %vm4960, %v4961, %v4957
        %v4963 = vadd.s32 %v4958, %v4962
        %v4964 = vadd.s32 %v4963, 536870912
        %v4965 = vshrl.u32 %v4964, 30
        %v4966 = vshll.u32 %v4965, 30
        %v4967 = vsub.s32 %v4963, %v4966
        %vm4968 = vcmp.lt.s32.totalorder %v4967, 0
        %v4969 = vsub.s32 0, %v4967
        %v4970 = vsel %vm4968, %v4969, %v4967
        %v4971 = vclz %v4970
        %v4972 = vsub.s32 %v4971, 2
        %vm4973 = vcmp.gt.s32.totalorder 0, %v4972
        %v4974 = vsel %vm4973, 0, %v4972
        %v4975 = vsub.s32 32, %v4974
        %v4976 = vshll.u32 %v4967, %v4974
        %v4977 = vshrl.u32 %v4959, %v4975
        %v4978 = vor.u32 %v4976, %v4977
        %v4979 = vsub.s32 4294967266, %v4974
        %v4980 = vadd.s32 %v4979, 127
        %v4981 = vshll.u32 %v4980, 23
        %v4982 = vor.u32 4788187, %v4981
        %v4983 = vand.u32 2147483647, %v4982
        %v4985 = vcvt.s32.f32 %v4978
        %v4986 = vmul.f32 %v4985, %v4983
        %v4987 = vxor.u32 %v4986, 2147483648
        %v4988 = vsel %vm4867, %v4987, %v4986
        %v4989 = vsub.s32 4, %v4965
        %v4990 = vsel %vm4867, %v4989, %v4965
        %v4991 = vsel %vm4866, %v4861, %v4988
        %v4992 = vsel %vm4866, 0, %v4990
        %v4993 = vmul.f32 %v4991, %v4991
        %v4994 = vmul.f32 %v4993, -0.001358992
        %v4995 = vadd.f32 %v4994, 0.041655596
        %v4996 = vmul.f32 %v4993, %v4995
        %v4997 = vadd.f32 %v4996, -0.4999988
        %v4998 = vmul.f32 %v4993, %v4997
        %v4999 = vadd.f32 1.0, %v4998
        %v5000 = vmul.f32 %v4991, %v4991
        %v5001 = vmul.f32 %v5000, -0.00019511016
        %v5002 = vadd.f32 %v5001, 0.008332121
        %v5003 = vmul.f32 %v5000, %v5002
        %v5004 = vadd.f32 %v5003, -0.16666654
        %v5005 = vmul.f32 %v5000, %v5004
        %v5006 = vadd.f32 %v5005, 1.0
        %v5007 = vmul.f32 %v5006, %v4991
        %vm5008 = vweird.f32 %v4861
        %v5009 = vand.u32 %v4992, 3
        %vm5010 = vcmp.lt.s32.totalorder %v5009, 2
        %vm5011 = vcmp.eq.s32.totalorder %v5009, 0
        %v5012 = vxor.u32 %v5007, 2147483648
        %v5013 = vsel %vm5011, %v4999, %v5012
        %vm5014 = vcmp.eq.s32.totalorder %v5009, 2
        %v5015 = vxor.u32 %v4999, 2147483648
        %v5016 = vsel %vm5014, %v5015, %v5007
        %v5017 = vsel %vm5010, %v5013, %v5016
        %v5018 = vsel %vm5008, nan, %v5017
        %v5019 = vand.u32 2147483647, %v4862
        %vm5020 = vcmp.le.f32.partialorder %v5019, 0.7853982
        %vm5021 = vcmp.lt.s32.totalorder %v4862, 0
        %v5022 = vand.u32 %v4862, 2139095040
        %v5023 = vshrl.u32 %v5022, 23
        %v5024 = vsub.s32 %v5023, 127
        %v5025 = vand.u32 2147483647, %v4862
        %v5026 = vand.u32 %v5025, 8388607
        %v5027 = vor.u32 %v5026, 8388608
        %v5028 = vsub.s32 0, %v5027
        %v5029 = vadd.s32 %v5024, 1
        %vm5030 = vcmp.gt.s32.totalorder %v5029, 0
        %v5031 = vsel %vm5030, %v5029, 0
        %v5032 = vshrl.u32 %v5031, 5
        %v5033 = vand.u32 %v5031, 31
        %v5034 = vsub.s32 32, %v5033
        %v5035 = vshrl.u32 683565275, %v5034
        %v5036 = vshll.u32 683565275, %v5033
        %v5037 = vshrl.u32 2475754826, %v5034
        %v5038 = vor.u32 %v5036, %v5037
        %v5039 = vshll.u32 2475754826, %v5033
        %v5040 = vshrl.u32 2131351028, %v5034
        %v5041 = vor.u32 %v5039, %v5040
        %v5042 = vshll.u32 2131351028, %v5033
        %v5043 = vshrl.u32 2102212464, %v5034
        %v5044 = vor.u32 %v5042, %v5043
        %v5045 = vshll.u32 2102212464, %v5033
        %v5046 = vshrl.u32 920167782, %v5034
        %v5047 = vor.u32 %v5045, %v5046
        %v5048 = vshll.u32 920167782, %v5033
        %v5049 = vshrl.u32 1326507024, %v5034
        %v5050 = vor.u32 %v5048, %v5049
        %vm5051 = vcmp.lt.s32.totalorder %v5032, 1
        %vm5052 = vcmp.lt.s32.totalorder %v5032, 2
        %vm5053 = vcmp.lt.s32.totalorder %v5032, 3
        %vm5054 = vcmp.lt.s32.totalorder %v5032, 4
        %v5055 = vsel %vm5051, %v5035, %v5038
        %v5056 = vsel %vm5054, %v5044, 2102212464
        %v5057 = vsel %vm5053, %v5041, %v5056
        %v5058 = vsel %vm5052, %v5055, %v5057
        %v5059 = vsel %vm5051, %v5038, %v5041
        %v5060 = vsel %vm5054, %v5047, 920167782
        %v5061 = vsel %vm5053, %v5044, %v5060
        %v5062 = vsel %vm5052, %v5059, %v5061
        %v5063 = vsel %vm5051, %v5041, %v5044
        %v5064 = vsel %vm5054, %v5050, 1326507024
        %v5065 = vsel %vm5053, %v5047, %v5064
        %v5066 = vsel %vm5052, %v5063, %v5065
        %v5067 = vshll.u32 %v5027, 8
        %v5068 = vand.u32 %v5067, 65535
        %v5069 = vshrl.u32 %v5067, 16
        %v5070 = vand.u32 %v5066, 65535
        %v5071 = vshrl.u32 %v5066, 16
        %v5072 = vmul.u32 %v5068, %v5070
        %v5073 = vmul.u32 %v5068, %v5071
        %v5074 = vmul.u32 %v5069, %v5070
        %v5075 = vmul.u32 %v5069, %v5071
        %v5076 = vshll.u32 %v5073, 16
        %v5077 = vshrl.u32 %v5073, 16
        %v5078 = vshll.u32 %v5074, 16
        %v5079 = vshrl.u32 %v5074, 16
        %vm5080 = vc.u32 %v5072, %v5076
        %v5081 = vsel %vm5080, 1, 0
        %v5082 = vadd.s32 %v5072, %v5076
        %v5083 = vadd.s32 %v5075, %v5081
        %vm5084 = vc.u32 %v5082, %v5078
        %v5085 = vsel %vm5084, 1, 0
        %v5086 = vadd.s32 %v5082, %v5078
        %v5087 = vadd.s32 %v5083, %v5085
        %v5088 = vadd.s32 %v5087, %v5077
        %v5089 = vadd.s32 %v5088, %v5079
        %v5090 = vand.u32 %v5067, 65535
        %v5091 = vshrl.u32 %v5067, 16
        %v5092 = vand.u32 %v5062, 65535
        %v5093 = vshrl.u32 %v5062, 16
        %v5094 = vmul.u32 %v5090, %v5092
        %v5095 = vmul.u32 %v5090, %v5093
        %v5096 = vmul.u32 %v5091, %v5092
        %v5097 = vmul.u32 %v5091, %v5093
        %v5098 = vshll.u32 %v5095, 16
        %v5099 = vshrl.u32 %v5095, 16
        %v5100 = vshll.u32 %v5096, 16
        %v5101 = vshrl.u32 %v5096, 16
        %vm5102 = vc.u32 %v5094, %v5098
        %v5103 = vsel %vm5102, 1, 0
        %v5104 = vadd.s32 %v5094, %v5098
        %v5105 = vadd.s32 %v5097, %v5103
        %vm5106 = vc.u32 %v5104, %v5100
        %v5107 = vsel %vm5106, 1, 0
        %v5108 = vadd.s32 %v5104, %v5100
        %v5109 = vadd.s32 %v5105, %v5107
        %v5110 = vadd.s32 %v5109, %v5099
        %v5111 = vadd.s32 %v5110, %v5101
        %v5112 = vmul.u32 %v5067, %v5058
        %v5113 = vadd.s32 %v5089, %v5108
        %vm5114 = vc.u32 %v5089, %v5108
        %v5115 = vadd.s32 %v5111, 1
        %v5116 = vsel %vm5114, %v5115, %v5111
        %v5117 = vadd.s32 %v5112, %v5116
        %v5118 = vadd.s32 %v5117, 536870912
        %v5119 = vshrl.u32 %v5118, 30
        %v5120 = vshll.u32 %v5119, 30
        %v5121 = vsub.s32 %v5117, %v5120
        %vm5122 = vcmp.lt.s32.totalorder %v5121, 0
        %v5123 = vsub.s32 0, %v5121
        %v5124 = vsel %vm5122, %v5123, %v5121
        %v5125 = vclz %v5124
        %v5126 = vsub.s32 %v5125, 2
        %vm5127 = vcmp.gt.s32.totalorder 0, %v5126
        %v5128 = vsel %vm5127, 0, %v5126
        %v5129 = vsub.s32 32, %v5128
        %v5130 = vshll.u32 %v5121, %v5128
        %v5131 = vshrl.u32 %v5113, %v5129
        %v5132 = vor.u32 %v5130, %v5131
        %v5133 = vsub.s32 4294967266, %v5128
        %v5134 = vadd.s32 %v5133, 127
        %v5135 = vshll.u32 %v5134, 23
        %v5136 = vor.u32 4788187, %v5135
        %v5137 = vand.u32 2147483647, %v5136
        %v5139 = vcvt.s32.f32 %v5132
        %v5140 = vmul.f32 %v5139, %v5137
        %v5141 = vxor.u32 %v5140, 2147483648
        %v5142 = vsel %vm5021, %v5141, %v5140
        %v5143 = vsub.s32 4, %v5119
        %v5144 = vsel %vm5021, %v5143, %v5119
        %v5145 = vsel %vm5020, %v4862, %v5142
        %v5146 = vsel %vm5020, 0, %v5144
        %v5147 = vmul.f32 %v5145, %v5145
        %v5148 = vmul.f32 %v5147, -0.001358992
        %v5149 = vadd.f32 %v5148, 0.041655596
        %v5150 = vmul.f32 %v5147, %v5149
        %v5151 = vadd.f32 %v5150, -0.4999988
        %v5152 = vmul.f32 %v5147, %v5151
        %v5153 = vadd.f32 1.0, %v5152
        %v5154 = vmul.f32 %v5145, %v5145
        %v5155 = vmul.f32 %v5154, -0.00019511016
        %v5156 = vadd.f32 %v5155, 0.008332121
        %v5157 = vmul.f32 %v5154, %v5156
        %v5158 = vadd.f32 %v5157, -0.16666654
        %v5159 = vmul.f32 %v5154, %v5158
        %v5160 = vadd.f32 %v5159, 1.0
        %v5161 = vmul.f32 %v5160, %v5145
        %vm5162 = vweird.f32 %v4862
        %v5163 = vand.u32 %v5146, 3
        %vm5164 = vcmp.lt.s32.totalorder %v5163, 2
        %vm5165 = vcmp.eq.s32.totalorder %v5163, 0
        %v5166 = vxor.u32 %v5161, 2147483648
        %v5167 = vsel %vm5165, %v5153, %v5166
        %vm5168 = vcmp.eq.s32.totalorder %v5163, 2
        %v5169 = vxor.u32 %v5153, 2147483648
        %v5170 = vsel %vm5168, %v5169, %v5161
        %v5171 = vsel %vm5164, %v5167, %v5170
        %v5172 = vsel %vm5162, nan, %v5171
        %v5173 = vand.u32 2147483647, %v4863
        %vm5174 = vcmp.le.f32.partialorder %v5173, 0.7853982
        %vm5175 = vcmp.lt.s32.totalorder %v4863, 0
        %v5176 = vand.u32 %v4863, 2139095040
        %v5177 = vshrl.u32 %v5176, 23
        %v5178 = vsub.s32 %v5177, 127
        %v5179 = vand.u32 2147483647, %v4863
        %v5180 = vand.u32 %v5179, 8388607
        %v5181 = vor.u32 %v5180, 8388608
        %v5182 = vsub.s32 0, %v5181
        %v5183 = vadd.s32 %v5178, 1
        %vm5184 = vcmp.gt.s32.totalorder %v5183, 0
        %v5185 = vsel %vm5184, %v5183, 0
        %v5186 = vshrl.u32 %v5185, 5
        %v5187 = vand.u32 %v5185, 31
        %v5188 = vsub.s32 32, %v5187
        %v5189 = vshrl.u32 683565275, %v5188
        %v5190 = vshll.u32 683565275, %v5187
        %v5191 = vshrl.u32 2475754826, %v5188
        %v5192 = vor.u32 %v5190, %v5191
        %v5193 = vshll.u32 2475754826, %v5187
        %v5194 = vshrl.u32 2131351028, %v5188
        %v5195 = vor.u32 %v5193, %v5194
        %v5196 = vshll.u32 2131351028, %v5187
        %v5197 = vshrl.u32 2102212464, %v5188
        %v5198 = vor.u32 %v5196, %v5197
        %v5199 = vshll.u32 2102212464, %v5187
        %v5200 = vshrl.u32 920167782, %v5188
        %v5201 = vor.u32 %v5199, %v5200
        %v5202 = vshll.u32 920167782, %v5187
        %v5203 = vshrl.u32 1326507024, %v5188
        %v5204 = vor.u32 %v5202, %v5203
        %vm5205 = vcmp.lt.s32.totalorder %v5186, 1
        %vm5206 = vcmp.lt.s32.totalorder %v5186, 2
        %vm5207 = vcmp.lt.s32.totalorder %v5186, 3
        %vm5208 = vcmp.lt.s32.totalorder %v5186, 4
        %v5209 = vsel %vm5205, %v5189, %v5192
        %v5210 = vsel %vm5208, %v5198, 2102212464
        %v5211 = vsel %vm5207, %v5195, %v5210
        %v5212 = vsel %vm5206, %v5209, %v5211
        %v5213 = vsel %vm5205, %v5192, %v5195
        %v5214 = vsel %vm5208, %v5201, 920167782
        %v5215 = vsel %vm5207, %v5198, %v5214
        %v5216 = vsel %vm5206, %v5213, %v5215
        %v5217 = vsel %vm5205, %v5195, %v5198
        %v5218 = vsel %vm5208, %v5204, 1326507024
        %v5219 = vsel %vm5207, %v5201, %v5218
        %v5220 = vsel %vm5206, %v5217, %v5219
        %v5221 = vshll.u32 %v5181, 8
        %v5222 = vand.u32 %v5221, 65535
        %v5223 = vshrl.u32 %v5221, 16
        %v5224 = vand.u32 %v5220, 65535
        %v5225 = vshrl.u32 %v5220, 16
        %v5226 = vmul.u32 %v5222, %v5224
        %v5227 = vmul.u32 %v5222, %v5225
        %v5228 = vmul.u32 %v5223, %v5224
        %v5229 = vmul.u32 %v5223, %v5225
        %v5230 = vshll.u32 %v5227, 16
        %v5231 = vshrl.u32 %v5227, 16
        %v5232 = vshll.u32 %v5228, 16
        %v5233 = vshrl.u32 %v5228, 16
        %vm5234 = vc.u32 %v5226, %v5230
        %v5235 = vsel %vm5234, 1, 0
        %v5236 = vadd.s32 %v5226, %v5230
        %v5237 = vadd.s32 %v5229, %v5235
        %vm5238 = vc.u32 %v5236, %v5232
        %v5239 = vsel %vm5238, 1, 0
        %v5240 = vadd.s32 %v5236, %v5232
        %v5241 = vadd.s32 %v5237, %v5239
        %v5242 = vadd.s32 %v5241, %v5231
        %v5243 = vadd.s32 %v5242, %v5233
        %v5244 = vand.u32 %v5221, 65535
        %v5245 = vshrl.u32 %v5221, 16
        %v5246 = vand.u32 %v5216, 65535
        %v5247 = vshrl.u32 %v5216, 16
        %v5248 = vmul.u32 %v5244, %v5246
        %v5249 = vmul.u32 %v5244, %v5247
        %v5250 = vmul.u32 %v5245, %v5246
        %v5251 = vmul.u32 %v5245, %v5247
        %v5252 = vshll.u32 %v5249, 16
        %v5253 = vshrl.u32 %v5249, 16
        %v5254 = vshll.u32 %v5250, 16
        %v5255 = vshrl.u32 %v5250, 16
        %vm5256 = vc.u32 %v5248, %v5252
        %v5257 = vsel %vm5256, 1, 0
        %v5258 = vadd.s32 %v5248, %v5252
        %v5259 = vadd.s32 %v5251, %v5257
        %vm5260 = vc.u32 %v5258, %v5254
        %v5261 = vsel %vm5260, 1, 0
        %v5262 = vadd.s32 %v5258, %v5254
        %v5263 = vadd.s32 %v5259, %v5261
        %v5264 = vadd.s32 %v5263, %v5253
        %v5265 = vadd.s32 %v5264, %v5255
        %v5266 = vmul.u32 %v5221, %v5212
        %v5267 = vadd.s32 %v5243, %v5262
        %vm5268 = vc.u32 %v5243, %v5262
        %v5269 = vadd.s32 %v5265, 1
        %v5270 = vsel %vm5268, %v5269, %v5265
        %v5271 = vadd.s32 %v5266, %v5270
        %v5272 = vadd.s32 %v5271, 536870912
        %v5273 = vshrl.u32 %v5272, 30
        %v5274 = vshll.u32 %v5273, 30
        %v5275 = vsub.s32 %v5271, %v5274
        %vm5276 = vcmp.lt.s32.totalorder %v5275, 0
        %v5277 = vsub.s32 0, %v5275
        %v5278 = vsel %vm5276, %v5277, %v5275
        %v5279 = vclz %v5278
        %v5280 = vsub.s32 %v5279, 2
        %vm5281 = vcmp.gt.s32.totalorder 0, %v5280
        %v5282 = vsel %vm5281, 0, %v5280
        %v5283 = vsub.s32 32, %v5282
        %v5284 = vshll.u32 %v5275, %v5282
        %v5285 = vshrl.u32 %v5267, %v5283
        %v5286 = vor.u32 %v5284, %v5285
        %v5287 = vsub.s32 4294967266, %v5282
        %v5288 = vadd.s32 %v5287, 127
        %v5289 = vshll.u32 %v5288, 23
        %v5290 = vor.u32 4788187, %v5289
        %v5291 = vand.u32 2147483647, %v5290
        %v5293 = vcvt.s32.f32 %v5286
        %v5294 = vmul.f32 %v5293, %v5291
        %v5295 = vxor.u32 %v5294, 2147483648
        %v5296 = vsel %vm5175, %v5295, %v5294
        %v5297 = vsub.s32 4, %v5273
        %v5298 = vsel %vm5175, %v5297, %v5273
        %v5299 = vsel %vm5174, %v4863, %v5296
        %v5300 = vsel %vm5174, 0, %v5298
        %v5301 = vmul.f32 %v5299, %v5299
        %v5302 = vmul.f32 %v5301, -0.001358992
        %v5303 = vadd.f32 %v5302, 0.041655596
        %v5304 = vmul.f32 %v5301, %v5303
        %v5305 = vadd.f32 %v5304, -0.4999988
        %v5306 = vmul.f32 %v5301, %v5305
        %v5307 = vadd.f32 1.0, %v5306
        %v5308 = vmul.f32 %v5299, %v5299
        %v5309 = vmul.f32 %v5308, -0.00019511016
        %v5310 = vadd.f32 %v5309, 0.008332121
        %v5311 = vmul.f32 %v5308, %v5310
        %v5312 = vadd.f32 %v5311, -0.16666654
        %v5313 = vmul.f32 %v5308, %v5312
        %v5314 = vadd.f32 %v5313, 1.0
        %v5315 = vmul.f32 %v5314, %v5299
        %vm5316 = vweird.f32 %v4863
        %v5317 = vand.u32 %v5300, 3
        %vm5318 = vcmp.lt.s32.totalorder %v5317, 2
        %vm5319 = vcmp.eq.s32.totalorder %v5317, 0
        %v5320 = vxor.u32 %v5315, 2147483648
        %v5321 = vsel %vm5319, %v5307, %v5320
        %vm5322 = vcmp.eq.s32.totalorder %v5317, 2
        %v5323 = vxor.u32 %v5307, 2147483648
        %v5324 = vsel %vm5322, %v5323, %v5315
        %v5325 = vsel %vm5318, %v5321, %v5324
        %v5326 = vsel %vm5316, nan, %v5325
        %v5327 = vand.u32 2147483647, %v4864
        %vm5328 = vcmp.le.f32.partialorder %v5327, 0.7853982
        %vm5329 = vcmp.lt.s32.totalorder %v4864, 0
        %v5330 = vand.u32 %v4864, 2139095040
        %v5331 = vshrl.u32 %v5330, 23
        %v5332 = vsub.s32 %v5331, 127
        %v5333 = vand.u32 2147483647, %v4864
        %v5334 = vand.u32 %v5333, 8388607
        %v5335 = vor.u32 %v5334, 8388608
        %v5336 = vsub.s32 0, %v5335
        %v5337 = vadd.s32 %v5332, 1
        %vm5338 = vcmp.gt.s32.totalorder %v5337, 0
        %v5339 = vsel %vm5338, %v5337, 0
        %v5340 = vshrl.u32 %v5339, 5
        %v5341 = vand.u32 %v5339, 31
        %v5342 = vsub.s32 32, %v5341
        %v5343 = vshrl.u32 683565275, %v5342
        %v5344 = vshll.u32 683565275, %v5341
        %v5345 = vshrl.u32 2475754826, %v5342
        %v5346 = vor.u32 %v5344, %v5345
        %v5347 = vshll.u32 2475754826, %v5341
        %v5348 = vshrl.u32 2131351028, %v5342
        %v5349 = vor.u32 %v5347, %v5348
        %v5350 = vshll.u32 2131351028, %v5341
        %v5351 = vshrl.u32 2102212464, %v5342
        %v5352 = vor.u32 %v5350, %v5351
        %v5353 = vshll.u32 2102212464, %v5341
        %v5354 = vshrl.u32 920167782, %v5342
        %v5355 = vor.u32 %v5353, %v5354
        %v5356 = vshll.u32 920167782, %v5341
        %v5357 = vshrl.u32 1326507024, %v5342
        %v5358 = vor.u32 %v5356, %v5357
        %vm5359 = vcmp.lt.s32.totalorder %v5340, 1
        %vm5360 = vcmp.lt.s32.totalorder %v5340, 2
        %vm5361 = vcmp.lt.s32.totalorder %v5340, 3
        %vm5362 = vcmp.lt.s32.totalorder %v5340, 4
        %v5363 = vsel %vm5359, %v5343, %v5346
        %v5364 = vsel %vm5362, %v5352, 2102212464
        %v5365 = vsel %vm5361, %v5349, %v5364
        %v5366 = vsel %vm5360, %v5363, %v5365
        %v5367 = vsel %vm5359, %v5346, %v5349
        %v5368 = vsel %vm5362, %v5355, 920167782
        %v5369 = vsel %vm5361, %v5352, %v5368
        %v5370 = vsel %vm5360, %v5367, %v5369
        %v5371 = vsel %vm5359, %v5349, %v5352
        %v5372 = vsel %vm5362, %v5358, 1326507024
        %v5373 = vsel %vm5361, %v5355, %v5372
        %v5374 = vsel %vm5360, %v5371, %v5373
        %v5375 = vshll.u32 %v5335, 8
        %v5376 = vand.u32 %v5375, 65535
        %v5377 = vshrl.u32 %v5375, 16
        %v5378 = vand.u32 %v5374, 65535
        %v5379 = vshrl.u32 %v5374, 16
        %v5380 = vmul.u32 %v5376, %v5378
        %v5381 = vmul.u32 %v5376, %v5379
        %v5382 = vmul.u32 %v5377, %v5378
        %v5383 = vmul.u32 %v5377, %v5379
        %v5384 = vshll.u32 %v5381, 16
        %v5385 = vshrl.u32 %v5381, 16
        %v5386 = vshll.u32 %v5382, 16
        %v5387 = vshrl.u32 %v5382, 16
        %vm5388 = vc.u32 %v5380, %v5384
        %v5389 = vsel %vm5388, 1, 0
        %v5390 = vadd.s32 %v5380, %v5384
        %v5391 = vadd.s32 %v5383, %v5389
        %vm5392 = vc.u32 %v5390, %v5386
        %v5393 = vsel %vm5392, 1, 0
        %v5394 = vadd.s32 %v5390, %v5386
        %v5395 = vadd.s32 %v5391, %v5393
        %v5396 = vadd.s32 %v5395, %v5385
        %v5397 = vadd.s32 %v5396, %v5387
        %v5398 = vand.u32 %v5375, 65535
        %v5399 = vshrl.u32 %v5375, 16
        %v5400 = vand.u32 %v5370, 65535
        %v5401 = vshrl.u32 %v5370, 16
        %v5402 = vmul.u32 %v5398, %v5400
        %v5403 = vmul.u32 %v5398, %v5401
        %v5404 = vmul.u32 %v5399, %v5400
        %v5405 = vmul.u32 %v5399, %v5401
        %v5406 = vshll.u32 %v5403, 16
        %v5407 = vshrl.u32 %v5403, 16
        %v5408 = vshll.u32 %v5404, 16
        %v5409 = vshrl.u32 %v5404, 16
        %vm5410 = vc.u32 %v5402, %v5406
        %v5411 = vsel %vm5410, 1, 0
        %v5412 = vadd.s32 %v5402, %v5406
        %v5413 = vadd.s32 %v5405, %v5411
        %vm5414 = vc.u32 %v5412, %v5408
        %v5415 = vsel %vm5414, 1, 0
        %v5416 = vadd.s32 %v5412, %v5408
        %v5417 = vadd.s32 %v5413, %v5415
        %v5418 = vadd.s32 %v5417, %v5407
        %v5419 = vadd.s32 %v5418, %v5409
        %v5420 = vmul.u32 %v5375, %v5366
        %v5421 = vadd.s32 %v5397, %v5416
        %vm5422 = vc.u32 %v5397, %v5416
        %v5423 = vadd.s32 %v5419, 1
        %v5424 = vsel %vm5422, %v5423, %v5419
        %v5425 = vadd.s32 %v5420, %v5424
        %v5426 = vadd.s32 %v5425, 536870912
        %v5427 = vshrl.u32 %v5426, 30
        %v5428 = vshll.u32 %v5427, 30
        %v5429 = vsub.s32 %v5425, %v5428
        %vm5430 = vcmp.lt.s32.totalorder %v5429, 0
        %v5431 = vsub.s32 0, %v5429
        %v5432 = vsel %vm5430, %v5431, %v5429
        %v5433 = vclz %v5432
        %v5434 = vsub.s32 %v5433, 2
        %vm5435 = vcmp.gt.s32.totalorder 0, %v5434
        %v5436 = vsel %vm5435, 0, %v5434
        %v5437 = vsub.s32 32, %v5436
        %v5438 = vshll.u32 %v5429, %v5436
        %v5439 = vshrl.u32 %v5421, %v5437
        %v5440 = vor.u32 %v5438, %v5439
        %v5441 = vsub.s32 4294967266, %v5436
        %v5442 = vadd.s32 %v5441, 127
        %v5443 = vshll.u32 %v5442, 23
        %v5444 = vor.u32 4788187, %v5443
        %v5445 = vand.u32 2147483647, %v5444
        %v5447 = vcvt.s32.f32 %v5440
        %v5448 = vmul.f32 %v5447, %v5445
        %v5449 = vxor.u32 %v5448, 2147483648
        %v5450 = vsel %vm5329, %v5449, %v5448
        %v5451 = vsub.s32 4, %v5427
        %v5452 = vsel %vm5329, %v5451, %v5427
        %v5453 = vsel %vm5328, %v4864, %v5450
        %v5454 = vsel %vm5328, 0, %v5452
        %v5455 = vmul.f32 %v5453, %v5453
        %v5456 = vmul.f32 %v5455, -0.001358992
        %v5457 = vadd.f32 %v5456, 0.041655596
        %v5458 = vmul.f32 %v5455, %v5457
        %v5459 = vadd.f32 %v5458, -0.4999988
        %v5460 = vmul.f32 %v5455, %v5459
        %v5461 = vadd.f32 1.0, %v5460
        %v5462 = vmul.f32 %v5453, %v5453
        %v5463 = vmul.f32 %v5462, -0.00019511016
        %v5464 = vadd.f32 %v5463, 0.008332121
        %v5465 = vmul.f32 %v5462, %v5464
        %v5466 = vadd.f32 %v5465, -0.16666654
        %v5467 = vmul.f32 %v5462, %v5466
        %v5468 = vadd.f32 %v5467, 1.0
        %v5469 = vmul.f32 %v5468, %v5453
        %vm5470 = vweird.f32 %v4864
        %v5471 = vand.u32 %v5454, 3
        %vm5472 = vcmp.lt.s32.totalorder %v5471, 2
        %vm5473 = vcmp.eq.s32.totalorder %v5471, 0
        %v5474 = vxor.u32 %v5469, 2147483648
        %v5475 = vsel %vm5473, %v5461, %v5474
        %vm5476 = vcmp.eq.s32.totalorder %v5471, 2
        %v5477 = vxor.u32 %v5461, 2147483648
        %v5478 = vsel %vm5476, %v5477, %v5469
        %v5479 = vsel %vm5472, %v5475, %v5478
        %v5480 = vsel %vm5470, nan, %v5479
        %v5481 = vmul.f32 %v4854, %v5018
        %v5482 = vmul.f32 %v4856, %v5172
        %v5483 = vmul.f32 %v4858, %v5326
        %v5484 = vmul.f32 %v4860, %v5480
        %v5485 = vand.u32 2147483647, %v4861
        %vm5486 = vcmp.le.f32.partialorder %v5485, 0.7853982
        %vm5487 = vcmp.lt.s32.totalorder %v4861, 0
        %v5488 = vand.u32 %v4861, 2139095040
        %v5489 = vshrl.u32 %v5488, 23
        %v5490 = vsub.s32 %v5489, 127
        %v5491 = vand.u32 2147483647, %v4861
        %v5492 = vand.u32 %v5491, 8388607
        %v5493 = vor.u32 %v5492, 8388608
        %v5494 = vsub.s32 0, %v5493
        %v5495 = vadd.s32 %v5490, 1
        %vm5496 = vcmp.gt.s32.totalorder %v5495, 0
        %v5497 = vsel %vm5496, %v5495, 0
        %v5498 = vshrl.u32 %v5497, 5
        %v5499 = vand.u32 %v5497, 31
        %v5500 = vsub.s32 32, %v5499
        %v5501 = vshrl.u32 683565275, %v5500
        %v5502 = vshll.u32 683565275, %v5499
        %v5503 = vshrl.u32 2475754826, %v5500
        %v5504 = vor.u32 %v5502, %v5503
        %v5505 = vshll.u32 2475754826, %v5499
        %v5506 = vshrl.u32 2131351028, %v5500
        %v5507 = vor.u32 %v5505, %v5506
        %v5508 = vshll.u32 2131351028, %v5499
        %v5509 = vshrl.u32 2102212464, %v5500
        %v5510 = vor.u32 %v5508, %v5509
        %v5511 = vshll.u32 2102212464, %v5499
        %v5512 = vshrl.u32 920167782, %v5500
        %v5513 = vor.u32 %v5511, %v5512
        %v5514 = vshll.u32 920167782, %v5499
        %v5515 = vshrl.u32 1326507024, %v5500
        %v5516 = vor.u32 %v5514, %v5515
        %vm5517 = vcmp.lt.s32.totalorder %v5498, 1
        %vm5518 = vcmp.lt.s32.totalorder %v5498, 2
        %vm5519 = vcmp.lt.s32.totalorder %v5498, 3
        %vm5520 = vcmp.lt.s32.totalorder %v5498, 4
        %v5521 = vsel %vm5517, %v5501, %v5504
        %v5522 = vsel %vm5520, %v5510, 2102212464
        %v5523 = vsel %vm5519, %v5507, %v5522
        %v5524 = vsel %vm5518, %v5521, %v5523
        %v5525 = vsel %vm5517, %v5504, %v5507
        %v5526 = vsel %vm5520, %v5513, 920167782
        %v5527 = vsel %vm5519, %v5510, %v5526
        %v5528 = vsel %vm5518, %v5525, %v5527
        %v5529 = vsel %vm5517, %v5507, %v5510
        %v5530 = vsel %vm5520, %v5516, 1326507024
        %v5531 = vsel %vm5519, %v5513, %v5530
        %v5532 = vsel %vm5518, %v5529, %v5531
        %v5533 = vshll.u32 %v5493, 8
        %v5534 = vand.u32 %v5533, 65535
        %v5535 = vshrl.u32 %v5533, 16
        %v5536 = vand.u32 %v5532, 65535
        %v5537 = vshrl.u32 %v5532, 16
        %v5538 = vmul.u32 %v5534, %v5536
        %v5539 = vmul.u32 %v5534, %v5537
        %v5540 = vmul.u32 %v5535, %v5536
        %v5541 = vmul.u32 %v5535, %v5537
        %v5542 = vshll.u32 %v5539, 16
        %v5543 = vshrl.u32 %v5539, 16
        %v5544 = vshll.u32 %v5540, 16
        %v5545 = vshrl.u32 %v5540, 16
        %vm5546 = vc.u32 %v5538, %v5542
        %v5547 = vsel %vm5546, 1, 0
        %v5548 = vadd.s32 %v5538, %v5542
        %v5549 = vadd.s32 %v5541, %v5547
        %vm5550 = vc.u32 %v5548, %v5544
        %v5551 = vsel %vm5550, 1, 0
        %v5552 = vadd.s32 %v5548, %v5544
        %v5553 = vadd.s32 %v5549, %v5551
        %v5554 = vadd.s32 %v5553, %v5543
        %v5555 = vadd.s32 %v5554, %v5545
        %v5556 = vand.u32 %v5533, 65535
        %v5557 = vshrl.u32 %v5533, 16
        %v5558 = vand.u32 %v5528, 65535
        %v5559 = vshrl.u32 %v5528, 16
        %v5560 = vmul.u32 %v5556, %v5558
        %v5561 = vmul.u32 %v5556, %v5559
        %v5562 = vmul.u32 %v5557, %v5558
        %v5563 = vmul.u32 %v5557, %v5559
        %v5564 = vshll.u32 %v5561, 16
        %v5565 = vshrl.u32 %v5561, 16
        %v5566 = vshll.u32 %v5562, 16
        %v5567 = vshrl.u32 %v5562, 16
        %vm5568 = vc.u32 %v5560, %v5564
        %v5569 = vsel %vm5568, 1, 0
        %v5570 = vadd.s32 %v5560, %v5564
        %v5571 = vadd.s32 %v5563, %v5569
        %vm5572 = vc.u32 %v5570, %v5566
        %v5573 = vsel %vm5572, 1, 0
        %v5574 = vadd.s32 %v5570, %v5566
        %v5575 = vadd.s32 %v5571, %v5573
        %v5576 = vadd.s32 %v5575, %v5565
        %v5577 = vadd.s32 %v5576, %v5567
        %v5578 = vmul.u32 %v5533, %v5524
        %v5579 = vadd.s32 %v5555, %v5574
        %vm5580 = vc.u32 %v5555, %v5574
        %v5581 = vadd.s32 %v5577, 1
        %v5582 = vsel %vm5580, %v5581, %v5577
        %v5583 = vadd.s32 %v5578, %v5582
        %v5584 = vadd.s32 %v5583, 536870912
        %v5585 = vshrl.u32 %v5584, 30
        %v5586 = vshll.u32 %v5585, 30
        %v5587 = vsub.s32 %v5583, %v5586
        %vm5588 = vcmp.lt.s32.totalorder %v5587, 0
        %v5589 = vsub.s32 0, %v5587
        %v5590 = vsel %vm5588, %v5589, %v5587
        %v5591 = vclz %v5590
        %v5592 = vsub.s32 %v5591, 2
        %vm5593 = vcmp.gt.s32.totalorder 0, %v5592
        %v5594 = vsel %vm5593, 0, %v5592
        %v5595 = vsub.s32 32, %v5594
        %v5596 = vshll.u32 %v5587, %v5594
        %v5597 = vshrl.u32 %v5579, %v5595
        %v5598 = vor.u32 %v5596, %v5597
        %v5599 = vsub.s32 4294967266, %v5594
        %v5600 = vadd.s32 %v5599, 127
        %v5601 = vshll.u32 %v5600, 23
        %v5602 = vor.u32 4788187, %v5601
        %v5603 = vand.u32 2147483647, %v5602
        %v5605 = vcvt.s32.f32 %v5598
        %v5606 = vmul.f32 %v5605, %v5603
        %v5607 = vxor.u32 %v5606, 2147483648
        %v5608 = vsel %vm5487, %v5607, %v5606
        %v5609 = vsub.s32 4, %v5585
        %v5610 = vsel %vm5487, %v5609, %v5585
        %v5611 = vsel %vm5486, %v4861, %v5608
        %v5612 = vsel %vm5486, 0, %v5610
        %v5613 = vmul.f32 %v5611, %v5611
        %v5614 = vmul.f32 %v5613, -0.001358992
        %v5615 = vadd.f32 %v5614, 0.041655596
        %v5616 = vmul.f32 %v5613, %v5615
        %v5617 = vadd.f32 %v5616, -0.4999988
        %v5618 = vmul.f32 %v5613, %v5617
        %v5619 = vadd.f32 1.0, %v5618
        %v5620 = vmul.f32 %v5611, %v5611
        %v5621 = vmul.f32 %v5620, -0.00019511016
        %v5622 = vadd.f32 %v5621, 0.008332121
        %v5623 = vmul.f32 %v5620, %v5622
        %v5624 = vadd.f32 %v5623, -0.16666654
        %v5625 = vmul.f32 %v5620, %v5624
        %v5626 = vadd.f32 %v5625, 1.0
        %v5627 = vmul.f32 %v5626, %v5611
        %vm5628 = vweird.f32 %v4861
        %v5629 = vadd.s32 %v5612, 3
        %v5630 = vand.u32 %v5629, 3
        %vm5631 = vcmp.lt.s32.totalorder %v5630, 2
        %vm5632 = vcmp.eq.s32.totalorder %v5630, 0
        %v5633 = vxor.u32 %v5627, 2147483648
        %v5634 = vsel %vm5632, %v5619, %v5633
        %vm5635 = vcmp.eq.s32.totalorder %v5630, 2
        %v5636 = vxor.u32 %v5619, 2147483648
        %v5637 = vsel %vm5635, %v5636, %v5627
        %v5638 = vsel %vm5631, %v5634, %v5637
        %v5639 = vsel %vm5628, nan, %v5638
        %v5640 = vand.u32 2147483647, %v4862
        %vm5641 = vcmp.le.f32.partialorder %v5640, 0.7853982
        %vm5642 = vcmp.lt.s32.totalorder %v4862, 0
        %v5643 = vand.u32 %v4862, 2139095040
        %v5644 = vshrl.u32 %v5643, 23
        %v5645 = vsub.s32 %v5644, 127
        %v5646 = vand.u32 2147483647, %v4862
        %v5647 = vand.u32 %v5646, 8388607
        %v5648 = vor.u32 %v5647, 8388608
        %v5649 = vsub.s32 0, %v5648
        %v5650 = vadd.s32 %v5645, 1
        %vm5651 = vcmp.gt.s32.totalorder %v5650, 0
        %v5652 = vsel %vm5651, %v5650, 0
        %v5653 = vshrl.u32 %v5652, 5
        %v5654 = vand.u32 %v5652, 31
        %v5655 = vsub.s32 32, %v5654
        %v5656 = vshrl.u32 683565275, %v5655
        %v5657 = vshll.u32 683565275, %v5654
        %v5658 = vshrl.u32 2475754826, %v5655
        %v5659 = vor.u32 %v5657, %v5658
        %v5660 = vshll.u32 2475754826, %v5654
        %v5661 = vshrl.u32 2131351028, %v5655
        %v5662 = vor.u32 %v5660, %v5661
        %v5663 = vshll.u32 2131351028, %v5654
        %v5664 = vshrl.u32 2102212464, %v5655
        %v5665 = vor.u32 %v5663, %v5664
        %v5666 = vshll.u32 2102212464, %v5654
        %v5667 = vshrl.u32 920167782, %v5655
        %v5668 = vor.u32 %v5666, %v5667
        %v5669 = vshll.u32 920167782, %v5654
        %v5670 = vshrl.u32 1326507024, %v5655
        %v5671 = vor.u32 %v5669, %v5670
        %vm5672 = vcmp.lt.s32.totalorder %v5653, 1
        %vm5673 = vcmp.lt.s32.totalorder %v5653, 2
        %vm5674 = vcmp.lt.s32.totalorder %v5653, 3
        %vm5675 = vcmp.lt.s32.totalorder %v5653, 4
        %v5676 = vsel %vm5672, %v5656, %v5659
        %v5677 = vsel %vm5675, %v5665, 2102212464
        %v5678 = vsel %vm5674, %v5662, %v5677
        %v5679 = vsel %vm5673, %v5676, %v5678
        %v5680 = vsel %vm5672, %v5659, %v5662
        %v5681 = vsel %vm5675, %v5668, 920167782
        %v5682 = vsel %vm5674, %v5665, %v5681
        %v5683 = vsel %vm5673, %v5680, %v5682
        %v5684 = vsel %vm5672, %v5662, %v5665
        %v5685 = vsel %vm5675, %v5671, 1326507024
        %v5686 = vsel %vm5674, %v5668, %v5685
        %v5687 = vsel %vm5673, %v5684, %v5686
        %v5688 = vshll.u32 %v5648, 8
        %v5689 = vand.u32 %v5688, 65535
        %v5690 = vshrl.u32 %v5688, 16
        %v5691 = vand.u32 %v5687, 65535
        %v5692 = vshrl.u32 %v5687, 16
        %v5693 = vmul.u32 %v5689, %v5691
        %v5694 = vmul.u32 %v5689, %v5692
        %v5695 = vmul.u32 %v5690, %v5691
        %v5696 = vmul.u32 %v5690, %v5692
        %v5697 = vshll.u32 %v5694, 16
        %v5698 = vshrl.u32 %v5694, 16
        %v5699 = vshll.u32 %v5695, 16
        %v5700 = vshrl.u32 %v5695, 16
        %vm5701 = vc.u32 %v5693, %v5697
        %v5702 = vsel %vm5701, 1, 0
        %v5703 = vadd.s32 %v5693, %v5697
        %v5704 = vadd.s32 %v5696, %v5702
        %vm5705 = vc.u32 %v5703, %v5699
        %v5706 = vsel %vm5705, 1, 0
        %v5707 = vadd.s32 %v5703, %v5699
        %v5708 = vadd.s32 %v5704, %v5706
        %v5709 = vadd.s32 %v5708, %v5698
        %v5710 = vadd.s32 %v5709, %v5700
        %v5711 = vand.u32 %v5688, 65535
        %v5712 = vshrl.u32 %v5688, 16
        %v5713 = vand.u32 %v5683, 65535
        %v5714 = vshrl.u32 %v5683, 16
        %v5715 = vmul.u32 %v5711, %v5713
        %v5716 = vmul.u32 %v5711, %v5714
        %v5717 = vmul.u32 %v5712, %v5713
        %v5718 = vmul.u32 %v5712, %v5714
        %v5719 = vshll.u32 %v5716, 16
        %v5720 = vshrl.u32 %v5716, 16
        %v5721 = vshll.u32 %v5717, 16
        %v5722 = vshrl.u32 %v5717, 16
        %vm5723 = vc.u32 %v5715, %v5719
        %v5724 = vsel %vm5723, 1, 0
        %v5725 = vadd.s32 %v5715, %v5719
        %v5726 = vadd.s32 %v5718, %v5724
        %vm5727 = vc.u32 %v5725, %v5721
        %v5728 = vsel %vm5727, 1, 0
        %v5729 = vadd.s32 %v5725, %v5721
        %v5730 = vadd.s32 %v5726, %v5728
        %v5731 = vadd.s32 %v5730, %v5720
        %v5732 = vadd.s32 %v5731, %v5722
        %v5733 = vmul.u32 %v5688, %v5679
        %v5734 = vadd.s32 %v5710, %v5729
        %vm5735 = vc.u32 %v5710, %v5729
        %v5736 = vadd.s32 %v5732, 1
        %v5737 = vsel %vm5735, %v5736, %v5732
        %v5738 = vadd.s32 %v5733, %v5737
        %v5739 = vadd.s32 %v5738, 536870912
        %v5740 = vshrl.u32 %v5739, 30
        %v5741 = vshll.u32 %v5740, 30
        %v5742 = vsub.s32 %v5738, %v5741
        %vm5743 = vcmp.lt.s32.totalorder %v5742, 0
        %v5744 = vsub.s32 0, %v5742
        %v5745 = vsel %vm5743, %v5744, %v5742
        %v5746 = vclz %v5745
        %v5747 = vsub.s32 %v5746, 2
        %vm5748 = vcmp.gt.s32.totalorder 0, %v5747
        %v5749 = vsel %vm5748, 0, %v5747
        %v5750 = vsub.s32 32, %v5749
        %v5751 = vshll.u32 %v5742, %v5749
        %v5752 = vshrl.u32 %v5734, %v5750
        %v5753 = vor.u32 %v5751, %v5752
        %v5754 = vsub.s32 4294967266, %v5749
        %v5755 = vadd.s32 %v5754, 127
        %v5756 = vshll.u32 %v5755, 23
        %v5757 = vor.u32 4788187, %v5756
        %v5758 = vand.u32 2147483647, %v5757
        %v5760 = vcvt.s32.f32 %v5753
        %v5761 = vmul.f32 %v5760, %v5758
        %v5762 = vxor.u32 %v5761, 2147483648
        %v5763 = vsel %vm5642, %v5762, %v5761
        %v5764 = vsub.s32 4, %v5740
        %v5765 = vsel %vm5642, %v5764, %v5740
        %v5766 = vsel %vm5641, %v4862, %v5763
        %v5767 = vsel %vm5641, 0, %v5765
        %v5768 = vmul.f32 %v5766, %v5766
        %v5769 = vmul.f32 %v5768, -0.001358992
        %v5770 = vadd.f32 %v5769, 0.041655596
        %v5771 = vmul.f32 %v5768, %v5770
        %v5772 = vadd.f32 %v5771, -0.4999988
        %v5773 = vmul.f32 %v5768, %v5772
        %v5774 = vadd.f32 1.0, %v5773
        %v5775 = vmul.f32 %v5766, %v5766
        %v5776 = vmul.f32 %v5775, -0.00019511016
        %v5777 = vadd.f32 %v5776, 0.008332121
        %v5778 = vmul.f32 %v5775, %v5777
        %v5779 = vadd.f32 %v5778, -0.16666654
        %v5780 = vmul.f32 %v5775, %v5779
        %v5781 = vadd.f32 %v5780, 1.0
        %v5782 = vmul.f32 %v5781, %v5766
        %vm5783 = vweird.f32 %v4862
        %v5784 = vadd.s32 %v5767, 3
        %v5785 = vand.u32 %v5784, 3
        %vm5786 = vcmp.lt.s32.totalorder %v5785, 2
        %vm5787 = vcmp.eq.s32.totalorder %v5785, 0
        %v5788 = vxor.u32 %v5782, 2147483648
        %v5789 = vsel %vm5787, %v5774, %v5788
        %vm5790 = vcmp.eq.s32.totalorder %v5785, 2
        %v5791 = vxor.u32 %v5774, 2147483648
        %v5792 = vsel %vm5790, %v5791, %v5782
        %v5793 = vsel %vm5786, %v5789, %v5792
        %v5794 = vsel %vm5783, nan, %v5793
        %v5795 = vand.u32 2147483647, %v4863
        %vm5796 = vcmp.le.f32.partialorder %v5795, 0.7853982
        %vm5797 = vcmp.lt.s32.totalorder %v4863, 0
        %v5798 = vand.u32 %v4863, 2139095040
        %v5799 = vshrl.u32 %v5798, 23
        %v5800 = vsub.s32 %v5799, 127
        %v5801 = vand.u32 2147483647, %v4863
        %v5802 = vand.u32 %v5801, 8388607
        %v5803 = vor.u32 %v5802, 8388608
        %v5804 = vsub.s32 0, %v5803
        %v5805 = vadd.s32 %v5800, 1
        %vm5806 = vcmp.gt.s32.totalorder %v5805, 0
        %v5807 = vsel %vm5806, %v5805, 0
        %v5808 = vshrl.u32 %v5807, 5
        %v5809 = vand.u32 %v5807, 31
        %v5810 = vsub.s32 32, %v5809
        %v5811 = vshrl.u32 683565275, %v5810
        %v5812 = vshll.u32 683565275, %v5809
        %v5813 = vshrl.u32 2475754826, %v5810
        %v5814 = vor.u32 %v5812, %v5813
        %v5815 = vshll.u32 2475754826, %v5809
        %v5816 = vshrl.u32 2131351028, %v5810
        %v5817 = vor.u32 %v5815, %v5816
        %v5818 = vshll.u32 2131351028, %v5809
        %v5819 = vshrl.u32 2102212464, %v5810
        %v5820 = vor.u32 %v5818, %v5819
        %v5821 = vshll.u32 2102212464, %v5809
        %v5822 = vshrl.u32 920167782, %v5810
        %v5823 = vor.u32 %v5821, %v5822
        %v5824 = vshll.u32 920167782, %v5809
        %v5825 = vshrl.u32 1326507024, %v5810
        %v5826 = vor.u32 %v5824, %v5825
        %vm5827 = vcmp.lt.s32.totalorder %v5808, 1
        %vm5828 = vcmp.lt.s32.totalorder %v5808, 2
        %vm5829 = vcmp.lt.s32.totalorder %v5808, 3
        %vm5830 = vcmp.lt.s32.totalorder %v5808, 4
        %v5831 = vsel %vm5827, %v5811, %v5814
        %v5832 = vsel %vm5830, %v5820, 2102212464
        %v5833 = vsel %vm5829, %v5817, %v5832
        %v5834 = vsel %vm5828, %v5831, %v5833
        %v5835 = vsel %vm5827, %v5814, %v5817
        %v5836 = vsel %vm5830, %v5823, 920167782
        %v5837 = vsel %vm5829, %v5820, %v5836
        %v5838 = vsel %vm5828, %v5835, %v5837
        %v5839 = vsel %vm5827, %v5817, %v5820
        %v5840 = vsel %vm5830, %v5826, 1326507024
        %v5841 = vsel %vm5829, %v5823, %v5840
        %v5842 = vsel %vm5828, %v5839, %v5841
        %v5843 = vshll.u32 %v5803, 8
        %v5844 = vand.u32 %v5843, 65535
        %v5845 = vshrl.u32 %v5843, 16
        %v5846 = vand.u32 %v5842, 65535
        %v5847 = vshrl.u32 %v5842, 16
        %v5848 = vmul.u32 %v5844, %v5846
        %v5849 = vmul.u32 %v5844, %v5847
        %v5850 = vmul.u32 %v5845, %v5846
        %v5851 = vmul.u32 %v5845, %v5847
        %v5852 = vshll.u32 %v5849, 16
        %v5853 = vshrl.u32 %v5849, 16
        %v5854 = vshll.u32 %v5850, 16
        %v5855 = vshrl.u32 %v5850, 16
        %vm5856 = vc.u32 %v5848, %v5852
        %v5857 = vsel %vm5856, 1, 0
        %v5858 = vadd.s32 %v5848, %v5852
        %v5859 = vadd.s32 %v5851, %v5857
        %vm5860 = vc.u32 %v5858, %v5854
        %v5861 = vsel %vm5860, 1, 0
        %v5862 = vadd.s32 %v5858, %v5854
        %v5863 = vadd.s32 %v5859, %v5861
        %v5864 = vadd.s32 %v5863, %v5853
        %v5865 = vadd.s32 %v5864, %v5855
        %v5866 = vand.u32 %v5843, 65535
        %v5867 = vshrl.u32 %v5843, 16
        %v5868 = vand.u32 %v5838, 65535
        %v5869 = vshrl.u32 %v5838, 16
        %v5870 = vmul.u32 %v5866, %v5868
        %v5871 = vmul.u32 %v5866, %v5869
        %v5872 = vmul.u32 %v5867, %v5868
        %v5873 = vmul.u32 %v5867, %v5869
        %v5874 = vshll.u32 %v5871, 16
        %v5875 = vshrl.u32 %v5871, 16
        %v5876 = vshll.u32 %v5872, 16
        %v5877 = vshrl.u32 %v5872, 16
        %vm5878 = vc.u32 %v5870, %v5874
        %v5879 = vsel %vm5878, 1, 0
        %v5880 = vadd.s32 %v5870, %v5874
        %v5881 = vadd.s32 %v5873, %v5879
        %vm5882 = vc.u32 %v5880, %v5876
        %v5883 = vsel %vm5882, 1, 0
        %v5884 = vadd.s32 %v5880, %v5876
        %v5885 = vadd.s32 %v5881, %v5883
        %v5886 = vadd.s32 %v5885, %v5875
        %v5887 = vadd.s32 %v5886, %v5877
        %v5888 = vmul.u32 %v5843, %v5834
        %v5889 = vadd.s32 %v5865, %v5884
        %vm5890 = vc.u32 %v5865, %v5884
        %v5891 = vadd.s32 %v5887, 1
        %v5892 = vsel %vm5890, %v5891, %v5887
        %v5893 = vadd.s32 %v5888, %v5892
        %v5894 = vadd.s32 %v5893, 536870912
        %v5895 = vshrl.u32 %v5894, 30
        %v5896 = vshll.u32 %v5895, 30
        %v5897 = vsub.s32 %v5893, %v5896
        %vm5898 = vcmp.lt.s32.totalorder %v5897, 0
        %v5899 = vsub.s32 0, %v5897
        %v5900 = vsel %vm5898, %v5899, %v5897
        %v5901 = vclz %v5900
        %v5902 = vsub.s32 %v5901, 2
        %vm5903 = vcmp.gt.s32.totalorder 0, %v5902
        %v5904 = vsel %vm5903, 0, %v5902
        %v5905 = vsub.s32 32, %v5904
        %v5906 = vshll.u32 %v5897, %v5904
        %v5907 = vshrl.u32 %v5889, %v5905
        %v5908 = vor.u32 %v5906, %v5907
        %v5909 = vsub.s32 4294967266, %v5904
        %v5910 = vadd.s32 %v5909, 127
        %v5911 = vshll.u32 %v5910, 23
        %v5912 = vor.u32 4788187, %v5911
        %v5913 = vand.u32 2147483647, %v5912
        %v5915 = vcvt.s32.f32 %v5908
        %v5916 = vmul.f32 %v5915, %v5913
        %v5917 = vxor.u32 %v5916, 2147483648
        %v5918 = vsel %vm5797, %v5917, %v5916
        %v5919 = vsub.s32 4, %v5895
        %v5920 = vsel %vm5797, %v5919, %v5895
        %v5921 = vsel %vm5796, %v4863, %v5918
        %v5922 = vsel %vm5796, 0, %v5920
        %v5923 = vmul.f32 %v5921, %v5921
        %v5924 = vmul.f32 %v5923, -0.001358992
        %v5925 = vadd.f32 %v5924, 0.041655596
        %v5926 = vmul.f32 %v5923, %v5925
        %v5927 = vadd.f32 %v5926, -0.4999988
        %v5928 = vmul.f32 %v5923, %v5927
        %v5929 = vadd.f32 1.0, %v5928
        %v5930 = vmul.f32 %v5921, %v5921
        %v5931 = vmul.f32 %v5930, -0.00019511016
        %v5932 = vadd.f32 %v5931, 0.008332121
        %v5933 = vmul.f32 %v5930, %v5932
        %v5934 = vadd.f32 %v5933, -0.16666654
        %v5935 = vmul.f32 %v5930, %v5934
        %v5936 = vadd.f32 %v5935, 1.0
        %v5937 = vmul.f32 %v5936, %v5921
        %vm5938 = vweird.f32 %v4863
        %v5939 = vadd.s32 %v5922, 3
        %v5940 = vand.u32 %v5939, 3
        %vm5941 = vcmp.lt.s32.totalorder %v5940, 2
        %vm5942 = vcmp.eq.s32.totalorder %v5940, 0
        %v5943 = vxor.u32 %v5937, 2147483648
        %v5944 = vsel %vm5942, %v5929, %v5943
        %vm5945 = vcmp.eq.s32.totalorder %v5940, 2
        %v5946 = vxor.u32 %v5929, 2147483648
        %v5947 = vsel %vm5945, %v5946, %v5937
        %v5948 = vsel %vm5941, %v5944, %v5947
        %v5949 = vsel %vm5938, nan, %v5948
        %v5950 = vand.u32 2147483647, %v4864
        %vm5951 = vcmp.le.f32.partialorder %v5950, 0.7853982
        %vm5952 = vcmp.lt.s32.totalorder %v4864, 0
        %v5953 = vand.u32 %v4864, 2139095040
        %v5954 = vshrl.u32 %v5953, 23
        %v5955 = vsub.s32 %v5954, 127
        %v5956 = vand.u32 2147483647, %v4864
        %v5957 = vand.u32 %v5956, 8388607
        %v5958 = vor.u32 %v5957, 8388608
        %v5959 = vsub.s32 0, %v5958
        %v5960 = vadd.s32 %v5955, 1
        %vm5961 = vcmp.gt.s32.totalorder %v5960, 0
        %v5962 = vsel %vm5961, %v5960, 0
        %v5963 = vshrl.u32 %v5962, 5
        %v5964 = vand.u32 %v5962, 31
        %v5965 = vsub.s32 32, %v5964
        %v5966 = vshrl.u32 683565275, %v5965
        %v5967 = vshll.u32 683565275, %v5964
        %v5968 = vshrl.u32 2475754826, %v5965
        %v5969 = vor.u32 %v5967, %v5968
        %v5970 = vshll.u32 2475754826, %v5964
        %v5971 = vshrl.u32 2131351028, %v5965
        %v5972 = vor.u32 %v5970, %v5971
        %v5973 = vshll.u32 2131351028, %v5964
        %v5974 = vshrl.u32 2102212464, %v5965
        %v5975 = vor.u32 %v5973, %v5974
        %v5976 = vshll.u32 2102212464, %v5964
        %v5977 = vshrl.u32 920167782, %v5965
        %v5978 = vor.u32 %v5976, %v5977
        %v5979 = vshll.u32 920167782, %v5964
        %v5980 = vshrl.u32 1326507024, %v5965
        %v5981 = vor.u32 %v5979, %v5980
        %vm5982 = vcmp.lt.s32.totalorder %v5963, 1
        %vm5983 = vcmp.lt.s32.totalorder %v5963, 2
        %vm5984 = vcmp.lt.s32.totalorder %v5963, 3
        %vm5985 = vcmp.lt.s32.totalorder %v5963, 4
        %v5986 = vsel %vm5982, %v5966, %v5969
        %v5987 = vsel %vm5985, %v5975, 2102212464
        %v5988 = vsel %vm5984, %v5972, %v5987
        %v5989 = vsel %vm5983, %v5986, %v5988
        %v5990 = vsel %vm5982, %v5969, %v5972
        %v5991 = vsel %vm5985, %v5978, 920167782
        %v5992 = vsel %vm5984, %v5975, %v5991
        %v5993 = vsel %vm5983, %v5990, %v5992
        %v5994 = vsel %vm5982, %v5972, %v5975
        %v5995 = vsel %vm5985, %v5981, 1326507024
        %v5996 = vsel %vm5984, %v5978, %v5995
        %v5997 = vsel %vm5983, %v5994, %v5996
        %v5998 = vshll.u32 %v5958, 8
        %v5999 = vand.u32 %v5998, 65535
        %v6000 = vshrl.u32 %v5998, 16
        %v6001 = vand.u32 %v5997, 65535
        %v6002 = vshrl.u32 %v5997, 16
        %v6003 = vmul.u32 %v5999, %v6001
        %v6004 = vmul.u32 %v5999, %v6002
        %v6005 = vmul.u32 %v6000, %v6001
        %v6006 = vmul.u32 %v6000, %v6002
        %v6007 = vshll.u32 %v6004, 16
        %v6008 = vshrl.u32 %v6004, 16
        %v6009 = vshll.u32 %v6005, 16
        %v6010 = vshrl.u32 %v6005, 16
        %vm6011 = vc.u32 %v6003, %v6007
        %v6012 = vsel %vm6011, 1, 0
        %v6013 = vadd.s32 %v6003, %v6007
        %v6014 = vadd.s32 %v6006, %v6012
        %vm6015 = vc.u32 %v6013, %v6009
        %v6016 = vsel %vm6015, 1, 0
        %v6017 = vadd.s32 %v6013, %v6009
        %v6018 = vadd.s32 %v6014, %v6016
        %v6019 = vadd.s32 %v6018, %v6008
        %v6020 = vadd.s32 %v6019, %v6010
        %v6021 = vand.u32 %v5998, 65535
        %v6022 = vshrl.u32 %v5998, 16
        %v6023 = vand.u32 %v5993, 65535
        %v6024 = vshrl.u32 %v5993, 16
        %v6025 = vmul.u32 %v6021, %v6023
        %v6026 = vmul.u32 %v6021, %v6024
        %v6027 = vmul.u32 %v6022, %v6023
        %v6028 = vmul.u32 %v6022, %v6024
        %v6029 = vshll.u32 %v6026, 16
        %v6030 = vshrl.u32 %v6026, 16
        %v6031 = vshll.u32 %v6027, 16
        %v6032 = vshrl.u32 %v6027, 16
        %vm6033 = vc.u32 %v6025, %v6029
        %v6034 = vsel %vm6033, 1, 0
        %v6035 = vadd.s32 %v6025, %v6029
        %v6036 = vadd.s32 %v6028, %v6034
        %vm6037 = vc.u32 %v6035, %v6031
        %v6038 = vsel %vm6037, 1, 0
        %v6039 = vadd.s32 %v6035, %v6031
        %v6040 = vadd.s32 %v6036, %v6038
        %v6041 = vadd.s32 %v6040, %v6030
        %v6042 = vadd.s32 %v6041, %v6032
        %v6043 = vmul.u32 %v5998, %v5989
        %v6044 = vadd.s32 %v6020, %v6039
        %vm6045 = vc.u32 %v6020, %v6039
        %v6046 = vadd.s32 %v6042, 1
        %v6047 = vsel %vm6045, %v6046, %v6042
        %v6048 = vadd.s32 %v6043, %v6047
        %v6049 = vadd.s32 %v6048, 536870912
        %v6050 = vshrl.u32 %v6049, 30
        %v6051 = vshll.u32 %v6050, 30
        %v6052 = vsub.s32 %v6048, %v6051
        %vm6053 = vcmp.lt.s32.totalorder %v6052, 0
        %v6054 = vsub.s32 0, %v6052
        %v6055 = vsel %vm6053, %v6054, %v6052
        %v6056 = vclz %v6055
        %v6057 = vsub.s32 %v6056, 2
        %vm6058 = vcmp.gt.s32.totalorder 0, %v6057
        %v6059 = vsel %vm6058, 0, %v6057
        %v6060 = vsub.s32 32, %v6059
        %v6061 = vshll.u32 %v6052, %v6059
        %v6062 = vshrl.u32 %v6044, %v6060
        %v6063 = vor.u32 %v6061, %v6062
        %v6064 = vsub.s32 4294967266, %v6059
        %v6065 = vadd.s32 %v6064, 127
        %v6066 = vshll.u32 %v6065, 23
        %v6067 = vor.u32 4788187, %v6066
        %v6068 = vand.u32 2147483647, %v6067
        %v6070 = vcvt.s32.f32 %v6063
        %v6071 = vmul.f32 %v6070, %v6068
        %v6072 = vxor.u32 %v6071, 2147483648
        %v6073 = vsel %vm5952, %v6072, %v6071
        %v6074 = vsub.s32 4, %v6050
        %v6075 = vsel %vm5952, %v6074, %v6050
        %v6076 = vsel %vm5951, %v4864, %v6073
        %v6077 = vsel %vm5951, 0, %v6075
        %v6078 = vmul.f32 %v6076, %v6076
        %v6079 = vmul.f32 %v6078, -0.001358992
        %v6080 = vadd.f32 %v6079, 0.041655596
        %v6081 = vmul.f32 %v6078, %v6080
        %v6082 = vadd.f32 %v6081, -0.4999988
        %v6083 = vmul.f32 %v6078, %v6082
        %v6084 = vadd.f32 1.0, %v6083
        %v6085 = vmul.f32 %v6076, %v6076
        %v6086 = vmul.f32 %v6085, -0.00019511016
        %v6087 = vadd.f32 %v6086, 0.008332121
        %v6088 = vmul.f32 %v6085, %v6087
        %v6089 = vadd.f32 %v6088, -0.16666654
        %v6090 = vmul.f32 %v6085, %v6089
        %v6091 = vadd.f32 %v6090, 1.0
        %v6092 = vmul.f32 %v6091, %v6076
        %vm6093 = vweird.f32 %v4864
        %v6094 = vadd.s32 %v6077, 3
        %v6095 = vand.u32 %v6094, 3
        %vm6096 = vcmp.lt.s32.totalorder %v6095, 2
        %vm6097 = vcmp.eq.s32.totalorder %v6095, 0
        %v6098 = vxor.u32 %v6092, 2147483648
        %v6099 = vsel %vm6097, %v6084, %v6098
        %vm6100 = vcmp.eq.s32.totalorder %v6095, 2
        %v6101 = vxor.u32 %v6084, 2147483648
        %v6102 = vsel %vm6100, %v6101, %v6092
        %v6103 = vsel %vm6096, %v6099, %v6102
        %v6104 = vsel %vm6093, nan, %v6103
        %v6105 = vmul.f32 %v4854, %v5639
        %v6106 = vmul.f32 %v4856, %v5794
        %v6107 = vmul.f32 %v4858, %v5949
        %v6108 = vmul.f32 %v4860, %v6104
        %v6109 = vmul.f32 %v5481, %v5481
        %v6110 = vmul.f32 %v5482, %v5482
        %v6111 = vmul.f32 %v5483, %v5483
        %v6112 = vmul.f32 %v5484, %v5484
        %v6113 = vmul.f32 %v6105, %v6105
        %v6114 = vmul.f32 %v6106, %v6106
        %v6115 = vmul.f32 %v6107, %v6107
        %v6116 = vmul.f32 %v6108, %v6108
        %v6117 = vadd.f32 %v6109, %v6113
        %v6118 = vadd.f32 %v6110, %v6114
        %v6119 = vadd.f32 %v6111, %v6115
        %v6120 = vadd.f32 %v6112, %v6116
        %v6121 = vrcp.pop %v6117
        %v6122 = vmul.f32 %v6117, %v6121
        %v6123 = vsub.f32 1.0, %v6122
        %v6124 = vmul.f32 %v6121, %v6123
        %v6125 = vadd.f32 %v6121, %v6124
        %vm6126 = vweird.f32 %v6117
        %vm6127 = vweird.f32 %v6121
        %vm6128 = vmor %vm6126, %vm6127
        %v6129 = vsel %vm6128, %v6121, %v6125
        %v6130 = vand.u32 2147483647, %v6117
        %vm6131 = vcmp.eq.f32.partialorder %v6130, 8.507059e+37
        %v6132 = vand.u32 %v6117, 2147483648
        %v6133 = vor.u32 1.1754944e-38, %v6132
        %v6134 = vsel %vm6131, %v6133, %v6129
        %v6135 = vrcp.pop %v6118
        %v6136 = vmul.f32 %v6118, %v6135
        %v6137 = vsub.f32 1.0, %v6136
        %v6138 = vmul.f32 %v6135, %v6137
        %v6139 = vadd.f32 %v6135, %v6138
        %vm6140 = vweird.f32 %v6118
        %vm6141 = vweird.f32 %v6135
        %vm6142 = vmor %vm6140, %vm6141
        %v6143 = vsel %vm6142, %v6135, %v6139
        %v6144 = vand.u32 2147483647, %v6118
        %vm6145 = vcmp.eq.f32.partialorder %v6144, 8.507059e+37
        %v6146 = vand.u32 %v6118, 2147483648
        %v6147 = vor.u32 1.1754944e-38, %v6146
        %v6148 = vsel %vm6145, %v6147, %v6143
        %v6149 = vrcp.pop %v6119
        %v6150 = vmul.f32 %v6119, %v6149
        %v6151 = vsub.f32 1.0, %v6150
        %v6152 = vmul.f32 %v6149, %v6151
        %v6153 = vadd.f32 %v6149, %v6152
        %vm6154 = vweird.f32 %v6119
        %vm6155 = vweird.f32 %v6149
        %vm6156 = vmor %vm6154, %vm6155
        %v6157 = vsel %vm6156, %v6149, %v6153
        %v6158 = vand.u32 2147483647, %v6119
        %vm6159 = vcmp.eq.f32.partialorder %v6158, 8.507059e+37
        %v6160 = vand.u32 %v6119, 2147483648
        %v6161 = vor.u32 1.1754944e-38, %v6160
        %v6162 = vsel %vm6159, %v6161, %v6157
        %v6163 = vrcp.pop %v6120
        %v6164 = vmul.f32 %v6120, %v6163
        %v6165 = vsub.f32 1.0, %v6164
        %v6166 = vmul.f32 %v6163, %v6165
        %v6167 = vadd.f32 %v6163, %v6166
        %vm6168 = vweird.f32 %v6120
        %vm6169 = vweird.f32 %v6163
        %vm6170 = vmor %vm6168, %vm6169
        %v6171 = vsel %vm6170, %v6163, %v6167
        %v6172 = vand.u32 2147483647, %v6120
        %vm6173 = vcmp.eq.f32.partialorder %v6172, 8.507059e+37
        %v6174 = vand.u32 %v6120, 2147483648
        %v6175 = vor.u32 1.1754944e-38, %v6174
        %v6176 = vsel %vm6173, %v6175, %v6171
        %v6177 = vmul.f32 %v4799, %v5481
        %v6178 = vmul.f32 %v4802, %v5482
        %v6179 = vmul.f32 %v4805, %v5483
        %v6180 = vmul.f32 %v4808, %v5484
        %6185 = vrot.lane.b32.xlu0 %v6105, 32
        %v6186 = vpop.permute.xlu0 %6185
        %6187 = vrot.lane.b32.xlu0 %v6106, 32
        %v6188 = vpop.permute.xlu0 %6187
        %6189 = vrot.lane.b32.xlu0 %v6107, 32
        %v6190 = vpop.permute.xlu0 %6189
        %6191 = vrot.lane.b32.xlu0 %v6108, 32
        %v6192 = vpop.permute.xlu0 %6191
        %v6197 = vmul.f32 %v4799, %v6186
        %v6198 = vmul.f32 %v4802, %v6188
        %v6199 = vmul.f32 %v4805, %v6190
        %v6200 = vmul.f32 %v4808, %v6192
        %6205 = vrot.lane.b32.xlu0 %v6197, 96
        %v6206 = vpop.permute.xlu0 %6205
        %6207 = vrot.lane.b32.xlu0 %v6198, 96
        %v6208 = vpop.permute.xlu0 %6207
        %6209 = vrot.lane.b32.xlu0 %v6199, 96
        %v6210 = vpop.permute.xlu0 %6209
        %6211 = vrot.lane.b32.xlu0 %v6200, 96
        %v6212 = vpop.permute.xlu0 %6211
        %v6217 = vadd.f32 %v6177, %v6206
        %v6218 = vadd.f32 %v6178, %v6208
        %v6219 = vadd.f32 %v6179, %v6210
        %v6220 = vadd.f32 %v6180, %v6212
        %6225 = vrot.lane.b32.xlu0 %v5481, 32
        %v6226 = vpop.permute.xlu0 %6225
        %6227 = vrot.lane.b32.xlu0 %v5482, 32
        %v6228 = vpop.permute.xlu0 %6227
        %6229 = vrot.lane.b32.xlu0 %v5483, 32
        %v6230 = vpop.permute.xlu0 %6229
        %6231 = vrot.lane.b32.xlu0 %v5484, 32
        %v6232 = vpop.permute.xlu0 %6231
        %v6237 = vmul.f32 %v4799, %v6226
        %v6238 = vmul.f32 %v4802, %v6228
        %v6239 = vmul.f32 %v4805, %v6230
        %v6240 = vmul.f32 %v4808, %v6232
        %v6241 = vmul.f32 %v4799, %v6105
        %v6242 = vmul.f32 %v4802, %v6106
        %v6243 = vmul.f32 %v4805, %v6107
        %v6244 = vmul.f32 %v4808, %v6108
        %6249 = vrot.lane.b32.xlu0 %v6241, 32
        %v6250 = vpop.permute.xlu0 %6249
        %6251 = vrot.lane.b32.xlu0 %v6242, 32
        %v6252 = vpop.permute.xlu0 %6251
        %6253 = vrot.lane.b32.xlu0 %v6243, 32
        %v6254 = vpop.permute.xlu0 %6253
        %6255 = vrot.lane.b32.xlu0 %v6244, 32
        %v6256 = vpop.permute.xlu0 %6255
        %v6261 = vsub.f32 %v6237, %v6250
        %v6262 = vsub.f32 %v6238, %v6252
        %v6263 = vsub.f32 %v6239, %v6254
        %v6264 = vsub.f32 %v6240, %v6256
        %v6265 = vmul.f32 %v6217, %v6134
        %v6266 = vmul.f32 %v6218, %v6148
        %v6267 = vmul.f32 %v6219, %v6162
        %v6268 = vmul.f32 %v6220, %v6176
        %6269 = vst.msk [vmem:[#allocation2] sm:$0xff] %vm251, %v6265
        %6270 = vst.msk [vmem:[#allocation2 + $0x8] sm:$0xff] %vm251, %v6266
        %6271 = vst.msk [vmem:[#allocation2 + $0x10] sm:$0xff] %vm251, %v6267
        %6272 = vst.msk [vmem:[#allocation2 + $0x18] sm:$0xff] %vm251, %v6268
        %6277 = vrot.lane.b32.xlu0 %v6134, 32
        %v6278 = vpop.permute.xlu0 %6277
        %6279 = vrot.lane.b32.xlu0 %v6148, 32
        %v6280 = vpop.permute.xlu0 %6279
        %6281 = vrot.lane.b32.xlu0 %v6162, 32
        %v6282 = vpop.permute.xlu0 %6281
        %6283 = vrot.lane.b32.xlu0 %v6176, 32
        %v6284 = vpop.permute.xlu0 %6283
        %v6289 = vmul.f32 %v6261, %v6278
        %v6290 = vmul.f32 %v6262, %v6280
        %v6291 = vmul.f32 %v6263, %v6282
        %v6292 = vmul.f32 %v6264, %v6284
        %6297 = vrot.lane.b32.xlu0 %v6289, 96
        %v6298 = vpop.permute.xlu0 %6297
        %6299 = vrot.lane.b32.xlu0 %v6290, 96
        %v6300 = vpop.permute.xlu0 %6299
        %6301 = vrot.lane.b32.xlu0 %v6291, 96
        %v6302 = vpop.permute.xlu0 %6301
        %6303 = vrot.lane.b32.xlu0 %v6292, 96
        %v6304 = vpop.permute.xlu0 %6303
        %6309 = vst.msk [vmem:[#allocation3] sm:$0xff] %vm251, %v6298
        %6310 = vst.msk [vmem:[#allocation3 + $0x8] sm:$0xff] %vm251, %v6300
        %6311 = vst.msk [vmem:[#allocation3 + $0x10] sm:$0xff] %vm251, %v6302
        %6312 = vst.msk [vmem:[#allocation3 + $0x18] sm:$0xff] %vm251, %v6304
      $region127: #{tpu_custom_call.1} parent=120 // pred_fallthru
        _
    $region121: #{tpu_custom_call.1} parent=1 // loop_footer
      %s2795 = sadd.s32 1, %s2791
    $region122: #{tpu_custom_call.1} parent=1 // loop_footer_branch
      %2790 = sbr.rel target = $region118
    $region123: #{tpu_custom_call.1} parent=1 // loop_exit
      _
    // Predicated region
    $region128: #{tpu_custom_call.1} parent=1 // pred_check
      _
    $region129: #{tpu_custom_call.1} parent=1 // pred_check_branch
      %6314 = sbr.rel (0) target = $region131
    $region130: #{tpu_custom_call.1} parent=1 // pred_region
      %6316 = vsyncadd [#allocation8], 0
      %s6317 = sshll.u32 [#allocation27], 4
      %s6318 = int_to_ptr.vmem [resolvable:$true] %s6317
      %s6319 = sshll.u32 %s13, 4
      %s6320 = int_to_ptr.hbm [resolvable:$true] %s6319
      %6325 = dma.vmem_to_hbm [thread:$0]  %s6318, 1536, %s6320, [#allocation8], 128, 128, 8
    $region131: #{tpu_custom_call.1} parent=1 // pred_fallthru
      _
    // Predicated region
    $region132: #{tpu_custom_call.1} parent=1 // pred_check
      _
    $region133: #{tpu_custom_call.1} parent=1 // pred_check_branch
      %6327 = sbr.rel (0) target = $region135
    $region134: #{tpu_custom_call.1} parent=1 // pred_region
      %6329 = dma.done [#allocation8], 1536
    $region135: #{tpu_custom_call.1} parent=1 // pred_fallthru
      _
    %6330 = vsyncpa [#allocation7], 1
    %6331 = vsyncpa [#allocation10], 1
    %6332 = vsyncpa [#allocation13], 1
    %6333 = vsyncpa [#allocation16], 1
    %6334 = vsyncpa [#allocation19], 1
    %6335 = vsyncpa [#allocation22], 1
    %6336 = vsyncpa [#allocation25], 1
    %6337 = vsyncpa [#allocation8], 1

</llo_original>
